<compile_context>
chip_gen: v7x
topology: tpu7x:2x2x1
jax: 0.10.0
libtpu: 0.0.40
codegen_flags: <defaults>
</compile_context>

<pallas_src>
import functools

import jax
import jax.numpy as jnp
from jax import lax
from jax.experimental import pallas as pl
from jax.experimental.pallas import tpu as pltpu

EPS = 1e-5
LANES = 128  # Cout padded to this so every store / VPU op is lane-dense


# ----------------------------- Pallas kernel --------------------------------

def _res_block_kernel(xph0_ref, xph1_ref, w1_ref, w2_ref, eye_ref, valid_ref,
                      g1_ref, be1_ref, g2_ref, be2_ref,
                      o_ref, z0_ref, z1_ref, *, N, H, W, C):
    """Fused ResBlock forward (single grid step, everything VMEM-resident)."""
    Hh, Wh = H // 2, W // 2            # conv2 output grid padded to (Hh, Wh)
    Ho2, Wo2 = Hh - 1, Wh - 1          # valid conv2 output extent ((H-4)//2+1)
    R1 = N * H * Wh                    # conv1 rows per W-phase
    R2 = N * Hh * Wh                   # conv2 (padded) rows

    xph = (xph0_ref, xph1_ref)

    # ---- conv1 (3x3, s1, p1): 9 shifted matmuls per W-parity phase ----------
    # xph[q][n, h, u, c] = xpad[n, h, 2u + q, c]  (xpad = spatially 1-padded x)
    def conv1_phase(p):
        acc, resid = None, None
        for ki in range(3):
            for kj in range(3):
                s = p + kj                       # absolute W offset = 2u + s
                src = xph[s % 2]
                u0 = s // 2
                patch = src[:, ki:ki + H, u0:u0 + Wh, :].reshape(R1, C)
                if ki == 1 and kj == 1:
                    resid = patch                # residual = un-shifted input
                t = jnp.dot(patch.astype(jnp.bfloat16), w1_ref[ki * 3 + kj],
                            preferred_element_type=jnp.float32)
                acc = t if acc is None else acc + t
        return acc, resid

    acc0, res0 = conv1_phase(0)                  # rows = (n, h, u), w = 2u
    acc1, res1 = conv1_phase(1)                  # rows = (n, h, u), w = 2u + 1

    # ---- BN1 over all N*H*W rows (both phases), folded affine, +res, ReLU ---
    n1 = float(2 * R1)
    mean1 = (jnp.sum(acc0, axis=0, keepdims=True)
             + jnp.sum(acc1, axis=0, keepdims=True)) / n1
    d0, d1 = acc0 - mean1, acc1 - mean1
    var1 = (jnp.sum(d0 * d0, axis=0, keepdims=True)
            + jnp.sum(d1 * d1, axis=0, keepdims=True)) / n1
    scale1 = g1_ref[...] * lax.rsqrt(var1 + EPS)      # gamma folded into rsqrt
    shift1 = be1_ref[...] - mean1 * scale1            # beta folded into shift

    eye = eye_ref[...]                                # (C, 128) padded identity
    z0 = jnp.maximum(acc0 * scale1 + shift1
                     + jnp.dot(res0, eye, preferred_element_type=jnp.float32),
                     0.0)
    z1 = jnp.maximum(acc1 * scale1 + shift1
                     + jnp.dot(res1, eye, preferred_element_type=jnp.float32),
                     0.0)

    # ---- stage z into zero-padded VMEM scratches split by (H, W) parity -----
    # layout: (n, h_half, h_phase, w_half, c); the zero padding supplies the
    # out-of-range taps of the (Hh, Wh)-padded conv2 output grid.
    z0_ref[...] = jnp.zeros_like(z0_ref)
    z1_ref[...] = jnp.zeros_like(z1_ref)
    z0_ref[:, 0:Hh, :, 0:Wh, :] = z0.reshape(N, Hh, 2, Wh, LANES)
    z1_ref[:, 0:Hh, :, 0:Wh, :] = z1.reshape(N, Hh, 2, Wh, LANES)
    zscr = (z0_ref, z1_ref)

    # ---- conv2 (4x4, stride 2): 16 unit-stride matmuls ----------------------
    # z[n, 2*ho+ki, 2*wo+kj, :] = zscr[kj%2][n, ho + ki//2, ki%2, wo + kj//2, :]
    acc2 = None
    for ki in range(4):
        for kj in range(4):
            src = zscr[kj % 2]
            patch = src[:, ki // 2:ki // 2 + Hh, ki % 2,
                        kj // 2:kj // 2 + Wh, :].reshape(R2, LANES)
            t = jnp.dot(patch.astype(jnp.bfloat16), w2_ref[ki * 4 + kj],
                        preferred_element_type=jnp.float32)
            acc2 = t if acc2 is None else acc2 + t

    # ---- BN2 over the valid (ho < Ho2, wo < Wo2) rows only, then ReLU -------
    valid = valid_ref[...]                            # (R2, 1) {0,1} mask
    cnt = float(N * Ho2 * Wo2)
    mean2 = jnp.sum(acc2 * valid, axis=0, keepdims=True) / cnt
    d2 = (acc2 - mean2) * valid
    var2 = jnp.sum(d2 * d2, axis=0, keepdims=True) / cnt
    scale2 = g2_ref[...] * lax.rsqrt(var2 + EPS)
    shift2 = be2_ref[...] - mean2 * scale2
    o_ref[...] = jnp.maximum(acc2 * scale2 + shift2, 0.0)


def _full_spec(shape):
    nd = len(shape)
    return pl.BlockSpec(shape, lambda i, _nd=nd: (0,) * _nd)


# ------------------------------- JAX wrapper ---------------------------------

@jax.jit
def res_block_forward(x_nchw, params):
    """Forward pass of ResBlock.  Input/output in NCHW (PyTorch convention)."""
    x = jnp.transpose(x_nchw, (0, 2, 3, 1)).astype(jnp.float32)     # NHWC
    N, H, W, C = x.shape
    # Shape requirements of this fully-fused, single-step kernel.
    # TODO(synk): for large inputs, row-tile the grid with two-pass BN stats
    # and mark it "parallel" to shard across v7x's 2 TensorCores.
    assert C <= LANES and H % 2 == 0 and W % 16 == 0 and H >= 4 and W >= 4

    cpad = LANES - C
    Hh, Wh = H // 2, W // 2
    Ho2, Wo2 = Hh - 1, Wh - 1
    R2 = N * Hh * Wh

    # inputs: pad spatially by 1 and split by W parity (pure data movement;
    # replaces the 9x/16x HBM im2col of the previous version).
    xpad = jnp.pad(x, ((0, 0), (1, 1), (1, 1), (0, 0)))
    xph0 = xpad[:, :, 0::2, :]                      # (N, H+2, (W+2)//2, C)
    xph1 = xpad[:, :, 1::2, :]

    # weights: (KH, KW, Cin, Cout) -> (KH*KW, Cin(_pad), 128) bf16, Cout padded
    w1 = jnp.pad(params["w1"], ((0, 0), (0, 0), (0, 0), (0, cpad)))
    w1 = w1.reshape(9, C, LANES).astype(jnp.bfloat16)
    w2 = jnp.pad(params["w2"], ((0, 0), (0, 0), (0, cpad), (0, cpad)))
    w2 = w2.reshape(16, LANES, LANES).astype(jnp.bfloat16)
    # NOTE: conv biases (params["b1"], params["b2"]) are intentionally NOT
    # passed: a per-channel bias before training-mode BatchNorm is exactly
    # cancelled by the mean subtraction.
    g1 = jnp.pad(params["g1"], ((0, 0), (0, cpad)))
    be1 = jnp.pad(params["beta1"], ((0, 0), (0, cpad)))
    g2 = jnp.pad(params["g2"], ((0, 0), (0, cpad)))
    be2 = jnp.pad(params["beta2"], ((0, 0), (0, cpad)))

    # tiny constants used inside the kernel
    eye = jnp.eye(C, LANES, dtype=jnp.float32)      # widens residual C -> 128
    ho = jnp.arange(Hh).reshape(1, Hh, 1)
    wo = jnp.arange(Wh).reshape(1, 1, Wh)
    valid = jnp.broadcast_to((ho < Ho2) & (wo < Wo2), (N, Hh, Wh))
    valid = valid.astype(jnp.float32).reshape(R2, 1)

    kern = functools.partial(_res_block_kernel, N=N, H=H, W=W, C=C)

    out2d = pl.pallas_call(
        kern,
        out_shape=jax.ShapeDtypeStruct((R2, LANES), jnp.float32),
        grid=(1,),
        in_specs=[_full_spec(xph0.shape), _full_spec(xph1.shape),
                  _full_spec(w1.shape), _full_spec(w2.shape),
                  _full_spec(eye.shape), _full_spec(valid.shape),
                  _full_spec(g1.shape), _full_spec(be1.shape),
                  _full_spec(g2.shape), _full_spec(be2.shape)],
        out_specs=_full_spec((R2, LANES)),
        scratch_shapes=[pltpu.VMEM((N, Hh + 1, 2, Wh + 1, LANES), jnp.float32),
                        pltpu.VMEM((N, Hh + 1, 2, Wh + 1, LANES), jnp.float32)],
        compiler_params=pltpu.CompilerParams(
            dimension_semantics=("arbitrary",),
            vmem_limit_bytes=32 * 1024 * 1024),
    )(xph0, xph1, w1, w2, eye, valid, g1, be1, g2, be2)

    out = out2d.reshape(N, Hh, Wh, LANES)[:, :Ho2, :Wo2, :C]
    return jnp.transpose(out, (0, 3, 1, 2))          # back to NCHW


# ------------------------------ reference & init -----------------------------

def init_params(key, num_hidden):
    """Deterministic parameter init (PyTorch-like uniform fan-in scaling)."""
    c = num_hidden
    k1, k2, k3, k4 = jax.random.split(key, 4)
    bound1 = 1.0 / jnp.sqrt(9.0 * c)
    bound2 = 1.0 / jnp.sqrt(16.0 * c)
    return dict(
        w1=jax.random.uniform(k1, (3, 3, c, c), jnp.float32, -bound1, bound1),
        b1=jax.random.uniform(k2, (1, c), jnp.float32, -bound1, bound1),
        w2=jax.random.uniform(k3, (4, 4, c, c), jnp.float32, -bound2, bound2),
        b2=jax.random.uniform(k4, (1, c), jnp.float32, -bound2, bound2),
        g1=jnp.ones((1, c), jnp.float32), beta1=jnp.zeros((1, c), jnp.float32),
        g2=jnp.ones((1, c), jnp.float32), beta2=jnp.zeros((1, c), jnp.float32),
    )


def _reference(x_nchw, params):
    """Pure-XLA reference (same bf16-operand / f32-accumulate conv math)."""
    x = jnp.transpose(x_nchw, (0, 2, 3, 1)).astype(jnp.float32)
    dn = ("NHWC", "HWIO", "NHWC")

    def conv(a, w, stride, pad):
        return lax.conv_general_dilated(
            a.astype(jnp.bfloat16), w.astype(jnp.bfloat16), stride, pad,
            dimension_numbers=dn, preferred_element_type=jnp.float32)

    def bn(y, g, b):
        mean = jnp.mean(y, axis=(0, 1, 2), keepdims=True)
        var = jnp.mean(jnp.square(y - mean), axis=(0, 1, 2), keepdims=True)
        return ((y - mean) * lax.rsqrt(var + EPS) * g.reshape(1, 1, 1, -1)
                + b.reshape(1, 1, 1, -1))

    y = conv(x, params["w1"], (1, 1), ((1, 1), (1, 1)))
    y = y + params["b1"].reshape(1, 1, 1, -1)
    y = jnp.maximum(bn(y, params["g1"], params["beta1"]) + x, 0.0)
    y = conv(y, params["w2"], (2, 2), ((0, 0), (0, 0)))
    y = y + params["b2"].reshape(1, 1, 1, -1)
    y = jnp.maximum(bn(y, params["g2"], params["beta2"]), 0.0)
    return jnp.transpose(y, (0, 3, 1, 2))


# --------------------------------- main ---------------------------------------

if __name__ == "__main__":
    num_hidden = 32
    key = jax.random.PRNGKey(0)
    kx, kp = jax.random.split(key)

    x = jax.random.normal(kx, (2, num_hidden, 16, 16), jnp.float32)  # NCHW
    params = init_params(kp, num_hidden)

    out = jax.block_until_ready(res_block_forward(x, params))

    # conv2: kernel 4, stride 2, no pad -> (16 - 4)//2 + 1 = 7
    assert out.shape == (2, num_hidden, 7, 7), out.shape
    assert bool(jnp.all(jnp.isfinite(out)))
    assert bool(jnp.all(out >= 0.0))            # ReLU output

    ref = jax.block_until_ready(_reference(x, params))
    err = float(jnp.max(jnp.abs(out - ref)))
    assert err < 5e-2, err

    print("KERNEL_OK")
</pallas_src>

<mosaic_0001>
module attributes {stable_mosaic.version = 11 : i64} {
  func.func @_res_block_kernel(%arg0: i32, %arg1: memref<2x18x9x32xf32, #tpu.memory_space<vmem>>, %arg2: memref<2x18x9x32xf32, #tpu.memory_space<vmem>>, %arg3: memref<9x32x128xbf16, #tpu.memory_space<vmem>>, %arg4: memref<16x128x128xbf16, #tpu.memory_space<vmem>>, %arg5: memref<32x128xf32, #tpu.memory_space<vmem>>, %arg6: memref<128x1xf32, #tpu.memory_space<vmem>>, %arg7: memref<1x128xf32, #tpu.memory_space<vmem>>, %arg8: memref<1x128xf32, #tpu.memory_space<vmem>>, %arg9: memref<1x128xf32, #tpu.memory_space<vmem>>, %arg10: memref<1x128xf32, #tpu.memory_space<vmem>>, %arg11: memref<128x128xf32, #tpu.memory_space<vmem>>, %arg12: memref<2x9x2x9x128xf32, #tpu.memory_space<vmem>>, %arg13: memref<2x9x2x9x128xf32, #tpu.memory_space<vmem>>) attributes {dimension_semantics = [#tpu.dimension_semantics<arbitrary>], iteration_bounds = array<i64: 1>, scalar_prefetch = 0 : i64, scratch_operands = 2 : i64, tpu.core_type = #tpu.core_type<tc>, window_params = [{pipeline_mode = #tpu.pipeline_mode<synchronous>, transform_indices = @transform_0, window_bounds = array<i64: 2, 18, 9, 32>}, {pipeline_mode = #tpu.pipeline_mode<synchronous>, transform_indices = @transform_1, window_bounds = array<i64: 2, 18, 9, 32>}, {pipeline_mode = #tpu.pipeline_mode<synchronous>, transform_indices = @transform_2, window_bounds = array<i64: 9, 32, 128>}, {pipeline_mode = #tpu.pipeline_mode<synchronous>, transform_indices = @transform_3, window_bounds = array<i64: 16, 128, 128>}, {pipeline_mode = #tpu.pipeline_mode<synchronous>, transform_indices = @transform_4, window_bounds = array<i64: 32, 128>}, {pipeline_mode = #tpu.pipeline_mode<synchronous>, transform_indices = @transform_5, window_bounds = array<i64: 128, 1>}, {pipeline_mode = #tpu.pipeline_mode<synchronous>, transform_indices = @transform_6, window_bounds = array<i64: 1, 128>}, {pipeline_mode = #tpu.pipeline_mode<synchronous>, transform_indices = @transform_7, window_bounds = array<i64: 1, 128>}, {pipeline_mode = #tpu.pipeline_mode<synchronous>, transform_indices = @transform_8, window_bounds = array<i64: 1, 128>}, {pipeline_mode = #tpu.pipeline_mode<synchronous>, transform_indices = @transform_9, window_bounds = array<i64: 1, 128>}, {pipeline_mode = #tpu.pipeline_mode<synchronous>, transform_indices = @transform_10, window_bounds = array<i64: 128, 128>}]} {
    %c0 = arith.constant 0 : index
    %c0_0 = arith.constant 0 : index
    %c0_1 = arith.constant 0 : index
    %c0_2 = arith.constant 0 : index
    %0 = vector.load %arg1[%c0, %c0_0, %c0_1, %c0_2] : memref<2x18x9x32xf32, #tpu.memory_space<vmem>>, vector<2x16x8x32xf32>
    %1 = vector.shape_cast %0 : vector<2x16x8x32xf32> to vector<256x32xf32>
    %2 = arith.truncf %1 : vector<256x32xf32> to vector<256x32xbf16>
    %c0_3 = arith.constant 0 : index
    %c0_4 = arith.constant 0 : index
    %c0_5 = arith.constant 0 : index
    %3 = vector.load %arg3[%c0_3, %c0_4, %c0_5] : memref<9x32x128xbf16, #tpu.memory_space<vmem>>, vector<1x32x128xbf16>
    %4 = vector.shape_cast %3 : vector<1x32x128xbf16> to vector<32x128xbf16>
    %cst = arith.constant dense<0.000000e+00> : vector<256x128xf32>
    %5 = tpu.matmul %2, %4, %cst {dimension_numbers = #tpu.dot_dimension_numbers<[1], [0], [0], [1], [0, 0, 1, 1], [], []>} : vector<256x32xbf16>, vector<32x128xbf16>, vector<256x128xf32> -> vector<256x128xf32>
    %c0_6 = arith.constant 0 : index
    %c0_7 = arith.constant 0 : index
    %c0_8 = arith.constant 0 : index
    %c0_9 = arith.constant 0 : index
    %6 = vector.load %arg2[%c0_6, %c0_7, %c0_8, %c0_9] : memref<2x18x9x32xf32, #tpu.memory_space<vmem>>, vector<2x16x8x32xf32>
    %7 = vector.shape_cast %6 : vector<2x16x8x32xf32> to vector<256x32xf32>
    %8 = arith.truncf %7 : vector<256x32xf32> to vector<256x32xbf16>
    %c1 = arith.constant 1 : index
    %c0_10 = arith.constant 0 : index
    %c0_11 = arith.constant 0 : index
    %9 = vector.load %arg3[%c1, %c0_10, %c0_11] : memref<9x32x128xbf16, #tpu.memory_space<vmem>>, vector<1x32x128xbf16>
    %10 = vector.shape_cast %9 : vector<1x32x128xbf16> to vector<32x128xbf16>
    %cst_12 = arith.constant dense<0.000000e+00> : vector<256x128xf32>
    %11 = tpu.matmul %8, %10, %cst_12 {dimension_numbers = #tpu.dot_dimension_numbers<[1], [0], [0], [1], [0, 0, 1, 1], [], []>} : vector<256x32xbf16>, vector<32x128xbf16>, vector<256x128xf32> -> vector<256x128xf32>
    %12 = arith.addf %5, %11 : vector<256x128xf32>
    %c0_13 = arith.constant 0 : index
    %c0_14 = arith.constant 0 : index
    %c1_15 = arith.constant 1 : index
    %c0_16 = arith.constant 0 : index
    %13 = vector.load %arg1[%c0_13, %c0_14, %c1_15, %c0_16] : memref<2x18x9x32xf32, #tpu.memory_space<vmem>>, vector<2x16x8x32xf32>
    %14 = vector.shape_cast %13 : vector<2x16x8x32xf32> to vector<256x32xf32>
    %15 = arith.truncf %14 : vector<256x32xf32> to vector<256x32xbf16>
    %c2 = arith.constant 2 : index
    %c0_17 = arith.constant 0 : index
    %c0_18 = arith.constant 0 : index
    %16 = vector.load %arg3[%c2, %c0_17, %c0_18] : memref<9x32x128xbf16, #tpu.memory_space<vmem>>, vector<1x32x128xbf16>
    %17 = vector.shape_cast %16 : vector<1x32x128xbf16> to vector<32x128xbf16>
    %cst_19 = arith.constant dense<0.000000e+00> : vector<256x128xf32>
    %18 = tpu.matmul %15, %17, %cst_19 {dimension_numbers = #tpu.dot_dimension_numbers<[1], [0], [0], [1], [0, 0, 1, 1], [], []>} : vector<256x32xbf16>, vector<32x128xbf16>, vector<256x128xf32> -> vector<256x128xf32>
    %19 = arith.addf %12, %18 : vector<256x128xf32>
    %c0_20 = arith.constant 0 : index
    %c1_21 = arith.constant 1 : index
    %c0_22 = arith.constant 0 : index
    %c0_23 = arith.constant 0 : index
    %20 = vector.load %arg1[%c0_20, %c1_21, %c0_22, %c0_23] : memref<2x18x9x32xf32, #tpu.memory_space<vmem>>, vector<2x16x8x32xf32>
    %21 = vector.shape_cast %20 : vector<2x16x8x32xf32> to vector<256x32xf32>
    %22 = arith.truncf %21 : vector<256x32xf32> to vector<256x32xbf16>
    %c3 = arith.constant 3 : index
    %c0_24 = arith.constant 0 : index
    %c0_25 = arith.constant 0 : index
    %23 = vector.load %arg3[%c3, %c0_24, %c0_25] : memref<9x32x128xbf16, #tpu.memory_space<vmem>>, vector<1x32x128xbf16>
    %24 = vector.shape_cast %23 : vector<1x32x128xbf16> to vector<32x128xbf16>
    %cst_26 = arith.constant dense<0.000000e+00> : vector<256x128xf32>
    %25 = tpu.matmul %22, %24, %cst_26 {dimension_numbers = #tpu.dot_dimension_numbers<[1], [0], [0], [1], [0, 0, 1, 1], [], []>} : vector<256x32xbf16>, vector<32x128xbf16>, vector<256x128xf32> -> vector<256x128xf32>
    %26 = arith.addf %19, %25 : vector<256x128xf32>
    %c0_27 = arith.constant 0 : index
    %c1_28 = arith.constant 1 : index
    %c0_29 = arith.constant 0 : index
    %c0_30 = arith.constant 0 : index
    %27 = vector.load %arg2[%c0_27, %c1_28, %c0_29, %c0_30] : memref<2x18x9x32xf32, #tpu.memory_space<vmem>>, vector<2x16x8x32xf32>
    %28 = vector.shape_cast %27 : vector<2x16x8x32xf32> to vector<256x32xf32>
    %29 = arith.truncf %28 : vector<256x32xf32> to vector<256x32xbf16>
    %c4 = arith.constant 4 : index
    %c0_31 = arith.constant 0 : index
    %c0_32 = arith.constant 0 : index
    %30 = vector.load %arg3[%c4, %c0_31, %c0_32] : memref<9x32x128xbf16, #tpu.memory_space<vmem>>, vector<1x32x128xbf16>
    %31 = vector.shape_cast %30 : vector<1x32x128xbf16> to vector<32x128xbf16>
    %cst_33 = arith.constant dense<0.000000e+00> : vector<256x128xf32>
    %32 = tpu.matmul %29, %31, %cst_33 {dimension_numbers = #tpu.dot_dimension_numbers<[1], [0], [0], [1], [0, 0, 1, 1], [], []>} : vector<256x32xbf16>, vector<32x128xbf16>, vector<256x128xf32> -> vector<256x128xf32>
    %33 = arith.addf %26, %32 : vector<256x128xf32>
    %c0_34 = arith.constant 0 : index
    %c1_35 = arith.constant 1 : index
    %c1_36 = arith.constant 1 : index
    %c0_37 = arith.constant 0 : index
    %34 = vector.load %arg1[%c0_34, %c1_35, %c1_36, %c0_37] : memref<2x18x9x32xf32, #tpu.memory_space<vmem>>, vector<2x16x8x32xf32>
    %35 = vector.shape_cast %34 : vector<2x16x8x32xf32> to vector<256x32xf32>
    %36 = arith.truncf %35 : vector<256x32xf32> to vector<256x32xbf16>
    %c5 = arith.constant 5 : index
    %c0_38 = arith.constant 0 : index
    %c0_39 = arith.constant 0 : index
    %37 = vector.load %arg3[%c5, %c0_38, %c0_39] : memref<9x32x128xbf16, #tpu.memory_space<vmem>>, vector<1x32x128xbf16>
    %38 = vector.shape_cast %37 : vector<1x32x128xbf16> to vector<32x128xbf16>
    %cst_40 = arith.constant dense<0.000000e+00> : vector<256x128xf32>
    %39 = tpu.matmul %36, %38, %cst_40 {dimension_numbers = #tpu.dot_dimension_numbers<[1], [0], [0], [1], [0, 0, 1, 1], [], []>} : vector<256x32xbf16>, vector<32x128xbf16>, vector<256x128xf32> -> vector<256x128xf32>
    %40 = arith.addf %33, %39 : vector<256x128xf32>
    %c0_41 = arith.constant 0 : index
    %c2_42 = arith.constant 2 : index
    %c0_43 = arith.constant 0 : index
    %c0_44 = arith.constant 0 : index
    %41 = vector.load %arg1[%c0_41, %c2_42, %c0_43, %c0_44] : memref<2x18x9x32xf32, #tpu.memory_space<vmem>>, vector<2x16x8x32xf32>
    %42 = vector.shape_cast %41 : vector<2x16x8x32xf32> to vector<256x32xf32>
    %43 = arith.truncf %42 : vector<256x32xf32> to vector<256x32xbf16>
    %c6 = arith.constant 6 : index
    %c0_45 = arith.constant 0 : index
    %c0_46 = arith.constant 0 : index
    %44 = vector.load %arg3[%c6, %c0_45, %c0_46] : memref<9x32x128xbf16, #tpu.memory_space<vmem>>, vector<1x32x128xbf16>
    %45 = vector.shape_cast %44 : vector<1x32x128xbf16> to vector<32x128xbf16>
    %cst_47 = arith.constant dense<0.000000e+00> : vector<256x128xf32>
    %46 = tpu.matmul %43, %45, %cst_47 {dimension_numbers = #tpu.dot_dimension_numbers<[1], [0], [0], [1], [0, 0, 1, 1], [], []>} : vector<256x32xbf16>, vector<32x128xbf16>, vector<256x128xf32> -> vector<256x128xf32>
    %47 = arith.addf %40, %46 : vector<256x128xf32>
    %c0_48 = arith.constant 0 : index
    %c2_49 = arith.constant 2 : index
    %c0_50 = arith.constant 0 : index
    %c0_51 = arith.constant 0 : index
    %48 = vector.load %arg2[%c0_48, %c2_49, %c0_50, %c0_51] : memref<2x18x9x32xf32, #tpu.memory_space<vmem>>, vector<2x16x8x32xf32>
    %49 = vector.shape_cast %48 : vector<2x16x8x32xf32> to vector<256x32xf32>
    %50 = arith.truncf %49 : vector<256x32xf32> to vector<256x32xbf16>
    %c7 = arith.constant 7 : index
    %c0_52 = arith.constant 0 : index
    %c0_53 = arith.constant 0 : index
    %51 = vector.load %arg3[%c7, %c0_52, %c0_53] : memref<9x32x128xbf16, #tpu.memory_space<vmem>>, vector<1x32x128xbf16>
    %52 = vector.shape_cast %51 : vector<1x32x128xbf16> to vector<32x128xbf16>
    %cst_54 = arith.constant dense<0.000000e+00> : vector<256x128xf32>
    %53 = tpu.matmul %50, %52, %cst_54 {dimension_numbers = #tpu.dot_dimension_numbers<[1], [0], [0], [1], [0, 0, 1, 1], [], []>} : vector<256x32xbf16>, vector<32x128xbf16>, vector<256x128xf32> -> vector<256x128xf32>
    %54 = arith.addf %47, %53 : vector<256x128xf32>
    %c0_55 = arith.constant 0 : index
    %c2_56 = arith.constant 2 : index
    %c1_57 = arith.constant 1 : index
    %c0_58 = arith.constant 0 : index
    %55 = vector.load %arg1[%c0_55, %c2_56, %c1_57, %c0_58] : memref<2x18x9x32xf32, #tpu.memory_space<vmem>>, vector<2x16x8x32xf32>
    %56 = vector.shape_cast %55 : vector<2x16x8x32xf32> to vector<256x32xf32>
    %57 = arith.truncf %56 : vector<256x32xf32> to vector<256x32xbf16>
    %c8 = arith.constant 8 : index
    %c0_59 = arith.constant 0 : index
    %c0_60 = arith.constant 0 : index
    %58 = vector.load %arg3[%c8, %c0_59, %c0_60] : memref<9x32x128xbf16, #tpu.memory_space<vmem>>, vector<1x32x128xbf16>
    %59 = vector.shape_cast %58 : vector<1x32x128xbf16> to vector<32x128xbf16>
    %cst_61 = arith.constant dense<0.000000e+00> : vector<256x128xf32>
    %60 = tpu.matmul %57, %59, %cst_61 {dimension_numbers = #tpu.dot_dimension_numbers<[1], [0], [0], [1], [0, 0, 1, 1], [], []>} : vector<256x32xbf16>, vector<32x128xbf16>, vector<256x128xf32> -> vector<256x128xf32>
    %61 = arith.addf %54, %60 : vector<256x128xf32>
    %c0_62 = arith.constant 0 : index
    %c0_63 = arith.constant 0 : index
    %c0_64 = arith.constant 0 : index
    %c0_65 = arith.constant 0 : index
    %62 = vector.load %arg2[%c0_62, %c0_63, %c0_64, %c0_65] : memref<2x18x9x32xf32, #tpu.memory_space<vmem>>, vector<2x16x8x32xf32>
    %63 = vector.shape_cast %62 : vector<2x16x8x32xf32> to vector<256x32xf32>
    %64 = arith.truncf %63 : vector<256x32xf32> to vector<256x32xbf16>
    %c0_66 = arith.constant 0 : index
    %c0_67 = arith.constant 0 : index
    %c0_68 = arith.constant 0 : index
    %65 = vector.load %arg3[%c0_66, %c0_67, %c0_68] : memref<9x32x128xbf16, #tpu.memory_space<vmem>>, vector<1x32x128xbf16>
    %66 = vector.shape_cast %65 : vector<1x32x128xbf16> to vector<32x128xbf16>
    %cst_69 = arith.constant dense<0.000000e+00> : vector<256x128xf32>
    %67 = tpu.matmul %64, %66, %cst_69 {dimension_numbers = #tpu.dot_dimension_numbers<[1], [0], [0], [1], [0, 0, 1, 1], [], []>} : vector<256x32xbf16>, vector<32x128xbf16>, vector<256x128xf32> -> vector<256x128xf32>
    %c0_70 = arith.constant 0 : index
    %c0_71 = arith.constant 0 : index
    %c1_72 = arith.constant 1 : index
    %c0_73 = arith.constant 0 : index
    %68 = vector.load %arg1[%c0_70, %c0_71, %c1_72, %c0_73] : memref<2x18x9x32xf32, #tpu.memory_space<vmem>>, vector<2x16x8x32xf32>
    %69 = vector.shape_cast %68 : vector<2x16x8x32xf32> to vector<256x32xf32>
    %70 = arith.truncf %69 : vector<256x32xf32> to vector<256x32xbf16>
    %c1_74 = arith.constant 1 : index
    %c0_75 = arith.constant 0 : index
    %c0_76 = arith.constant 0 : index
    %71 = vector.load %arg3[%c1_74, %c0_75, %c0_76] : memref<9x32x128xbf16, #tpu.memory_space<vmem>>, vector<1x32x128xbf16>
    %72 = vector.shape_cast %71 : vector<1x32x128xbf16> to vector<32x128xbf16>
    %cst_77 = arith.constant dense<0.000000e+00> : vector<256x128xf32>
    %73 = tpu.matmul %70, %72, %cst_77 {dimension_numbers = #tpu.dot_dimension_numbers<[1], [0], [0], [1], [0, 0, 1, 1], [], []>} : vector<256x32xbf16>, vector<32x128xbf16>, vector<256x128xf32> -> vector<256x128xf32>
    %74 = arith.addf %67, %73 : vector<256x128xf32>
    %c0_78 = arith.constant 0 : index
    %c0_79 = arith.constant 0 : index
    %c1_80 = arith.constant 1 : index
    %c0_81 = arith.constant 0 : index
    %75 = vector.load %arg2[%c0_78, %c0_79, %c1_80, %c0_81] : memref<2x18x9x32xf32, #tpu.memory_space<vmem>>, vector<2x16x8x32xf32>
    %76 = vector.shape_cast %75 : vector<2x16x8x32xf32> to vector<256x32xf32>
    %77 = arith.truncf %76 : vector<256x32xf32> to vector<256x32xbf16>
    %c2_82 = arith.constant 2 : index
    %c0_83 = arith.constant 0 : index
    %c0_84 = arith.constant 0 : index
    %78 = vector.load %arg3[%c2_82, %c0_83, %c0_84] : memref<9x32x128xbf16, #tpu.memory_space<vmem>>, vector<1x32x128xbf16>
    %79 = vector.shape_cast %78 : vector<1x32x128xbf16> to vector<32x128xbf16>
    %cst_85 = arith.constant dense<0.000000e+00> : vector<256x128xf32>
    %80 = tpu.matmul %77, %79, %cst_85 {dimension_numbers = #tpu.dot_dimension_numbers<[1], [0], [0], [1], [0, 0, 1, 1], [], []>} : vector<256x32xbf16>, vector<32x128xbf16>, vector<256x128xf32> -> vector<256x128xf32>
    %81 = arith.addf %74, %80 : vector<256x128xf32>
    %c0_86 = arith.constant 0 : index
    %c1_87 = arith.constant 1 : index
    %c0_88 = arith.constant 0 : index
    %c0_89 = arith.constant 0 : index
    %82 = vector.load %arg2[%c0_86, %c1_87, %c0_88, %c0_89] : memref<2x18x9x32xf32, #tpu.memory_space<vmem>>, vector<2x16x8x32xf32>
    %83 = vector.shape_cast %82 : vector<2x16x8x32xf32> to vector<256x32xf32>
    %84 = arith.truncf %83 : vector<256x32xf32> to vector<256x32xbf16>
    %c3_90 = arith.constant 3 : index
    %c0_91 = arith.constant 0 : index
    %c0_92 = arith.constant 0 : index
    %85 = vector.load %arg3[%c3_90, %c0_91, %c0_92] : memref<9x32x128xbf16, #tpu.memory_space<vmem>>, vector<1x32x128xbf16>
    %86 = vector.shape_cast %85 : vector<1x32x128xbf16> to vector<32x128xbf16>
    %cst_93 = arith.constant dense<0.000000e+00> : vector<256x128xf32>
    %87 = tpu.matmul %84, %86, %cst_93 {dimension_numbers = #tpu.dot_dimension_numbers<[1], [0], [0], [1], [0, 0, 1, 1], [], []>} : vector<256x32xbf16>, vector<32x128xbf16>, vector<256x128xf32> -> vector<256x128xf32>
    %88 = arith.addf %81, %87 : vector<256x128xf32>
    %c0_94 = arith.constant 0 : index
    %c1_95 = arith.constant 1 : index
    %c1_96 = arith.constant 1 : index
    %c0_97 = arith.constant 0 : index
    %89 = vector.load %arg1[%c0_94, %c1_95, %c1_96, %c0_97] : memref<2x18x9x32xf32, #tpu.memory_space<vmem>>, vector<2x16x8x32xf32>
    %90 = vector.shape_cast %89 : vector<2x16x8x32xf32> to vector<256x32xf32>
    %91 = arith.truncf %90 : vector<256x32xf32> to vector<256x32xbf16>
    %c4_98 = arith.constant 4 : index
    %c0_99 = arith.constant 0 : index
    %c0_100 = arith.constant 0 : index
    %92 = vector.load %arg3[%c4_98, %c0_99, %c0_100] : memref<9x32x128xbf16, #tpu.memory_space<vmem>>, vector<1x32x128xbf16>
    %93 = vector.shape_cast %92 : vector<1x32x128xbf16> to vector<32x128xbf16>
    %cst_101 = arith.constant dense<0.000000e+00> : vector<256x128xf32>
    %94 = tpu.matmul %91, %93, %cst_101 {dimension_numbers = #tpu.dot_dimension_numbers<[1], [0], [0], [1], [0, 0, 1, 1], [], []>} : vector<256x32xbf16>, vector<32x128xbf16>, vector<256x128xf32> -> vector<256x128xf32>
    %95 = arith.addf %88, %94 : vector<256x128xf32>
    %c0_102 = arith.constant 0 : index
    %c1_103 = arith.constant 1 : index
    %c1_104 = arith.constant 1 : index
    %c0_105 = arith.constant 0 : index
    %96 = vector.load %arg2[%c0_102, %c1_103, %c1_104, %c0_105] : memref<2x18x9x32xf32, #tpu.memory_space<vmem>>, vector<2x16x8x32xf32>
    %97 = vector.shape_cast %96 : vector<2x16x8x32xf32> to vector<256x32xf32>
    %98 = arith.truncf %97 : vector<256x32xf32> to vector<256x32xbf16>
    %c5_106 = arith.constant 5 : index
    %c0_107 = arith.constant 0 : index
    %c0_108 = arith.constant 0 : index
    %99 = vector.load %arg3[%c5_106, %c0_107, %c0_108] : memref<9x32x128xbf16, #tpu.memory_space<vmem>>, vector<1x32x128xbf16>
    %100 = vector.shape_cast %99 : vector<1x32x128xbf16> to vector<32x128xbf16>
    %cst_109 = arith.constant dense<0.000000e+00> : vector<256x128xf32>
    %101 = tpu.matmul %98, %100, %cst_109 {dimension_numbers = #tpu.dot_dimension_numbers<[1], [0], [0], [1], [0, 0, 1, 1], [], []>} : vector<256x32xbf16>, vector<32x128xbf16>, vector<256x128xf32> -> vector<256x128xf32>
    %102 = arith.addf %95, %101 : vector<256x128xf32>
    %c0_110 = arith.constant 0 : index
    %c2_111 = arith.constant 2 : index
    %c0_112 = arith.constant 0 : index
    %c0_113 = arith.constant 0 : index
    %103 = vector.load %arg2[%c0_110, %c2_111, %c0_112, %c0_113] : memref<2x18x9x32xf32, #tpu.memory_space<vmem>>, vector<2x16x8x32xf32>
    %104 = vector.shape_cast %103 : vector<2x16x8x32xf32> to vector<256x32xf32>
    %105 = arith.truncf %104 : vector<256x32xf32> to vector<256x32xbf16>
    %c6_114 = arith.constant 6 : index
    %c0_115 = arith.constant 0 : index
    %c0_116 = arith.constant 0 : index
    %106 = vector.load %arg3[%c6_114, %c0_115, %c0_116] : memref<9x32x128xbf16, #tpu.memory_space<vmem>>, vector<1x32x128xbf16>
    %107 = vector.shape_cast %106 : vector<1x32x128xbf16> to vector<32x128xbf16>
    %cst_117 = arith.constant dense<0.000000e+00> : vector<256x128xf32>
    %108 = tpu.matmul %105, %107, %cst_117 {dimension_numbers = #tpu.dot_dimension_numbers<[1], [0], [0], [1], [0, 0, 1, 1], [], []>} : vector<256x32xbf16>, vector<32x128xbf16>, vector<256x128xf32> -> vector<256x128xf32>
    %109 = arith.addf %102, %108 : vector<256x128xf32>
    %c0_118 = arith.constant 0 : index
    %c2_119 = arith.constant 2 : index
    %c1_120 = arith.constant 1 : index
    %c0_121 = arith.constant 0 : index
    %110 = vector.load %arg1[%c0_118, %c2_119, %c1_120, %c0_121] : memref<2x18x9x32xf32, #tpu.memory_space<vmem>>, vector<2x16x8x32xf32>
    %111 = vector.shape_cast %110 : vector<2x16x8x32xf32> to vector<256x32xf32>
    %112 = arith.truncf %111 : vector<256x32xf32> to vector<256x32xbf16>
    %c7_122 = arith.constant 7 : index
    %c0_123 = arith.constant 0 : index
    %c0_124 = arith.constant 0 : index
    %113 = vector.load %arg3[%c7_122, %c0_123, %c0_124] : memref<9x32x128xbf16, #tpu.memory_space<vmem>>, vector<1x32x128xbf16>
    %114 = vector.shape_cast %113 : vector<1x32x128xbf16> to vector<32x128xbf16>
    %cst_125 = arith.constant dense<0.000000e+00> : vector<256x128xf32>
    %115 = tpu.matmul %112, %114, %cst_125 {dimension_numbers = #tpu.dot_dimension_numbers<[1], [0], [0], [1], [0, 0, 1, 1], [], []>} : vector<256x32xbf16>, vector<32x128xbf16>, vector<256x128xf32> -> vector<256x128xf32>
    %116 = arith.addf %109, %115 : vector<256x128xf32>
    %c0_126 = arith.constant 0 : index
    %c2_127 = arith.constant 2 : index
    %c1_128 = arith.constant 1 : index
    %c0_129 = arith.constant 0 : index
    %117 = vector.load %arg2[%c0_126, %c2_127, %c1_128, %c0_129] : memref<2x18x9x32xf32, #tpu.memory_space<vmem>>, vector<2x16x8x32xf32>
    %118 = vector.shape_cast %117 : vector<2x16x8x32xf32> to vector<256x32xf32>
    %119 = arith.truncf %118 : vector<256x32xf32> to vector<256x32xbf16>
    %c8_130 = arith.constant 8 : index
    %c0_131 = arith.constant 0 : index
    %c0_132 = arith.constant 0 : index
    %120 = vector.load %arg3[%c8_130, %c0_131, %c0_132] : memref<9x32x128xbf16, #tpu.memory_space<vmem>>, vector<1x32x128xbf16>
    %121 = vector.shape_cast %120 : vector<1x32x128xbf16> to vector<32x128xbf16>
    %cst_133 = arith.constant dense<0.000000e+00> : vector<256x128xf32>
    %122 = tpu.matmul %119, %121, %cst_133 {dimension_numbers = #tpu.dot_dimension_numbers<[1], [0], [0], [1], [0, 0, 1, 1], [], []>} : vector<256x32xbf16>, vector<32x128xbf16>, vector<256x128xf32> -> vector<256x128xf32>
    %123 = arith.addf %116, %122 : vector<256x128xf32>
    %cst_134 = arith.constant dense<0.000000e+00> : vector<128xf32>
    %124 = vector.multi_reduction <add>, %61, %cst_134 [0] : vector<256x128xf32> to vector<128xf32>
    %125 = vector.shape_cast %124 : vector<128xf32> to vector<1x128xf32>
    %cst_135 = arith.constant dense<0.000000e+00> : vector<128xf32>
    %126 = vector.multi_reduction <add>, %123, %cst_135 [0] : vector<256x128xf32> to vector<128xf32>
    %127 = vector.shape_cast %126 : vector<128xf32> to vector<1x128xf32>
    %128 = arith.addf %125, %127 : vector<1x128xf32>
    %cst_136 = arith.constant 5.120000e+02 : f32
    %129 = vector.broadcast %cst_136 : f32 to vector<1x128xf32>
    %130 = arith.divf %128, %129 : vector<1x128xf32>
    %131 = vector.broadcast %130 : vector<1x128xf32> to vector<256x128xf32>
    %132 = arith.subf %61, %131 : vector<256x128xf32>
    %133 = vector.broadcast %130 : vector<1x128xf32> to vector<256x128xf32>
    %134 = arith.subf %123, %133 : vector<256x128xf32>
    %135 = arith.mulf %132, %132 : vector<256x128xf32>
    %cst_137 = arith.constant dense<0.000000e+00> : vector<128xf32>
    %136 = vector.multi_reduction <add>, %135, %cst_137 [0] : vector<256x128xf32> to vector<128xf32>
    %137 = vector.shape_cast %136 : vector<128xf32> to vector<1x128xf32>
    %138 = arith.mulf %134, %134 : vector<256x128xf32>
    %cst_138 = arith.constant dense<0.000000e+00> : vector<128xf32>
    %139 = vector.multi_reduction <add>, %138, %cst_138 [0] : vector<256x128xf32> to vector<128xf32>
    %140 = vector.shape_cast %139 : vector<128xf32> to vector<1x128xf32>
    %141 = arith.addf %137, %140 : vector<1x128xf32>
    %cst_139 = arith.constant 5.120000e+02 : f32
    %142 = vector.broadcast %cst_139 : f32 to vector<1x128xf32>
    %143 = arith.divf %141, %142 : vector<1x128xf32>
    %c0_140 = arith.constant 0 : index
    %c0_141 = arith.constant 0 : index
    %144 = vector.load %arg7[%c0_140, %c0_141] : memref<1x128xf32, #tpu.memory_space<vmem>>, vector<1x128xf32>
    %cst_142 = arith.constant 9.99999974E-6 : f32
    %145 = vector.broadcast %cst_142 : f32 to vector<1x128xf32>
    %146 = arith.addf %143, %145 : vector<1x128xf32>
    %147 = math.rsqrt %146 : vector<1x128xf32>
    %148 = arith.mulf %144, %147 : vector<1x128xf32>
    %c0_143 = arith.constant 0 : index
    %c0_144 = arith.constant 0 : index
    %149 = vector.load %arg8[%c0_143, %c0_144] : memref<1x128xf32, #tpu.memory_space<vmem>>, vector<1x128xf32>
    %150 = arith.mulf %130, %148 : vector<1x128xf32>
    %151 = arith.subf %149, %150 : vector<1x128xf32>
    %c0_145 = arith.constant 0 : index
    %c0_146 = arith.constant 0 : index
    %152 = vector.load %arg5[%c0_145, %c0_146] : memref<32x128xf32, #tpu.memory_space<vmem>>, vector<32x128xf32>
    %153 = vector.broadcast %148 : vector<1x128xf32> to vector<256x128xf32>
    %154 = arith.mulf %61, %153 : vector<256x128xf32>
    %155 = vector.broadcast %151 : vector<1x128xf32> to vector<256x128xf32>
    %156 = arith.addf %154, %155 : vector<256x128xf32>
    %cst_147 = arith.constant dense<0.000000e+00> : vector<256x128xf32>
    %157 = tpu.matmul %28, %152, %cst_147 {dimension_numbers = #tpu.dot_dimension_numbers<[1], [0], [0], [1], [0, 0, 1, 1], [], []>} : vector<256x32xf32>, vector<32x128xf32>, vector<256x128xf32> -> vector<256x128xf32>
    %158 = arith.addf %156, %157 : vector<256x128xf32>
    %cst_148 = arith.constant 0.000000e+00 : f32
    %159 = vector.broadcast %cst_148 : f32 to vector<256x128xf32>
    %160 = arith.maximumf %158, %159 : vector<256x128xf32>
    %161 = vector.broadcast %148 : vector<1x128xf32> to vector<256x128xf32>
    %162 = arith.mulf %123, %161 : vector<256x128xf32>
    %163 = vector.broadcast %151 : vector<1x128xf32> to vector<256x128xf32>
    %164 = arith.addf %162, %163 : vector<256x128xf32>
    %cst_149 = arith.constant dense<0.000000e+00> : vector<256x128xf32>
    %165 = tpu.matmul %90, %152, %cst_149 {dimension_numbers = #tpu.dot_dimension_numbers<[1], [0], [0], [1], [0, 0, 1, 1], [], []>} : vector<256x32xf32>, vector<32x128xf32>, vector<256x128xf32> -> vector<256x128xf32>
    %166 = arith.addf %164, %165 : vector<256x128xf32>
    %cst_150 = arith.constant 0.000000e+00 : f32
    %167 = vector.broadcast %cst_150 : f32 to vector<256x128xf32>
    %168 = arith.maximumf %166, %167 : vector<256x128xf32>
    %cst_151 = arith.constant 0.000000e+00 : f32
    %169 = vector.broadcast %cst_151 : f32 to vector<2x9x2x9x128xf32>
    %c0_152 = arith.constant 0 : index
    %c0_153 = arith.constant 0 : index
    %c0_154 = arith.constant 0 : index
    %c0_155 = arith.constant 0 : index
    %c0_156 = arith.constant 0 : index
    %170 = vector.load %arg12[%c0_152, %c0_153, %c0_154, %c0_155, %c0_156] : memref<2x9x2x9x128xf32, #tpu.memory_space<vmem>>, vector<2x9x2x9x128xf32>
    tpu.vector_store %arg12[%c0_152, %c0_153, %c0_154, %c0_155, %c0_156], %169 {strides = array<i32>} : memref<2x9x2x9x128xf32, #tpu.memory_space<vmem>>, vector<2x9x2x9x128xf32>,
    %cst_157 = arith.constant 0.000000e+00 : f32
    %171 = vector.broadcast %cst_157 : f32 to vector<2x9x2x9x128xf32>
    %c0_158 = arith.constant 0 : index
    %c0_159 = arith.constant 0 : index
    %c0_160 = arith.constant 0 : index
    %c0_161 = arith.constant 0 : index
    %c0_162 = arith.constant 0 : index
    %172 = vector.load %arg13[%c0_158, %c0_159, %c0_160, %c0_161, %c0_162] : memref<2x9x2x9x128xf32, #tpu.memory_space<vmem>>, vector<2x9x2x9x128xf32>
    tpu.vector_store %arg13[%c0_158, %c0_159, %c0_160, %c0_161, %c0_162], %171 {strides = array<i32>} : memref<2x9x2x9x128xf32, #tpu.memory_space<vmem>>, vector<2x9x2x9x128xf32>,
    %173 = vector.shape_cast %160 : vector<256x128xf32> to vector<2x8x2x8x128xf32>
    %c0_163 = arith.constant 0 : index
    %c0_164 = arith.constant 0 : index
    %c0_165 = arith.constant 0 : index
    %c0_166 = arith.constant 0 : index
    %c0_167 = arith.constant 0 : index
    %174 = vector.load %arg12[%c0_163, %c0_164, %c0_165, %c0_166, %c0_167] : memref<2x9x2x9x128xf32, #tpu.memory_space<vmem>>, vector<2x8x2x8x128xf32>
    tpu.vector_store %arg12[%c0_163, %c0_164, %c0_165, %c0_166, %c0_167], %173 {strides = array<i32>} : memref<2x9x2x9x128xf32, #tpu.memory_space<vmem>>, vector<2x8x2x8x128xf32>,
    %175 = vector.shape_cast %168 : vector<256x128xf32> to vector<2x8x2x8x128xf32>
    %c0_168 = arith.constant 0 : index
    %c0_169 = arith.constant 0 : index
    %c0_170 = arith.constant 0 : index
    %c0_171 = arith.constant 0 : index
    %c0_172 = arith.constant 0 : index
    %176 = vector.load %arg13[%c0_168, %c0_169, %c0_170, %c0_171, %c0_172] : memref<2x9x2x9x128xf32, #tpu.memory_space<vmem>>, vector<2x8x2x8x128xf32>
    tpu.vector_store %arg13[%c0_168, %c0_169, %c0_170, %c0_171, %c0_172], %175 {strides = array<i32>} : memref<2x9x2x9x128xf32, #tpu.memory_space<vmem>>, vector<2x8x2x8x128xf32>,
    %c0_173 = arith.constant 0 : index
    %c0_174 = arith.constant 0 : index
    %c0_175 = arith.constant 0 : index
    %c0_176 = arith.constant 0 : index
    %c0_177 = arith.constant 0 : index
    %177 = vector.load %arg12[%c0_173, %c0_174, %c0_175, %c0_176, %c0_177] : memref<2x9x2x9x128xf32, #tpu.memory_space<vmem>>, vector<2x8x1x8x128xf32>
    %178 = vector.shape_cast %177 : vector<2x8x1x8x128xf32> to vector<2x8x8x128xf32>
    %179 = vector.shape_cast %178 : vector<2x8x8x128xf32> to vector<128x128xf32>
    %180 = arith.truncf %179 : vector<128x128xf32> to vector<128x128xbf16>
    %c0_178 = arith.constant 0 : index
    %c0_179 = arith.constant 0 : index
    %c0_180 = arith.constant 0 : index
    %181 = vector.load %arg4[%c0_178, %c0_179, %c0_180] : memref<16x128x128xbf16, #tpu.memory_space<vmem>>, vector<1x128x128xbf16>
    %182 = vector.shape_cast %181 : vector<1x128x128xbf16> to vector<128x128xbf16>
    %cst_181 = arith.constant dense<0.000000e+00> : vector<128x128xf32>
    %183 = tpu.matmul %180, %182, %cst_181 {dimension_numbers = #tpu.dot_dimension_numbers<[1], [0], [0], [1], [0, 0, 1, 1], [], []>} : vector<128x128xbf16>, vector<128x128xbf16>, vector<128x128xf32> -> vector<128x128xf32>
    %c0_182 = arith.constant 0 : index
    %c0_183 = arith.constant 0 : index
    %c0_184 = arith.constant 0 : index
    %c0_185 = arith.constant 0 : index
    %c0_186 = arith.constant 0 : index
    %184 = vector.load %arg13[%c0_182, %c0_183, %c0_184, %c0_185, %c0_186] : memref<2x9x2x9x128xf32, #tpu.memory_space<vmem>>, vector<2x8x1x8x128xf32>
    %185 = vector.shape_cast %184 : vector<2x8x1x8x128xf32> to vector<2x8x8x128xf32>
    %186 = vector.shape_cast %185 : vector<2x8x8x128xf32> to vector<128x128xf32>
    %187 = arith.truncf %186 : vector<128x128xf32> to vector<128x128xbf16>
    %c1_187 = arith.constant 1 : index
    %c0_188 = arith.constant 0 : index
    %c0_189 = arith.constant 0 : index
    %188 = vector.load %arg4[%c1_187, %c0_188, %c0_189] : memref<16x128x128xbf16, #tpu.memory_space<vmem>>, vector<1x128x128xbf16>
    %189 = vector.shape_cast %188 : vector<1x128x128xbf16> to vector<128x128xbf16>
    %cst_190 = arith.constant dense<0.000000e+00> : vector<128x128xf32>
    %190 = tpu.matmul %187, %189, %cst_190 {dimension_numbers = #tpu.dot_dimension_numbers<[1], [0], [0], [1], [0, 0, 1, 1], [], []>} : vector<128x128xbf16>, vector<128x128xbf16>, vector<128x128xf32> -> vector<128x128xf32>
    %191 = arith.addf %183, %190 : vector<128x128xf32>
    %c0_191 = arith.constant 0 : index
    %c0_192 = arith.constant 0 : index
    %c0_193 = arith.constant 0 : index
    %c1_194 = arith.constant 1 : index
    %c0_195 = arith.constant 0 : index
    %192 = vector.load %arg12[%c0_191, %c0_192, %c0_193, %c1_194, %c0_195] : memref<2x9x2x9x128xf32, #tpu.memory_space<vmem>>, vector<2x8x1x8x128xf32>
    %193 = vector.shape_cast %192 : vector<2x8x1x8x128xf32> to vector<2x8x8x128xf32>
    %194 = vector.shape_cast %193 : vector<2x8x8x128xf32> to vector<128x128xf32>
    %195 = arith.truncf %194 : vector<128x128xf32> to vector<128x128xbf16>
    %c2_196 = arith.constant 2 : index
    %c0_197 = arith.constant 0 : index
    %c0_198 = arith.constant 0 : index
    %196 = vector.load %arg4[%c2_196, %c0_197, %c0_198] : memref<16x128x128xbf16, #tpu.memory_space<vmem>>, vector<1x128x128xbf16>
    %197 = vector.shape_cast %196 : vector<1x128x128xbf16> to vector<128x128xbf16>
    %cst_199 = arith.constant dense<0.000000e+00> : vector<128x128xf32>
    %198 = tpu.matmul %195, %197, %cst_199 {dimension_numbers = #tpu.dot_dimension_numbers<[1], [0], [0], [1], [0, 0, 1, 1], [], []>} : vector<128x128xbf16>, vector<128x128xbf16>, vector<128x128xf32> -> vector<128x128xf32>
    %199 = arith.addf %191, %198 : vector<128x128xf32>
    %c0_200 = arith.constant 0 : index
    %c0_201 = arith.constant 0 : index
    %c0_202 = arith.constant 0 : index
    %c1_203 = arith.constant 1 : index
    %c0_204 = arith.constant 0 : index
    %200 = vector.load %arg13[%c0_200, %c0_201, %c0_202, %c1_203, %c0_204] : memref<2x9x2x9x128xf32, #tpu.memory_space<vmem>>, vector<2x8x1x8x128xf32>
    %201 = vector.shape_cast %200 : vector<2x8x1x8x128xf32> to vector<2x8x8x128xf32>
    %202 = vector.shape_cast %201 : vector<2x8x8x128xf32> to vector<128x128xf32>
    %203 = arith.truncf %202 : vector<128x128xf32> to vector<128x128xbf16>
    %c3_205 = arith.constant 3 : index
    %c0_206 = arith.constant 0 : index
    %c0_207 = arith.constant 0 : index
    %204 = vector.load %arg4[%c3_205, %c0_206, %c0_207] : memref<16x128x128xbf16, #tpu.memory_space<vmem>>, vector<1x128x128xbf16>
    %205 = vector.shape_cast %204 : vector<1x128x128xbf16> to vector<128x128xbf16>
    %cst_208 = arith.constant dense<0.000000e+00> : vector<128x128xf32>
    %206 = tpu.matmul %203, %205, %cst_208 {dimension_numbers = #tpu.dot_dimension_numbers<[1], [0], [0], [1], [0, 0, 1, 1], [], []>} : vector<128x128xbf16>, vector<128x128xbf16>, vector<128x128xf32> -> vector<128x128xf32>
    %207 = arith.addf %199, %206 : vector<128x128xf32>
    %c0_209 = arith.constant 0 : index
    %c0_210 = arith.constant 0 : index
    %c1_211 = arith.constant 1 : index
    %c0_212 = arith.constant 0 : index
    %c0_213 = arith.constant 0 : index
    %208 = vector.load %arg12[%c0_209, %c0_210, %c1_211, %c0_212, %c0_213] : memref<2x9x2x9x128xf32, #tpu.memory_space<vmem>>, vector<2x8x1x8x128xf32>
    %209 = vector.shape_cast %208 : vector<2x8x1x8x128xf32> to vector<2x8x8x128xf32>
    %210 = vector.shape_cast %209 : vector<2x8x8x128xf32> to vector<128x128xf32>
    %211 = arith.truncf %210 : vector<128x128xf32> to vector<128x128xbf16>
    %c4_214 = arith.constant 4 : index
    %c0_215 = arith.constant 0 : index
    %c0_216 = arith.constant 0 : index
    %212 = vector.load %arg4[%c4_214, %c0_215, %c0_216] : memref<16x128x128xbf16, #tpu.memory_space<vmem>>, vector<1x128x128xbf16>
    %213 = vector.shape_cast %212 : vector<1x128x128xbf16> to vector<128x128xbf16>
    %cst_217 = arith.constant dense<0.000000e+00> : vector<128x128xf32>
    %214 = tpu.matmul %211, %213, %cst_217 {dimension_numbers = #tpu.dot_dimension_numbers<[1], [0], [0], [1], [0, 0, 1, 1], [], []>} : vector<128x128xbf16>, vector<128x128xbf16>, vector<128x128xf32> -> vector<128x128xf32>
    %215 = arith.addf %207, %214 : vector<128x128xf32>
    %c0_218 = arith.constant 0 : index
    %c0_219 = arith.constant 0 : index
    %c1_220 = arith.constant 1 : index
    %c0_221 = arith.constant 0 : index
    %c0_222 = arith.constant 0 : index
    %216 = vector.load %arg13[%c0_218, %c0_219, %c1_220, %c0_221, %c0_222] : memref<2x9x2x9x128xf32, #tpu.memory_space<vmem>>, vector<2x8x1x8x128xf32>
    %217 = vector.shape_cast %216 : vector<2x8x1x8x128xf32> to vector<2x8x8x128xf32>
    %218 = vector.shape_cast %217 : vector<2x8x8x128xf32> to vector<128x128xf32>
    %219 = arith.truncf %218 : vector<128x128xf32> to vector<128x128xbf16>
    %c5_223 = arith.constant 5 : index
    %c0_224 = arith.constant 0 : index
    %c0_225 = arith.constant 0 : index
    %220 = vector.load %arg4[%c5_223, %c0_224, %c0_225] : memref<16x128x128xbf16, #tpu.memory_space<vmem>>, vector<1x128x128xbf16>
    %221 = vector.shape_cast %220 : vector<1x128x128xbf16> to vector<128x128xbf16>
    %cst_226 = arith.constant dense<0.000000e+00> : vector<128x128xf32>
    %222 = tpu.matmul %219, %221, %cst_226 {dimension_numbers = #tpu.dot_dimension_numbers<[1], [0], [0], [1], [0, 0, 1, 1], [], []>} : vector<128x128xbf16>, vector<128x128xbf16>, vector<128x128xf32> -> vector<128x128xf32>
    %223 = arith.addf %215, %222 : vector<128x128xf32>
    %c0_227 = arith.constant 0 : index
    %c0_228 = arith.constant 0 : index
    %c1_229 = arith.constant 1 : index
    %c1_230 = arith.constant 1 : index
    %c0_231 = arith.constant 0 : index
    %224 = vector.load %arg12[%c0_227, %c0_228, %c1_229, %c1_230, %c0_231] : memref<2x9x2x9x128xf32, #tpu.memory_space<vmem>>, vector<2x8x1x8x128xf32>
    %225 = vector.shape_cast %224 : vector<2x8x1x8x128xf32> to vector<2x8x8x128xf32>
    %226 = vector.shape_cast %225 : vector<2x8x8x128xf32> to vector<128x128xf32>
    %227 = arith.truncf %226 : vector<128x128xf32> to vector<128x128xbf16>
    %c6_232 = arith.constant 6 : index
    %c0_233 = arith.constant 0 : index
    %c0_234 = arith.constant 0 : index
    %228 = vector.load %arg4[%c6_232, %c0_233, %c0_234] : memref<16x128x128xbf16, #tpu.memory_space<vmem>>, vector<1x128x128xbf16>
    %229 = vector.shape_cast %228 : vector<1x128x128xbf16> to vector<128x128xbf16>
    %cst_235 = arith.constant dense<0.000000e+00> : vector<128x128xf32>
    %230 = tpu.matmul %227, %229, %cst_235 {dimension_numbers = #tpu.dot_dimension_numbers<[1], [0], [0], [1], [0, 0, 1, 1], [], []>} : vector<128x128xbf16>, vector<128x128xbf16>, vector<128x128xf32> -> vector<128x128xf32>
    %231 = arith.addf %223, %230 : vector<128x128xf32>
    %c0_236 = arith.constant 0 : index
    %c0_237 = arith.constant 0 : index
    %c1_238 = arith.constant 1 : index
    %c1_239 = arith.constant 1 : index
    %c0_240 = arith.constant 0 : index
    %232 = vector.load %arg13[%c0_236, %c0_237, %c1_238, %c1_239, %c0_240] : memref<2x9x2x9x128xf32, #tpu.memory_space<vmem>>, vector<2x8x1x8x128xf32>
    %233 = vector.shape_cast %232 : vector<2x8x1x8x128xf32> to vector<2x8x8x128xf32>
    %234 = vector.shape_cast %233 : vector<2x8x8x128xf32> to vector<128x128xf32>
    %235 = arith.truncf %234 : vector<128x128xf32> to vector<128x128xbf16>
    %c7_241 = arith.constant 7 : index
    %c0_242 = arith.constant 0 : index
    %c0_243 = arith.constant 0 : index
    %236 = vector.load %arg4[%c7_241, %c0_242, %c0_243] : memref<16x128x128xbf16, #tpu.memory_space<vmem>>, vector<1x128x128xbf16>
    %237 = vector.shape_cast %236 : vector<1x128x128xbf16> to vector<128x128xbf16>
    %cst_244 = arith.constant dense<0.000000e+00> : vector<128x128xf32>
    %238 = tpu.matmul %235, %237, %cst_244 {dimension_numbers = #tpu.dot_dimension_numbers<[1], [0], [0], [1], [0, 0, 1, 1], [], []>} : vector<128x128xbf16>, vector<128x128xbf16>, vector<128x128xf32> -> vector<128x128xf32>
    %239 = arith.addf %231, %238 : vector<128x128xf32>
    %c0_245 = arith.constant 0 : index
    %c1_246 = arith.constant 1 : index
    %c0_247 = arith.constant 0 : index
    %c0_248 = arith.constant 0 : index
    %c0_249 = arith.constant 0 : index
    %240 = vector.load %arg12[%c0_245, %c1_246, %c0_247, %c0_248, %c0_249] : memref<2x9x2x9x128xf32, #tpu.memory_space<vmem>>, vector<2x8x1x8x128xf32>
    %241 = vector.shape_cast %240 : vector<2x8x1x8x128xf32> to vector<2x8x8x128xf32>
    %242 = vector.shape_cast %241 : vector<2x8x8x128xf32> to vector<128x128xf32>
    %243 = arith.truncf %242 : vector<128x128xf32> to vector<128x128xbf16>
    %c8_250 = arith.constant 8 : index
    %c0_251 = arith.constant 0 : index
    %c0_252 = arith.constant 0 : index
    %244 = vector.load %arg4[%c8_250, %c0_251, %c0_252] : memref<16x128x128xbf16, #tpu.memory_space<vmem>>, vector<1x128x128xbf16>
    %245 = vector.shape_cast %244 : vector<1x128x128xbf16> to vector<128x128xbf16>
    %cst_253 = arith.constant dense<0.000000e+00> : vector<128x128xf32>
    %246 = tpu.matmul %243, %245, %cst_253 {dimension_numbers = #tpu.dot_dimension_numbers<[1], [0], [0], [1], [0, 0, 1, 1], [], []>} : vector<128x128xbf16>, vector<128x128xbf16>, vector<128x128xf32> -> vector<128x128xf32>
    %247 = arith.addf %239, %246 : vector<128x128xf32>
    %c0_254 = arith.constant 0 : index
    %c1_255 = arith.constant 1 : index
    %c0_256 = arith.constant 0 : index
    %c0_257 = arith.constant 0 : index
    %c0_258 = arith.constant 0 : index
    %248 = vector.load %arg13[%c0_254, %c1_255, %c0_256, %c0_257, %c0_258] : memref<2x9x2x9x128xf32, #tpu.memory_space<vmem>>, vector<2x8x1x8x128xf32>
    %249 = vector.shape_cast %248 : vector<2x8x1x8x128xf32> to vector<2x8x8x128xf32>
    %250 = vector.shape_cast %249 : vector<2x8x8x128xf32> to vector<128x128xf32>
    %251 = arith.truncf %250 : vector<128x128xf32> to vector<128x128xbf16>
    %c9 = arith.constant 9 : index
    %c0_259 = arith.constant 0 : index
    %c0_260 = arith.constant 0 : index
    %252 = vector.load %arg4[%c9, %c0_259, %c0_260] : memref<16x128x128xbf16, #tpu.memory_space<vmem>>, vector<1x128x128xbf16>
    %253 = vector.shape_cast %252 : vector<1x128x128xbf16> to vector<128x128xbf16>
    %cst_261 = arith.constant dense<0.000000e+00> : vector<128x128xf32>
    %254 = tpu.matmul %251, %253, %cst_261 {dimension_numbers = #tpu.dot_dimension_numbers<[1], [0], [0], [1], [0, 0, 1, 1], [], []>} : vector<128x128xbf16>, vector<128x128xbf16>, vector<128x128xf32> -> vector<128x128xf32>
    %255 = arith.addf %247, %254 : vector<128x128xf32>
    %c0_262 = arith.constant 0 : index
    %c1_263 = arith.constant 1 : index
    %c0_264 = arith.constant 0 : index
    %c1_265 = arith.constant 1 : index
    %c0_266 = arith.constant 0 : index
    %256 = vector.load %arg12[%c0_262, %c1_263, %c0_264, %c1_265, %c0_266] : memref<2x9x2x9x128xf32, #tpu.memory_space<vmem>>, vector<2x8x1x8x128xf32>
    %257 = vector.shape_cast %256 : vector<2x8x1x8x128xf32> to vector<2x8x8x128xf32>
    %258 = vector.shape_cast %257 : vector<2x8x8x128xf32> to vector<128x128xf32>
    %259 = arith.truncf %258 : vector<128x128xf32> to vector<128x128xbf16>
    %c10 = arith.constant 10 : index
    %c0_267 = arith.constant 0 : index
    %c0_268 = arith.constant 0 : index
    %260 = vector.load %arg4[%c10, %c0_267, %c0_268] : memref<16x128x128xbf16, #tpu.memory_space<vmem>>, vector<1x128x128xbf16>
    %261 = vector.shape_cast %260 : vector<1x128x128xbf16> to vector<128x128xbf16>
    %cst_269 = arith.constant dense<0.000000e+00> : vector<128x128xf32>
    %262 = tpu.matmul %259, %261, %cst_269 {dimension_numbers = #tpu.dot_dimension_numbers<[1], [0], [0], [1], [0, 0, 1, 1], [], []>} : vector<128x128xbf16>, vector<128x128xbf16>, vector<128x128xf32> -> vector<128x128xf32>
    %263 = arith.addf %255, %262 : vector<128x128xf32>
    %c0_270 = arith.constant 0 : index
    %c1_271 = arith.constant 1 : index
    %c0_272 = arith.constant 0 : index
    %c1_273 = arith.constant 1 : index
    %c0_274 = arith.constant 0 : index
    %264 = vector.load %arg13[%c0_270, %c1_271, %c0_272, %c1_273, %c0_274] : memref<2x9x2x9x128xf32, #tpu.memory_space<vmem>>, vector<2x8x1x8x128xf32>
    %265 = vector.shape_cast %264 : vector<2x8x1x8x128xf32> to vector<2x8x8x128xf32>
    %266 = vector.shape_cast %265 : vector<2x8x8x128xf32> to vector<128x128xf32>
    %267 = arith.truncf %266 : vector<128x128xf32> to vector<128x128xbf16>
    %c11 = arith.constant 11 : index
    %c0_275 = arith.constant 0 : index
    %c0_276 = arith.constant 0 : index
    %268 = vector.load %arg4[%c11, %c0_275, %c0_276] : memref<16x128x128xbf16, #tpu.memory_space<vmem>>, vector<1x128x128xbf16>
    %269 = vector.shape_cast %268 : vector<1x128x128xbf16> to vector<128x128xbf16>
    %cst_277 = arith.constant dense<0.000000e+00> : vector<128x128xf32>
    %270 = tpu.matmul %267, %269, %cst_277 {dimension_numbers = #tpu.dot_dimension_numbers<[1], [0], [0], [1], [0, 0, 1, 1], [], []>} : vector<128x128xbf16>, vector<128x128xbf16>, vector<128x128xf32> -> vector<128x128xf32>
    %271 = arith.addf %263, %270 : vector<128x128xf32>
    %c0_278 = arith.constant 0 : index
    %c1_279 = arith.constant 1 : index
    %c1_280 = arith.constant 1 : index
    %c0_281 = arith.constant 0 : index
    %c0_282 = arith.constant 0 : index
    %272 = vector.load %arg12[%c0_278, %c1_279, %c1_280, %c0_281, %c0_282] : memref<2x9x2x9x128xf32, #tpu.memory_space<vmem>>, vector<2x8x1x8x128xf32>
    %273 = vector.shape_cast %272 : vector<2x8x1x8x128xf32> to vector<2x8x8x128xf32>
    %274 = vector.shape_cast %273 : vector<2x8x8x128xf32> to vector<128x128xf32>
    %275 = arith.truncf %274 : vector<128x128xf32> to vector<128x128xbf16>
    %c12 = arith.constant 12 : index
    %c0_283 = arith.constant 0 : index
    %c0_284 = arith.constant 0 : index
    %276 = vector.load %arg4[%c12, %c0_283, %c0_284] : memref<16x128x128xbf16, #tpu.memory_space<vmem>>, vector<1x128x128xbf16>
    %277 = vector.shape_cast %276 : vector<1x128x128xbf16> to vector<128x128xbf16>
    %cst_285 = arith.constant dense<0.000000e+00> : vector<128x128xf32>
    %278 = tpu.matmul %275, %277, %cst_285 {dimension_numbers = #tpu.dot_dimension_numbers<[1], [0], [0], [1], [0, 0, 1, 1], [], []>} : vector<128x128xbf16>, vector<128x128xbf16>, vector<128x128xf32> -> vector<128x128xf32>
    %279 = arith.addf %271, %278 : vector<128x128xf32>
    %c0_286 = arith.constant 0 : index
    %c1_287 = arith.constant 1 : index
    %c1_288 = arith.constant 1 : index
    %c0_289 = arith.constant 0 : index
    %c0_290 = arith.constant 0 : index
    %280 = vector.load %arg13[%c0_286, %c1_287, %c1_288, %c0_289, %c0_290] : memref<2x9x2x9x128xf32, #tpu.memory_space<vmem>>, vector<2x8x1x8x128xf32>
    %281 = vector.shape_cast %280 : vector<2x8x1x8x128xf32> to vector<2x8x8x128xf32>
    %282 = vector.shape_cast %281 : vector<2x8x8x128xf32> to vector<128x128xf32>
    %283 = arith.truncf %282 : vector<128x128xf32> to vector<128x128xbf16>
    %c13 = arith.constant 13 : index
    %c0_291 = arith.constant 0 : index
    %c0_292 = arith.constant 0 : index
    %284 = vector.load %arg4[%c13, %c0_291, %c0_292] : memref<16x128x128xbf16, #tpu.memory_space<vmem>>, vector<1x128x128xbf16>
    %285 = vector.shape_cast %284 : vector<1x128x128xbf16> to vector<128x128xbf16>
    %cst_293 = arith.constant dense<0.000000e+00> : vector<128x128xf32>
    %286 = tpu.matmul %283, %285, %cst_293 {dimension_numbers = #tpu.dot_dimension_numbers<[1], [0], [0], [1], [0, 0, 1, 1], [], []>} : vector<128x128xbf16>, vector<128x128xbf16>, vector<128x128xf32> -> vector<128x128xf32>
    %287 = arith.addf %279, %286 : vector<128x128xf32>
    %c0_294 = arith.constant 0 : index
    %c1_295 = arith.constant 1 : index
    %c1_296 = arith.constant 1 : index
    %c1_297 = arith.constant 1 : index
    %c0_298 = arith.constant 0 : index
    %288 = vector.load %arg12[%c0_294, %c1_295, %c1_296, %c1_297, %c0_298] : memref<2x9x2x9x128xf32, #tpu.memory_space<vmem>>, vector<2x8x1x8x128xf32>
    %289 = vector.shape_cast %288 : vector<2x8x1x8x128xf32> to vector<2x8x8x128xf32>
    %290 = vector.shape_cast %289 : vector<2x8x8x128xf32> to vector<128x128xf32>
    %291 = arith.truncf %290 : vector<128x128xf32> to vector<128x128xbf16>
    %c14 = arith.constant 14 : index
    %c0_299 = arith.constant 0 : index
    %c0_300 = arith.constant 0 : index
    %292 = vector.load %arg4[%c14, %c0_299, %c0_300] : memref<16x128x128xbf16, #tpu.memory_space<vmem>>, vector<1x128x128xbf16>
    %293 = vector.shape_cast %292 : vector<1x128x128xbf16> to vector<128x128xbf16>
    %cst_301 = arith.constant dense<0.000000e+00> : vector<128x128xf32>
    %294 = tpu.matmul %291, %293, %cst_301 {dimension_numbers = #tpu.dot_dimension_numbers<[1], [0], [0], [1], [0, 0, 1, 1], [], []>} : vector<128x128xbf16>, vector<128x128xbf16>, vector<128x128xf32> -> vector<128x128xf32>
    %295 = arith.addf %287, %294 : vector<128x128xf32>
    %c0_302 = arith.constant 0 : index
    %c1_303 = arith.constant 1 : index
    %c1_304 = arith.constant 1 : index
    %c1_305 = arith.constant 1 : index
    %c0_306 = arith.constant 0 : index
    %296 = vector.load %arg13[%c0_302, %c1_303, %c1_304, %c1_305, %c0_306] : memref<2x9x2x9x128xf32, #tpu.memory_space<vmem>>, vector<2x8x1x8x128xf32>
    %297 = vector.shape_cast %296 : vector<2x8x1x8x128xf32> to vector<2x8x8x128xf32>
    %298 = vector.shape_cast %297 : vector<2x8x8x128xf32> to vector<128x128xf32>
    %299 = arith.truncf %298 : vector<128x128xf32> to vector<128x128xbf16>
    %c15 = arith.constant 15 : index
    %c0_307 = arith.constant 0 : index
    %c0_308 = arith.constant 0 : index
    %300 = vector.load %arg4[%c15, %c0_307, %c0_308] : memref<16x128x128xbf16, #tpu.memory_space<vmem>>, vector<1x128x128xbf16>
    %301 = vector.shape_cast %300 : vector<1x128x128xbf16> to vector<128x128xbf16>
    %cst_309 = arith.constant dense<0.000000e+00> : vector<128x128xf32>
    %302 = tpu.matmul %299, %301, %cst_309 {dimension_numbers = #tpu.dot_dimension_numbers<[1], [0], [0], [1], [0, 0, 1, 1], [], []>} : vector<128x128xbf16>, vector<128x128xbf16>, vector<128x128xf32> -> vector<128x128xf32>
    %303 = arith.addf %295, %302 : vector<128x128xf32>
    %c0_310 = arith.constant 0 : index
    %c0_311 = arith.constant 0 : index
    %304 = vector.load %arg6[%c0_310, %c0_311] : memref<128x1xf32, #tpu.memory_space<vmem>>, vector<128x1xf32>
    %305 = vector.broadcast %304 : vector<128x1xf32> to vector<128x128xf32>
    %306 = arith.mulf %303, %305 : vector<128x128xf32>
    %cst_312 = arith.constant dense<0.000000e+00> : vector<128xf32>
    %307 = vector.multi_reduction <add>, %306, %cst_312 [0] : vector<128x128xf32> to vector<128xf32>
    %308 = vector.shape_cast %307 : vector<128xf32> to vector<1x128xf32>
    %cst_313 = arith.constant 9.800000e+01 : f32
    %309 = vector.broadcast %cst_313 : f32 to vector<1x128xf32>
    %310 = arith.divf %308, %309 : vector<1x128xf32>
    %311 = vector.broadcast %310 : vector<1x128xf32> to vector<128x128xf32>
    %312 = arith.subf %303, %311 : vector<128x128xf32>
    %313 = vector.broadcast %304 : vector<128x1xf32> to vector<128x128xf32>
    %314 = arith.mulf %312, %313 : vector<128x128xf32>
    %315 = arith.mulf %314, %314 : vector<128x128xf32>
    %cst_314 = arith.constant dense<0.000000e+00> : vector<128xf32>
    %316 = vector.multi_reduction <add>, %315, %cst_314 [0] : vector<128x128xf32> to vector<128xf32>
    %317 = vector.shape_cast %316 : vector<128xf32> to vector<1x128xf32>
    %cst_315 = arith.constant 9.800000e+01 : f32
    %318 = vector.broadcast %cst_315 : f32 to vector<1x128xf32>
    %319 = arith.divf %317, %318 : vector<1x128xf32>
    %c0_316 = arith.constant 0 : index
    %c0_317 = arith.constant 0 : index
    %320 = vector.load %arg9[%c0_316, %c0_317] : memref<1x128xf32, #tpu.memory_space<vmem>>, vector<1x128xf32>
    %cst_318 = arith.constant 9.99999974E-6 : f32
    %321 = vector.broadcast %cst_318 : f32 to vector<1x128xf32>
    %322 = arith.addf %319, %321 : vector<1x128xf32>
    %323 = math.rsqrt %322 : vector<1x128xf32>
    %324 = arith.mulf %320, %323 : vector<1x128xf32>
    %c0_319 = arith.constant 0 : index
    %c0_320 = arith.constant 0 : index
    %325 = vector.load %arg10[%c0_319, %c0_320] : memref<1x128xf32, #tpu.memory_space<vmem>>, vector<1x128xf32>
    %326 = arith.mulf %310, %324 : vector<1x128xf32>
    %327 = arith.subf %325, %326 : vector<1x128xf32>
    %328 = vector.broadcast %324 : vector<1x128xf32> to vector<128x128xf32>
    %329 = arith.mulf %303, %328 : vector<128x128xf32>
    %330 = vector.broadcast %327 : vector<1x128xf32> to vector<128x128xf32>
    %331 = arith.addf %329, %330 : vector<128x128xf32>
    %cst_321 = arith.constant 0.000000e+00 : f32
    %332 = vector.broadcast %cst_321 : f32 to vector<128x128xf32>
    %333 = arith.maximumf %331, %332 : vector<128x128xf32>
    %c0_322 = arith.constant 0 : index
    %c0_323 = arith.constant 0 : index
    %334 = vector.load %arg11[%c0_322, %c0_323] : memref<128x128xf32, #tpu.memory_space<vmem>>, vector<128x128xf32>
    tpu.vector_store %arg11[%c0_322, %c0_323], %333 {strides = array<i32>} : memref<128x128xf32, #tpu.memory_space<vmem>>, vector<128x128xf32>,
    return
  }
  func.func @transform_0(%arg0: i32) -> (i32, i32, i32, i32) {
    %c0_i32 = arith.constant 0 : i32
    %c0_i32_0 = arith.constant 0 : i32
    %c0_i32_1 = arith.constant 0 : i32
    %c0_i32_2 = arith.constant 0 : i32
    %c0_i32_3 = arith.constant 0 : i32
    return %c0_i32, %c0_i32_0, %c0_i32_1, %c0_i32_2 : i32, i32, i32, i32
  }
  func.func @transform_1(%arg0: i32) -> (i32, i32, i32, i32) {
    %c0_i32 = arith.constant 0 : i32
    %c0_i32_0 = arith.constant 0 : i32
    %c0_i32_1 = arith.constant 0 : i32
    %c0_i32_2 = arith.constant 0 : i32
    %c0_i32_3 = arith.constant 0 : i32
    return %c0_i32, %c0_i32_0, %c0_i32_1, %c0_i32_2 : i32, i32, i32, i32
  }
  func.func @transform_2(%arg0: i32) -> (i32, i32, i32) {
    %c0_i32 = arith.constant 0 : i32
    %c0_i32_0 = arith.constant 0 : i32
    %c0_i32_1 = arith.constant 0 : i32
    %c0_i32_2 = arith.constant 0 : i32
    return %c0_i32, %c0_i32_0, %c0_i32_1 : i32, i32, i32
  }
  func.func @transform_3(%arg0: i32) -> (i32, i32, i32) {
    %c0_i32 = arith.constant 0 : i32
    %c0_i32_0 = arith.constant 0 : i32
    %c0_i32_1 = arith.constant 0 : i32
    %c0_i32_2 = arith.constant 0 : i32
    return %c0_i32, %c0_i32_0, %c0_i32_1 : i32, i32, i32
  }
  func.func @transform_4(%arg0: i32) -> (i32, i32) {
    %c0_i32 = arith.constant 0 : i32
    %c0_i32_0 = arith.constant 0 : i32
    %c0_i32_1 = arith.constant 0 : i32
    return %c0_i32, %c0_i32_0 : i32, i32
  }
  func.func @transform_5(%arg0: i32) -> (i32, i32) {
    %c0_i32 = arith.constant 0 : i32
    %c0_i32_0 = arith.constant 0 : i32
    %c0_i32_1 = arith.constant 0 : i32
    return %c0_i32, %c0_i32_0 : i32, i32
  }
  func.func @transform_6(%arg0: i32) -> (i32, i32) {
    %c0_i32 = arith.constant 0 : i32
    %c0_i32_0 = arith.constant 0 : i32
    %c0_i32_1 = arith.constant 0 : i32
    return %c0_i32, %c0_i32_0 : i32, i32
  }
  func.func @transform_7(%arg0: i32) -> (i32, i32) {
    %c0_i32 = arith.constant 0 : i32
    %c0_i32_0 = arith.constant 0 : i32
    %c0_i32_1 = arith.constant 0 : i32
    return %c0_i32, %c0_i32_0 : i32, i32
  }
  func.func @transform_8(%arg0: i32) -> (i32, i32) {
    %c0_i32 = arith.constant 0 : i32
    %c0_i32_0 = arith.constant 0 : i32
    %c0_i32_1 = arith.constant 0 : i32
    return %c0_i32, %c0_i32_0 : i32, i32
  }
  func.func @transform_9(%arg0: i32) -> (i32, i32) {
    %c0_i32 = arith.constant 0 : i32
    %c0_i32_0 = arith.constant 0 : i32
    %c0_i32_1 = arith.constant 0 : i32
    return %c0_i32, %c0_i32_0 : i32, i32
  }
  func.func @transform_10(%arg0: i32) -> (i32, i32) {
    %c0_i32 = arith.constant 0 : i32
    %c0_i32_0 = arith.constant 0 : i32
    %c0_i32_1 = arith.constant 0 : i32
    return %c0_i32, %c0_i32_0 : i32, i32
  }
}

</mosaic_0001>

<llo_original>
// kernel: res_block_forward.1
$region0: #{res_block_forward.1}
  #allocation0 [shape = 'u32[]', space=smem, size = 0x4, offset = 0x4, fixed_abs, tag = 'smem constant byte address 0x4 - core index']
  #allocation1 [shape = 'u32[144,128]{1,0:T(1,128)}', space=vmem, size = 0x12000, scoped, tag = 'internal scratch']
  #allocation2 [shape = 'f32[2,9,2,9,128]{4,3,2,1,0:T(8,128)}', space=vmem, size = 0x48000, scoped, tag = 'scratch operand']
  #allocation3 [shape = 'f32[2,9,2,9,128]{4,3,2,1,0:T(8,128)}', space=vmem, size = 0x48000, scoped, tag = 'scratch operand']
  %s0 = inlined_call_operand.vmem [shape: f32[2,18,9,32], index: 0, kind: input, shape index: {}]
  %s1 = inlined_call_operand.vmem [shape: f32[2,18,9,32], index: 1, kind: input, shape index: {}]
  %s2 = inlined_call_operand.vmem [shape: bf16[9,32,128], index: 2, kind: input, shape index: {}]
  %s3 = inlined_call_operand.vmem [shape: bf16[16,128,128], index: 3, kind: input, shape index: {}]
  %s4 = inlined_call_operand.vmem [shape: f32[32,128], index: 4, kind: input, shape index: {}]
  %s5 = inlined_call_operand.vmem [shape: f32[128,1], index: 5, kind: input, shape index: {}]
  %s6 = inlined_call_operand.vmem [shape: f32[1,128], index: 6, kind: input, shape index: {}]
  %s7 = inlined_call_operand.vmem [shape: f32[1,128], index: 7, kind: input, shape index: {}]
  %s8 = inlined_call_operand.vmem [shape: f32[1,128], index: 8, kind: input, shape index: {}]
  %s9 = inlined_call_operand.vmem [shape: f32[1,128], index: 9, kind: input, shape index: {}]
  %s10 = inlined_call_operand.vmem [shape: f32[128,128], index: 10, kind: output, shape index: {}]
  %s11 = sld [smem:[#allocation0]]
  $region50: #{res_block_forward.1} parent=0
    _
  %s13 = ssub.s32 1, %s11
  %s14 = scalar_select 0, %s13, %s11
  // Predicated region
  $region2: #{res_block_forward.1} parent=0 // pred_check
    _
  $region3: #{res_block_forward.1} parent=0 // pred_check_branch
    %16 = sbr.rel (0) target = $region5
  $region4: #{res_block_forward.1} parent=0 // pred_region
    _
  $region5: #{res_block_forward.1} parent=0 // pred_fallthru
    _
  // Predicated region
  $region6: #{res_block_forward.1} parent=0 // pred_check
    _
  $region7: #{res_block_forward.1} parent=0 // pred_check_branch
    %18 = sbr.rel (0) target = $region9
  $region8: #{res_block_forward.1} parent=0 // pred_region
    _
  $region9: #{res_block_forward.1} parent=0 // pred_fallthru
    _
  // Predicated region
  $region10: #{res_block_forward.1} parent=0 // pred_check
    _
  $region11: #{res_block_forward.1} parent=0 // pred_check_branch
    %20 = sbr.rel (0) target = $region13
  $region12: #{res_block_forward.1} parent=0 // pred_region
    _
  $region13: #{res_block_forward.1} parent=0 // pred_fallthru
    _
  // Predicated region
  $region14: #{res_block_forward.1} parent=0 // pred_check
    _
  $region15: #{res_block_forward.1} parent=0 // pred_check_branch
    %22 = sbr.rel (0) target = $region17
  $region16: #{res_block_forward.1} parent=0 // pred_region
    _
  $region17: #{res_block_forward.1} parent=0 // pred_fallthru
    _
  // Predicated region
  $region18: #{res_block_forward.1} parent=0 // pred_check
    _
  $region19: #{res_block_forward.1} parent=0 // pred_check_branch
    %24 = sbr.rel (0) target = $region21
  $region20: #{res_block_forward.1} parent=0 // pred_region
    _
  $region21: #{res_block_forward.1} parent=0 // pred_fallthru
    _
  // Predicated region
  $region22: #{res_block_forward.1} parent=0 // pred_check
    _
  $region23: #{res_block_forward.1} parent=0 // pred_check_branch
    %26 = sbr.rel (0) target = $region25
  $region24: #{res_block_forward.1} parent=0 // pred_region
    _
  $region25: #{res_block_forward.1} parent=0 // pred_fallthru
    _
  // Predicated region
  $region26: #{res_block_forward.1} parent=0 // pred_check
    _
  $region27: #{res_block_forward.1} parent=0 // pred_check_branch
    %28 = sbr.rel (0) target = $region29
  $region28: #{res_block_forward.1} parent=0 // pred_region
    _
  $region29: #{res_block_forward.1} parent=0 // pred_fallthru
    _
  // Predicated region
  $region30: #{res_block_forward.1} parent=0 // pred_check
    _
  $region31: #{res_block_forward.1} parent=0 // pred_check_branch
    %30 = sbr.rel (0) target = $region33
  $region32: #{res_block_forward.1} parent=0 // pred_region
    _
  $region33: #{res_block_forward.1} parent=0 // pred_fallthru
    _
  // Predicated region
  $region34: #{res_block_forward.1} parent=0 // pred_check
    _
  $region35: #{res_block_forward.1} parent=0 // pred_check_branch
    %32 = sbr.rel (0) target = $region37
  $region36: #{res_block_forward.1} parent=0 // pred_region
    _
  $region37: #{res_block_forward.1} parent=0 // pred_fallthru
    _
  // Predicated region
  $region38: #{res_block_forward.1} parent=0 // pred_check
    _
  $region39: #{res_block_forward.1} parent=0 // pred_check_branch
    %34 = sbr.rel (0) target = $region41
  $region40: #{res_block_forward.1} parent=0 // pred_region
    _
  $region41: #{res_block_forward.1} parent=0 // pred_fallthru
    _
  %v36 = vld [vmem:[%s0] sm:$0xff]
  %v37 = vld [vmem:[%s0 + $0x10] sm:$0xff]
  %v38 = vld [vmem:[%s0 + $0x20] sm:$0xff]
  %v39 = vld [vmem:[%s0 + $0x30] sm:$0xff]
  %v40 = vld [vmem:[%s0 + $0x40] sm:$0xff]
  %v41 = vld [vmem:[%s0 + $0x50] sm:$0xff]
  %v42 = vld [vmem:[%s0 + $0x60] sm:$0xff]
  %v43 = vld [vmem:[%s0 + $0x70] sm:$0xff]
  %v44 = vld [vmem:[%s0 + $0x80] sm:$0xff]
  %v45 = vld [vmem:[%s0 + $0x90] sm:$0xff]
  %v46 = vld [vmem:[%s0 + $0xa0] sm:$0xff]
  %v47 = vld [vmem:[%s0 + $0xb0] sm:$0xff]
  %v48 = vld [vmem:[%s0 + $0xc0] sm:$0xff]
  %v49 = vld [vmem:[%s0 + $0xd0] sm:$0xff]
  %v50 = vld [vmem:[%s0 + $0xe0] sm:$0xff]
  %v51 = vld [vmem:[%s0 + $0xf0] sm:$0xff]
  %v52 = vld [vmem:[%s0 + $0x120] sm:$0xff]
  %v53 = vld [vmem:[%s0 + $0x130] sm:$0xff]
  %v54 = vld [vmem:[%s0 + $0x140] sm:$0xff]
  %v55 = vld [vmem:[%s0 + $0x150] sm:$0xff]
  %v56 = vld [vmem:[%s0 + $0x160] sm:$0xff]
  %v57 = vld [vmem:[%s0 + $0x170] sm:$0xff]
  %v58 = vld [vmem:[%s0 + $0x180] sm:$0xff]
  %v59 = vld [vmem:[%s0 + $0x190] sm:$0xff]
  %v60 = vld [vmem:[%s0 + $0x1a0] sm:$0xff]
  %v61 = vld [vmem:[%s0 + $0x1b0] sm:$0xff]
  %v62 = vld [vmem:[%s0 + $0x1c0] sm:$0xff]
  %v63 = vld [vmem:[%s0 + $0x1d0] sm:$0xff]
  %v64 = vld [vmem:[%s0 + $0x1e0] sm:$0xff]
  %v65 = vld [vmem:[%s0 + $0x1f0] sm:$0xff]
  %v66 = vld [vmem:[%s0 + $0x200] sm:$0xff]
  %v67 = vld [vmem:[%s0 + $0x210] sm:$0xff]
  %v68 = vpack.c.bf16 %v37, %v36
  %v69 = vpack.c.bf16 %v39, %v38
  %v70 = vpack.c.bf16 %v41, %v40
  %v71 = vpack.c.bf16 %v43, %v42
  %v72 = vpack.c.bf16 %v45, %v44
  %v73 = vpack.c.bf16 %v47, %v46
  %v74 = vpack.c.bf16 %v49, %v48
  %v75 = vpack.c.bf16 %v51, %v50
  %v76 = vpack.c.bf16 %v53, %v52
  %v77 = vpack.c.bf16 %v55, %v54
  %v78 = vpack.c.bf16 %v57, %v56
  %v79 = vpack.c.bf16 %v59, %v58
  %v80 = vpack.c.bf16 %v61, %v60
  %v81 = vpack.c.bf16 %v63, %v62
  %v82 = vpack.c.bf16 %v65, %v64
  %v83 = vpack.c.bf16 %v67, %v66
  %v84 = vld [vmem:[%s2] sm:$0xf]
  %v85 = vld [vmem:[%s2 + $0x4] sm:$0xf]
  %v86 = vld [vmem:[%s2 + $0x8] sm:$0xf]
  %v87 = vld [vmem:[%s2 + $0xc] sm:$0xf]
  %v88 = vld [vmem:[%s1] sm:$0xff]
  %v89 = vld [vmem:[%s1 + $0x10] sm:$0xff]
  %v90 = vld [vmem:[%s1 + $0x20] sm:$0xff]
  %v91 = vld [vmem:[%s1 + $0x30] sm:$0xff]
  %v92 = vld [vmem:[%s1 + $0x40] sm:$0xff]
  %v93 = vld [vmem:[%s1 + $0x50] sm:$0xff]
  %v94 = vld [vmem:[%s1 + $0x60] sm:$0xff]
  %v95 = vld [vmem:[%s1 + $0x70] sm:$0xff]
  %v96 = vld [vmem:[%s1 + $0x80] sm:$0xff]
  %v97 = vld [vmem:[%s1 + $0x90] sm:$0xff]
  %v98 = vld [vmem:[%s1 + $0xa0] sm:$0xff]
  %v99 = vld [vmem:[%s1 + $0xb0] sm:$0xff]
  %v100 = vld [vmem:[%s1 + $0xc0] sm:$0xff]
  %v101 = vld [vmem:[%s1 + $0xd0] sm:$0xff]
  %v102 = vld [vmem:[%s1 + $0xe0] sm:$0xff]
  %v103 = vld [vmem:[%s1 + $0xf0] sm:$0xff]
  %v104 = vld [vmem:[%s1 + $0x120] sm:$0xff]
  %v105 = vld [vmem:[%s1 + $0x130] sm:$0xff]
  %v106 = vld [vmem:[%s1 + $0x140] sm:$0xff]
  %v107 = vld [vmem:[%s1 + $0x150] sm:$0xff]
  %v108 = vld [vmem:[%s1 + $0x160] sm:$0xff]
  %v109 = vld [vmem:[%s1 + $0x170] sm:$0xff]
  %v110 = vld [vmem:[%s1 + $0x180] sm:$0xff]
  %v111 = vld [vmem:[%s1 + $0x190] sm:$0xff]
  %v112 = vld [vmem:[%s1 + $0x1a0] sm:$0xff]
  %v113 = vld [vmem:[%s1 + $0x1b0] sm:$0xff]
  %v114 = vld [vmem:[%s1 + $0x1c0] sm:$0xff]
  %v115 = vld [vmem:[%s1 + $0x1d0] sm:$0xff]
  %v116 = vld [vmem:[%s1 + $0x1e0] sm:$0xff]
  %v117 = vld [vmem:[%s1 + $0x1f0] sm:$0xff]
  %v118 = vld [vmem:[%s1 + $0x200] sm:$0xff]
  %v119 = vld [vmem:[%s1 + $0x210] sm:$0xff]
  %v120 = vpack.c.bf16 %v89, %v88
  %v121 = vpack.c.bf16 %v91, %v90
  %v122 = vpack.c.bf16 %v93, %v92
  %v123 = vpack.c.bf16 %v95, %v94
  %v124 = vpack.c.bf16 %v97, %v96
  %v125 = vpack.c.bf16 %v99, %v98
  %v126 = vpack.c.bf16 %v101, %v100
  %v127 = vpack.c.bf16 %v103, %v102
  %v128 = vpack.c.bf16 %v105, %v104
  %v129 = vpack.c.bf16 %v107, %v106
  %v130 = vpack.c.bf16 %v109, %v108
  %v131 = vpack.c.bf16 %v111, %v110
  %v132 = vpack.c.bf16 %v113, %v112
  %v133 = vpack.c.bf16 %v115, %v114
  %v134 = vpack.c.bf16 %v117, %v116
  %v135 = vpack.c.bf16 %v119, %v118
  %s136 = scalar_lea.vmem %s2, 16
  %v137 = vld [vmem:[%s136] sm:$0xf]
  %v138 = vld [vmem:[%s136 + $0x4] sm:$0xf]
  %v139 = vld [vmem:[%s136 + $0x8] sm:$0xf]
  %v140 = vld [vmem:[%s136 + $0xc] sm:$0xf]
  %v145 = vunpack.c.l.b16 %v137
  %v146 = vunpack.c.l.b16 %v138
  %v147 = vunpack.c.l.b16 %v139
  %v148 = vunpack.c.l.b16 %v140
  %v149 = vpack.c.b16 %v146, %v145
  %v150 = vpack.c.b16 %v148, %v147
  %vm153 = vcmask 261120
  %v155 = vsel %vm153, %v120, 0
  %v158 = vsel %vm153, %v121, 0
  %v161 = vsel %vm153, %v122, 0
  %v164 = vsel %vm153, %v123, 0
  %v167 = vsel %vm153, %v124, 0
  %v170 = vsel %vm153, %v125, 0
  %v173 = vsel %vm153, %v126, 0
  %v176 = vsel %vm153, %v127, 0
  %v179 = vsel %vm153, %v128, 0
  %v182 = vsel %vm153, %v129, 0
  %v185 = vsel %vm153, %v130, 0
  %v188 = vsel %vm153, %v131, 0
  %v191 = vsel %vm153, %v132, 0
  %v194 = vsel %vm153, %v133, 0
  %v197 = vsel %vm153, %v134, 0
  %v200 = vsel %vm153, %v135, 0
  %202 = vmatprep.subr.bf16.mxu0 0
  %203 = vmatpush1.bf16.msra.mxu0 %v149
  %204 = vmatprep.subr.bf16.mxu0 0
  %205 = vmatpush1.bf16.msra.mxu0 %v150
  %206 = vmatprep.subr.bf16.mxu0 0
  %207 = vmatpush1.bf16.msra.mxu0 0
  %208 = vmatprep.subr.bf16.mxu0 0
  %209 = vmatpush1.bf16.msra.mxu0 0
  %210 = vmatprep.subr.bf16.mxu0 0
  %211 = vmatpush1.bf16.msra.mxu0 0
  %212 = vmatprep.subr.bf16.mxu0 0
  %213 = vmatpush1.bf16.msra.mxu0 0
  %214 = vmatprep.subr.bf16.mxu0 0
  %215 = vmatpush1.bf16.msra.mxu0 0
  %216 = vmatprep.subr.bf16.mxu0 0
  %217 = vmatpush1.bf16.msra.mxu0 0
  %218 = vmatprep.subr.bf16.mxu0 0
  %219 = vmatpush1.bf16.msra.mxu0 0
  %220 = vmatprep.subr.bf16.mxu0 0
  %221 = vmatpush1.bf16.msra.mxu0 0
  %222 = vmatprep.subr.bf16.mxu0 0
  %223 = vmatpush1.bf16.msra.mxu0 0
  %224 = vmatprep.subr.bf16.mxu0 0
  %225 = vmatpush1.bf16.msra.mxu0 0
  %226 = vmatprep.subr.bf16.mxu0 0
  %227 = vmatpush1.bf16.msra.mxu0 0
  %228 = vmatprep.subr.bf16.mxu0 0
  %229 = vmatpush1.bf16.msra.mxu0 0
  %230 = vmatprep.subr.bf16.mxu0 0
  %231 = vmatpush1.bf16.msra.mxu0 0
  %232 = vmatprep.subr.bf16.mxu0 0
  %233 = vmatpush1.bf16.msra.mxu0 0
  %234 = vmatprep.mubr.bf16.mxu0 0
  %235 = vmatmul.mubr.bf16.gmra.mrb[0].mxu0 %v155
  %v236 = vpop.f32.mrb[0].mxu0
  %v237 = vadd.f32 0.0, %v236
  %v238 = vpop.f32.mrb[0].mxu0
  %v239 = vpop.f32.mrb[0].mxu0
  %v240 = vadd.f32 0.0, %v239
  %v241 = vpop.f32.mrb[0].mxu0
  %242 = vmatprep.mubr.bf16.mxu0 0
  %243 = vmatmul.mubr.bf16.gmra.mrb[0].mxu0 %v158
  %v244 = vpop.f32.mrb[0].mxu0
  %v245 = vadd.f32 0.0, %v244
  %v246 = vpop.f32.mrb[0].mxu0
  %v247 = vpop.f32.mrb[0].mxu0
  %v248 = vadd.f32 0.0, %v247
  %v249 = vpop.f32.mrb[0].mxu0
  %250 = vmatprep.mubr.bf16.mxu0 0
  %251 = vmatmul.mubr.bf16.gmra.mrb[0].mxu0 %v161
  %v252 = vpop.f32.mrb[0].mxu0
  %v253 = vadd.f32 0.0, %v252
  %v254 = vpop.f32.mrb[0].mxu0
  %v255 = vpop.f32.mrb[0].mxu0
  %v256 = vadd.f32 0.0, %v255
  %v257 = vpop.f32.mrb[0].mxu0
  %258 = vmatprep.mubr.bf16.mxu0 0
  %259 = vmatmul.mubr.bf16.gmra.mrb[0].mxu0 %v164
  %v260 = vpop.f32.mrb[0].mxu0
  %v261 = vadd.f32 0.0, %v260
  %v262 = vpop.f32.mrb[0].mxu0
  %v263 = vpop.f32.mrb[0].mxu0
  %v264 = vadd.f32 0.0, %v263
  %v265 = vpop.f32.mrb[0].mxu0
  %266 = vmatprep.mubr.bf16.mxu0 0
  %267 = vmatmul.mubr.bf16.gmra.mrb[0].mxu0 %v167
  %v268 = vpop.f32.mrb[0].mxu0
  %v269 = vadd.f32 0.0, %v268
  %v270 = vpop.f32.mrb[0].mxu0
  %v271 = vpop.f32.mrb[0].mxu0
  %v272 = vadd.f32 0.0, %v271
  %v273 = vpop.f32.mrb[0].mxu0
  %274 = vmatprep.mubr.bf16.mxu0 0
  %275 = vmatmul.mubr.bf16.gmra.mrb[0].mxu0 %v170
  %v276 = vpop.f32.mrb[0].mxu0
  %v277 = vadd.f32 0.0, %v276
  %v278 = vpop.f32.mrb[0].mxu0
  %v279 = vpop.f32.mrb[0].mxu0
  %v280 = vadd.f32 0.0, %v279
  %v281 = vpop.f32.mrb[0].mxu0
  %282 = vmatprep.mubr.bf16.mxu0 0
  %283 = vmatmul.mubr.bf16.gmra.mrb[0].mxu0 %v173
  %v284 = vpop.f32.mrb[0].mxu0
  %v285 = vadd.f32 0.0, %v284
  %v286 = vpop.f32.mrb[0].mxu0
  %v287 = vpop.f32.mrb[0].mxu0
  %v288 = vadd.f32 0.0, %v287
  %v289 = vpop.f32.mrb[0].mxu0
  %290 = vmatprep.mubr.bf16.mxu0 0
  %291 = vmatmul.mubr.bf16.gmra.mrb[0].mxu0 %v176
  %v292 = vpop.f32.mrb[0].mxu0
  %v293 = vadd.f32 0.0, %v292
  %v294 = vpop.f32.mrb[0].mxu0
  %v295 = vpop.f32.mrb[0].mxu0
  %v296 = vadd.f32 0.0, %v295
  %v297 = vpop.f32.mrb[0].mxu0
  %298 = vmatprep.mubr.bf16.mxu0 0
  %299 = vmatmul.mubr.bf16.gmra.mrb[0].mxu0 %v179
  %v300 = vpop.f32.mrb[0].mxu0
  %v301 = vadd.f32 0.0, %v300
  %v302 = vpop.f32.mrb[0].mxu0
  %v303 = vpop.f32.mrb[0].mxu0
  %v304 = vadd.f32 0.0, %v303
  %v305 = vpop.f32.mrb[0].mxu0
  %306 = vmatprep.mubr.bf16.mxu0 0
  %307 = vmatmul.mubr.bf16.gmra.mrb[0].mxu0 %v182
  %v308 = vpop.f32.mrb[0].mxu0
  %v309 = vadd.f32 0.0, %v308
  %v310 = vpop.f32.mrb[0].mxu0
  %v311 = vpop.f32.mrb[0].mxu0
  %v312 = vadd.f32 0.0, %v311
  %v313 = vpop.f32.mrb[0].mxu0
  %314 = vmatprep.mubr.bf16.mxu0 0
  %315 = vmatmul.mubr.bf16.gmra.mrb[0].mxu0 %v185
  %v316 = vpop.f32.mrb[0].mxu0
  %v317 = vadd.f32 0.0, %v316
  %v318 = vpop.f32.mrb[0].mxu0
  %v319 = vpop.f32.mrb[0].mxu0
  %v320 = vadd.f32 0.0, %v319
  %v321 = vpop.f32.mrb[0].mxu0
  %322 = vmatprep.mubr.bf16.mxu0 0
  %323 = vmatmul.mubr.bf16.gmra.mrb[0].mxu0 %v188
  %v324 = vpop.f32.mrb[0].mxu0
  %v325 = vadd.f32 0.0, %v324
  %v326 = vpop.f32.mrb[0].mxu0
  %v327 = vpop.f32.mrb[0].mxu0
  %v328 = vadd.f32 0.0, %v327
  %v329 = vpop.f32.mrb[0].mxu0
  %330 = vmatprep.mubr.bf16.mxu0 0
  %331 = vmatmul.mubr.bf16.gmra.mrb[0].mxu0 %v191
  %v332 = vpop.f32.mrb[0].mxu0
  %v333 = vadd.f32 0.0, %v332
  %v334 = vpop.f32.mrb[0].mxu0
  %v335 = vpop.f32.mrb[0].mxu0
  %v336 = vadd.f32 0.0, %v335
  %v337 = vpop.f32.mrb[0].mxu0
  %338 = vmatprep.mubr.bf16.mxu0 0
  %339 = vmatmul.mubr.bf16.gmra.mrb[0].mxu0 %v194
  %v340 = vpop.f32.mrb[0].mxu0
  %v341 = vadd.f32 0.0, %v340
  %v342 = vpop.f32.mrb[0].mxu0
  %v343 = vpop.f32.mrb[0].mxu0
  %v344 = vadd.f32 0.0, %v343
  %v345 = vpop.f32.mrb[0].mxu0
  %346 = vmatprep.mubr.bf16.mxu0 0
  %347 = vmatmul.mubr.bf16.gmra.mrb[0].mxu0 %v197
  %v348 = vpop.f32.mrb[0].mxu0
  %v349 = vadd.f32 0.0, %v348
  %v350 = vpop.f32.mrb[0].mxu0
  %v351 = vpop.f32.mrb[0].mxu0
  %v352 = vadd.f32 0.0, %v351
  %v353 = vpop.f32.mrb[0].mxu0
  %354 = vmatprep.mubr.bf16.mxu0 0
  %355 = vmatmul.mubr.bf16.gmra.mrb[0].mxu0 %v200
  %v356 = vpop.f32.mrb[0].mxu0
  %v357 = vadd.f32 0.0, %v356
  %v358 = vpop.f32.mrb[0].mxu0
  %v359 = vpop.f32.mrb[0].mxu0
  %v360 = vadd.f32 0.0, %v359
  %v361 = vpop.f32.mrb[0].mxu0
  %362 = vdwg.mxu0
  %v367 = vunpack.c.l.b16 %v84
  %v368 = vunpack.c.l.b16 %v85
  %v369 = vunpack.c.l.b16 %v86
  %v370 = vunpack.c.l.b16 %v87
  %v371 = vpack.c.b16 %v368, %v367
  %v372 = vpack.c.b16 %v370, %v369
  %v376 = vsel %vm153, %v68, 0
  %v379 = vsel %vm153, %v69, 0
  %v382 = vsel %vm153, %v70, 0
  %v385 = vsel %vm153, %v71, 0
  %v388 = vsel %vm153, %v72, 0
  %v391 = vsel %vm153, %v73, 0
  %v394 = vsel %vm153, %v74, 0
  %v397 = vsel %vm153, %v75, 0
  %v400 = vsel %vm153, %v76, 0
  %v403 = vsel %vm153, %v77, 0
  %v406 = vsel %vm153, %v78, 0
  %v409 = vsel %vm153, %v79, 0
  %v412 = vsel %vm153, %v80, 0
  %v415 = vsel %vm153, %v81, 0
  %v418 = vsel %vm153, %v82, 0
  %v421 = vsel %vm153, %v83, 0
  %423 = vmatprep.subr.bf16.mxu0 0
  %424 = vmatpush1.bf16.msra.mxu0 %v371
  %425 = vmatprep.subr.bf16.mxu0 0
  %426 = vmatpush1.bf16.msra.mxu0 %v372
  %427 = vmatprep.subr.bf16.mxu0 0
  %428 = vmatpush1.bf16.msra.mxu0 0
  %429 = vmatprep.subr.bf16.mxu0 0
  %430 = vmatpush1.bf16.msra.mxu0 0
  %431 = vmatprep.subr.bf16.mxu0 0
  %432 = vmatpush1.bf16.msra.mxu0 0
  %433 = vmatprep.subr.bf16.mxu0 0
  %434 = vmatpush1.bf16.msra.mxu0 0
  %435 = vmatprep.subr.bf16.mxu0 0
  %436 = vmatpush1.bf16.msra.mxu0 0
  %437 = vmatprep.subr.bf16.mxu0 0
  %438 = vmatpush1.bf16.msra.mxu0 0
  %439 = vmatprep.subr.bf16.mxu0 0
  %440 = vmatpush1.bf16.msra.mxu0 0
  %441 = vmatprep.subr.bf16.mxu0 0
  %442 = vmatpush1.bf16.msra.mxu0 0
  %443 = vmatprep.subr.bf16.mxu0 0
  %444 = vmatpush1.bf16.msra.mxu0 0
  %445 = vmatprep.subr.bf16.mxu0 0
  %446 = vmatpush1.bf16.msra.mxu0 0
  %447 = vmatprep.subr.bf16.mxu0 0
  %448 = vmatpush1.bf16.msra.mxu0 0
  %449 = vmatprep.subr.bf16.mxu0 0
  %450 = vmatpush1.bf16.msra.mxu0 0
  %451 = vmatprep.subr.bf16.mxu0 0
  %452 = vmatpush1.bf16.msra.mxu0 0
  %453 = vmatprep.subr.bf16.mxu0 0
  %454 = vmatpush1.bf16.msra.mxu0 0
  %455 = vmatprep.mubr.bf16.mxu0 0
  %456 = vmatmul.mubr.bf16.gmra.mrb[0].mxu0 %v376
  %v457 = vpop.f32.mrb[0].mxu0
  %v458 = vadd.f32 %v237, %v457
  %v459 = vpop.f32.mrb[0].mxu0
  %v460 = vpop.f32.mrb[0].mxu0
  %v461 = vadd.f32 %v240, %v460
  %v462 = vpop.f32.mrb[0].mxu0
  %463 = vmatprep.mubr.bf16.mxu0 0
  %464 = vmatmul.mubr.bf16.gmra.mrb[0].mxu0 %v379
  %v465 = vpop.f32.mrb[0].mxu0
  %v466 = vadd.f32 %v245, %v465
  %v467 = vpop.f32.mrb[0].mxu0
  %v468 = vpop.f32.mrb[0].mxu0
  %v469 = vadd.f32 %v248, %v468
  %v470 = vpop.f32.mrb[0].mxu0
  %471 = vmatprep.mubr.bf16.mxu0 0
  %472 = vmatmul.mubr.bf16.gmra.mrb[0].mxu0 %v382
  %v473 = vpop.f32.mrb[0].mxu0
  %v474 = vadd.f32 %v253, %v473
  %v475 = vpop.f32.mrb[0].mxu0
  %v476 = vpop.f32.mrb[0].mxu0
  %v477 = vadd.f32 %v256, %v476
  %v478 = vpop.f32.mrb[0].mxu0
  %479 = vmatprep.mubr.bf16.mxu0 0
  %480 = vmatmul.mubr.bf16.gmra.mrb[0].mxu0 %v385
  %v481 = vpop.f32.mrb[0].mxu0
  %v482 = vadd.f32 %v261, %v481
  %v483 = vpop.f32.mrb[0].mxu0
  %v484 = vpop.f32.mrb[0].mxu0
  %v485 = vadd.f32 %v264, %v484
  %v486 = vpop.f32.mrb[0].mxu0
  %487 = vmatprep.mubr.bf16.mxu0 0
  %488 = vmatmul.mubr.bf16.gmra.mrb[0].mxu0 %v388
  %v489 = vpop.f32.mrb[0].mxu0
  %v490 = vadd.f32 %v269, %v489
  %v491 = vpop.f32.mrb[0].mxu0
  %v492 = vpop.f32.mrb[0].mxu0
  %v493 = vadd.f32 %v272, %v492
  %v494 = vpop.f32.mrb[0].mxu0
  %495 = vmatprep.mubr.bf16.mxu0 0
  %496 = vmatmul.mubr.bf16.gmra.mrb[0].mxu0 %v391
  %v497 = vpop.f32.mrb[0].mxu0
  %v498 = vadd.f32 %v277, %v497
  %v499 = vpop.f32.mrb[0].mxu0
  %v500 = vpop.f32.mrb[0].mxu0
  %v501 = vadd.f32 %v280, %v500
  %v502 = vpop.f32.mrb[0].mxu0
  %503 = vmatprep.mubr.bf16.mxu0 0
  %504 = vmatmul.mubr.bf16.gmra.mrb[0].mxu0 %v394
  %v505 = vpop.f32.mrb[0].mxu0
  %v506 = vadd.f32 %v285, %v505
  %v507 = vpop.f32.mrb[0].mxu0
  %v508 = vpop.f32.mrb[0].mxu0
  %v509 = vadd.f32 %v288, %v508
  %v510 = vpop.f32.mrb[0].mxu0
  %511 = vmatprep.mubr.bf16.mxu0 0
  %512 = vmatmul.mubr.bf16.gmra.mrb[0].mxu0 %v397
  %v513 = vpop.f32.mrb[0].mxu0
  %v514 = vadd.f32 %v293, %v513
  %v515 = vpop.f32.mrb[0].mxu0
  %v516 = vpop.f32.mrb[0].mxu0
  %v517 = vadd.f32 %v296, %v516
  %v518 = vpop.f32.mrb[0].mxu0
  %519 = vmatprep.mubr.bf16.mxu0 0
  %520 = vmatmul.mubr.bf16.gmra.mrb[0].mxu0 %v400
  %v521 = vpop.f32.mrb[0].mxu0
  %v522 = vadd.f32 %v301, %v521
  %v523 = vpop.f32.mrb[0].mxu0
  %v524 = vpop.f32.mrb[0].mxu0
  %v525 = vadd.f32 %v304, %v524
  %v526 = vpop.f32.mrb[0].mxu0
  %527 = vmatprep.mubr.bf16.mxu0 0
  %528 = vmatmul.mubr.bf16.gmra.mrb[0].mxu0 %v403
  %v529 = vpop.f32.mrb[0].mxu0
  %v530 = vadd.f32 %v309, %v529
  %v531 = vpop.f32.mrb[0].mxu0
  %v532 = vpop.f32.mrb[0].mxu0
  %v533 = vadd.f32 %v312, %v532
  %v534 = vpop.f32.mrb[0].mxu0
  %535 = vmatprep.mubr.bf16.mxu0 0
  %536 = vmatmul.mubr.bf16.gmra.mrb[0].mxu0 %v406
  %v537 = vpop.f32.mrb[0].mxu0
  %v538 = vadd.f32 %v317, %v537
  %v539 = vpop.f32.mrb[0].mxu0
  %v540 = vpop.f32.mrb[0].mxu0
  %v541 = vadd.f32 %v320, %v540
  %v542 = vpop.f32.mrb[0].mxu0
  %543 = vmatprep.mubr.bf16.mxu0 0
  %544 = vmatmul.mubr.bf16.gmra.mrb[0].mxu0 %v409
  %v545 = vpop.f32.mrb[0].mxu0
  %v546 = vadd.f32 %v325, %v545
  %v547 = vpop.f32.mrb[0].mxu0
  %v548 = vpop.f32.mrb[0].mxu0
  %v549 = vadd.f32 %v328, %v548
  %v550 = vpop.f32.mrb[0].mxu0
  %551 = vmatprep.mubr.bf16.mxu0 0
  %552 = vmatmul.mubr.bf16.gmra.mrb[0].mxu0 %v412
  %v553 = vpop.f32.mrb[0].mxu0
  %v554 = vadd.f32 %v333, %v553
  %v555 = vpop.f32.mrb[0].mxu0
  %v556 = vpop.f32.mrb[0].mxu0
  %v557 = vadd.f32 %v336, %v556
  %v558 = vpop.f32.mrb[0].mxu0
  %559 = vmatprep.mubr.bf16.mxu0 0
  %560 = vmatmul.mubr.bf16.gmra.mrb[0].mxu0 %v415
  %v561 = vpop.f32.mrb[0].mxu0
  %v562 = vadd.f32 %v341, %v561
  %v563 = vpop.f32.mrb[0].mxu0
  %v564 = vpop.f32.mrb[0].mxu0
  %v565 = vadd.f32 %v344, %v564
  %v566 = vpop.f32.mrb[0].mxu0
  %567 = vmatprep.mubr.bf16.mxu0 0
  %568 = vmatmul.mubr.bf16.gmra.mrb[0].mxu0 %v418
  %v569 = vpop.f32.mrb[0].mxu0
  %v570 = vadd.f32 %v349, %v569
  %v571 = vpop.f32.mrb[0].mxu0
  %v572 = vpop.f32.mrb[0].mxu0
  %v573 = vadd.f32 %v352, %v572
  %v574 = vpop.f32.mrb[0].mxu0
  %575 = vmatprep.mubr.bf16.mxu0 0
  %576 = vmatmul.mubr.bf16.gmra.mrb[0].mxu0 %v421
  %v577 = vpop.f32.mrb[0].mxu0
  %v578 = vadd.f32 %v357, %v577
  %v579 = vpop.f32.mrb[0].mxu0
  %v580 = vpop.f32.mrb[0].mxu0
  %v581 = vadd.f32 %v360, %v580
  %v582 = vpop.f32.mrb[0].mxu0
  %583 = vdwg.mxu0
  %v584 = vld [vmem:[%s0 + $0x1] sm:$0xff]
  %v585 = vld [vmem:[%s0 + $0x11] sm:$0xff]
  %v586 = vld [vmem:[%s0 + $0x21] sm:$0xff]
  %v587 = vld [vmem:[%s0 + $0x31] sm:$0xff]
  %v588 = vld [vmem:[%s0 + $0x41] sm:$0xff]
  %v589 = vld [vmem:[%s0 + $0x51] sm:$0xff]
  %v590 = vld [vmem:[%s0 + $0x61] sm:$0xff]
  %v591 = vld [vmem:[%s0 + $0x71] sm:$0xff]
  %v592 = vld [vmem:[%s0 + $0x81] sm:$0xff]
  %v593 = vld [vmem:[%s0 + $0x91] sm:$0xff]
  %v594 = vld [vmem:[%s0 + $0xa1] sm:$0xff]
  %v595 = vld [vmem:[%s0 + $0xb1] sm:$0xff]
  %v596 = vld [vmem:[%s0 + $0xc1] sm:$0xff]
  %v597 = vld [vmem:[%s0 + $0xd1] sm:$0xff]
  %v598 = vld [vmem:[%s0 + $0xe1] sm:$0xff]
  %v599 = vld [vmem:[%s0 + $0xf1] sm:$0xff]
  %v600 = vld [vmem:[%s0 + $0x121] sm:$0xff]
  %v601 = vld [vmem:[%s0 + $0x131] sm:$0xff]
  %v602 = vld [vmem:[%s0 + $0x141] sm:$0xff]
  %v603 = vld [vmem:[%s0 + $0x151] sm:$0xff]
  %v604 = vld [vmem:[%s0 + $0x161] sm:$0xff]
  %v605 = vld [vmem:[%s0 + $0x171] sm:$0xff]
  %v606 = vld [vmem:[%s0 + $0x181] sm:$0xff]
  %v607 = vld [vmem:[%s0 + $0x191] sm:$0xff]
  %v608 = vld [vmem:[%s0 + $0x1a1] sm:$0xff]
  %v609 = vld [vmem:[%s0 + $0x1b1] sm:$0xff]
  %v610 = vld [vmem:[%s0 + $0x1c1] sm:$0xff]
  %v611 = vld [vmem:[%s0 + $0x1d1] sm:$0xff]
  %v612 = vld [vmem:[%s0 + $0x1e1] sm:$0xff]
  %v613 = vld [vmem:[%s0 + $0x1f1] sm:$0xff]
  %v614 = vld [vmem:[%s0 + $0x201] sm:$0xff]
  %v615 = vld [vmem:[%s0 + $0x211] sm:$0xff]
  %v616 = vpack.c.bf16 %v585, %v584
  %v617 = vpack.c.bf16 %v587, %v586
  %v618 = vpack.c.bf16 %v589, %v588
  %v619 = vpack.c.bf16 %v591, %v590
  %v620 = vpack.c.bf16 %v593, %v592
  %v621 = vpack.c.bf16 %v595, %v594
  %v622 = vpack.c.bf16 %v597, %v596
  %v623 = vpack.c.bf16 %v599, %v598
  %v624 = vpack.c.bf16 %v601, %v600
  %v625 = vpack.c.bf16 %v603, %v602
  %v626 = vpack.c.bf16 %v605, %v604
  %v627 = vpack.c.bf16 %v607, %v606
  %v628 = vpack.c.bf16 %v609, %v608
  %v629 = vpack.c.bf16 %v611, %v610
  %v630 = vpack.c.bf16 %v613, %v612
  %v631 = vpack.c.bf16 %v615, %v614
  %s632 = scalar_lea.vmem %s2, 32
  %v633 = vld [vmem:[%s632] sm:$0xf]
  %v634 = vld [vmem:[%s632 + $0x4] sm:$0xf]
  %v635 = vld [vmem:[%s632 + $0x8] sm:$0xf]
  %v636 = vld [vmem:[%s632 + $0xc] sm:$0xf]
  %v641 = vunpack.c.l.b16 %v633
  %v642 = vunpack.c.l.b16 %v634
  %v643 = vunpack.c.l.b16 %v635
  %v644 = vunpack.c.l.b16 %v636
  %v645 = vpack.c.b16 %v642, %v641
  %v646 = vpack.c.b16 %v644, %v643
  %v650 = vsel %vm153, %v616, 0
  %v653 = vsel %vm153, %v617, 0
  %v656 = vsel %vm153, %v618, 0
  %v659 = vsel %vm153, %v619, 0
  %v662 = vsel %vm153, %v620, 0
  %v665 = vsel %vm153, %v621, 0
  %v668 = vsel %vm153, %v622, 0
  %v671 = vsel %vm153, %v623, 0
  %v674 = vsel %vm153, %v624, 0
  %v677 = vsel %vm153, %v625, 0
  %v680 = vsel %vm153, %v626, 0
  %v683 = vsel %vm153, %v627, 0
  %v686 = vsel %vm153, %v628, 0
  %v689 = vsel %vm153, %v629, 0
  %v692 = vsel %vm153, %v630, 0
  %v695 = vsel %vm153, %v631, 0
  %697 = vmatprep.subr.bf16.mxu0 0
  %698 = vmatpush1.bf16.msra.mxu0 %v645
  %699 = vmatprep.subr.bf16.mxu0 0
  %700 = vmatpush1.bf16.msra.mxu0 %v646
  %701 = vmatprep.subr.bf16.mxu0 0
  %702 = vmatpush1.bf16.msra.mxu0 0
  %703 = vmatprep.subr.bf16.mxu0 0
  %704 = vmatpush1.bf16.msra.mxu0 0
  %705 = vmatprep.subr.bf16.mxu0 0
  %706 = vmatpush1.bf16.msra.mxu0 0
  %707 = vmatprep.subr.bf16.mxu0 0
  %708 = vmatpush1.bf16.msra.mxu0 0
  %709 = vmatprep.subr.bf16.mxu0 0
  %710 = vmatpush1.bf16.msra.mxu0 0
  %711 = vmatprep.subr.bf16.mxu0 0
  %712 = vmatpush1.bf16.msra.mxu0 0
  %713 = vmatprep.subr.bf16.mxu0 0
  %714 = vmatpush1.bf16.msra.mxu0 0
  %715 = vmatprep.subr.bf16.mxu0 0
  %716 = vmatpush1.bf16.msra.mxu0 0
  %717 = vmatprep.subr.bf16.mxu0 0
  %718 = vmatpush1.bf16.msra.mxu0 0
  %719 = vmatprep.subr.bf16.mxu0 0
  %720 = vmatpush1.bf16.msra.mxu0 0
  %721 = vmatprep.subr.bf16.mxu0 0
  %722 = vmatpush1.bf16.msra.mxu0 0
  %723 = vmatprep.subr.bf16.mxu0 0
  %724 = vmatpush1.bf16.msra.mxu0 0
  %725 = vmatprep.subr.bf16.mxu0 0
  %726 = vmatpush1.bf16.msra.mxu0 0
  %727 = vmatprep.subr.bf16.mxu0 0
  %728 = vmatpush1.bf16.msra.mxu0 0
  %729 = vmatprep.mubr.bf16.mxu0 0
  %730 = vmatmul.mubr.bf16.gmra.mrb[0].mxu0 %v650
  %v731 = vpop.f32.mrb[0].mxu0
  %v732 = vadd.f32 0.0, %v731
  %v733 = vpop.f32.mrb[0].mxu0
  %v734 = vpop.f32.mrb[0].mxu0
  %v735 = vadd.f32 0.0, %v734
  %v736 = vpop.f32.mrb[0].mxu0
  %737 = vmatprep.mubr.bf16.mxu0 0
  %738 = vmatmul.mubr.bf16.gmra.mrb[0].mxu0 %v653
  %v739 = vpop.f32.mrb[0].mxu0
  %v740 = vadd.f32 0.0, %v739
  %v741 = vpop.f32.mrb[0].mxu0
  %v742 = vpop.f32.mrb[0].mxu0
  %v743 = vadd.f32 0.0, %v742
  %v744 = vpop.f32.mrb[0].mxu0
  %745 = vmatprep.mubr.bf16.mxu0 0
  %746 = vmatmul.mubr.bf16.gmra.mrb[0].mxu0 %v656
  %v747 = vpop.f32.mrb[0].mxu0
  %v748 = vadd.f32 0.0, %v747
  %v749 = vpop.f32.mrb[0].mxu0
  %v750 = vpop.f32.mrb[0].mxu0
  %v751 = vadd.f32 0.0, %v750
  %v752 = vpop.f32.mrb[0].mxu0
  %753 = vmatprep.mubr.bf16.mxu0 0
  %754 = vmatmul.mubr.bf16.gmra.mrb[0].mxu0 %v659
  %v755 = vpop.f32.mrb[0].mxu0
  %v756 = vadd.f32 0.0, %v755
  %v757 = vpop.f32.mrb[0].mxu0
  %v758 = vpop.f32.mrb[0].mxu0
  %v759 = vadd.f32 0.0, %v758
  %v760 = vpop.f32.mrb[0].mxu0
  %761 = vmatprep.mubr.bf16.mxu0 0
  %762 = vmatmul.mubr.bf16.gmra.mrb[0].mxu0 %v662
  %v763 = vpop.f32.mrb[0].mxu0
  %v764 = vadd.f32 0.0, %v763
  %v765 = vpop.f32.mrb[0].mxu0
  %v766 = vpop.f32.mrb[0].mxu0
  %v767 = vadd.f32 0.0, %v766
  %v768 = vpop.f32.mrb[0].mxu0
  %769 = vmatprep.mubr.bf16.mxu0 0
  %770 = vmatmul.mubr.bf16.gmra.mrb[0].mxu0 %v665
  %v771 = vpop.f32.mrb[0].mxu0
  %v772 = vadd.f32 0.0, %v771
  %v773 = vpop.f32.mrb[0].mxu0
  %v774 = vpop.f32.mrb[0].mxu0
  %v775 = vadd.f32 0.0, %v774
  %v776 = vpop.f32.mrb[0].mxu0
  %777 = vmatprep.mubr.bf16.mxu0 0
  %778 = vmatmul.mubr.bf16.gmra.mrb[0].mxu0 %v668
  %v779 = vpop.f32.mrb[0].mxu0
  %v780 = vadd.f32 0.0, %v779
  %v781 = vpop.f32.mrb[0].mxu0
  %v782 = vpop.f32.mrb[0].mxu0
  %v783 = vadd.f32 0.0, %v782
  %v784 = vpop.f32.mrb[0].mxu0
  %785 = vmatprep.mubr.bf16.mxu0 0
  %786 = vmatmul.mubr.bf16.gmra.mrb[0].mxu0 %v671
  %v787 = vpop.f32.mrb[0].mxu0
  %v788 = vadd.f32 0.0, %v787
  %v789 = vpop.f32.mrb[0].mxu0
  %v790 = vpop.f32.mrb[0].mxu0
  %v791 = vadd.f32 0.0, %v790
  %v792 = vpop.f32.mrb[0].mxu0
  %793 = vmatprep.mubr.bf16.mxu0 0
  %794 = vmatmul.mubr.bf16.gmra.mrb[0].mxu0 %v674
  %v795 = vpop.f32.mrb[0].mxu0
  %v796 = vadd.f32 0.0, %v795
  %v797 = vpop.f32.mrb[0].mxu0
  %v798 = vpop.f32.mrb[0].mxu0
  %v799 = vadd.f32 0.0, %v798
  %v800 = vpop.f32.mrb[0].mxu0
  %801 = vmatprep.mubr.bf16.mxu0 0
  %802 = vmatmul.mubr.bf16.gmra.mrb[0].mxu0 %v677
  %v803 = vpop.f32.mrb[0].mxu0
  %v804 = vadd.f32 0.0, %v803
  %v805 = vpop.f32.mrb[0].mxu0
  %v806 = vpop.f32.mrb[0].mxu0
  %v807 = vadd.f32 0.0, %v806
  %v808 = vpop.f32.mrb[0].mxu0
  %809 = vmatprep.mubr.bf16.mxu0 0
  %810 = vmatmul.mubr.bf16.gmra.mrb[0].mxu0 %v680
  %v811 = vpop.f32.mrb[0].mxu0
  %v812 = vadd.f32 0.0, %v811
  %v813 = vpop.f32.mrb[0].mxu0
  %v814 = vpop.f32.mrb[0].mxu0
  %v815 = vadd.f32 0.0, %v814
  %v816 = vpop.f32.mrb[0].mxu0
  %817 = vmatprep.mubr.bf16.mxu0 0
  %818 = vmatmul.mubr.bf16.gmra.mrb[0].mxu0 %v683
  %v819 = vpop.f32.mrb[0].mxu0
  %v820 = vadd.f32 0.0, %v819
  %v821 = vpop.f32.mrb[0].mxu0
  %v822 = vpop.f32.mrb[0].mxu0
  %v823 = vadd.f32 0.0, %v822
  %v824 = vpop.f32.mrb[0].mxu0
  %825 = vmatprep.mubr.bf16.mxu0 0
  %826 = vmatmul.mubr.bf16.gmra.mrb[0].mxu0 %v686
  %v827 = vpop.f32.mrb[0].mxu0
  %v828 = vadd.f32 0.0, %v827
  %v829 = vpop.f32.mrb[0].mxu0
  %v830 = vpop.f32.mrb[0].mxu0
  %v831 = vadd.f32 0.0, %v830
  %v832 = vpop.f32.mrb[0].mxu0
  %833 = vmatprep.mubr.bf16.mxu0 0
  %834 = vmatmul.mubr.bf16.gmra.mrb[0].mxu0 %v689
  %v835 = vpop.f32.mrb[0].mxu0
  %v836 = vadd.f32 0.0, %v835
  %v837 = vpop.f32.mrb[0].mxu0
  %v838 = vpop.f32.mrb[0].mxu0
  %v839 = vadd.f32 0.0, %v838
  %v840 = vpop.f32.mrb[0].mxu0
  %841 = vmatprep.mubr.bf16.mxu0 0
  %842 = vmatmul.mubr.bf16.gmra.mrb[0].mxu0 %v692
  %v843 = vpop.f32.mrb[0].mxu0
  %v844 = vadd.f32 0.0, %v843
  %v845 = vpop.f32.mrb[0].mxu0
  %v846 = vpop.f32.mrb[0].mxu0
  %v847 = vadd.f32 0.0, %v846
  %v848 = vpop.f32.mrb[0].mxu0
  %849 = vmatprep.mubr.bf16.mxu0 0
  %850 = vmatmul.mubr.bf16.gmra.mrb[0].mxu0 %v695
  %v851 = vpop.f32.mrb[0].mxu0
  %v852 = vadd.f32 0.0, %v851
  %v853 = vpop.f32.mrb[0].mxu0
  %v854 = vpop.f32.mrb[0].mxu0
  %v855 = vadd.f32 0.0, %v854
  %v856 = vpop.f32.mrb[0].mxu0
  %857 = vdwg.mxu0
  %v858 = vadd.f32 %v458, %v732
  %v859 = vadd.f32 %v461, %v735
  %v860 = vadd.f32 %v466, %v740
  %v861 = vadd.f32 %v469, %v743
  %v862 = vadd.f32 %v474, %v748
  %v863 = vadd.f32 %v477, %v751
  %v864 = vadd.f32 %v482, %v756
  %v865 = vadd.f32 %v485, %v759
  %v866 = vadd.f32 %v490, %v764
  %v867 = vadd.f32 %v493, %v767
  %v868 = vadd.f32 %v498, %v772
  %v869 = vadd.f32 %v501, %v775
  %v870 = vadd.f32 %v506, %v780
  %v871 = vadd.f32 %v509, %v783
  %v872 = vadd.f32 %v514, %v788
  %v873 = vadd.f32 %v517, %v791
  %v874 = vadd.f32 %v522, %v796
  %v875 = vadd.f32 %v525, %v799
  %v876 = vadd.f32 %v530, %v804
  %v877 = vadd.f32 %v533, %v807
  %v878 = vadd.f32 %v538, %v812
  %v879 = vadd.f32 %v541, %v815
  %v880 = vadd.f32 %v546, %v820
  %v881 = vadd.f32 %v549, %v823
  %v882 = vadd.f32 %v554, %v828
  %v883 = vadd.f32 %v557, %v831
  %v884 = vadd.f32 %v562, %v836
  %v885 = vadd.f32 %v565, %v839
  %v886 = vadd.f32 %v570, %v844
  %v887 = vadd.f32 %v573, %v847
  %v888 = vadd.f32 %v578, %v852
  %v889 = vadd.f32 %v581, %v855
  %s890 = scalar_lea.vmem %s0, 16
  %v891 = vld [vmem:[%s890] sm:$0xff]
  %v892 = vld [vmem:[%s890 + $0x10] sm:$0xff]
  %v893 = vld [vmem:[%s890 + $0x20] sm:$0xff]
  %v894 = vld [vmem:[%s890 + $0x30] sm:$0xff]
  %v895 = vld [vmem:[%s890 + $0x40] sm:$0xff]
  %v896 = vld [vmem:[%s890 + $0x50] sm:$0xff]
  %v897 = vld [vmem:[%s890 + $0x60] sm:$0xff]
  %v898 = vld [vmem:[%s890 + $0x70] sm:$0xff]
  %v899 = vld [vmem:[%s890 + $0x80] sm:$0xff]
  %v900 = vld [vmem:[%s890 + $0x90] sm:$0xff]
  %v901 = vld [vmem:[%s890 + $0xa0] sm:$0xff]
  %v902 = vld [vmem:[%s890 + $0xb0] sm:$0xff]
  %v903 = vld [vmem:[%s890 + $0xc0] sm:$0xff]
  %v904 = vld [vmem:[%s890 + $0xd0] sm:$0xff]
  %v905 = vld [vmem:[%s890 + $0xe0] sm:$0xff]
  %v906 = vld [vmem:[%s890 + $0xf0] sm:$0xff]
  %v907 = vld [vmem:[%s890 + $0x120] sm:$0xff]
  %v908 = vld [vmem:[%s890 + $0x130] sm:$0xff]
  %v909 = vld [vmem:[%s890 + $0x140] sm:$0xff]
  %v910 = vld [vmem:[%s890 + $0x150] sm:$0xff]
  %v911 = vld [vmem:[%s890 + $0x160] sm:$0xff]
  %v912 = vld [vmem:[%s890 + $0x170] sm:$0xff]
  %v913 = vld [vmem:[%s890 + $0x180] sm:$0xff]
  %v914 = vld [vmem:[%s890 + $0x190] sm:$0xff]
  %v915 = vld [vmem:[%s890 + $0x1a0] sm:$0xff]
  %v916 = vld [vmem:[%s890 + $0x1b0] sm:$0xff]
  %v917 = vld [vmem:[%s890 + $0x1c0] sm:$0xff]
  %v918 = vld [vmem:[%s890 + $0x1d0] sm:$0xff]
  %v919 = vld [vmem:[%s890 + $0x1e0] sm:$0xff]
  %v920 = vld [vmem:[%s890 + $0x1f0] sm:$0xff]
  %v921 = vld [vmem:[%s890 + $0x200] sm:$0xff]
  %v922 = vld [vmem:[%s890 + $0x210] sm:$0xff]
  %v923 = vpack.c.bf16 %v892, %v891
  %v924 = vpack.c.bf16 %v894, %v893
  %v925 = vpack.c.bf16 %v896, %v895
  %v926 = vpack.c.bf16 %v898, %v897
  %v927 = vpack.c.bf16 %v900, %v899
  %v928 = vpack.c.bf16 %v902, %v901
  %v929 = vpack.c.bf16 %v904, %v903
  %v930 = vpack.c.bf16 %v906, %v905
  %v931 = vpack.c.bf16 %v908, %v907
  %v932 = vpack.c.bf16 %v910, %v909
  %v933 = vpack.c.bf16 %v912, %v911
  %v934 = vpack.c.bf16 %v914, %v913
  %v935 = vpack.c.bf16 %v916, %v915
  %v936 = vpack.c.bf16 %v918, %v917
  %v937 = vpack.c.bf16 %v920, %v919
  %v938 = vpack.c.bf16 %v922, %v921
  %s939 = scalar_lea.vmem %s2, 48
  %v940 = vld [vmem:[%s939] sm:$0xf]
  %v941 = vld [vmem:[%s939 + $0x4] sm:$0xf]
  %v942 = vld [vmem:[%s939 + $0x8] sm:$0xf]
  %v943 = vld [vmem:[%s939 + $0xc] sm:$0xf]
  %v948 = vunpack.c.l.b16 %v940
  %v949 = vunpack.c.l.b16 %v941
  %v950 = vunpack.c.l.b16 %v942
  %v951 = vunpack.c.l.b16 %v943
  %v952 = vpack.c.b16 %v949, %v948
  %v953 = vpack.c.b16 %v951, %v950
  %v957 = vsel %vm153, %v923, 0
  %v960 = vsel %vm153, %v924, 0
  %v963 = vsel %vm153, %v925, 0
  %v966 = vsel %vm153, %v926, 0
  %v969 = vsel %vm153, %v927, 0
  %v972 = vsel %vm153, %v928, 0
  %v975 = vsel %vm153, %v929, 0
  %v978 = vsel %vm153, %v930, 0
  %v981 = vsel %vm153, %v931, 0
  %v984 = vsel %vm153, %v932, 0
  %v987 = vsel %vm153, %v933, 0
  %v990 = vsel %vm153, %v934, 0
  %v993 = vsel %vm153, %v935, 0
  %v996 = vsel %vm153, %v936, 0
  %v999 = vsel %vm153, %v937, 0
  %v1002 = vsel %vm153, %v938, 0
  %1004 = vmatprep.subr.bf16.mxu0 0
  %1005 = vmatpush1.bf16.msra.mxu0 %v952
  %1006 = vmatprep.subr.bf16.mxu0 0
  %1007 = vmatpush1.bf16.msra.mxu0 %v953
  %1008 = vmatprep.subr.bf16.mxu0 0
  %1009 = vmatpush1.bf16.msra.mxu0 0
  %1010 = vmatprep.subr.bf16.mxu0 0
  %1011 = vmatpush1.bf16.msra.mxu0 0
  %1012 = vmatprep.subr.bf16.mxu0 0
  %1013 = vmatpush1.bf16.msra.mxu0 0
  %1014 = vmatprep.subr.bf16.mxu0 0
  %1015 = vmatpush1.bf16.msra.mxu0 0
  %1016 = vmatprep.subr.bf16.mxu0 0
  %1017 = vmatpush1.bf16.msra.mxu0 0
  %1018 = vmatprep.subr.bf16.mxu0 0
  %1019 = vmatpush1.bf16.msra.mxu0 0
  %1020 = vmatprep.subr.bf16.mxu0 0
  %1021 = vmatpush1.bf16.msra.mxu0 0
  %1022 = vmatprep.subr.bf16.mxu0 0
  %1023 = vmatpush1.bf16.msra.mxu0 0
  %1024 = vmatprep.subr.bf16.mxu0 0
  %1025 = vmatpush1.bf16.msra.mxu0 0
  %1026 = vmatprep.subr.bf16.mxu0 0
  %1027 = vmatpush1.bf16.msra.mxu0 0
  %1028 = vmatprep.subr.bf16.mxu0 0
  %1029 = vmatpush1.bf16.msra.mxu0 0
  %1030 = vmatprep.subr.bf16.mxu0 0
  %1031 = vmatpush1.bf16.msra.mxu0 0
  %1032 = vmatprep.subr.bf16.mxu0 0
  %1033 = vmatpush1.bf16.msra.mxu0 0
  %1034 = vmatprep.subr.bf16.mxu0 0
  %1035 = vmatpush1.bf16.msra.mxu0 0
  %1036 = vmatprep.mubr.bf16.mxu0 0
  %1037 = vmatmul.mubr.bf16.gmra.mrb[0].mxu0 %v957
  %v1038 = vpop.f32.mrb[0].mxu0
  %v1039 = vadd.f32 0.0, %v1038
  %v1040 = vpop.f32.mrb[0].mxu0
  %v1041 = vpop.f32.mrb[0].mxu0
  %v1042 = vadd.f32 0.0, %v1041
  %v1043 = vpop.f32.mrb[0].mxu0
  %1044 = vmatprep.mubr.bf16.mxu0 0
  %1045 = vmatmul.mubr.bf16.gmra.mrb[0].mxu0 %v960
  %v1046 = vpop.f32.mrb[0].mxu0
  %v1047 = vadd.f32 0.0, %v1046
  %v1048 = vpop.f32.mrb[0].mxu0
  %v1049 = vpop.f32.mrb[0].mxu0
  %v1050 = vadd.f32 0.0, %v1049
  %v1051 = vpop.f32.mrb[0].mxu0
  %1052 = vmatprep.mubr.bf16.mxu0 0
  %1053 = vmatmul.mubr.bf16.gmra.mrb[0].mxu0 %v963
  %v1054 = vpop.f32.mrb[0].mxu0
  %v1055 = vadd.f32 0.0, %v1054
  %v1056 = vpop.f32.mrb[0].mxu0
  %v1057 = vpop.f32.mrb[0].mxu0
  %v1058 = vadd.f32 0.0, %v1057
  %v1059 = vpop.f32.mrb[0].mxu0
  %1060 = vmatprep.mubr.bf16.mxu0 0
  %1061 = vmatmul.mubr.bf16.gmra.mrb[0].mxu0 %v966
  %v1062 = vpop.f32.mrb[0].mxu0
  %v1063 = vadd.f32 0.0, %v1062
  %v1064 = vpop.f32.mrb[0].mxu0
  %v1065 = vpop.f32.mrb[0].mxu0
  %v1066 = vadd.f32 0.0, %v1065
  %v1067 = vpop.f32.mrb[0].mxu0
  %1068 = vmatprep.mubr.bf16.mxu0 0
  %1069 = vmatmul.mubr.bf16.gmra.mrb[0].mxu0 %v969
  %v1070 = vpop.f32.mrb[0].mxu0
  %v1071 = vadd.f32 0.0, %v1070
  %v1072 = vpop.f32.mrb[0].mxu0
  %v1073 = vpop.f32.mrb[0].mxu0
  %v1074 = vadd.f32 0.0, %v1073
  %v1075 = vpop.f32.mrb[0].mxu0
  %1076 = vmatprep.mubr.bf16.mxu0 0
  %1077 = vmatmul.mubr.bf16.gmra.mrb[0].mxu0 %v972
  %v1078 = vpop.f32.mrb[0].mxu0
  %v1079 = vadd.f32 0.0, %v1078
  %v1080 = vpop.f32.mrb[0].mxu0
  %v1081 = vpop.f32.mrb[0].mxu0
  %v1082 = vadd.f32 0.0, %v1081
  %v1083 = vpop.f32.mrb[0].mxu0
  %1084 = vmatprep.mubr.bf16.mxu0 0
  %1085 = vmatmul.mubr.bf16.gmra.mrb[0].mxu0 %v975
  %v1086 = vpop.f32.mrb[0].mxu0
  %v1087 = vadd.f32 0.0, %v1086
  %v1088 = vpop.f32.mrb[0].mxu0
  %v1089 = vpop.f32.mrb[0].mxu0
  %v1090 = vadd.f32 0.0, %v1089
  %v1091 = vpop.f32.mrb[0].mxu0
  %1092 = vmatprep.mubr.bf16.mxu0 0
  %1093 = vmatmul.mubr.bf16.gmra.mrb[0].mxu0 %v978
  %v1094 = vpop.f32.mrb[0].mxu0
  %v1095 = vadd.f32 0.0, %v1094
  %v1096 = vpop.f32.mrb[0].mxu0
  %v1097 = vpop.f32.mrb[0].mxu0
  %v1098 = vadd.f32 0.0, %v1097
  %v1099 = vpop.f32.mrb[0].mxu0
  %1100 = vmatprep.mubr.bf16.mxu0 0
  %1101 = vmatmul.mubr.bf16.gmra.mrb[0].mxu0 %v981
  %v1102 = vpop.f32.mrb[0].mxu0
  %v1103 = vadd.f32 0.0, %v1102
  %v1104 = vpop.f32.mrb[0].mxu0
  %v1105 = vpop.f32.mrb[0].mxu0
  %v1106 = vadd.f32 0.0, %v1105
  %v1107 = vpop.f32.mrb[0].mxu0
  %1108 = vmatprep.mubr.bf16.mxu0 0
  %1109 = vmatmul.mubr.bf16.gmra.mrb[0].mxu0 %v984
  %v1110 = vpop.f32.mrb[0].mxu0
  %v1111 = vadd.f32 0.0, %v1110
  %v1112 = vpop.f32.mrb[0].mxu0
  %v1113 = vpop.f32.mrb[0].mxu0
  %v1114 = vadd.f32 0.0, %v1113
  %v1115 = vpop.f32.mrb[0].mxu0
  %1116 = vmatprep.mubr.bf16.mxu0 0
  %1117 = vmatmul.mubr.bf16.gmra.mrb[0].mxu0 %v987
  %v1118 = vpop.f32.mrb[0].mxu0
  %v1119 = vadd.f32 0.0, %v1118
  %v1120 = vpop.f32.mrb[0].mxu0
  %v1121 = vpop.f32.mrb[0].mxu0
  %v1122 = vadd.f32 0.0, %v1121
  %v1123 = vpop.f32.mrb[0].mxu0
  %1124 = vmatprep.mubr.bf16.mxu0 0
  %1125 = vmatmul.mubr.bf16.gmra.mrb[0].mxu0 %v990
  %v1126 = vpop.f32.mrb[0].mxu0
  %v1127 = vadd.f32 0.0, %v1126
  %v1128 = vpop.f32.mrb[0].mxu0
  %v1129 = vpop.f32.mrb[0].mxu0
  %v1130 = vadd.f32 0.0, %v1129
  %v1131 = vpop.f32.mrb[0].mxu0
  %1132 = vmatprep.mubr.bf16.mxu0 0
  %1133 = vmatmul.mubr.bf16.gmra.mrb[0].mxu0 %v993
  %v1134 = vpop.f32.mrb[0].mxu0
  %v1135 = vadd.f32 0.0, %v1134
  %v1136 = vpop.f32.mrb[0].mxu0
  %v1137 = vpop.f32.mrb[0].mxu0
  %v1138 = vadd.f32 0.0, %v1137
  %v1139 = vpop.f32.mrb[0].mxu0
  %1140 = vmatprep.mubr.bf16.mxu0 0
  %1141 = vmatmul.mubr.bf16.gmra.mrb[0].mxu0 %v996
  %v1142 = vpop.f32.mrb[0].mxu0
  %v1143 = vadd.f32 0.0, %v1142
  %v1144 = vpop.f32.mrb[0].mxu0
  %v1145 = vpop.f32.mrb[0].mxu0
  %v1146 = vadd.f32 0.0, %v1145
  %v1147 = vpop.f32.mrb[0].mxu0
  %1148 = vmatprep.mubr.bf16.mxu0 0
  %1149 = vmatmul.mubr.bf16.gmra.mrb[0].mxu0 %v999
  %v1150 = vpop.f32.mrb[0].mxu0
  %v1151 = vadd.f32 0.0, %v1150
  %v1152 = vpop.f32.mrb[0].mxu0
  %v1153 = vpop.f32.mrb[0].mxu0
  %v1154 = vadd.f32 0.0, %v1153
  %v1155 = vpop.f32.mrb[0].mxu0
  %1156 = vmatprep.mubr.bf16.mxu0 0
  %1157 = vmatmul.mubr.bf16.gmra.mrb[0].mxu0 %v1002
  %v1158 = vpop.f32.mrb[0].mxu0
  %v1159 = vadd.f32 0.0, %v1158
  %v1160 = vpop.f32.mrb[0].mxu0
  %v1161 = vpop.f32.mrb[0].mxu0
  %v1162 = vadd.f32 0.0, %v1161
  %v1163 = vpop.f32.mrb[0].mxu0
  %1164 = vdwg.mxu0
  %v1165 = vadd.f32 %v858, %v1039
  %v1166 = vadd.f32 %v859, %v1042
  %v1167 = vadd.f32 %v860, %v1047
  %v1168 = vadd.f32 %v861, %v1050
  %v1169 = vadd.f32 %v862, %v1055
  %v1170 = vadd.f32 %v863, %v1058
  %v1171 = vadd.f32 %v864, %v1063
  %v1172 = vadd.f32 %v865, %v1066
  %v1173 = vadd.f32 %v866, %v1071
  %v1174 = vadd.f32 %v867, %v1074
  %v1175 = vadd.f32 %v868, %v1079
  %v1176 = vadd.f32 %v869, %v1082
  %v1177 = vadd.f32 %v870, %v1087
  %v1178 = vadd.f32 %v871, %v1090
  %v1179 = vadd.f32 %v872, %v1095
  %v1180 = vadd.f32 %v873, %v1098
  %v1181 = vadd.f32 %v874, %v1103
  %v1182 = vadd.f32 %v875, %v1106
  %v1183 = vadd.f32 %v876, %v1111
  %v1184 = vadd.f32 %v877, %v1114
  %v1185 = vadd.f32 %v878, %v1119
  %v1186 = vadd.f32 %v879, %v1122
  %v1187 = vadd.f32 %v880, %v1127
  %v1188 = vadd.f32 %v881, %v1130
  %v1189 = vadd.f32 %v882, %v1135
  %v1190 = vadd.f32 %v883, %v1138
  %v1191 = vadd.f32 %v884, %v1143
  %v1192 = vadd.f32 %v885, %v1146
  %v1193 = vadd.f32 %v886, %v1151
  %v1194 = vadd.f32 %v887, %v1154
  %v1195 = vadd.f32 %v888, %v1159
  %v1196 = vadd.f32 %v889, %v1162
  %s1197 = scalar_lea.vmem %s1, 16
  %v1198 = vld [vmem:[%s1197] sm:$0xff]
  %v1199 = vld [vmem:[%s1197 + $0x10] sm:$0xff]
  %v1200 = vld [vmem:[%s1197 + $0x20] sm:$0xff]
  %v1201 = vld [vmem:[%s1197 + $0x30] sm:$0xff]
  %v1202 = vld [vmem:[%s1197 + $0x40] sm:$0xff]
  %v1203 = vld [vmem:[%s1197 + $0x50] sm:$0xff]
  %v1204 = vld [vmem:[%s1197 + $0x60] sm:$0xff]
  %v1205 = vld [vmem:[%s1197 + $0x70] sm:$0xff]
  %v1206 = vld [vmem:[%s1197 + $0x80] sm:$0xff]
  %v1207 = vld [vmem:[%s1197 + $0x90] sm:$0xff]
  %v1208 = vld [vmem:[%s1197 + $0xa0] sm:$0xff]
  %v1209 = vld [vmem:[%s1197 + $0xb0] sm:$0xff]
  %v1210 = vld [vmem:[%s1197 + $0xc0] sm:$0xff]
  %v1211 = vld [vmem:[%s1197 + $0xd0] sm:$0xff]
  %v1212 = vld [vmem:[%s1197 + $0xe0] sm:$0xff]
  %v1213 = vld [vmem:[%s1197 + $0xf0] sm:$0xff]
  %v1214 = vld [vmem:[%s1197 + $0x120] sm:$0xff]
  %v1215 = vld [vmem:[%s1197 + $0x130] sm:$0xff]
  %v1216 = vld [vmem:[%s1197 + $0x140] sm:$0xff]
  %v1217 = vld [vmem:[%s1197 + $0x150] sm:$0xff]
  %v1218 = vld [vmem:[%s1197 + $0x160] sm:$0xff]
  %v1219 = vld [vmem:[%s1197 + $0x170] sm:$0xff]
  %v1220 = vld [vmem:[%s1197 + $0x180] sm:$0xff]
  %v1221 = vld [vmem:[%s1197 + $0x190] sm:$0xff]
  %v1222 = vld [vmem:[%s1197 + $0x1a0] sm:$0xff]
  %v1223 = vld [vmem:[%s1197 + $0x1b0] sm:$0xff]
  %v1224 = vld [vmem:[%s1197 + $0x1c0] sm:$0xff]
  %v1225 = vld [vmem:[%s1197 + $0x1d0] sm:$0xff]
  %v1226 = vld [vmem:[%s1197 + $0x1e0] sm:$0xff]
  %v1227 = vld [vmem:[%s1197 + $0x1f0] sm:$0xff]
  %v1228 = vld [vmem:[%s1197 + $0x200] sm:$0xff]
  %v1229 = vld [vmem:[%s1197 + $0x210] sm:$0xff]
  %v1230 = vpack.c.bf16 %v1199, %v1198
  %v1231 = vpack.c.bf16 %v1201, %v1200
  %v1232 = vpack.c.bf16 %v1203, %v1202
  %v1233 = vpack.c.bf16 %v1205, %v1204
  %v1234 = vpack.c.bf16 %v1207, %v1206
  %v1235 = vpack.c.bf16 %v1209, %v1208
  %v1236 = vpack.c.bf16 %v1211, %v1210
  %v1237 = vpack.c.bf16 %v1213, %v1212
  %v1238 = vpack.c.bf16 %v1215, %v1214
  %v1239 = vpack.c.bf16 %v1217, %v1216
  %v1240 = vpack.c.bf16 %v1219, %v1218
  %v1241 = vpack.c.bf16 %v1221, %v1220
  %v1242 = vpack.c.bf16 %v1223, %v1222
  %v1243 = vpack.c.bf16 %v1225, %v1224
  %v1244 = vpack.c.bf16 %v1227, %v1226
  %v1245 = vpack.c.bf16 %v1229, %v1228
  %s1246 = scalar_lea.vmem %s2, 64
  %v1247 = vld [vmem:[%s1246] sm:$0xf]
  %v1248 = vld [vmem:[%s1246 + $0x4] sm:$0xf]
  %v1249 = vld [vmem:[%s1246 + $0x8] sm:$0xf]
  %v1250 = vld [vmem:[%s1246 + $0xc] sm:$0xf]
  %v1255 = vunpack.c.l.b16 %v1247
  %v1256 = vunpack.c.l.b16 %v1248
  %v1257 = vunpack.c.l.b16 %v1249
  %v1258 = vunpack.c.l.b16 %v1250
  %v1259 = vpack.c.b16 %v1256, %v1255
  %v1260 = vpack.c.b16 %v1258, %v1257
  %v1264 = vsel %vm153, %v1230, 0
  %v1267 = vsel %vm153, %v1231, 0
  %v1270 = vsel %vm153, %v1232, 0
  %v1273 = vsel %vm153, %v1233, 0
  %v1276 = vsel %vm153, %v1234, 0
  %v1279 = vsel %vm153, %v1235, 0
  %v1282 = vsel %vm153, %v1236, 0
  %v1285 = vsel %vm153, %v1237, 0
  %v1288 = vsel %vm153, %v1238, 0
  %v1291 = vsel %vm153, %v1239, 0
  %v1294 = vsel %vm153, %v1240, 0
  %v1297 = vsel %vm153, %v1241, 0
  %v1300 = vsel %vm153, %v1242, 0
  %v1303 = vsel %vm153, %v1243, 0
  %v1306 = vsel %vm153, %v1244, 0
  %v1309 = vsel %vm153, %v1245, 0
  %1311 = vmatprep.subr.bf16.mxu0 0
  %1312 = vmatpush1.bf16.msra.mxu0 %v1259
  %1313 = vmatprep.subr.bf16.mxu0 0
  %1314 = vmatpush1.bf16.msra.mxu0 %v1260
  %1315 = vmatprep.subr.bf16.mxu0 0
  %1316 = vmatpush1.bf16.msra.mxu0 0
  %1317 = vmatprep.subr.bf16.mxu0 0
  %1318 = vmatpush1.bf16.msra.mxu0 0
  %1319 = vmatprep.subr.bf16.mxu0 0
  %1320 = vmatpush1.bf16.msra.mxu0 0
  %1321 = vmatprep.subr.bf16.mxu0 0
  %1322 = vmatpush1.bf16.msra.mxu0 0
  %1323 = vmatprep.subr.bf16.mxu0 0
  %1324 = vmatpush1.bf16.msra.mxu0 0
  %1325 = vmatprep.subr.bf16.mxu0 0
  %1326 = vmatpush1.bf16.msra.mxu0 0
  %1327 = vmatprep.subr.bf16.mxu0 0
  %1328 = vmatpush1.bf16.msra.mxu0 0
  %1329 = vmatprep.subr.bf16.mxu0 0
  %1330 = vmatpush1.bf16.msra.mxu0 0
  %1331 = vmatprep.subr.bf16.mxu0 0
  %1332 = vmatpush1.bf16.msra.mxu0 0
  %1333 = vmatprep.subr.bf16.mxu0 0
  %1334 = vmatpush1.bf16.msra.mxu0 0
  %1335 = vmatprep.subr.bf16.mxu0 0
  %1336 = vmatpush1.bf16.msra.mxu0 0
  %1337 = vmatprep.subr.bf16.mxu0 0
  %1338 = vmatpush1.bf16.msra.mxu0 0
  %1339 = vmatprep.subr.bf16.mxu0 0
  %1340 = vmatpush1.bf16.msra.mxu0 0
  %1341 = vmatprep.subr.bf16.mxu0 0
  %1342 = vmatpush1.bf16.msra.mxu0 0
  %1343 = vmatprep.mubr.bf16.mxu0 0
  %1344 = vmatmul.mubr.bf16.gmra.mrb[0].mxu0 %v1264
  %v1345 = vpop.f32.mrb[0].mxu0
  %v1346 = vadd.f32 0.0, %v1345
  %v1347 = vpop.f32.mrb[0].mxu0
  %v1348 = vpop.f32.mrb[0].mxu0
  %v1349 = vadd.f32 0.0, %v1348
  %v1350 = vpop.f32.mrb[0].mxu0
  %1351 = vmatprep.mubr.bf16.mxu0 0
  %1352 = vmatmul.mubr.bf16.gmra.mrb[0].mxu0 %v1267
  %v1353 = vpop.f32.mrb[0].mxu0
  %v1354 = vadd.f32 0.0, %v1353
  %v1355 = vpop.f32.mrb[0].mxu0
  %v1356 = vpop.f32.mrb[0].mxu0
  %v1357 = vadd.f32 0.0, %v1356
  %v1358 = vpop.f32.mrb[0].mxu0
  %1359 = vmatprep.mubr.bf16.mxu0 0
  %1360 = vmatmul.mubr.bf16.gmra.mrb[0].mxu0 %v1270
  %v1361 = vpop.f32.mrb[0].mxu0
  %v1362 = vadd.f32 0.0, %v1361
  %v1363 = vpop.f32.mrb[0].mxu0
  %v1364 = vpop.f32.mrb[0].mxu0
  %v1365 = vadd.f32 0.0, %v1364
  %v1366 = vpop.f32.mrb[0].mxu0
  %1367 = vmatprep.mubr.bf16.mxu0 0
  %1368 = vmatmul.mubr.bf16.gmra.mrb[0].mxu0 %v1273
  %v1369 = vpop.f32.mrb[0].mxu0
  %v1370 = vadd.f32 0.0, %v1369
  %v1371 = vpop.f32.mrb[0].mxu0
  %v1372 = vpop.f32.mrb[0].mxu0
  %v1373 = vadd.f32 0.0, %v1372
  %v1374 = vpop.f32.mrb[0].mxu0
  %1375 = vmatprep.mubr.bf16.mxu0 0
  %1376 = vmatmul.mubr.bf16.gmra.mrb[0].mxu0 %v1276
  %v1377 = vpop.f32.mrb[0].mxu0
  %v1378 = vadd.f32 0.0, %v1377
  %v1379 = vpop.f32.mrb[0].mxu0
  %v1380 = vpop.f32.mrb[0].mxu0
  %v1381 = vadd.f32 0.0, %v1380
  %v1382 = vpop.f32.mrb[0].mxu0
  %1383 = vmatprep.mubr.bf16.mxu0 0
  %1384 = vmatmul.mubr.bf16.gmra.mrb[0].mxu0 %v1279
  %v1385 = vpop.f32.mrb[0].mxu0
  %v1386 = vadd.f32 0.0, %v1385
  %v1387 = vpop.f32.mrb[0].mxu0
  %v1388 = vpop.f32.mrb[0].mxu0
  %v1389 = vadd.f32 0.0, %v1388
  %v1390 = vpop.f32.mrb[0].mxu0
  %1391 = vmatprep.mubr.bf16.mxu0 0
  %1392 = vmatmul.mubr.bf16.gmra.mrb[0].mxu0 %v1282
  %v1393 = vpop.f32.mrb[0].mxu0
  %v1394 = vadd.f32 0.0, %v1393
  %v1395 = vpop.f32.mrb[0].mxu0
  %v1396 = vpop.f32.mrb[0].mxu0
  %v1397 = vadd.f32 0.0, %v1396
  %v1398 = vpop.f32.mrb[0].mxu0
  %1399 = vmatprep.mubr.bf16.mxu0 0
  %1400 = vmatmul.mubr.bf16.gmra.mrb[0].mxu0 %v1285
  %v1401 = vpop.f32.mrb[0].mxu0
  %v1402 = vadd.f32 0.0, %v1401
  %v1403 = vpop.f32.mrb[0].mxu0
  %v1404 = vpop.f32.mrb[0].mxu0
  %v1405 = vadd.f32 0.0, %v1404
  %v1406 = vpop.f32.mrb[0].mxu0
  %1407 = vmatprep.mubr.bf16.mxu0 0
  %1408 = vmatmul.mubr.bf16.gmra.mrb[0].mxu0 %v1288
  %v1409 = vpop.f32.mrb[0].mxu0
  %v1410 = vadd.f32 0.0, %v1409
  %v1411 = vpop.f32.mrb[0].mxu0
  %v1412 = vpop.f32.mrb[0].mxu0
  %v1413 = vadd.f32 0.0, %v1412
  %v1414 = vpop.f32.mrb[0].mxu0
  %1415 = vmatprep.mubr.bf16.mxu0 0
  %1416 = vmatmul.mubr.bf16.gmra.mrb[0].mxu0 %v1291
  %v1417 = vpop.f32.mrb[0].mxu0
  %v1418 = vadd.f32 0.0, %v1417
  %v1419 = vpop.f32.mrb[0].mxu0
  %v1420 = vpop.f32.mrb[0].mxu0
  %v1421 = vadd.f32 0.0, %v1420
  %v1422 = vpop.f32.mrb[0].mxu0
  %1423 = vmatprep.mubr.bf16.mxu0 0
  %1424 = vmatmul.mubr.bf16.gmra.mrb[0].mxu0 %v1294
  %v1425 = vpop.f32.mrb[0].mxu0
  %v1426 = vadd.f32 0.0, %v1425
  %v1427 = vpop.f32.mrb[0].mxu0
  %v1428 = vpop.f32.mrb[0].mxu0
  %v1429 = vadd.f32 0.0, %v1428
  %v1430 = vpop.f32.mrb[0].mxu0
  %1431 = vmatprep.mubr.bf16.mxu0 0
  %1432 = vmatmul.mubr.bf16.gmra.mrb[0].mxu0 %v1297
  %v1433 = vpop.f32.mrb[0].mxu0
  %v1434 = vadd.f32 0.0, %v1433
  %v1435 = vpop.f32.mrb[0].mxu0
  %v1436 = vpop.f32.mrb[0].mxu0
  %v1437 = vadd.f32 0.0, %v1436
  %v1438 = vpop.f32.mrb[0].mxu0
  %1439 = vmatprep.mubr.bf16.mxu0 0
  %1440 = vmatmul.mubr.bf16.gmra.mrb[0].mxu0 %v1300
  %v1441 = vpop.f32.mrb[0].mxu0
  %v1442 = vadd.f32 0.0, %v1441
  %v1443 = vpop.f32.mrb[0].mxu0
  %v1444 = vpop.f32.mrb[0].mxu0
  %v1445 = vadd.f32 0.0, %v1444
  %v1446 = vpop.f32.mrb[0].mxu0
  %1447 = vmatprep.mubr.bf16.mxu0 0
  %1448 = vmatmul.mubr.bf16.gmra.mrb[0].mxu0 %v1303
  %v1449 = vpop.f32.mrb[0].mxu0
  %v1450 = vadd.f32 0.0, %v1449
  %v1451 = vpop.f32.mrb[0].mxu0
  %v1452 = vpop.f32.mrb[0].mxu0
  %v1453 = vadd.f32 0.0, %v1452
  %v1454 = vpop.f32.mrb[0].mxu0
  %1455 = vmatprep.mubr.bf16.mxu0 0
  %1456 = vmatmul.mubr.bf16.gmra.mrb[0].mxu0 %v1306
  %v1457 = vpop.f32.mrb[0].mxu0
  %v1458 = vadd.f32 0.0, %v1457
  %v1459 = vpop.f32.mrb[0].mxu0
  %v1460 = vpop.f32.mrb[0].mxu0
  %v1461 = vadd.f32 0.0, %v1460
  %v1462 = vpop.f32.mrb[0].mxu0
  %1463 = vmatprep.mubr.bf16.mxu0 0
  %1464 = vmatmul.mubr.bf16.gmra.mrb[0].mxu0 %v1309
  %v1465 = vpop.f32.mrb[0].mxu0
  %v1466 = vadd.f32 0.0, %v1465
  %v1467 = vpop.f32.mrb[0].mxu0
  %v1468 = vpop.f32.mrb[0].mxu0
  %v1469 = vadd.f32 0.0, %v1468
  %v1470 = vpop.f32.mrb[0].mxu0
  %1471 = vdwg.mxu0
  %v1472 = vadd.f32 %v1165, %v1346
  %v1473 = vadd.f32 %v1166, %v1349
  %v1474 = vadd.f32 %v1167, %v1354
  %v1475 = vadd.f32 %v1168, %v1357
  %v1476 = vadd.f32 %v1169, %v1362
  %v1477 = vadd.f32 %v1170, %v1365
  %v1478 = vadd.f32 %v1171, %v1370
  %v1479 = vadd.f32 %v1172, %v1373
  %v1480 = vadd.f32 %v1173, %v1378
  %v1481 = vadd.f32 %v1174, %v1381
  %v1482 = vadd.f32 %v1175, %v1386
  %v1483 = vadd.f32 %v1176, %v1389
  %v1484 = vadd.f32 %v1177, %v1394
  %v1485 = vadd.f32 %v1178, %v1397
  %v1486 = vadd.f32 %v1179, %v1402
  %v1487 = vadd.f32 %v1180, %v1405
  %v1488 = vadd.f32 %v1181, %v1410
  %v1489 = vadd.f32 %v1182, %v1413
  %v1490 = vadd.f32 %v1183, %v1418
  %v1491 = vadd.f32 %v1184, %v1421
  %v1492 = vadd.f32 %v1185, %v1426
  %v1493 = vadd.f32 %v1186, %v1429
  %v1494 = vadd.f32 %v1187, %v1434
  %v1495 = vadd.f32 %v1188, %v1437
  %v1496 = vadd.f32 %v1189, %v1442
  %v1497 = vadd.f32 %v1190, %v1445
  %v1498 = vadd.f32 %v1191, %v1450
  %v1499 = vadd.f32 %v1192, %v1453
  %v1500 = vadd.f32 %v1193, %v1458
  %v1501 = vadd.f32 %v1194, %v1461
  %v1502 = vadd.f32 %v1195, %v1466
  %v1503 = vadd.f32 %v1196, %v1469
  %v1504 = vld [vmem:[%s890 + $0x1] sm:$0xff]
  %v1505 = vld [vmem:[%s890 + $0x11] sm:$0xff]
  %v1506 = vld [vmem:[%s890 + $0x21] sm:$0xff]
  %v1507 = vld [vmem:[%s890 + $0x31] sm:$0xff]
  %v1508 = vld [vmem:[%s890 + $0x41] sm:$0xff]
  %v1509 = vld [vmem:[%s890 + $0x51] sm:$0xff]
  %v1510 = vld [vmem:[%s890 + $0x61] sm:$0xff]
  %v1511 = vld [vmem:[%s890 + $0x71] sm:$0xff]
  %v1512 = vld [vmem:[%s890 + $0x81] sm:$0xff]
  %v1513 = vld [vmem:[%s890 + $0x91] sm:$0xff]
  %v1514 = vld [vmem:[%s890 + $0xa1] sm:$0xff]
  %v1515 = vld [vmem:[%s890 + $0xb1] sm:$0xff]
  %v1516 = vld [vmem:[%s890 + $0xc1] sm:$0xff]
  %v1517 = vld [vmem:[%s890 + $0xd1] sm:$0xff]
  %v1518 = vld [vmem:[%s890 + $0xe1] sm:$0xff]
  %v1519 = vld [vmem:[%s890 + $0xf1] sm:$0xff]
  %v1520 = vld [vmem:[%s890 + $0x121] sm:$0xff]
  %v1521 = vld [vmem:[%s890 + $0x131] sm:$0xff]
  %v1522 = vld [vmem:[%s890 + $0x141] sm:$0xff]
  %v1523 = vld [vmem:[%s890 + $0x151] sm:$0xff]
  %v1524 = vld [vmem:[%s890 + $0x161] sm:$0xff]
  %v1525 = vld [vmem:[%s890 + $0x171] sm:$0xff]
  %v1526 = vld [vmem:[%s890 + $0x181] sm:$0xff]
  %v1527 = vld [vmem:[%s890 + $0x191] sm:$0xff]
  %v1528 = vld [vmem:[%s890 + $0x1a1] sm:$0xff]
  %v1529 = vld [vmem:[%s890 + $0x1b1] sm:$0xff]
  %v1530 = vld [vmem:[%s890 + $0x1c1] sm:$0xff]
  %v1531 = vld [vmem:[%s890 + $0x1d1] sm:$0xff]
  %v1532 = vld [vmem:[%s890 + $0x1e1] sm:$0xff]
  %v1533 = vld [vmem:[%s890 + $0x1f1] sm:$0xff]
  %v1534 = vld [vmem:[%s890 + $0x201] sm:$0xff]
  %v1535 = vld [vmem:[%s890 + $0x211] sm:$0xff]
  %v1536 = vpack.c.bf16 %v1505, %v1504
  %v1537 = vpack.c.bf16 %v1507, %v1506
  %v1538 = vpack.c.bf16 %v1509, %v1508
  %v1539 = vpack.c.bf16 %v1511, %v1510
  %v1540 = vpack.c.bf16 %v1513, %v1512
  %v1541 = vpack.c.bf16 %v1515, %v1514
  %v1542 = vpack.c.bf16 %v1517, %v1516
  %v1543 = vpack.c.bf16 %v1519, %v1518
  %v1544 = vpack.c.bf16 %v1521, %v1520
  %v1545 = vpack.c.bf16 %v1523, %v1522
  %v1546 = vpack.c.bf16 %v1525, %v1524
  %v1547 = vpack.c.bf16 %v1527, %v1526
  %v1548 = vpack.c.bf16 %v1529, %v1528
  %v1549 = vpack.c.bf16 %v1531, %v1530
  %v1550 = vpack.c.bf16 %v1533, %v1532
  %v1551 = vpack.c.bf16 %v1535, %v1534
  %s1552 = scalar_lea.vmem %s2, 80
  %v1553 = vld [vmem:[%s1552] sm:$0xf]
  %v1554 = vld [vmem:[%s1552 + $0x4] sm:$0xf]
  %v1555 = vld [vmem:[%s1552 + $0x8] sm:$0xf]
  %v1556 = vld [vmem:[%s1552 + $0xc] sm:$0xf]
  %v1561 = vunpack.c.l.b16 %v1553
  %v1562 = vunpack.c.l.b16 %v1554
  %v1563 = vunpack.c.l.b16 %v1555
  %v1564 = vunpack.c.l.b16 %v1556
  %v1565 = vpack.c.b16 %v1562, %v1561
  %v1566 = vpack.c.b16 %v1564, %v1563
  %v1570 = vsel %vm153, %v1536, 0
  %v1573 = vsel %vm153, %v1537, 0
  %v1576 = vsel %vm153, %v1538, 0
  %v1579 = vsel %vm153, %v1539, 0
  %v1582 = vsel %vm153, %v1540, 0
  %v1585 = vsel %vm153, %v1541, 0
  %v1588 = vsel %vm153, %v1542, 0
  %v1591 = vsel %vm153, %v1543, 0
  %v1594 = vsel %vm153, %v1544, 0
  %v1597 = vsel %vm153, %v1545, 0
  %v1600 = vsel %vm153, %v1546, 0
  %v1603 = vsel %vm153, %v1547, 0
  %v1606 = vsel %vm153, %v1548, 0
  %v1609 = vsel %vm153, %v1549, 0
  %v1612 = vsel %vm153, %v1550, 0
  %v1615 = vsel %vm153, %v1551, 0
  %1617 = vmatprep.subr.bf16.mxu0 0
  %1618 = vmatpush1.bf16.msra.mxu0 %v1565
  %1619 = vmatprep.subr.bf16.mxu0 0
  %1620 = vmatpush1.bf16.msra.mxu0 %v1566
  %1621 = vmatprep.subr.bf16.mxu0 0
  %1622 = vmatpush1.bf16.msra.mxu0 0
  %1623 = vmatprep.subr.bf16.mxu0 0
  %1624 = vmatpush1.bf16.msra.mxu0 0
  %1625 = vmatprep.subr.bf16.mxu0 0
  %1626 = vmatpush1.bf16.msra.mxu0 0
  %1627 = vmatprep.subr.bf16.mxu0 0
  %1628 = vmatpush1.bf16.msra.mxu0 0
  %1629 = vmatprep.subr.bf16.mxu0 0
  %1630 = vmatpush1.bf16.msra.mxu0 0
  %1631 = vmatprep.subr.bf16.mxu0 0
  %1632 = vmatpush1.bf16.msra.mxu0 0
  %1633 = vmatprep.subr.bf16.mxu0 0
  %1634 = vmatpush1.bf16.msra.mxu0 0
  %1635 = vmatprep.subr.bf16.mxu0 0
  %1636 = vmatpush1.bf16.msra.mxu0 0
  %1637 = vmatprep.subr.bf16.mxu0 0
  %1638 = vmatpush1.bf16.msra.mxu0 0
  %1639 = vmatprep.subr.bf16.mxu0 0
  %1640 = vmatpush1.bf16.msra.mxu0 0
  %1641 = vmatprep.subr.bf16.mxu0 0
  %1642 = vmatpush1.bf16.msra.mxu0 0
  %1643 = vmatprep.subr.bf16.mxu0 0
  %1644 = vmatpush1.bf16.msra.mxu0 0
  %1645 = vmatprep.subr.bf16.mxu0 0
  %1646 = vmatpush1.bf16.msra.mxu0 0
  %1647 = vmatprep.subr.bf16.mxu0 0
  %1648 = vmatpush1.bf16.msra.mxu0 0
  %1649 = vmatprep.mubr.bf16.mxu0 0
  %1650 = vmatmul.mubr.bf16.gmra.mrb[0].mxu0 %v1570
  %v1651 = vpop.f32.mrb[0].mxu0
  %v1652 = vadd.f32 0.0, %v1651
  %v1653 = vpop.f32.mrb[0].mxu0
  %v1654 = vpop.f32.mrb[0].mxu0
  %v1655 = vadd.f32 0.0, %v1654
  %v1656 = vpop.f32.mrb[0].mxu0
  %1657 = vmatprep.mubr.bf16.mxu0 0
  %1658 = vmatmul.mubr.bf16.gmra.mrb[0].mxu0 %v1573
  %v1659 = vpop.f32.mrb[0].mxu0
  %v1660 = vadd.f32 0.0, %v1659
  %v1661 = vpop.f32.mrb[0].mxu0
  %v1662 = vpop.f32.mrb[0].mxu0
  %v1663 = vadd.f32 0.0, %v1662
  %v1664 = vpop.f32.mrb[0].mxu0
  %1665 = vmatprep.mubr.bf16.mxu0 0
  %1666 = vmatmul.mubr.bf16.gmra.mrb[0].mxu0 %v1576
  %v1667 = vpop.f32.mrb[0].mxu0
  %v1668 = vadd.f32 0.0, %v1667
  %v1669 = vpop.f32.mrb[0].mxu0
  %v1670 = vpop.f32.mrb[0].mxu0
  %v1671 = vadd.f32 0.0, %v1670
  %v1672 = vpop.f32.mrb[0].mxu0
  %1673 = vmatprep.mubr.bf16.mxu0 0
  %1674 = vmatmul.mubr.bf16.gmra.mrb[0].mxu0 %v1579
  %v1675 = vpop.f32.mrb[0].mxu0
  %v1676 = vadd.f32 0.0, %v1675
  %v1677 = vpop.f32.mrb[0].mxu0
  %v1678 = vpop.f32.mrb[0].mxu0
  %v1679 = vadd.f32 0.0, %v1678
  %v1680 = vpop.f32.mrb[0].mxu0
  %1681 = vmatprep.mubr.bf16.mxu0 0
  %1682 = vmatmul.mubr.bf16.gmra.mrb[0].mxu0 %v1582
  %v1683 = vpop.f32.mrb[0].mxu0
  %v1684 = vadd.f32 0.0, %v1683
  %v1685 = vpop.f32.mrb[0].mxu0
  %v1686 = vpop.f32.mrb[0].mxu0
  %v1687 = vadd.f32 0.0, %v1686
  %v1688 = vpop.f32.mrb[0].mxu0
  %1689 = vmatprep.mubr.bf16.mxu0 0
  %1690 = vmatmul.mubr.bf16.gmra.mrb[0].mxu0 %v1585
  %v1691 = vpop.f32.mrb[0].mxu0
  %v1692 = vadd.f32 0.0, %v1691
  %v1693 = vpop.f32.mrb[0].mxu0
  %v1694 = vpop.f32.mrb[0].mxu0
  %v1695 = vadd.f32 0.0, %v1694
  %v1696 = vpop.f32.mrb[0].mxu0
  %1697 = vmatprep.mubr.bf16.mxu0 0
  %1698 = vmatmul.mubr.bf16.gmra.mrb[0].mxu0 %v1588
  %v1699 = vpop.f32.mrb[0].mxu0
  %v1700 = vadd.f32 0.0, %v1699
  %v1701 = vpop.f32.mrb[0].mxu0
  %v1702 = vpop.f32.mrb[0].mxu0
  %v1703 = vadd.f32 0.0, %v1702
  %v1704 = vpop.f32.mrb[0].mxu0
  %1705 = vmatprep.mubr.bf16.mxu0 0
  %1706 = vmatmul.mubr.bf16.gmra.mrb[0].mxu0 %v1591
  %v1707 = vpop.f32.mrb[0].mxu0
  %v1708 = vadd.f32 0.0, %v1707
  %v1709 = vpop.f32.mrb[0].mxu0
  %v1710 = vpop.f32.mrb[0].mxu0
  %v1711 = vadd.f32 0.0, %v1710
  %v1712 = vpop.f32.mrb[0].mxu0
  %1713 = vmatprep.mubr.bf16.mxu0 0
  %1714 = vmatmul.mubr.bf16.gmra.mrb[0].mxu0 %v1594
  %v1715 = vpop.f32.mrb[0].mxu0
  %v1716 = vadd.f32 0.0, %v1715
  %v1717 = vpop.f32.mrb[0].mxu0
  %v1718 = vpop.f32.mrb[0].mxu0
  %v1719 = vadd.f32 0.0, %v1718
  %v1720 = vpop.f32.mrb[0].mxu0
  %1721 = vmatprep.mubr.bf16.mxu0 0
  %1722 = vmatmul.mubr.bf16.gmra.mrb[0].mxu0 %v1597
  %v1723 = vpop.f32.mrb[0].mxu0
  %v1724 = vadd.f32 0.0, %v1723
  %v1725 = vpop.f32.mrb[0].mxu0
  %v1726 = vpop.f32.mrb[0].mxu0
  %v1727 = vadd.f32 0.0, %v1726
  %v1728 = vpop.f32.mrb[0].mxu0
  %1729 = vmatprep.mubr.bf16.mxu0 0
  %1730 = vmatmul.mubr.bf16.gmra.mrb[0].mxu0 %v1600
  %v1731 = vpop.f32.mrb[0].mxu0
  %v1732 = vadd.f32 0.0, %v1731
  %v1733 = vpop.f32.mrb[0].mxu0
  %v1734 = vpop.f32.mrb[0].mxu0
  %v1735 = vadd.f32 0.0, %v1734
  %v1736 = vpop.f32.mrb[0].mxu0
  %1737 = vmatprep.mubr.bf16.mxu0 0
  %1738 = vmatmul.mubr.bf16.gmra.mrb[0].mxu0 %v1603
  %v1739 = vpop.f32.mrb[0].mxu0
  %v1740 = vadd.f32 0.0, %v1739
  %v1741 = vpop.f32.mrb[0].mxu0
  %v1742 = vpop.f32.mrb[0].mxu0
  %v1743 = vadd.f32 0.0, %v1742
  %v1744 = vpop.f32.mrb[0].mxu0
  %1745 = vmatprep.mubr.bf16.mxu0 0
  %1746 = vmatmul.mubr.bf16.gmra.mrb[0].mxu0 %v1606
  %v1747 = vpop.f32.mrb[0].mxu0
  %v1748 = vadd.f32 0.0, %v1747
  %v1749 = vpop.f32.mrb[0].mxu0
  %v1750 = vpop.f32.mrb[0].mxu0
  %v1751 = vadd.f32 0.0, %v1750
  %v1752 = vpop.f32.mrb[0].mxu0
  %1753 = vmatprep.mubr.bf16.mxu0 0
  %1754 = vmatmul.mubr.bf16.gmra.mrb[0].mxu0 %v1609
  %v1755 = vpop.f32.mrb[0].mxu0
  %v1756 = vadd.f32 0.0, %v1755
  %v1757 = vpop.f32.mrb[0].mxu0
  %v1758 = vpop.f32.mrb[0].mxu0
  %v1759 = vadd.f32 0.0, %v1758
  %v1760 = vpop.f32.mrb[0].mxu0
  %1761 = vmatprep.mubr.bf16.mxu0 0
  %1762 = vmatmul.mubr.bf16.gmra.mrb[0].mxu0 %v1612
  %v1763 = vpop.f32.mrb[0].mxu0
  %v1764 = vadd.f32 0.0, %v1763
  %v1765 = vpop.f32.mrb[0].mxu0
  %v1766 = vpop.f32.mrb[0].mxu0
  %v1767 = vadd.f32 0.0, %v1766
  %v1768 = vpop.f32.mrb[0].mxu0
  %1769 = vmatprep.mubr.bf16.mxu0 0
  %1770 = vmatmul.mubr.bf16.gmra.mrb[0].mxu0 %v1615
  %v1771 = vpop.f32.mrb[0].mxu0
  %v1772 = vadd.f32 0.0, %v1771
  %v1773 = vpop.f32.mrb[0].mxu0
  %v1774 = vpop.f32.mrb[0].mxu0
  %v1775 = vadd.f32 0.0, %v1774
  %v1776 = vpop.f32.mrb[0].mxu0
  %1777 = vdwg.mxu0
  %v1778 = vadd.f32 %v1472, %v1652
  %v1779 = vadd.f32 %v1473, %v1655
  %v1780 = vadd.f32 %v1474, %v1660
  %v1781 = vadd.f32 %v1475, %v1663
  %v1782 = vadd.f32 %v1476, %v1668
  %v1783 = vadd.f32 %v1477, %v1671
  %v1784 = vadd.f32 %v1478, %v1676
  %v1785 = vadd.f32 %v1479, %v1679
  %v1786 = vadd.f32 %v1480, %v1684
  %v1787 = vadd.f32 %v1481, %v1687
  %v1788 = vadd.f32 %v1482, %v1692
  %v1789 = vadd.f32 %v1483, %v1695
  %v1790 = vadd.f32 %v1484, %v1700
  %v1791 = vadd.f32 %v1485, %v1703
  %v1792 = vadd.f32 %v1486, %v1708
  %v1793 = vadd.f32 %v1487, %v1711
  %v1794 = vadd.f32 %v1488, %v1716
  %v1795 = vadd.f32 %v1489, %v1719
  %v1796 = vadd.f32 %v1490, %v1724
  %v1797 = vadd.f32 %v1491, %v1727
  %v1798 = vadd.f32 %v1492, %v1732
  %v1799 = vadd.f32 %v1493, %v1735
  %v1800 = vadd.f32 %v1494, %v1740
  %v1801 = vadd.f32 %v1495, %v1743
  %v1802 = vadd.f32 %v1496, %v1748
  %v1803 = vadd.f32 %v1497, %v1751
  %v1804 = vadd.f32 %v1498, %v1756
  %v1805 = vadd.f32 %v1499, %v1759
  %v1806 = vadd.f32 %v1500, %v1764
  %v1807 = vadd.f32 %v1501, %v1767
  %v1808 = vadd.f32 %v1502, %v1772
  %v1809 = vadd.f32 %v1503, %v1775
  %s1810 = scalar_lea.vmem %s0, 32
  %v1811 = vld [vmem:[%s1810] sm:$0xff]
  %v1812 = vld [vmem:[%s1810 + $0x10] sm:$0xff]
  %v1813 = vld [vmem:[%s1810 + $0x20] sm:$0xff]
  %v1814 = vld [vmem:[%s1810 + $0x30] sm:$0xff]
  %v1815 = vld [vmem:[%s1810 + $0x40] sm:$0xff]
  %v1816 = vld [vmem:[%s1810 + $0x50] sm:$0xff]
  %v1817 = vld [vmem:[%s1810 + $0x60] sm:$0xff]
  %v1818 = vld [vmem:[%s1810 + $0x70] sm:$0xff]
  %v1819 = vld [vmem:[%s1810 + $0x80] sm:$0xff]
  %v1820 = vld [vmem:[%s1810 + $0x90] sm:$0xff]
  %v1821 = vld [vmem:[%s1810 + $0xa0] sm:$0xff]
  %v1822 = vld [vmem:[%s1810 + $0xb0] sm:$0xff]
  %v1823 = vld [vmem:[%s1810 + $0xc0] sm:$0xff]
  %v1824 = vld [vmem:[%s1810 + $0xd0] sm:$0xff]
  %v1825 = vld [vmem:[%s1810 + $0xe0] sm:$0xff]
  %v1826 = vld [vmem:[%s1810 + $0xf0] sm:$0xff]
  %v1827 = vld [vmem:[%s1810 + $0x120] sm:$0xff]
  %v1828 = vld [vmem:[%s1810 + $0x130] sm:$0xff]
  %v1829 = vld [vmem:[%s1810 + $0x140] sm:$0xff]
  %v1830 = vld [vmem:[%s1810 + $0x150] sm:$0xff]
  %v1831 = vld [vmem:[%s1810 + $0x160] sm:$0xff]
  %v1832 = vld [vmem:[%s1810 + $0x170] sm:$0xff]
  %v1833 = vld [vmem:[%s1810 + $0x180] sm:$0xff]
  %v1834 = vld [vmem:[%s1810 + $0x190] sm:$0xff]
  %v1835 = vld [vmem:[%s1810 + $0x1a0] sm:$0xff]
  %v1836 = vld [vmem:[%s1810 + $0x1b0] sm:$0xff]
  %v1837 = vld [vmem:[%s1810 + $0x1c0] sm:$0xff]
  %v1838 = vld [vmem:[%s1810 + $0x1d0] sm:$0xff]
  %v1839 = vld [vmem:[%s1810 + $0x1e0] sm:$0xff]
  %v1840 = vld [vmem:[%s1810 + $0x1f0] sm:$0xff]
  %v1841 = vld [vmem:[%s1810 + $0x200] sm:$0xff]
  %v1842 = vld [vmem:[%s1810 + $0x210] sm:$0xff]
  %v1843 = vpack.c.bf16 %v1812, %v1811
  %v1844 = vpack.c.bf16 %v1814, %v1813
  %v1845 = vpack.c.bf16 %v1816, %v1815
  %v1846 = vpack.c.bf16 %v1818, %v1817
  %v1847 = vpack.c.bf16 %v1820, %v1819
  %v1848 = vpack.c.bf16 %v1822, %v1821
  %v1849 = vpack.c.bf16 %v1824, %v1823
  %v1850 = vpack.c.bf16 %v1826, %v1825
  %v1851 = vpack.c.bf16 %v1828, %v1827
  %v1852 = vpack.c.bf16 %v1830, %v1829
  %v1853 = vpack.c.bf16 %v1832, %v1831
  %v1854 = vpack.c.bf16 %v1834, %v1833
  %v1855 = vpack.c.bf16 %v1836, %v1835
  %v1856 = vpack.c.bf16 %v1838, %v1837
  %v1857 = vpack.c.bf16 %v1840, %v1839
  %v1858 = vpack.c.bf16 %v1842, %v1841
  %s1859 = scalar_lea.vmem %s2, 96
  %v1860 = vld [vmem:[%s1859] sm:$0xf]
  %v1861 = vld [vmem:[%s1859 + $0x4] sm:$0xf]
  %v1862 = vld [vmem:[%s1859 + $0x8] sm:$0xf]
  %v1863 = vld [vmem:[%s1859 + $0xc] sm:$0xf]
  %v1868 = vunpack.c.l.b16 %v1860
  %v1869 = vunpack.c.l.b16 %v1861
  %v1870 = vunpack.c.l.b16 %v1862
  %v1871 = vunpack.c.l.b16 %v1863
  %v1872 = vpack.c.b16 %v1869, %v1868
  %v1873 = vpack.c.b16 %v1871, %v1870
  %v1877 = vsel %vm153, %v1843, 0
  %v1880 = vsel %vm153, %v1844, 0
  %v1883 = vsel %vm153, %v1845, 0
  %v1886 = vsel %vm153, %v1846, 0
  %v1889 = vsel %vm153, %v1847, 0
  %v1892 = vsel %vm153, %v1848, 0
  %v1895 = vsel %vm153, %v1849, 0
  %v1898 = vsel %vm153, %v1850, 0
  %v1901 = vsel %vm153, %v1851, 0
  %v1904 = vsel %vm153, %v1852, 0
  %v1907 = vsel %vm153, %v1853, 0
  %v1910 = vsel %vm153, %v1854, 0
  %v1913 = vsel %vm153, %v1855, 0
  %v1916 = vsel %vm153, %v1856, 0
  %v1919 = vsel %vm153, %v1857, 0
  %v1922 = vsel %vm153, %v1858, 0
  %1924 = vmatprep.subr.bf16.mxu0 0
  %1925 = vmatpush1.bf16.msra.mxu0 %v1872
  %1926 = vmatprep.subr.bf16.mxu0 0
  %1927 = vmatpush1.bf16.msra.mxu0 %v1873
  %1928 = vmatprep.subr.bf16.mxu0 0
  %1929 = vmatpush1.bf16.msra.mxu0 0
  %1930 = vmatprep.subr.bf16.mxu0 0
  %1931 = vmatpush1.bf16.msra.mxu0 0
  %1932 = vmatprep.subr.bf16.mxu0 0
  %1933 = vmatpush1.bf16.msra.mxu0 0
  %1934 = vmatprep.subr.bf16.mxu0 0
  %1935 = vmatpush1.bf16.msra.mxu0 0
  %1936 = vmatprep.subr.bf16.mxu0 0
  %1937 = vmatpush1.bf16.msra.mxu0 0
  %1938 = vmatprep.subr.bf16.mxu0 0
  %1939 = vmatpush1.bf16.msra.mxu0 0
  %1940 = vmatprep.subr.bf16.mxu0 0
  %1941 = vmatpush1.bf16.msra.mxu0 0
  %1942 = vmatprep.subr.bf16.mxu0 0
  %1943 = vmatpush1.bf16.msra.mxu0 0
  %1944 = vmatprep.subr.bf16.mxu0 0
  %1945 = vmatpush1.bf16.msra.mxu0 0
  %1946 = vmatprep.subr.bf16.mxu0 0
  %1947 = vmatpush1.bf16.msra.mxu0 0
  %1948 = vmatprep.subr.bf16.mxu0 0
  %1949 = vmatpush1.bf16.msra.mxu0 0
  %1950 = vmatprep.subr.bf16.mxu0 0
  %1951 = vmatpush1.bf16.msra.mxu0 0
  %1952 = vmatprep.subr.bf16.mxu0 0
  %1953 = vmatpush1.bf16.msra.mxu0 0
  %1954 = vmatprep.subr.bf16.mxu0 0
  %1955 = vmatpush1.bf16.msra.mxu0 0
  %1956 = vmatprep.mubr.bf16.mxu0 0
  %1957 = vmatmul.mubr.bf16.gmra.mrb[0].mxu0 %v1877
  %v1958 = vpop.f32.mrb[0].mxu0
  %v1959 = vadd.f32 0.0, %v1958
  %v1960 = vpop.f32.mrb[0].mxu0
  %v1961 = vpop.f32.mrb[0].mxu0
  %v1962 = vadd.f32 0.0, %v1961
  %v1963 = vpop.f32.mrb[0].mxu0
  %1964 = vmatprep.mubr.bf16.mxu0 0
  %1965 = vmatmul.mubr.bf16.gmra.mrb[0].mxu0 %v1880
  %v1966 = vpop.f32.mrb[0].mxu0
  %v1967 = vadd.f32 0.0, %v1966
  %v1968 = vpop.f32.mrb[0].mxu0
  %v1969 = vpop.f32.mrb[0].mxu0
  %v1970 = vadd.f32 0.0, %v1969
  %v1971 = vpop.f32.mrb[0].mxu0
  %1972 = vmatprep.mubr.bf16.mxu0 0
  %1973 = vmatmul.mubr.bf16.gmra.mrb[0].mxu0 %v1883
  %v1974 = vpop.f32.mrb[0].mxu0
  %v1975 = vadd.f32 0.0, %v1974
  %v1976 = vpop.f32.mrb[0].mxu0
  %v1977 = vpop.f32.mrb[0].mxu0
  %v1978 = vadd.f32 0.0, %v1977
  %v1979 = vpop.f32.mrb[0].mxu0
  %1980 = vmatprep.mubr.bf16.mxu0 0
  %1981 = vmatmul.mubr.bf16.gmra.mrb[0].mxu0 %v1886
  %v1982 = vpop.f32.mrb[0].mxu0
  %v1983 = vadd.f32 0.0, %v1982
  %v1984 = vpop.f32.mrb[0].mxu0
  %v1985 = vpop.f32.mrb[0].mxu0
  %v1986 = vadd.f32 0.0, %v1985
  %v1987 = vpop.f32.mrb[0].mxu0
  %1988 = vmatprep.mubr.bf16.mxu0 0
  %1989 = vmatmul.mubr.bf16.gmra.mrb[0].mxu0 %v1889
  %v1990 = vpop.f32.mrb[0].mxu0
  %v1991 = vadd.f32 0.0, %v1990
  %v1992 = vpop.f32.mrb[0].mxu0
  %v1993 = vpop.f32.mrb[0].mxu0
  %v1994 = vadd.f32 0.0, %v1993
  %v1995 = vpop.f32.mrb[0].mxu0
  %1996 = vmatprep.mubr.bf16.mxu0 0
  %1997 = vmatmul.mubr.bf16.gmra.mrb[0].mxu0 %v1892
  %v1998 = vpop.f32.mrb[0].mxu0
  %v1999 = vadd.f32 0.0, %v1998
  %v2000 = vpop.f32.mrb[0].mxu0
  %v2001 = vpop.f32.mrb[0].mxu0
  %v2002 = vadd.f32 0.0, %v2001
  %v2003 = vpop.f32.mrb[0].mxu0
  %2004 = vmatprep.mubr.bf16.mxu0 0
  %2005 = vmatmul.mubr.bf16.gmra.mrb[0].mxu0 %v1895
  %v2006 = vpop.f32.mrb[0].mxu0
  %v2007 = vadd.f32 0.0, %v2006
  %v2008 = vpop.f32.mrb[0].mxu0
  %v2009 = vpop.f32.mrb[0].mxu0
  %v2010 = vadd.f32 0.0, %v2009
  %v2011 = vpop.f32.mrb[0].mxu0
  %2012 = vmatprep.mubr.bf16.mxu0 0
  %2013 = vmatmul.mubr.bf16.gmra.mrb[0].mxu0 %v1898
  %v2014 = vpop.f32.mrb[0].mxu0
  %v2015 = vadd.f32 0.0, %v2014
  %v2016 = vpop.f32.mrb[0].mxu0
  %v2017 = vpop.f32.mrb[0].mxu0
  %v2018 = vadd.f32 0.0, %v2017
  %v2019 = vpop.f32.mrb[0].mxu0
  %2020 = vmatprep.mubr.bf16.mxu0 0
  %2021 = vmatmul.mubr.bf16.gmra.mrb[0].mxu0 %v1901
  %v2022 = vpop.f32.mrb[0].mxu0
  %v2023 = vadd.f32 0.0, %v2022
  %v2024 = vpop.f32.mrb[0].mxu0
  %v2025 = vpop.f32.mrb[0].mxu0
  %v2026 = vadd.f32 0.0, %v2025
  %v2027 = vpop.f32.mrb[0].mxu0
  %2028 = vmatprep.mubr.bf16.mxu0 0
  %2029 = vmatmul.mubr.bf16.gmra.mrb[0].mxu0 %v1904
  %v2030 = vpop.f32.mrb[0].mxu0
  %v2031 = vadd.f32 0.0, %v2030
  %v2032 = vpop.f32.mrb[0].mxu0
  %v2033 = vpop.f32.mrb[0].mxu0
  %v2034 = vadd.f32 0.0, %v2033
  %v2035 = vpop.f32.mrb[0].mxu0
  %2036 = vmatprep.mubr.bf16.mxu0 0
  %2037 = vmatmul.mubr.bf16.gmra.mrb[0].mxu0 %v1907
  %v2038 = vpop.f32.mrb[0].mxu0
  %v2039 = vadd.f32 0.0, %v2038
  %v2040 = vpop.f32.mrb[0].mxu0
  %v2041 = vpop.f32.mrb[0].mxu0
  %v2042 = vadd.f32 0.0, %v2041
  %v2043 = vpop.f32.mrb[0].mxu0
  %2044 = vmatprep.mubr.bf16.mxu0 0
  %2045 = vmatmul.mubr.bf16.gmra.mrb[0].mxu0 %v1910
  %v2046 = vpop.f32.mrb[0].mxu0
  %v2047 = vadd.f32 0.0, %v2046
  %v2048 = vpop.f32.mrb[0].mxu0
  %v2049 = vpop.f32.mrb[0].mxu0
  %v2050 = vadd.f32 0.0, %v2049
  %v2051 = vpop.f32.mrb[0].mxu0
  %2052 = vmatprep.mubr.bf16.mxu0 0
  %2053 = vmatmul.mubr.bf16.gmra.mrb[0].mxu0 %v1913
  %v2054 = vpop.f32.mrb[0].mxu0
  %v2055 = vadd.f32 0.0, %v2054
  %v2056 = vpop.f32.mrb[0].mxu0
  %v2057 = vpop.f32.mrb[0].mxu0
  %v2058 = vadd.f32 0.0, %v2057
  %v2059 = vpop.f32.mrb[0].mxu0
  %2060 = vmatprep.mubr.bf16.mxu0 0
  %2061 = vmatmul.mubr.bf16.gmra.mrb[0].mxu0 %v1916
  %v2062 = vpop.f32.mrb[0].mxu0
  %v2063 = vadd.f32 0.0, %v2062
  %v2064 = vpop.f32.mrb[0].mxu0
  %v2065 = vpop.f32.mrb[0].mxu0
  %v2066 = vadd.f32 0.0, %v2065
  %v2067 = vpop.f32.mrb[0].mxu0
  %2068 = vmatprep.mubr.bf16.mxu0 0
  %2069 = vmatmul.mubr.bf16.gmra.mrb[0].mxu0 %v1919
  %v2070 = vpop.f32.mrb[0].mxu0
  %v2071 = vadd.f32 0.0, %v2070
  %v2072 = vpop.f32.mrb[0].mxu0
  %v2073 = vpop.f32.mrb[0].mxu0
  %v2074 = vadd.f32 0.0, %v2073
  %v2075 = vpop.f32.mrb[0].mxu0
  %2076 = vmatprep.mubr.bf16.mxu0 0
  %2077 = vmatmul.mubr.bf16.gmra.mrb[0].mxu0 %v1922
  %v2078 = vpop.f32.mrb[0].mxu0
  %v2079 = vadd.f32 0.0, %v2078
  %v2080 = vpop.f32.mrb[0].mxu0
  %v2081 = vpop.f32.mrb[0].mxu0
  %v2082 = vadd.f32 0.0, %v2081
  %v2083 = vpop.f32.mrb[0].mxu0
  %2084 = vdwg.mxu0
  %v2085 = vadd.f32 %v1778, %v1959
  %v2086 = vadd.f32 %v1779, %v1962
  %v2087 = vadd.f32 %v1780, %v1967
  %v2088 = vadd.f32 %v1781, %v1970
  %v2089 = vadd.f32 %v1782, %v1975
  %v2090 = vadd.f32 %v1783, %v1978
  %v2091 = vadd.f32 %v1784, %v1983
  %v2092 = vadd.f32 %v1785, %v1986
  %v2093 = vadd.f32 %v1786, %v1991
  %v2094 = vadd.f32 %v1787, %v1994
  %v2095 = vadd.f32 %v1788, %v1999
  %v2096 = vadd.f32 %v1789, %v2002
  %v2097 = vadd.f32 %v1790, %v2007
  %v2098 = vadd.f32 %v1791, %v2010
  %v2099 = vadd.f32 %v1792, %v2015
  %v2100 = vadd.f32 %v1793, %v2018
  %v2101 = vadd.f32 %v1794, %v2023
  %v2102 = vadd.f32 %v1795, %v2026
  %v2103 = vadd.f32 %v1796, %v2031
  %v2104 = vadd.f32 %v1797, %v2034
  %v2105 = vadd.f32 %v1798, %v2039
  %v2106 = vadd.f32 %v1799, %v2042
  %v2107 = vadd.f32 %v1800, %v2047
  %v2108 = vadd.f32 %v1801, %v2050
  %v2109 = vadd.f32 %v1802, %v2055
  %v2110 = vadd.f32 %v1803, %v2058
  %v2111 = vadd.f32 %v1804, %v2063
  %v2112 = vadd.f32 %v1805, %v2066
  %v2113 = vadd.f32 %v1806, %v2071
  %v2114 = vadd.f32 %v1807, %v2074
  %v2115 = vadd.f32 %v1808, %v2079
  %v2116 = vadd.f32 %v1809, %v2082
  %s2117 = scalar_lea.vmem %s1, 32
  %v2118 = vld [vmem:[%s2117] sm:$0xff]
  %v2119 = vld [vmem:[%s2117 + $0x10] sm:$0xff]
  %v2120 = vld [vmem:[%s2117 + $0x20] sm:$0xff]
  %v2121 = vld [vmem:[%s2117 + $0x30] sm:$0xff]
  %v2122 = vld [vmem:[%s2117 + $0x40] sm:$0xff]
  %v2123 = vld [vmem:[%s2117 + $0x50] sm:$0xff]
  %v2124 = vld [vmem:[%s2117 + $0x60] sm:$0xff]
  %v2125 = vld [vmem:[%s2117 + $0x70] sm:$0xff]
  %v2126 = vld [vmem:[%s2117 + $0x80] sm:$0xff]
  %v2127 = vld [vmem:[%s2117 + $0x90] sm:$0xff]
  %v2128 = vld [vmem:[%s2117 + $0xa0] sm:$0xff]
  %v2129 = vld [vmem:[%s2117 + $0xb0] sm:$0xff]
  %v2130 = vld [vmem:[%s2117 + $0xc0] sm:$0xff]
  %v2131 = vld [vmem:[%s2117 + $0xd0] sm:$0xff]
  %v2132 = vld [vmem:[%s2117 + $0xe0] sm:$0xff]
  %v2133 = vld [vmem:[%s2117 + $0xf0] sm:$0xff]
  %v2134 = vld [vmem:[%s2117 + $0x120] sm:$0xff]
  %v2135 = vld [vmem:[%s2117 + $0x130] sm:$0xff]
  %v2136 = vld [vmem:[%s2117 + $0x140] sm:$0xff]
  %v2137 = vld [vmem:[%s2117 + $0x150] sm:$0xff]
  %v2138 = vld [vmem:[%s2117 + $0x160] sm:$0xff]
  %v2139 = vld [vmem:[%s2117 + $0x170] sm:$0xff]
  %v2140 = vld [vmem:[%s2117 + $0x180] sm:$0xff]
  %v2141 = vld [vmem:[%s2117 + $0x190] sm:$0xff]
  %v2142 = vld [vmem:[%s2117 + $0x1a0] sm:$0xff]
  %v2143 = vld [vmem:[%s2117 + $0x1b0] sm:$0xff]
  %v2144 = vld [vmem:[%s2117 + $0x1c0] sm:$0xff]
  %v2145 = vld [vmem:[%s2117 + $0x1d0] sm:$0xff]
  %v2146 = vld [vmem:[%s2117 + $0x1e0] sm:$0xff]
  %v2147 = vld [vmem:[%s2117 + $0x1f0] sm:$0xff]
  %v2148 = vld [vmem:[%s2117 + $0x200] sm:$0xff]
  %v2149 = vld [vmem:[%s2117 + $0x210] sm:$0xff]
  %v2150 = vpack.c.bf16 %v2119, %v2118
  %v2151 = vpack.c.bf16 %v2121, %v2120
  %v2152 = vpack.c.bf16 %v2123, %v2122
  %v2153 = vpack.c.bf16 %v2125, %v2124
  %v2154 = vpack.c.bf16 %v2127, %v2126
  %v2155 = vpack.c.bf16 %v2129, %v2128
  %v2156 = vpack.c.bf16 %v2131, %v2130
  %v2157 = vpack.c.bf16 %v2133, %v2132
  %v2158 = vpack.c.bf16 %v2135, %v2134
  %v2159 = vpack.c.bf16 %v2137, %v2136
  %v2160 = vpack.c.bf16 %v2139, %v2138
  %v2161 = vpack.c.bf16 %v2141, %v2140
  %v2162 = vpack.c.bf16 %v2143, %v2142
  %v2163 = vpack.c.bf16 %v2145, %v2144
  %v2164 = vpack.c.bf16 %v2147, %v2146
  %v2165 = vpack.c.bf16 %v2149, %v2148
  %s2166 = scalar_lea.vmem %s2, 112
  %v2167 = vld [vmem:[%s2166] sm:$0xf]
  %v2168 = vld [vmem:[%s2166 + $0x4] sm:$0xf]
  %v2169 = vld [vmem:[%s2166 + $0x8] sm:$0xf]
  %v2170 = vld [vmem:[%s2166 + $0xc] sm:$0xf]
  %v2175 = vunpack.c.l.b16 %v2167
  %v2176 = vunpack.c.l.b16 %v2168
  %v2177 = vunpack.c.l.b16 %v2169
  %v2178 = vunpack.c.l.b16 %v2170
  %v2179 = vpack.c.b16 %v2176, %v2175
  %v2180 = vpack.c.b16 %v2178, %v2177
  %v2184 = vsel %vm153, %v2150, 0
  %v2187 = vsel %vm153, %v2151, 0
  %v2190 = vsel %vm153, %v2152, 0
  %v2193 = vsel %vm153, %v2153, 0
  %v2196 = vsel %vm153, %v2154, 0
  %v2199 = vsel %vm153, %v2155, 0
  %v2202 = vsel %vm153, %v2156, 0
  %v2205 = vsel %vm153, %v2157, 0
  %v2208 = vsel %vm153, %v2158, 0
  %v2211 = vsel %vm153, %v2159, 0
  %v2214 = vsel %vm153, %v2160, 0
  %v2217 = vsel %vm153, %v2161, 0
  %v2220 = vsel %vm153, %v2162, 0
  %v2223 = vsel %vm153, %v2163, 0
  %v2226 = vsel %vm153, %v2164, 0
  %v2229 = vsel %vm153, %v2165, 0
  %2231 = vmatprep.subr.bf16.mxu0 0
  %2232 = vmatpush1.bf16.msra.mxu0 %v2179
  %2233 = vmatprep.subr.bf16.mxu0 0
  %2234 = vmatpush1.bf16.msra.mxu0 %v2180
  %2235 = vmatprep.subr.bf16.mxu0 0
  %2236 = vmatpush1.bf16.msra.mxu0 0
  %2237 = vmatprep.subr.bf16.mxu0 0
  %2238 = vmatpush1.bf16.msra.mxu0 0
  %2239 = vmatprep.subr.bf16.mxu0 0
  %2240 = vmatpush1.bf16.msra.mxu0 0
  %2241 = vmatprep.subr.bf16.mxu0 0
  %2242 = vmatpush1.bf16.msra.mxu0 0
  %2243 = vmatprep.subr.bf16.mxu0 0
  %2244 = vmatpush1.bf16.msra.mxu0 0
  %2245 = vmatprep.subr.bf16.mxu0 0
  %2246 = vmatpush1.bf16.msra.mxu0 0
  %2247 = vmatprep.subr.bf16.mxu0 0
  %2248 = vmatpush1.bf16.msra.mxu0 0
  %2249 = vmatprep.subr.bf16.mxu0 0
  %2250 = vmatpush1.bf16.msra.mxu0 0
  %2251 = vmatprep.subr.bf16.mxu0 0
  %2252 = vmatpush1.bf16.msra.mxu0 0
  %2253 = vmatprep.subr.bf16.mxu0 0
  %2254 = vmatpush1.bf16.msra.mxu0 0
  %2255 = vmatprep.subr.bf16.mxu0 0
  %2256 = vmatpush1.bf16.msra.mxu0 0
  %2257 = vmatprep.subr.bf16.mxu0 0
  %2258 = vmatpush1.bf16.msra.mxu0 0
  %2259 = vmatprep.subr.bf16.mxu0 0
  %2260 = vmatpush1.bf16.msra.mxu0 0
  %2261 = vmatprep.subr.bf16.mxu0 0
  %2262 = vmatpush1.bf16.msra.mxu0 0
  %2263 = vmatprep.mubr.bf16.mxu0 0
  %2264 = vmatmul.mubr.bf16.gmra.mrb[0].mxu0 %v2184
  %v2265 = vpop.f32.mrb[0].mxu0
  %v2266 = vadd.f32 0.0, %v2265
  %v2267 = vpop.f32.mrb[0].mxu0
  %v2268 = vpop.f32.mrb[0].mxu0
  %v2269 = vadd.f32 0.0, %v2268
  %v2270 = vpop.f32.mrb[0].mxu0
  %2271 = vmatprep.mubr.bf16.mxu0 0
  %2272 = vmatmul.mubr.bf16.gmra.mrb[0].mxu0 %v2187
  %v2273 = vpop.f32.mrb[0].mxu0
  %v2274 = vadd.f32 0.0, %v2273
  %v2275 = vpop.f32.mrb[0].mxu0
  %v2276 = vpop.f32.mrb[0].mxu0
  %v2277 = vadd.f32 0.0, %v2276
  %v2278 = vpop.f32.mrb[0].mxu0
  %2279 = vmatprep.mubr.bf16.mxu0 0
  %2280 = vmatmul.mubr.bf16.gmra.mrb[0].mxu0 %v2190
  %v2281 = vpop.f32.mrb[0].mxu0
  %v2282 = vadd.f32 0.0, %v2281
  %v2283 = vpop.f32.mrb[0].mxu0
  %v2284 = vpop.f32.mrb[0].mxu0
  %v2285 = vadd.f32 0.0, %v2284
  %v2286 = vpop.f32.mrb[0].mxu0
  %2287 = vmatprep.mubr.bf16.mxu0 0
  %2288 = vmatmul.mubr.bf16.gmra.mrb[0].mxu0 %v2193
  %v2289 = vpop.f32.mrb[0].mxu0
  %v2290 = vadd.f32 0.0, %v2289
  %v2291 = vpop.f32.mrb[0].mxu0
  %v2292 = vpop.f32.mrb[0].mxu0
  %v2293 = vadd.f32 0.0, %v2292
  %v2294 = vpop.f32.mrb[0].mxu0
  %2295 = vmatprep.mubr.bf16.mxu0 0
  %2296 = vmatmul.mubr.bf16.gmra.mrb[0].mxu0 %v2196
  %v2297 = vpop.f32.mrb[0].mxu0
  %v2298 = vadd.f32 0.0, %v2297
  %v2299 = vpop.f32.mrb[0].mxu0
  %v2300 = vpop.f32.mrb[0].mxu0
  %v2301 = vadd.f32 0.0, %v2300
  %v2302 = vpop.f32.mrb[0].mxu0
  %2303 = vmatprep.mubr.bf16.mxu0 0
  %2304 = vmatmul.mubr.bf16.gmra.mrb[0].mxu0 %v2199
  %v2305 = vpop.f32.mrb[0].mxu0
  %v2306 = vadd.f32 0.0, %v2305
  %v2307 = vpop.f32.mrb[0].mxu0
  %v2308 = vpop.f32.mrb[0].mxu0
  %v2309 = vadd.f32 0.0, %v2308
  %v2310 = vpop.f32.mrb[0].mxu0
  %2311 = vmatprep.mubr.bf16.mxu0 0
  %2312 = vmatmul.mubr.bf16.gmra.mrb[0].mxu0 %v2202
  %v2313 = vpop.f32.mrb[0].mxu0
  %v2314 = vadd.f32 0.0, %v2313
  %v2315 = vpop.f32.mrb[0].mxu0
  %v2316 = vpop.f32.mrb[0].mxu0
  %v2317 = vadd.f32 0.0, %v2316
  %v2318 = vpop.f32.mrb[0].mxu0
  %2319 = vmatprep.mubr.bf16.mxu0 0
  %2320 = vmatmul.mubr.bf16.gmra.mrb[0].mxu0 %v2205
  %v2321 = vpop.f32.mrb[0].mxu0
  %v2322 = vadd.f32 0.0, %v2321
  %v2323 = vpop.f32.mrb[0].mxu0
  %v2324 = vpop.f32.mrb[0].mxu0
  %v2325 = vadd.f32 0.0, %v2324
  %v2326 = vpop.f32.mrb[0].mxu0
  %2327 = vmatprep.mubr.bf16.mxu0 0
  %2328 = vmatmul.mubr.bf16.gmra.mrb[0].mxu0 %v2208
  %v2329 = vpop.f32.mrb[0].mxu0
  %v2330 = vadd.f32 0.0, %v2329
  %v2331 = vpop.f32.mrb[0].mxu0
  %v2332 = vpop.f32.mrb[0].mxu0
  %v2333 = vadd.f32 0.0, %v2332
  %v2334 = vpop.f32.mrb[0].mxu0
  %2335 = vmatprep.mubr.bf16.mxu0 0
  %2336 = vmatmul.mubr.bf16.gmra.mrb[0].mxu0 %v2211
  %v2337 = vpop.f32.mrb[0].mxu0
  %v2338 = vadd.f32 0.0, %v2337
  %v2339 = vpop.f32.mrb[0].mxu0
  %v2340 = vpop.f32.mrb[0].mxu0
  %v2341 = vadd.f32 0.0, %v2340
  %v2342 = vpop.f32.mrb[0].mxu0
  %2343 = vmatprep.mubr.bf16.mxu0 0
  %2344 = vmatmul.mubr.bf16.gmra.mrb[0].mxu0 %v2214
  %v2345 = vpop.f32.mrb[0].mxu0
  %v2346 = vadd.f32 0.0, %v2345
  %v2347 = vpop.f32.mrb[0].mxu0
  %v2348 = vpop.f32.mrb[0].mxu0
  %v2349 = vadd.f32 0.0, %v2348
  %v2350 = vpop.f32.mrb[0].mxu0
  %2351 = vmatprep.mubr.bf16.mxu0 0
  %2352 = vmatmul.mubr.bf16.gmra.mrb[0].mxu0 %v2217
  %v2353 = vpop.f32.mrb[0].mxu0
  %v2354 = vadd.f32 0.0, %v2353
  %v2355 = vpop.f32.mrb[0].mxu0
  %v2356 = vpop.f32.mrb[0].mxu0
  %v2357 = vadd.f32 0.0, %v2356
  %v2358 = vpop.f32.mrb[0].mxu0
  %2359 = vmatprep.mubr.bf16.mxu0 0
  %2360 = vmatmul.mubr.bf16.gmra.mrb[0].mxu0 %v2220
  %v2361 = vpop.f32.mrb[0].mxu0
  %v2362 = vadd.f32 0.0, %v2361
  %v2363 = vpop.f32.mrb[0].mxu0
  %v2364 = vpop.f32.mrb[0].mxu0
  %v2365 = vadd.f32 0.0, %v2364
  %v2366 = vpop.f32.mrb[0].mxu0
  %2367 = vmatprep.mubr.bf16.mxu0 0
  %2368 = vmatmul.mubr.bf16.gmra.mrb[0].mxu0 %v2223
  %v2369 = vpop.f32.mrb[0].mxu0
  %v2370 = vadd.f32 0.0, %v2369
  %v2371 = vpop.f32.mrb[0].mxu0
  %v2372 = vpop.f32.mrb[0].mxu0
  %v2373 = vadd.f32 0.0, %v2372
  %v2374 = vpop.f32.mrb[0].mxu0
  %2375 = vmatprep.mubr.bf16.mxu0 0
  %2376 = vmatmul.mubr.bf16.gmra.mrb[0].mxu0 %v2226
  %v2377 = vpop.f32.mrb[0].mxu0
  %v2378 = vadd.f32 0.0, %v2377
  %v2379 = vpop.f32.mrb[0].mxu0
  %v2380 = vpop.f32.mrb[0].mxu0
  %v2381 = vadd.f32 0.0, %v2380
  %v2382 = vpop.f32.mrb[0].mxu0
  %2383 = vmatprep.mubr.bf16.mxu0 0
  %2384 = vmatmul.mubr.bf16.gmra.mrb[0].mxu0 %v2229
  %v2385 = vpop.f32.mrb[0].mxu0
  %v2386 = vadd.f32 0.0, %v2385
  %v2387 = vpop.f32.mrb[0].mxu0
  %v2388 = vpop.f32.mrb[0].mxu0
  %v2389 = vadd.f32 0.0, %v2388
  %v2390 = vpop.f32.mrb[0].mxu0
  %2391 = vdwg.mxu0
  %v2392 = vadd.f32 %v2085, %v2266
  %v2393 = vadd.f32 %v2086, %v2269
  %v2394 = vadd.f32 %v2087, %v2274
  %v2395 = vadd.f32 %v2088, %v2277
  %v2396 = vadd.f32 %v2089, %v2282
  %v2397 = vadd.f32 %v2090, %v2285
  %v2398 = vadd.f32 %v2091, %v2290
  %v2399 = vadd.f32 %v2092, %v2293
  %v2400 = vadd.f32 %v2093, %v2298
  %v2401 = vadd.f32 %v2094, %v2301
  %v2402 = vadd.f32 %v2095, %v2306
  %v2403 = vadd.f32 %v2096, %v2309
  %v2404 = vadd.f32 %v2097, %v2314
  %v2405 = vadd.f32 %v2098, %v2317
  %v2406 = vadd.f32 %v2099, %v2322
  %v2407 = vadd.f32 %v2100, %v2325
  %v2408 = vadd.f32 %v2101, %v2330
  %v2409 = vadd.f32 %v2102, %v2333
  %v2410 = vadd.f32 %v2103, %v2338
  %v2411 = vadd.f32 %v2104, %v2341
  %v2412 = vadd.f32 %v2105, %v2346
  %v2413 = vadd.f32 %v2106, %v2349
  %v2414 = vadd.f32 %v2107, %v2354
  %v2415 = vadd.f32 %v2108, %v2357
  %v2416 = vadd.f32 %v2109, %v2362
  %v2417 = vadd.f32 %v2110, %v2365
  %v2418 = vadd.f32 %v2111, %v2370
  %v2419 = vadd.f32 %v2112, %v2373
  %v2420 = vadd.f32 %v2113, %v2378
  %v2421 = vadd.f32 %v2114, %v2381
  %v2422 = vadd.f32 %v2115, %v2386
  %v2423 = vadd.f32 %v2116, %v2389
  %v2424 = vld [vmem:[%s1810 + $0x1] sm:$0xff]
  %v2425 = vld [vmem:[%s1810 + $0x11] sm:$0xff]
  %v2426 = vld [vmem:[%s1810 + $0x21] sm:$0xff]
  %v2427 = vld [vmem:[%s1810 + $0x31] sm:$0xff]
  %v2428 = vld [vmem:[%s1810 + $0x41] sm:$0xff]
  %v2429 = vld [vmem:[%s1810 + $0x51] sm:$0xff]
  %v2430 = vld [vmem:[%s1810 + $0x61] sm:$0xff]
  %v2431 = vld [vmem:[%s1810 + $0x71] sm:$0xff]
  %v2432 = vld [vmem:[%s1810 + $0x81] sm:$0xff]
  %v2433 = vld [vmem:[%s1810 + $0x91] sm:$0xff]
  %v2434 = vld [vmem:[%s1810 + $0xa1] sm:$0xff]
  %v2435 = vld [vmem:[%s1810 + $0xb1] sm:$0xff]
  %v2436 = vld [vmem:[%s1810 + $0xc1] sm:$0xff]
  %v2437 = vld [vmem:[%s1810 + $0xd1] sm:$0xff]
  %v2438 = vld [vmem:[%s1810 + $0xe1] sm:$0xff]
  %v2439 = vld [vmem:[%s1810 + $0xf1] sm:$0xff]
  %v2440 = vld [vmem:[%s1810 + $0x121] sm:$0xff]
  %v2441 = vld [vmem:[%s1810 + $0x131] sm:$0xff]
  %v2442 = vld [vmem:[%s1810 + $0x141] sm:$0xff]
  %v2443 = vld [vmem:[%s1810 + $0x151] sm:$0xff]
  %v2444 = vld [vmem:[%s1810 + $0x161] sm:$0xff]
  %v2445 = vld [vmem:[%s1810 + $0x171] sm:$0xff]
  %v2446 = vld [vmem:[%s1810 + $0x181] sm:$0xff]
  %v2447 = vld [vmem:[%s1810 + $0x191] sm:$0xff]
  %v2448 = vld [vmem:[%s1810 + $0x1a1] sm:$0xff]
  %v2449 = vld [vmem:[%s1810 + $0x1b1] sm:$0xff]
  %v2450 = vld [vmem:[%s1810 + $0x1c1] sm:$0xff]
  %v2451 = vld [vmem:[%s1810 + $0x1d1] sm:$0xff]
  %v2452 = vld [vmem:[%s1810 + $0x1e1] sm:$0xff]
  %v2453 = vld [vmem:[%s1810 + $0x1f1] sm:$0xff]
  %v2454 = vld [vmem:[%s1810 + $0x201] sm:$0xff]
  %v2455 = vld [vmem:[%s1810 + $0x211] sm:$0xff]
  %v2456 = vpack.c.bf16 %v2425, %v2424
  %v2457 = vpack.c.bf16 %v2427, %v2426
  %v2458 = vpack.c.bf16 %v2429, %v2428
  %v2459 = vpack.c.bf16 %v2431, %v2430
  %v2460 = vpack.c.bf16 %v2433, %v2432
  %v2461 = vpack.c.bf16 %v2435, %v2434
  %v2462 = vpack.c.bf16 %v2437, %v2436
  %v2463 = vpack.c.bf16 %v2439, %v2438
  %v2464 = vpack.c.bf16 %v2441, %v2440
  %v2465 = vpack.c.bf16 %v2443, %v2442
  %v2466 = vpack.c.bf16 %v2445, %v2444
  %v2467 = vpack.c.bf16 %v2447, %v2446
  %v2468 = vpack.c.bf16 %v2449, %v2448
  %v2469 = vpack.c.bf16 %v2451, %v2450
  %v2470 = vpack.c.bf16 %v2453, %v2452
  %v2471 = vpack.c.bf16 %v2455, %v2454
  %s2472 = scalar_lea.vmem %s2, 128
  %v2473 = vld [vmem:[%s2472] sm:$0xf]
  %v2474 = vld [vmem:[%s2472 + $0x4] sm:$0xf]
  %v2475 = vld [vmem:[%s2472 + $0x8] sm:$0xf]
  %v2476 = vld [vmem:[%s2472 + $0xc] sm:$0xf]
  %v2481 = vunpack.c.l.b16 %v2473
  %v2482 = vunpack.c.l.b16 %v2474
  %v2483 = vunpack.c.l.b16 %v2475
  %v2484 = vunpack.c.l.b16 %v2476
  %v2485 = vpack.c.b16 %v2482, %v2481
  %v2486 = vpack.c.b16 %v2484, %v2483
  %v2490 = vsel %vm153, %v2456, 0
  %v2493 = vsel %vm153, %v2457, 0
  %v2496 = vsel %vm153, %v2458, 0
  %v2499 = vsel %vm153, %v2459, 0
  %v2502 = vsel %vm153, %v2460, 0
  %v2505 = vsel %vm153, %v2461, 0
  %v2508 = vsel %vm153, %v2462, 0
  %v2511 = vsel %vm153, %v2463, 0
  %v2514 = vsel %vm153, %v2464, 0
  %v2517 = vsel %vm153, %v2465, 0
  %v2520 = vsel %vm153, %v2466, 0
  %v2523 = vsel %vm153, %v2467, 0
  %v2526 = vsel %vm153, %v2468, 0
  %v2529 = vsel %vm153, %v2469, 0
  %v2532 = vsel %vm153, %v2470, 0
  %v2535 = vsel %vm153, %v2471, 0
  %2537 = vmatprep.subr.bf16.mxu0 0
  %2538 = vmatpush1.bf16.msra.mxu0 %v2485
  %2539 = vmatprep.subr.bf16.mxu0 0
  %2540 = vmatpush1.bf16.msra.mxu0 %v2486
  %2541 = vmatprep.subr.bf16.mxu0 0
  %2542 = vmatpush1.bf16.msra.mxu0 0
  %2543 = vmatprep.subr.bf16.mxu0 0
  %2544 = vmatpush1.bf16.msra.mxu0 0
  %2545 = vmatprep.subr.bf16.mxu0 0
  %2546 = vmatpush1.bf16.msra.mxu0 0
  %2547 = vmatprep.subr.bf16.mxu0 0
  %2548 = vmatpush1.bf16.msra.mxu0 0
  %2549 = vmatprep.subr.bf16.mxu0 0
  %2550 = vmatpush1.bf16.msra.mxu0 0
  %2551 = vmatprep.subr.bf16.mxu0 0
  %2552 = vmatpush1.bf16.msra.mxu0 0
  %2553 = vmatprep.subr.bf16.mxu0 0
  %2554 = vmatpush1.bf16.msra.mxu0 0
  %2555 = vmatprep.subr.bf16.mxu0 0
  %2556 = vmatpush1.bf16.msra.mxu0 0
  %2557 = vmatprep.subr.bf16.mxu0 0
  %2558 = vmatpush1.bf16.msra.mxu0 0
  %2559 = vmatprep.subr.bf16.mxu0 0
  %2560 = vmatpush1.bf16.msra.mxu0 0
  %2561 = vmatprep.subr.bf16.mxu0 0
  %2562 = vmatpush1.bf16.msra.mxu0 0
  %2563 = vmatprep.subr.bf16.mxu0 0
  %2564 = vmatpush1.bf16.msra.mxu0 0
  %2565 = vmatprep.subr.bf16.mxu0 0
  %2566 = vmatpush1.bf16.msra.mxu0 0
  %2567 = vmatprep.subr.bf16.mxu0 0
  %2568 = vmatpush1.bf16.msra.mxu0 0
  %2569 = vmatprep.mubr.bf16.mxu0 0
  %2570 = vmatmul.mubr.bf16.gmra.mrb[0].mxu0 %v2490
  %v2571 = vpop.f32.mrb[0].mxu0
  %v2572 = vadd.f32 0.0, %v2571
  %v2573 = vpop.f32.mrb[0].mxu0
  %v2574 = vpop.f32.mrb[0].mxu0
  %v2575 = vadd.f32 0.0, %v2574
  %v2576 = vpop.f32.mrb[0].mxu0
  %2577 = vmatprep.mubr.bf16.mxu0 0
  %2578 = vmatmul.mubr.bf16.gmra.mrb[0].mxu0 %v2493
  %v2579 = vpop.f32.mrb[0].mxu0
  %v2580 = vadd.f32 0.0, %v2579
  %v2581 = vpop.f32.mrb[0].mxu0
  %v2582 = vpop.f32.mrb[0].mxu0
  %v2583 = vadd.f32 0.0, %v2582
  %v2584 = vpop.f32.mrb[0].mxu0
  %2585 = vmatprep.mubr.bf16.mxu0 0
  %2586 = vmatmul.mubr.bf16.gmra.mrb[0].mxu0 %v2496
  %v2587 = vpop.f32.mrb[0].mxu0
  %v2588 = vadd.f32 0.0, %v2587
  %v2589 = vpop.f32.mrb[0].mxu0
  %v2590 = vpop.f32.mrb[0].mxu0
  %v2591 = vadd.f32 0.0, %v2590
  %v2592 = vpop.f32.mrb[0].mxu0
  %2593 = vmatprep.mubr.bf16.mxu0 0
  %2594 = vmatmul.mubr.bf16.gmra.mrb[0].mxu0 %v2499
  %v2595 = vpop.f32.mrb[0].mxu0
  %v2596 = vadd.f32 0.0, %v2595
  %v2597 = vpop.f32.mrb[0].mxu0
  %v2598 = vpop.f32.mrb[0].mxu0
  %v2599 = vadd.f32 0.0, %v2598
  %v2600 = vpop.f32.mrb[0].mxu0
  %2601 = vmatprep.mubr.bf16.mxu0 0
  %2602 = vmatmul.mubr.bf16.gmra.mrb[0].mxu0 %v2502
  %v2603 = vpop.f32.mrb[0].mxu0
  %v2604 = vadd.f32 0.0, %v2603
  %v2605 = vpop.f32.mrb[0].mxu0
  %v2606 = vpop.f32.mrb[0].mxu0
  %v2607 = vadd.f32 0.0, %v2606
  %v2608 = vpop.f32.mrb[0].mxu0
  %2609 = vmatprep.mubr.bf16.mxu0 0
  %2610 = vmatmul.mubr.bf16.gmra.mrb[0].mxu0 %v2505
  %v2611 = vpop.f32.mrb[0].mxu0
  %v2612 = vadd.f32 0.0, %v2611
  %v2613 = vpop.f32.mrb[0].mxu0
  %v2614 = vpop.f32.mrb[0].mxu0
  %v2615 = vadd.f32 0.0, %v2614
  %v2616 = vpop.f32.mrb[0].mxu0
  %2617 = vmatprep.mubr.bf16.mxu0 0
  %2618 = vmatmul.mubr.bf16.gmra.mrb[0].mxu0 %v2508
  %v2619 = vpop.f32.mrb[0].mxu0
  %v2620 = vadd.f32 0.0, %v2619
  %v2621 = vpop.f32.mrb[0].mxu0
  %v2622 = vpop.f32.mrb[0].mxu0
  %v2623 = vadd.f32 0.0, %v2622
  %v2624 = vpop.f32.mrb[0].mxu0
  %2625 = vmatprep.mubr.bf16.mxu0 0
  %2626 = vmatmul.mubr.bf16.gmra.mrb[0].mxu0 %v2511
  %v2627 = vpop.f32.mrb[0].mxu0
  %v2628 = vadd.f32 0.0, %v2627
  %v2629 = vpop.f32.mrb[0].mxu0
  %v2630 = vpop.f32.mrb[0].mxu0
  %v2631 = vadd.f32 0.0, %v2630
  %v2632 = vpop.f32.mrb[0].mxu0
  %2633 = vmatprep.mubr.bf16.mxu0 0
  %2634 = vmatmul.mubr.bf16.gmra.mrb[0].mxu0 %v2514
  %v2635 = vpop.f32.mrb[0].mxu0
  %v2636 = vadd.f32 0.0, %v2635
  %v2637 = vpop.f32.mrb[0].mxu0
  %v2638 = vpop.f32.mrb[0].mxu0
  %v2639 = vadd.f32 0.0, %v2638
  %v2640 = vpop.f32.mrb[0].mxu0
  %2641 = vmatprep.mubr.bf16.mxu0 0
  %2642 = vmatmul.mubr.bf16.gmra.mrb[0].mxu0 %v2517
  %v2643 = vpop.f32.mrb[0].mxu0
  %v2644 = vadd.f32 0.0, %v2643
  %v2645 = vpop.f32.mrb[0].mxu0
  %v2646 = vpop.f32.mrb[0].mxu0
  %v2647 = vadd.f32 0.0, %v2646
  %v2648 = vpop.f32.mrb[0].mxu0
  %2649 = vmatprep.mubr.bf16.mxu0 0
  %2650 = vmatmul.mubr.bf16.gmra.mrb[0].mxu0 %v2520
  %v2651 = vpop.f32.mrb[0].mxu0
  %v2652 = vadd.f32 0.0, %v2651
  %v2653 = vpop.f32.mrb[0].mxu0
  %v2654 = vpop.f32.mrb[0].mxu0
  %v2655 = vadd.f32 0.0, %v2654
  %v2656 = vpop.f32.mrb[0].mxu0
  %2657 = vmatprep.mubr.bf16.mxu0 0
  %2658 = vmatmul.mubr.bf16.gmra.mrb[0].mxu0 %v2523
  %v2659 = vpop.f32.mrb[0].mxu0
  %v2660 = vadd.f32 0.0, %v2659
  %v2661 = vpop.f32.mrb[0].mxu0
  %v2662 = vpop.f32.mrb[0].mxu0
  %v2663 = vadd.f32 0.0, %v2662
  %v2664 = vpop.f32.mrb[0].mxu0
  %2665 = vmatprep.mubr.bf16.mxu0 0
  %2666 = vmatmul.mubr.bf16.gmra.mrb[0].mxu0 %v2526
  %v2667 = vpop.f32.mrb[0].mxu0
  %v2668 = vadd.f32 0.0, %v2667
  %v2669 = vpop.f32.mrb[0].mxu0
  %v2670 = vpop.f32.mrb[0].mxu0
  %v2671 = vadd.f32 0.0, %v2670
  %v2672 = vpop.f32.mrb[0].mxu0
  %2673 = vmatprep.mubr.bf16.mxu0 0
  %2674 = vmatmul.mubr.bf16.gmra.mrb[0].mxu0 %v2529
  %v2675 = vpop.f32.mrb[0].mxu0
  %v2676 = vadd.f32 0.0, %v2675
  %v2677 = vpop.f32.mrb[0].mxu0
  %v2678 = vpop.f32.mrb[0].mxu0
  %v2679 = vadd.f32 0.0, %v2678
  %v2680 = vpop.f32.mrb[0].mxu0
  %2681 = vmatprep.mubr.bf16.mxu0 0
  %2682 = vmatmul.mubr.bf16.gmra.mrb[0].mxu0 %v2532
  %v2683 = vpop.f32.mrb[0].mxu0
  %v2684 = vadd.f32 0.0, %v2683
  %v2685 = vpop.f32.mrb[0].mxu0
  %v2686 = vpop.f32.mrb[0].mxu0
  %v2687 = vadd.f32 0.0, %v2686
  %v2688 = vpop.f32.mrb[0].mxu0
  %2689 = vmatprep.mubr.bf16.mxu0 0
  %2690 = vmatmul.mubr.bf16.gmra.mrb[0].mxu0 %v2535
  %v2691 = vpop.f32.mrb[0].mxu0
  %v2692 = vadd.f32 0.0, %v2691
  %v2693 = vpop.f32.mrb[0].mxu0
  %v2694 = vpop.f32.mrb[0].mxu0
  %v2695 = vadd.f32 0.0, %v2694
  %v2696 = vpop.f32.mrb[0].mxu0
  %2697 = vdwg.mxu0
  %v2698 = vadd.f32 %v2392, %v2572
  %v2699 = vadd.f32 %v2393, %v2575
  %v2700 = vadd.f32 %v2394, %v2580
  %v2701 = vadd.f32 %v2395, %v2583
  %v2702 = vadd.f32 %v2396, %v2588
  %v2703 = vadd.f32 %v2397, %v2591
  %v2704 = vadd.f32 %v2398, %v2596
  %v2705 = vadd.f32 %v2399, %v2599
  %v2706 = vadd.f32 %v2400, %v2604
  %v2707 = vadd.f32 %v2401, %v2607
  %v2708 = vadd.f32 %v2402, %v2612
  %v2709 = vadd.f32 %v2403, %v2615
  %v2710 = vadd.f32 %v2404, %v2620
  %v2711 = vadd.f32 %v2405, %v2623
  %v2712 = vadd.f32 %v2406, %v2628
  %v2713 = vadd.f32 %v2407, %v2631
  %v2714 = vadd.f32 %v2408, %v2636
  %v2715 = vadd.f32 %v2409, %v2639
  %v2716 = vadd.f32 %v2410, %v2644
  %v2717 = vadd.f32 %v2411, %v2647
  %v2718 = vadd.f32 %v2412, %v2652
  %v2719 = vadd.f32 %v2413, %v2655
  %v2720 = vadd.f32 %v2414, %v2660
  %v2721 = vadd.f32 %v2415, %v2663
  %v2722 = vadd.f32 %v2416, %v2668
  %v2723 = vadd.f32 %v2417, %v2671
  %v2724 = vadd.f32 %v2418, %v2676
  %v2725 = vadd.f32 %v2419, %v2679
  %v2726 = vadd.f32 %v2420, %v2684
  %v2727 = vadd.f32 %v2421, %v2687
  %v2728 = vadd.f32 %v2422, %v2692
  %v2729 = vadd.f32 %v2423, %v2695
  %2730 = vmatprep.subr.bf16.mxu0 0
  %2731 = vmatpush1.bf16.msra.mxu0 %v149
  %2732 = vmatprep.subr.bf16.mxu0 0
  %2733 = vmatpush1.bf16.msra.mxu0 %v150
  %2734 = vmatprep.subr.bf16.mxu0 0
  %2735 = vmatpush1.bf16.msra.mxu0 0
  %2736 = vmatprep.subr.bf16.mxu0 0
  %2737 = vmatpush1.bf16.msra.mxu0 0
  %2738 = vmatprep.subr.bf16.mxu0 0
  %2739 = vmatpush1.bf16.msra.mxu0 0
  %2740 = vmatprep.subr.bf16.mxu0 0
  %2741 = vmatpush1.bf16.msra.mxu0 0
  %2742 = vmatprep.subr.bf16.mxu0 0
  %2743 = vmatpush1.bf16.msra.mxu0 0
  %2744 = vmatprep.subr.bf16.mxu0 0
  %2745 = vmatpush1.bf16.msra.mxu0 0
  %2746 = vmatprep.subr.bf16.mxu0 0
  %2747 = vmatpush1.bf16.msra.mxu0 0
  %2748 = vmatprep.subr.bf16.mxu0 0
  %2749 = vmatpush1.bf16.msra.mxu0 0
  %2750 = vmatprep.subr.bf16.mxu0 0
  %2751 = vmatpush1.bf16.msra.mxu0 0
  %2752 = vmatprep.subr.bf16.mxu0 0
  %2753 = vmatpush1.bf16.msra.mxu0 0
  %2754 = vmatprep.subr.bf16.mxu0 0
  %2755 = vmatpush1.bf16.msra.mxu0 0
  %2756 = vmatprep.subr.bf16.mxu0 0
  %2757 = vmatpush1.bf16.msra.mxu0 0
  %2758 = vmatprep.subr.bf16.mxu0 0
  %2759 = vmatpush1.bf16.msra.mxu0 0
  %2760 = vmatprep.subr.bf16.mxu0 0
  %2761 = vmatpush1.bf16.msra.mxu0 0
  %2762 = vmatprep.mubr.bf16.mxu0 0
  %2763 = vmatmul.mubr.bf16.gmra.mrb[0].mxu0 %v650
  %v2764 = vpop.f32.mrb[0].mxu0
  %v2765 = vadd.f32 0.0, %v2764
  %v2766 = vpop.f32.mrb[0].mxu0
  %v2767 = vpop.f32.mrb[0].mxu0
  %v2768 = vadd.f32 0.0, %v2767
  %v2769 = vpop.f32.mrb[0].mxu0
  %2770 = vmatprep.mubr.bf16.mxu0 0
  %2771 = vmatmul.mubr.bf16.gmra.mrb[0].mxu0 %v653
  %v2772 = vpop.f32.mrb[0].mxu0
  %v2773 = vadd.f32 0.0, %v2772
  %v2774 = vpop.f32.mrb[0].mxu0
  %v2775 = vpop.f32.mrb[0].mxu0
  %v2776 = vadd.f32 0.0, %v2775
  %v2777 = vpop.f32.mrb[0].mxu0
  %2778 = vmatprep.mubr.bf16.mxu0 0
  %2779 = vmatmul.mubr.bf16.gmra.mrb[0].mxu0 %v656
  %v2780 = vpop.f32.mrb[0].mxu0
  %v2781 = vadd.f32 0.0, %v2780
  %v2782 = vpop.f32.mrb[0].mxu0
  %v2783 = vpop.f32.mrb[0].mxu0
  %v2784 = vadd.f32 0.0, %v2783
  %v2785 = vpop.f32.mrb[0].mxu0
  %2786 = vmatprep.mubr.bf16.mxu0 0
  %2787 = vmatmul.mubr.bf16.gmra.mrb[0].mxu0 %v659
  %v2788 = vpop.f32.mrb[0].mxu0
  %v2789 = vadd.f32 0.0, %v2788
  %v2790 = vpop.f32.mrb[0].mxu0
  %v2791 = vpop.f32.mrb[0].mxu0
  %v2792 = vadd.f32 0.0, %v2791
  %v2793 = vpop.f32.mrb[0].mxu0
  %2794 = vmatprep.mubr.bf16.mxu0 0
  %2795 = vmatmul.mubr.bf16.gmra.mrb[0].mxu0 %v662
  %v2796 = vpop.f32.mrb[0].mxu0
  %v2797 = vadd.f32 0.0, %v2796
  %v2798 = vpop.f32.mrb[0].mxu0
  %v2799 = vpop.f32.mrb[0].mxu0
  %v2800 = vadd.f32 0.0, %v2799
  %v2801 = vpop.f32.mrb[0].mxu0
  %2802 = vmatprep.mubr.bf16.mxu0 0
  %2803 = vmatmul.mubr.bf16.gmra.mrb[0].mxu0 %v665
  %v2804 = vpop.f32.mrb[0].mxu0
  %v2805 = vadd.f32 0.0, %v2804
  %v2806 = vpop.f32.mrb[0].mxu0
  %v2807 = vpop.f32.mrb[0].mxu0
  %v2808 = vadd.f32 0.0, %v2807
  %v2809 = vpop.f32.mrb[0].mxu0
  %2810 = vmatprep.mubr.bf16.mxu0 0
  %2811 = vmatmul.mubr.bf16.gmra.mrb[0].mxu0 %v668
  %v2812 = vpop.f32.mrb[0].mxu0
  %v2813 = vadd.f32 0.0, %v2812
  %v2814 = vpop.f32.mrb[0].mxu0
  %v2815 = vpop.f32.mrb[0].mxu0
  %v2816 = vadd.f32 0.0, %v2815
  %v2817 = vpop.f32.mrb[0].mxu0
  %2818 = vmatprep.mubr.bf16.mxu0 0
  %2819 = vmatmul.mubr.bf16.gmra.mrb[0].mxu0 %v671
  %v2820 = vpop.f32.mrb[0].mxu0
  %v2821 = vadd.f32 0.0, %v2820
  %v2822 = vpop.f32.mrb[0].mxu0
  %v2823 = vpop.f32.mrb[0].mxu0
  %v2824 = vadd.f32 0.0, %v2823
  %v2825 = vpop.f32.mrb[0].mxu0
  %2826 = vmatprep.mubr.bf16.mxu0 0
  %2827 = vmatmul.mubr.bf16.gmra.mrb[0].mxu0 %v674
  %v2828 = vpop.f32.mrb[0].mxu0
  %v2829 = vadd.f32 0.0, %v2828
  %v2830 = vpop.f32.mrb[0].mxu0
  %v2831 = vpop.f32.mrb[0].mxu0
  %v2832 = vadd.f32 0.0, %v2831
  %v2833 = vpop.f32.mrb[0].mxu0
  %2834 = vmatprep.mubr.bf16.mxu0 0
  %2835 = vmatmul.mubr.bf16.gmra.mrb[0].mxu0 %v677
  %v2836 = vpop.f32.mrb[0].mxu0
  %v2837 = vadd.f32 0.0, %v2836
  %v2838 = vpop.f32.mrb[0].mxu0
  %v2839 = vpop.f32.mrb[0].mxu0
  %v2840 = vadd.f32 0.0, %v2839
  %v2841 = vpop.f32.mrb[0].mxu0
  %2842 = vmatprep.mubr.bf16.mxu0 0
  %2843 = vmatmul.mubr.bf16.gmra.mrb[0].mxu0 %v680
  %v2844 = vpop.f32.mrb[0].mxu0
  %v2845 = vadd.f32 0.0, %v2844
  %v2846 = vpop.f32.mrb[0].mxu0
  %v2847 = vpop.f32.mrb[0].mxu0
  %v2848 = vadd.f32 0.0, %v2847
  %v2849 = vpop.f32.mrb[0].mxu0
  %2850 = vmatprep.mubr.bf16.mxu0 0
  %2851 = vmatmul.mubr.bf16.gmra.mrb[0].mxu0 %v683
  %v2852 = vpop.f32.mrb[0].mxu0
  %v2853 = vadd.f32 0.0, %v2852
  %v2854 = vpop.f32.mrb[0].mxu0
  %v2855 = vpop.f32.mrb[0].mxu0
  %v2856 = vadd.f32 0.0, %v2855
  %v2857 = vpop.f32.mrb[0].mxu0
  %2858 = vmatprep.mubr.bf16.mxu0 0
  %2859 = vmatmul.mubr.bf16.gmra.mrb[0].mxu0 %v686
  %v2860 = vpop.f32.mrb[0].mxu0
  %v2861 = vadd.f32 0.0, %v2860
  %v2862 = vpop.f32.mrb[0].mxu0
  %v2863 = vpop.f32.mrb[0].mxu0
  %v2864 = vadd.f32 0.0, %v2863
  %v2865 = vpop.f32.mrb[0].mxu0
  %2866 = vmatprep.mubr.bf16.mxu0 0
  %2867 = vmatmul.mubr.bf16.gmra.mrb[0].mxu0 %v689
  %v2868 = vpop.f32.mrb[0].mxu0
  %v2869 = vadd.f32 0.0, %v2868
  %v2870 = vpop.f32.mrb[0].mxu0
  %v2871 = vpop.f32.mrb[0].mxu0
  %v2872 = vadd.f32 0.0, %v2871
  %v2873 = vpop.f32.mrb[0].mxu0
  %2874 = vmatprep.mubr.bf16.mxu0 0
  %2875 = vmatmul.mubr.bf16.gmra.mrb[0].mxu0 %v692
  %v2876 = vpop.f32.mrb[0].mxu0
  %v2877 = vadd.f32 0.0, %v2876
  %v2878 = vpop.f32.mrb[0].mxu0
  %v2879 = vpop.f32.mrb[0].mxu0
  %v2880 = vadd.f32 0.0, %v2879
  %v2881 = vpop.f32.mrb[0].mxu0
  %2882 = vmatprep.mubr.bf16.mxu0 0
  %2883 = vmatmul.mubr.bf16.gmra.mrb[0].mxu0 %v695
  %v2884 = vpop.f32.mrb[0].mxu0
  %v2885 = vadd.f32 0.0, %v2884
  %v2886 = vpop.f32.mrb[0].mxu0
  %v2887 = vpop.f32.mrb[0].mxu0
  %v2888 = vadd.f32 0.0, %v2887
  %v2889 = vpop.f32.mrb[0].mxu0
  %2890 = vdwg.mxu0
  %2891 = vmatprep.subr.bf16.mxu0 0
  %2892 = vmatpush1.bf16.msra.mxu0 %v371
  %2893 = vmatprep.subr.bf16.mxu0 0
  %2894 = vmatpush1.bf16.msra.mxu0 %v372
  %2895 = vmatprep.subr.bf16.mxu0 0
  %2896 = vmatpush1.bf16.msra.mxu0 0
  %2897 = vmatprep.subr.bf16.mxu0 0
  %2898 = vmatpush1.bf16.msra.mxu0 0
  %2899 = vmatprep.subr.bf16.mxu0 0
  %2900 = vmatpush1.bf16.msra.mxu0 0
  %2901 = vmatprep.subr.bf16.mxu0 0
  %2902 = vmatpush1.bf16.msra.mxu0 0
  %2903 = vmatprep.subr.bf16.mxu0 0
  %2904 = vmatpush1.bf16.msra.mxu0 0
  %2905 = vmatprep.subr.bf16.mxu0 0
  %2906 = vmatpush1.bf16.msra.mxu0 0
  %2907 = vmatprep.subr.bf16.mxu0 0
  %2908 = vmatpush1.bf16.msra.mxu0 0
  %2909 = vmatprep.subr.bf16.mxu0 0
  %2910 = vmatpush1.bf16.msra.mxu0 0
  %2911 = vmatprep.subr.bf16.mxu0 0
  %2912 = vmatpush1.bf16.msra.mxu0 0
  %2913 = vmatprep.subr.bf16.mxu0 0
  %2914 = vmatpush1.bf16.msra.mxu0 0
  %2915 = vmatprep.subr.bf16.mxu0 0
  %2916 = vmatpush1.bf16.msra.mxu0 0
  %2917 = vmatprep.subr.bf16.mxu0 0
  %2918 = vmatpush1.bf16.msra.mxu0 0
  %2919 = vmatprep.subr.bf16.mxu0 0
  %2920 = vmatpush1.bf16.msra.mxu0 0
  %2921 = vmatprep.subr.bf16.mxu0 0
  %2922 = vmatpush1.bf16.msra.mxu0 0
  %2923 = vmatprep.mubr.bf16.mxu0 0
  %2924 = vmatmul.mubr.bf16.gmra.mrb[0].mxu0 %v155
  %v2925 = vpop.f32.mrb[0].mxu0
  %v2926 = vadd.f32 %v2765, %v2925
  %v2927 = vpop.f32.mrb[0].mxu0
  %v2928 = vpop.f32.mrb[0].mxu0
  %v2929 = vadd.f32 %v2768, %v2928
  %v2930 = vpop.f32.mrb[0].mxu0
  %2931 = vmatprep.mubr.bf16.mxu0 0
  %2932 = vmatmul.mubr.bf16.gmra.mrb[0].mxu0 %v158
  %v2933 = vpop.f32.mrb[0].mxu0
  %v2934 = vadd.f32 %v2773, %v2933
  %v2935 = vpop.f32.mrb[0].mxu0
  %v2936 = vpop.f32.mrb[0].mxu0
  %v2937 = vadd.f32 %v2776, %v2936
  %v2938 = vpop.f32.mrb[0].mxu0
  %2939 = vmatprep.mubr.bf16.mxu0 0
  %2940 = vmatmul.mubr.bf16.gmra.mrb[0].mxu0 %v161
  %v2941 = vpop.f32.mrb[0].mxu0
  %v2942 = vadd.f32 %v2781, %v2941
  %v2943 = vpop.f32.mrb[0].mxu0
  %v2944 = vpop.f32.mrb[0].mxu0
  %v2945 = vadd.f32 %v2784, %v2944
  %v2946 = vpop.f32.mrb[0].mxu0
  %2947 = vmatprep.mubr.bf16.mxu0 0
  %2948 = vmatmul.mubr.bf16.gmra.mrb[0].mxu0 %v164
  %v2949 = vpop.f32.mrb[0].mxu0
  %v2950 = vadd.f32 %v2789, %v2949
  %v2951 = vpop.f32.mrb[0].mxu0
  %v2952 = vpop.f32.mrb[0].mxu0
  %v2953 = vadd.f32 %v2792, %v2952
  %v2954 = vpop.f32.mrb[0].mxu0
  %2955 = vmatprep.mubr.bf16.mxu0 0
  %2956 = vmatmul.mubr.bf16.gmra.mrb[0].mxu0 %v167
  %v2957 = vpop.f32.mrb[0].mxu0
  %v2958 = vadd.f32 %v2797, %v2957
  %v2959 = vpop.f32.mrb[0].mxu0
  %v2960 = vpop.f32.mrb[0].mxu0
  %v2961 = vadd.f32 %v2800, %v2960
  %v2962 = vpop.f32.mrb[0].mxu0
  %2963 = vmatprep.mubr.bf16.mxu0 0
  %2964 = vmatmul.mubr.bf16.gmra.mrb[0].mxu0 %v170
  %v2965 = vpop.f32.mrb[0].mxu0
  %v2966 = vadd.f32 %v2805, %v2965
  %v2967 = vpop.f32.mrb[0].mxu0
  %v2968 = vpop.f32.mrb[0].mxu0
  %v2969 = vadd.f32 %v2808, %v2968
  %v2970 = vpop.f32.mrb[0].mxu0
  %2971 = vmatprep.mubr.bf16.mxu0 0
  %2972 = vmatmul.mubr.bf16.gmra.mrb[0].mxu0 %v173
  %v2973 = vpop.f32.mrb[0].mxu0
  %v2974 = vadd.f32 %v2813, %v2973
  %v2975 = vpop.f32.mrb[0].mxu0
  %v2976 = vpop.f32.mrb[0].mxu0
  %v2977 = vadd.f32 %v2816, %v2976
  %v2978 = vpop.f32.mrb[0].mxu0
  %2979 = vmatprep.mubr.bf16.mxu0 0
  %2980 = vmatmul.mubr.bf16.gmra.mrb[0].mxu0 %v176
  %v2981 = vpop.f32.mrb[0].mxu0
  %v2982 = vadd.f32 %v2821, %v2981
  %v2983 = vpop.f32.mrb[0].mxu0
  %v2984 = vpop.f32.mrb[0].mxu0
  %v2985 = vadd.f32 %v2824, %v2984
  %v2986 = vpop.f32.mrb[0].mxu0
  %2987 = vmatprep.mubr.bf16.mxu0 0
  %2988 = vmatmul.mubr.bf16.gmra.mrb[0].mxu0 %v179
  %v2989 = vpop.f32.mrb[0].mxu0
  %v2990 = vadd.f32 %v2829, %v2989
  %v2991 = vpop.f32.mrb[0].mxu0
  %v2992 = vpop.f32.mrb[0].mxu0
  %v2993 = vadd.f32 %v2832, %v2992
  %v2994 = vpop.f32.mrb[0].mxu0
  %2995 = vmatprep.mubr.bf16.mxu0 0
  %2996 = vmatmul.mubr.bf16.gmra.mrb[0].mxu0 %v182
  %v2997 = vpop.f32.mrb[0].mxu0
  %v2998 = vadd.f32 %v2837, %v2997
  %v2999 = vpop.f32.mrb[0].mxu0
  %v3000 = vpop.f32.mrb[0].mxu0
  %v3001 = vadd.f32 %v2840, %v3000
  %v3002 = vpop.f32.mrb[0].mxu0
  %3003 = vmatprep.mubr.bf16.mxu0 0
  %3004 = vmatmul.mubr.bf16.gmra.mrb[0].mxu0 %v185
  %v3005 = vpop.f32.mrb[0].mxu0
  %v3006 = vadd.f32 %v2845, %v3005
  %v3007 = vpop.f32.mrb[0].mxu0
  %v3008 = vpop.f32.mrb[0].mxu0
  %v3009 = vadd.f32 %v2848, %v3008
  %v3010 = vpop.f32.mrb[0].mxu0
  %3011 = vmatprep.mubr.bf16.mxu0 0
  %3012 = vmatmul.mubr.bf16.gmra.mrb[0].mxu0 %v188
  %v3013 = vpop.f32.mrb[0].mxu0
  %v3014 = vadd.f32 %v2853, %v3013
  %v3015 = vpop.f32.mrb[0].mxu0
  %v3016 = vpop.f32.mrb[0].mxu0
  %v3017 = vadd.f32 %v2856, %v3016
  %v3018 = vpop.f32.mrb[0].mxu0
  %3019 = vmatprep.mubr.bf16.mxu0 0
  %3020 = vmatmul.mubr.bf16.gmra.mrb[0].mxu0 %v191
  %v3021 = vpop.f32.mrb[0].mxu0
  %v3022 = vadd.f32 %v2861, %v3021
  %v3023 = vpop.f32.mrb[0].mxu0
  %v3024 = vpop.f32.mrb[0].mxu0
  %v3025 = vadd.f32 %v2864, %v3024
  %v3026 = vpop.f32.mrb[0].mxu0
  %3027 = vmatprep.mubr.bf16.mxu0 0
  %3028 = vmatmul.mubr.bf16.gmra.mrb[0].mxu0 %v194
  %v3029 = vpop.f32.mrb[0].mxu0
  %v3030 = vadd.f32 %v2869, %v3029
  %v3031 = vpop.f32.mrb[0].mxu0
  %v3032 = vpop.f32.mrb[0].mxu0
  %v3033 = vadd.f32 %v2872, %v3032
  %v3034 = vpop.f32.mrb[0].mxu0
  %3035 = vmatprep.mubr.bf16.mxu0 0
  %3036 = vmatmul.mubr.bf16.gmra.mrb[0].mxu0 %v197
  %v3037 = vpop.f32.mrb[0].mxu0
  %v3038 = vadd.f32 %v2877, %v3037
  %v3039 = vpop.f32.mrb[0].mxu0
  %v3040 = vpop.f32.mrb[0].mxu0
  %v3041 = vadd.f32 %v2880, %v3040
  %v3042 = vpop.f32.mrb[0].mxu0
  %3043 = vmatprep.mubr.bf16.mxu0 0
  %3044 = vmatmul.mubr.bf16.gmra.mrb[0].mxu0 %v200
  %v3045 = vpop.f32.mrb[0].mxu0
  %v3046 = vadd.f32 %v2885, %v3045
  %v3047 = vpop.f32.mrb[0].mxu0
  %v3048 = vpop.f32.mrb[0].mxu0
  %v3049 = vadd.f32 %v2888, %v3048
  %v3050 = vpop.f32.mrb[0].mxu0
  %3051 = vdwg.mxu0
  %v3052 = vld [vmem:[%s1 + $0x1] sm:$0xff]
  %v3053 = vld [vmem:[%s1 + $0x11] sm:$0xff]
  %v3054 = vld [vmem:[%s1 + $0x21] sm:$0xff]
  %v3055 = vld [vmem:[%s1 + $0x31] sm:$0xff]
  %v3056 = vld [vmem:[%s1 + $0x41] sm:$0xff]
  %v3057 = vld [vmem:[%s1 + $0x51] sm:$0xff]
  %v3058 = vld [vmem:[%s1 + $0x61] sm:$0xff]
  %v3059 = vld [vmem:[%s1 + $0x71] sm:$0xff]
  %v3060 = vld [vmem:[%s1 + $0x81] sm:$0xff]
  %v3061 = vld [vmem:[%s1 + $0x91] sm:$0xff]
  %v3062 = vld [vmem:[%s1 + $0xa1] sm:$0xff]
  %v3063 = vld [vmem:[%s1 + $0xb1] sm:$0xff]
  %v3064 = vld [vmem:[%s1 + $0xc1] sm:$0xff]
  %v3065 = vld [vmem:[%s1 + $0xd1] sm:$0xff]
  %v3066 = vld [vmem:[%s1 + $0xe1] sm:$0xff]
  %v3067 = vld [vmem:[%s1 + $0xf1] sm:$0xff]
  %v3068 = vld [vmem:[%s1 + $0x121] sm:$0xff]
  %v3069 = vld [vmem:[%s1 + $0x131] sm:$0xff]
  %v3070 = vld [vmem:[%s1 + $0x141] sm:$0xff]
  %v3071 = vld [vmem:[%s1 + $0x151] sm:$0xff]
  %v3072 = vld [vmem:[%s1 + $0x161] sm:$0xff]
  %v3073 = vld [vmem:[%s1 + $0x171] sm:$0xff]
  %v3074 = vld [vmem:[%s1 + $0x181] sm:$0xff]
  %v3075 = vld [vmem:[%s1 + $0x191] sm:$0xff]
  %v3076 = vld [vmem:[%s1 + $0x1a1] sm:$0xff]
  %v3077 = vld [vmem:[%s1 + $0x1b1] sm:$0xff]
  %v3078 = vld [vmem:[%s1 + $0x1c1] sm:$0xff]
  %v3079 = vld [vmem:[%s1 + $0x1d1] sm:$0xff]
  %v3080 = vld [vmem:[%s1 + $0x1e1] sm:$0xff]
  %v3081 = vld [vmem:[%s1 + $0x1f1] sm:$0xff]
  %v3082 = vld [vmem:[%s1 + $0x201] sm:$0xff]
  %v3083 = vld [vmem:[%s1 + $0x211] sm:$0xff]
  %v3084 = vpack.c.bf16 %v3053, %v3052
  %v3085 = vpack.c.bf16 %v3055, %v3054
  %v3086 = vpack.c.bf16 %v3057, %v3056
  %v3087 = vpack.c.bf16 %v3059, %v3058
  %v3088 = vpack.c.bf16 %v3061, %v3060
  %v3089 = vpack.c.bf16 %v3063, %v3062
  %v3090 = vpack.c.bf16 %v3065, %v3064
  %v3091 = vpack.c.bf16 %v3067, %v3066
  %v3092 = vpack.c.bf16 %v3069, %v3068
  %v3093 = vpack.c.bf16 %v3071, %v3070
  %v3094 = vpack.c.bf16 %v3073, %v3072
  %v3095 = vpack.c.bf16 %v3075, %v3074
  %v3096 = vpack.c.bf16 %v3077, %v3076
  %v3097 = vpack.c.bf16 %v3079, %v3078
  %v3098 = vpack.c.bf16 %v3081, %v3080
  %v3099 = vpack.c.bf16 %v3083, %v3082
  %v3101 = vsel %vm153, %v3084, 0
  %v3104 = vsel %vm153, %v3085, 0
  %v3107 = vsel %vm153, %v3086, 0
  %v3110 = vsel %vm153, %v3087, 0
  %v3113 = vsel %vm153, %v3088, 0
  %v3116 = vsel %vm153, %v3089, 0
  %v3119 = vsel %vm153, %v3090, 0
  %v3122 = vsel %vm153, %v3091, 0
  %v3125 = vsel %vm153, %v3092, 0
  %v3128 = vsel %vm153, %v3093, 0
  %v3131 = vsel %vm153, %v3094, 0
  %v3134 = vsel %vm153, %v3095, 0
  %v3137 = vsel %vm153, %v3096, 0
  %v3140 = vsel %vm153, %v3097, 0
  %v3143 = vsel %vm153, %v3098, 0
  %v3146 = vsel %vm153, %v3099, 0
  %3148 = vmatprep.subr.bf16.mxu0 0
  %3149 = vmatpush1.bf16.msra.mxu0 %v645
  %3150 = vmatprep.subr.bf16.mxu0 0
  %3151 = vmatpush1.bf16.msra.mxu0 %v646
  %3152 = vmatprep.subr.bf16.mxu0 0
  %3153 = vmatpush1.bf16.msra.mxu0 0
  %3154 = vmatprep.subr.bf16.mxu0 0
  %3155 = vmatpush1.bf16.msra.mxu0 0
  %3156 = vmatprep.subr.bf16.mxu0 0
  %3157 = vmatpush1.bf16.msra.mxu0 0
  %3158 = vmatprep.subr.bf16.mxu0 0
  %3159 = vmatpush1.bf16.msra.mxu0 0
  %3160 = vmatprep.subr.bf16.mxu0 0
  %3161 = vmatpush1.bf16.msra.mxu0 0
  %3162 = vmatprep.subr.bf16.mxu0 0
  %3163 = vmatpush1.bf16.msra.mxu0 0
  %3164 = vmatprep.subr.bf16.mxu0 0
  %3165 = vmatpush1.bf16.msra.mxu0 0
  %3166 = vmatprep.subr.bf16.mxu0 0
  %3167 = vmatpush1.bf16.msra.mxu0 0
  %3168 = vmatprep.subr.bf16.mxu0 0
  %3169 = vmatpush1.bf16.msra.mxu0 0
  %3170 = vmatprep.subr.bf16.mxu0 0
  %3171 = vmatpush1.bf16.msra.mxu0 0
  %3172 = vmatprep.subr.bf16.mxu0 0
  %3173 = vmatpush1.bf16.msra.mxu0 0
  %3174 = vmatprep.subr.bf16.mxu0 0
  %3175 = vmatpush1.bf16.msra.mxu0 0
  %3176 = vmatprep.subr.bf16.mxu0 0
  %3177 = vmatpush1.bf16.msra.mxu0 0
  %3178 = vmatprep.subr.bf16.mxu0 0
  %3179 = vmatpush1.bf16.msra.mxu0 0
  %3180 = vmatprep.mubr.bf16.mxu0 0
  %3181 = vmatmul.mubr.bf16.gmra.mrb[0].mxu0 %v3101
  %v3182 = vpop.f32.mrb[0].mxu0
  %v3183 = vadd.f32 0.0, %v3182
  %v3184 = vpop.f32.mrb[0].mxu0
  %v3185 = vpop.f32.mrb[0].mxu0
  %v3186 = vadd.f32 0.0, %v3185
  %v3187 = vpop.f32.mrb[0].mxu0
  %3188 = vmatprep.mubr.bf16.mxu0 0
  %3189 = vmatmul.mubr.bf16.gmra.mrb[0].mxu0 %v3104
  %v3190 = vpop.f32.mrb[0].mxu0
  %v3191 = vadd.f32 0.0, %v3190
  %v3192 = vpop.f32.mrb[0].mxu0
  %v3193 = vpop.f32.mrb[0].mxu0
  %v3194 = vadd.f32 0.0, %v3193
  %v3195 = vpop.f32.mrb[0].mxu0
  %3196 = vmatprep.mubr.bf16.mxu0 0
  %3197 = vmatmul.mubr.bf16.gmra.mrb[0].mxu0 %v3107
  %v3198 = vpop.f32.mrb[0].mxu0
  %v3199 = vadd.f32 0.0, %v3198
  %v3200 = vpop.f32.mrb[0].mxu0
  %v3201 = vpop.f32.mrb[0].mxu0
  %v3202 = vadd.f32 0.0, %v3201
  %v3203 = vpop.f32.mrb[0].mxu0
  %3204 = vmatprep.mubr.bf16.mxu0 0
  %3205 = vmatmul.mubr.bf16.gmra.mrb[0].mxu0 %v3110
  %v3206 = vpop.f32.mrb[0].mxu0
  %v3207 = vadd.f32 0.0, %v3206
  %v3208 = vpop.f32.mrb[0].mxu0
  %v3209 = vpop.f32.mrb[0].mxu0
  %v3210 = vadd.f32 0.0, %v3209
  %v3211 = vpop.f32.mrb[0].mxu0
  %3212 = vmatprep.mubr.bf16.mxu0 0
  %3213 = vmatmul.mubr.bf16.gmra.mrb[0].mxu0 %v3113
  %v3214 = vpop.f32.mrb[0].mxu0
  %v3215 = vadd.f32 0.0, %v3214
  %v3216 = vpop.f32.mrb[0].mxu0
  %v3217 = vpop.f32.mrb[0].mxu0
  %v3218 = vadd.f32 0.0, %v3217
  %v3219 = vpop.f32.mrb[0].mxu0
  %3220 = vmatprep.mubr.bf16.mxu0 0
  %3221 = vmatmul.mubr.bf16.gmra.mrb[0].mxu0 %v3116
  %v3222 = vpop.f32.mrb[0].mxu0
  %v3223 = vadd.f32 0.0, %v3222
  %v3224 = vpop.f32.mrb[0].mxu0
  %v3225 = vpop.f32.mrb[0].mxu0
  %v3226 = vadd.f32 0.0, %v3225
  %v3227 = vpop.f32.mrb[0].mxu0
  %3228 = vmatprep.mubr.bf16.mxu0 0
  %3229 = vmatmul.mubr.bf16.gmra.mrb[0].mxu0 %v3119
  %v3230 = vpop.f32.mrb[0].mxu0
  %v3231 = vadd.f32 0.0, %v3230
  %v3232 = vpop.f32.mrb[0].mxu0
  %v3233 = vpop.f32.mrb[0].mxu0
  %v3234 = vadd.f32 0.0, %v3233
  %v3235 = vpop.f32.mrb[0].mxu0
  %3236 = vmatprep.mubr.bf16.mxu0 0
  %3237 = vmatmul.mubr.bf16.gmra.mrb[0].mxu0 %v3122
  %v3238 = vpop.f32.mrb[0].mxu0
  %v3239 = vadd.f32 0.0, %v3238
  %v3240 = vpop.f32.mrb[0].mxu0
  %v3241 = vpop.f32.mrb[0].mxu0
  %v3242 = vadd.f32 0.0, %v3241
  %v3243 = vpop.f32.mrb[0].mxu0
  %3244 = vmatprep.mubr.bf16.mxu0 0
  %3245 = vmatmul.mubr.bf16.gmra.mrb[0].mxu0 %v3125
  %v3246 = vpop.f32.mrb[0].mxu0
  %v3247 = vadd.f32 0.0, %v3246
  %v3248 = vpop.f32.mrb[0].mxu0
  %v3249 = vpop.f32.mrb[0].mxu0
  %v3250 = vadd.f32 0.0, %v3249
  %v3251 = vpop.f32.mrb[0].mxu0
  %3252 = vmatprep.mubr.bf16.mxu0 0
  %3253 = vmatmul.mubr.bf16.gmra.mrb[0].mxu0 %v3128
  %v3254 = vpop.f32.mrb[0].mxu0
  %v3255 = vadd.f32 0.0, %v3254
  %v3256 = vpop.f32.mrb[0].mxu0
  %v3257 = vpop.f32.mrb[0].mxu0
  %v3258 = vadd.f32 0.0, %v3257
  %v3259 = vpop.f32.mrb[0].mxu0
  %3260 = vmatprep.mubr.bf16.mxu0 0
  %3261 = vmatmul.mubr.bf16.gmra.mrb[0].mxu0 %v3131
  %v3262 = vpop.f32.mrb[0].mxu0
  %v3263 = vadd.f32 0.0, %v3262
  %v3264 = vpop.f32.mrb[0].mxu0
  %v3265 = vpop.f32.mrb[0].mxu0
  %v3266 = vadd.f32 0.0, %v3265
  %v3267 = vpop.f32.mrb[0].mxu0
  %3268 = vmatprep.mubr.bf16.mxu0 0
  %3269 = vmatmul.mubr.bf16.gmra.mrb[0].mxu0 %v3134
  %v3270 = vpop.f32.mrb[0].mxu0
  %v3271 = vadd.f32 0.0, %v3270
  %v3272 = vpop.f32.mrb[0].mxu0
  %v3273 = vpop.f32.mrb[0].mxu0
  %v3274 = vadd.f32 0.0, %v3273
  %v3275 = vpop.f32.mrb[0].mxu0
  %3276 = vmatprep.mubr.bf16.mxu0 0
  %3277 = vmatmul.mubr.bf16.gmra.mrb[0].mxu0 %v3137
  %v3278 = vpop.f32.mrb[0].mxu0
  %v3279 = vadd.f32 0.0, %v3278
  %v3280 = vpop.f32.mrb[0].mxu0
  %v3281 = vpop.f32.mrb[0].mxu0
  %v3282 = vadd.f32 0.0, %v3281
  %v3283 = vpop.f32.mrb[0].mxu0
  %3284 = vmatprep.mubr.bf16.mxu0 0
  %3285 = vmatmul.mubr.bf16.gmra.mrb[0].mxu0 %v3140
  %v3286 = vpop.f32.mrb[0].mxu0
  %v3287 = vadd.f32 0.0, %v3286
  %v3288 = vpop.f32.mrb[0].mxu0
  %v3289 = vpop.f32.mrb[0].mxu0
  %v3290 = vadd.f32 0.0, %v3289
  %v3291 = vpop.f32.mrb[0].mxu0
  %3292 = vmatprep.mubr.bf16.mxu0 0
  %3293 = vmatmul.mubr.bf16.gmra.mrb[0].mxu0 %v3143
  %v3294 = vpop.f32.mrb[0].mxu0
  %v3295 = vadd.f32 0.0, %v3294
  %v3296 = vpop.f32.mrb[0].mxu0
  %v3297 = vpop.f32.mrb[0].mxu0
  %v3298 = vadd.f32 0.0, %v3297
  %v3299 = vpop.f32.mrb[0].mxu0
  %3300 = vmatprep.mubr.bf16.mxu0 0
  %3301 = vmatmul.mubr.bf16.gmra.mrb[0].mxu0 %v3146
  %v3302 = vpop.f32.mrb[0].mxu0
  %v3303 = vadd.f32 0.0, %v3302
  %v3304 = vpop.f32.mrb[0].mxu0
  %v3305 = vpop.f32.mrb[0].mxu0
  %v3306 = vadd.f32 0.0, %v3305
  %v3307 = vpop.f32.mrb[0].mxu0
  %3308 = vdwg.mxu0
  %v3309 = vadd.f32 %v2926, %v3183
  %v3310 = vadd.f32 %v2929, %v3186
  %v3311 = vadd.f32 %v2934, %v3191
  %v3312 = vadd.f32 %v2937, %v3194
  %v3313 = vadd.f32 %v2942, %v3199
  %v3314 = vadd.f32 %v2945, %v3202
  %v3315 = vadd.f32 %v2950, %v3207
  %v3316 = vadd.f32 %v2953, %v3210
  %v3317 = vadd.f32 %v2958, %v3215
  %v3318 = vadd.f32 %v2961, %v3218
  %v3319 = vadd.f32 %v2966, %v3223
  %v3320 = vadd.f32 %v2969, %v3226
  %v3321 = vadd.f32 %v2974, %v3231
  %v3322 = vadd.f32 %v2977, %v3234
  %v3323 = vadd.f32 %v2982, %v3239
  %v3324 = vadd.f32 %v2985, %v3242
  %v3325 = vadd.f32 %v2990, %v3247
  %v3326 = vadd.f32 %v2993, %v3250
  %v3327 = vadd.f32 %v2998, %v3255
  %v3328 = vadd.f32 %v3001, %v3258
  %v3329 = vadd.f32 %v3006, %v3263
  %v3330 = vadd.f32 %v3009, %v3266
  %v3331 = vadd.f32 %v3014, %v3271
  %v3332 = vadd.f32 %v3017, %v3274
  %v3333 = vadd.f32 %v3022, %v3279
  %v3334 = vadd.f32 %v3025, %v3282
  %v3335 = vadd.f32 %v3030, %v3287
  %v3336 = vadd.f32 %v3033, %v3290
  %v3337 = vadd.f32 %v3038, %v3295
  %v3338 = vadd.f32 %v3041, %v3298
  %v3339 = vadd.f32 %v3046, %v3303
  %v3340 = vadd.f32 %v3049, %v3306
  %3341 = vmatprep.subr.bf16.mxu0 0
  %3342 = vmatpush1.bf16.msra.mxu0 %v952
  %3343 = vmatprep.subr.bf16.mxu0 0
  %3344 = vmatpush1.bf16.msra.mxu0 %v953
  %3345 = vmatprep.subr.bf16.mxu0 0
  %3346 = vmatpush1.bf16.msra.mxu0 0
  %3347 = vmatprep.subr.bf16.mxu0 0
  %3348 = vmatpush1.bf16.msra.mxu0 0
  %3349 = vmatprep.subr.bf16.mxu0 0
  %3350 = vmatpush1.bf16.msra.mxu0 0
  %3351 = vmatprep.subr.bf16.mxu0 0
  %3352 = vmatpush1.bf16.msra.mxu0 0
  %3353 = vmatprep.subr.bf16.mxu0 0
  %3354 = vmatpush1.bf16.msra.mxu0 0
  %3355 = vmatprep.subr.bf16.mxu0 0
  %3356 = vmatpush1.bf16.msra.mxu0 0
  %3357 = vmatprep.subr.bf16.mxu0 0
  %3358 = vmatpush1.bf16.msra.mxu0 0
  %3359 = vmatprep.subr.bf16.mxu0 0
  %3360 = vmatpush1.bf16.msra.mxu0 0
  %3361 = vmatprep.subr.bf16.mxu0 0
  %3362 = vmatpush1.bf16.msra.mxu0 0
  %3363 = vmatprep.subr.bf16.mxu0 0
  %3364 = vmatpush1.bf16.msra.mxu0 0
  %3365 = vmatprep.subr.bf16.mxu0 0
  %3366 = vmatpush1.bf16.msra.mxu0 0
  %3367 = vmatprep.subr.bf16.mxu0 0
  %3368 = vmatpush1.bf16.msra.mxu0 0
  %3369 = vmatprep.subr.bf16.mxu0 0
  %3370 = vmatpush1.bf16.msra.mxu0 0
  %3371 = vmatprep.subr.bf16.mxu0 0
  %3372 = vmatpush1.bf16.msra.mxu0 0
  %3373 = vmatprep.mubr.bf16.mxu0 0
  %3374 = vmatmul.mubr.bf16.gmra.mrb[0].mxu0 %v1264
  %v3375 = vpop.f32.mrb[0].mxu0
  %v3376 = vadd.f32 0.0, %v3375
  %v3377 = vpop.f32.mrb[0].mxu0
  %v3378 = vpop.f32.mrb[0].mxu0
  %v3379 = vadd.f32 0.0, %v3378
  %v3380 = vpop.f32.mrb[0].mxu0
  %3381 = vmatprep.mubr.bf16.mxu0 0
  %3382 = vmatmul.mubr.bf16.gmra.mrb[0].mxu0 %v1267
  %v3383 = vpop.f32.mrb[0].mxu0
  %v3384 = vadd.f32 0.0, %v3383
  %v3385 = vpop.f32.mrb[0].mxu0
  %v3386 = vpop.f32.mrb[0].mxu0
  %v3387 = vadd.f32 0.0, %v3386
  %v3388 = vpop.f32.mrb[0].mxu0
  %3389 = vmatprep.mubr.bf16.mxu0 0
  %3390 = vmatmul.mubr.bf16.gmra.mrb[0].mxu0 %v1270
  %v3391 = vpop.f32.mrb[0].mxu0
  %v3392 = vadd.f32 0.0, %v3391
  %v3393 = vpop.f32.mrb[0].mxu0
  %v3394 = vpop.f32.mrb[0].mxu0
  %v3395 = vadd.f32 0.0, %v3394
  %v3396 = vpop.f32.mrb[0].mxu0
  %3397 = vmatprep.mubr.bf16.mxu0 0
  %3398 = vmatmul.mubr.bf16.gmra.mrb[0].mxu0 %v1273
  %v3399 = vpop.f32.mrb[0].mxu0
  %v3400 = vadd.f32 0.0, %v3399
  %v3401 = vpop.f32.mrb[0].mxu0
  %v3402 = vpop.f32.mrb[0].mxu0
  %v3403 = vadd.f32 0.0, %v3402
  %v3404 = vpop.f32.mrb[0].mxu0
  %3405 = vmatprep.mubr.bf16.mxu0 0
  %3406 = vmatmul.mubr.bf16.gmra.mrb[0].mxu0 %v1276
  %v3407 = vpop.f32.mrb[0].mxu0
  %v3408 = vadd.f32 0.0, %v3407
  %v3409 = vpop.f32.mrb[0].mxu0
  %v3410 = vpop.f32.mrb[0].mxu0
  %v3411 = vadd.f32 0.0, %v3410
  %v3412 = vpop.f32.mrb[0].mxu0
  %3413 = vmatprep.mubr.bf16.mxu0 0
  %3414 = vmatmul.mubr.bf16.gmra.mrb[0].mxu0 %v1279
  %v3415 = vpop.f32.mrb[0].mxu0
  %v3416 = vadd.f32 0.0, %v3415
  %v3417 = vpop.f32.mrb[0].mxu0
  %v3418 = vpop.f32.mrb[0].mxu0
  %v3419 = vadd.f32 0.0, %v3418
  %v3420 = vpop.f32.mrb[0].mxu0
  %3421 = vmatprep.mubr.bf16.mxu0 0
  %3422 = vmatmul.mubr.bf16.gmra.mrb[0].mxu0 %v1282
  %v3423 = vpop.f32.mrb[0].mxu0
  %v3424 = vadd.f32 0.0, %v3423
  %v3425 = vpop.f32.mrb[0].mxu0
  %v3426 = vpop.f32.mrb[0].mxu0
  %v3427 = vadd.f32 0.0, %v3426
  %v3428 = vpop.f32.mrb[0].mxu0
  %3429 = vmatprep.mubr.bf16.mxu0 0
  %3430 = vmatmul.mubr.bf16.gmra.mrb[0].mxu0 %v1285
  %v3431 = vpop.f32.mrb[0].mxu0
  %v3432 = vadd.f32 0.0, %v3431
  %v3433 = vpop.f32.mrb[0].mxu0
  %v3434 = vpop.f32.mrb[0].mxu0
  %v3435 = vadd.f32 0.0, %v3434
  %v3436 = vpop.f32.mrb[0].mxu0
  %3437 = vmatprep.mubr.bf16.mxu0 0
  %3438 = vmatmul.mubr.bf16.gmra.mrb[0].mxu0 %v1288
  %v3439 = vpop.f32.mrb[0].mxu0
  %v3440 = vadd.f32 0.0, %v3439
  %v3441 = vpop.f32.mrb[0].mxu0
  %v3442 = vpop.f32.mrb[0].mxu0
  %v3443 = vadd.f32 0.0, %v3442
  %v3444 = vpop.f32.mrb[0].mxu0
  %3445 = vmatprep.mubr.bf16.mxu0 0
  %3446 = vmatmul.mubr.bf16.gmra.mrb[0].mxu0 %v1291
  %v3447 = vpop.f32.mrb[0].mxu0
  %v3448 = vadd.f32 0.0, %v3447
  %v3449 = vpop.f32.mrb[0].mxu0
  %v3450 = vpop.f32.mrb[0].mxu0
  %v3451 = vadd.f32 0.0, %v3450
  %v3452 = vpop.f32.mrb[0].mxu0
  %3453 = vmatprep.mubr.bf16.mxu0 0
  %3454 = vmatmul.mubr.bf16.gmra.mrb[0].mxu0 %v1294
  %v3455 = vpop.f32.mrb[0].mxu0
  %v3456 = vadd.f32 0.0, %v3455
  %v3457 = vpop.f32.mrb[0].mxu0
  %v3458 = vpop.f32.mrb[0].mxu0
  %v3459 = vadd.f32 0.0, %v3458
  %v3460 = vpop.f32.mrb[0].mxu0
  %3461 = vmatprep.mubr.bf16.mxu0 0
  %3462 = vmatmul.mubr.bf16.gmra.mrb[0].mxu0 %v1297
  %v3463 = vpop.f32.mrb[0].mxu0
  %v3464 = vadd.f32 0.0, %v3463
  %v3465 = vpop.f32.mrb[0].mxu0
  %v3466 = vpop.f32.mrb[0].mxu0
  %v3467 = vadd.f32 0.0, %v3466
  %v3468 = vpop.f32.mrb[0].mxu0
  %3469 = vmatprep.mubr.bf16.mxu0 0
  %3470 = vmatmul.mubr.bf16.gmra.mrb[0].mxu0 %v1300
  %v3471 = vpop.f32.mrb[0].mxu0
  %v3472 = vadd.f32 0.0, %v3471
  %v3473 = vpop.f32.mrb[0].mxu0
  %v3474 = vpop.f32.mrb[0].mxu0
  %v3475 = vadd.f32 0.0, %v3474
  %v3476 = vpop.f32.mrb[0].mxu0
  %3477 = vmatprep.mubr.bf16.mxu0 0
  %3478 = vmatmul.mubr.bf16.gmra.mrb[0].mxu0 %v1303
  %v3479 = vpop.f32.mrb[0].mxu0
  %v3480 = vadd.f32 0.0, %v3479
  %v3481 = vpop.f32.mrb[0].mxu0
  %v3482 = vpop.f32.mrb[0].mxu0
  %v3483 = vadd.f32 0.0, %v3482
  %v3484 = vpop.f32.mrb[0].mxu0
  %3485 = vmatprep.mubr.bf16.mxu0 0
  %3486 = vmatmul.mubr.bf16.gmra.mrb[0].mxu0 %v1306
  %v3487 = vpop.f32.mrb[0].mxu0
  %v3488 = vadd.f32 0.0, %v3487
  %v3489 = vpop.f32.mrb[0].mxu0
  %v3490 = vpop.f32.mrb[0].mxu0
  %v3491 = vadd.f32 0.0, %v3490
  %v3492 = vpop.f32.mrb[0].mxu0
  %3493 = vmatprep.mubr.bf16.mxu0 0
  %3494 = vmatmul.mubr.bf16.gmra.mrb[0].mxu0 %v1309
  %v3495 = vpop.f32.mrb[0].mxu0
  %v3496 = vadd.f32 0.0, %v3495
  %v3497 = vpop.f32.mrb[0].mxu0
  %v3498 = vpop.f32.mrb[0].mxu0
  %v3499 = vadd.f32 0.0, %v3498
  %v3500 = vpop.f32.mrb[0].mxu0
  %3501 = vdwg.mxu0
  %v3502 = vadd.f32 %v3309, %v3376
  %v3503 = vadd.f32 %v3310, %v3379
  %v3504 = vadd.f32 %v3311, %v3384
  %v3505 = vadd.f32 %v3312, %v3387
  %v3506 = vadd.f32 %v3313, %v3392
  %v3507 = vadd.f32 %v3314, %v3395
  %v3508 = vadd.f32 %v3315, %v3400
  %v3509 = vadd.f32 %v3316, %v3403
  %v3510 = vadd.f32 %v3317, %v3408
  %v3511 = vadd.f32 %v3318, %v3411
  %v3512 = vadd.f32 %v3319, %v3416
  %v3513 = vadd.f32 %v3320, %v3419
  %v3514 = vadd.f32 %v3321, %v3424
  %v3515 = vadd.f32 %v3322, %v3427
  %v3516 = vadd.f32 %v3323, %v3432
  %v3517 = vadd.f32 %v3324, %v3435
  %v3518 = vadd.f32 %v3325, %v3440
  %v3519 = vadd.f32 %v3326, %v3443
  %v3520 = vadd.f32 %v3327, %v3448
  %v3521 = vadd.f32 %v3328, %v3451
  %v3522 = vadd.f32 %v3329, %v3456
  %v3523 = vadd.f32 %v3330, %v3459
  %v3524 = vadd.f32 %v3331, %v3464
  %v3525 = vadd.f32 %v3332, %v3467
  %v3526 = vadd.f32 %v3333, %v3472
  %v3527 = vadd.f32 %v3334, %v3475
  %v3528 = vadd.f32 %v3335, %v3480
  %v3529 = vadd.f32 %v3336, %v3483
  %v3530 = vadd.f32 %v3337, %v3488
  %v3531 = vadd.f32 %v3338, %v3491
  %v3532 = vadd.f32 %v3339, %v3496
  %v3533 = vadd.f32 %v3340, %v3499
  %3534 = vmatprep.subr.bf16.mxu0 0
  %3535 = vmatpush1.bf16.msra.mxu0 %v1259
  %3536 = vmatprep.subr.bf16.mxu0 0
  %3537 = vmatpush1.bf16.msra.mxu0 %v1260
  %3538 = vmatprep.subr.bf16.mxu0 0
  %3539 = vmatpush1.bf16.msra.mxu0 0
  %3540 = vmatprep.subr.bf16.mxu0 0
  %3541 = vmatpush1.bf16.msra.mxu0 0
  %3542 = vmatprep.subr.bf16.mxu0 0
  %3543 = vmatpush1.bf16.msra.mxu0 0
  %3544 = vmatprep.subr.bf16.mxu0 0
  %3545 = vmatpush1.bf16.msra.mxu0 0
  %3546 = vmatprep.subr.bf16.mxu0 0
  %3547 = vmatpush1.bf16.msra.mxu0 0
  %3548 = vmatprep.subr.bf16.mxu0 0
  %3549 = vmatpush1.bf16.msra.mxu0 0
  %3550 = vmatprep.subr.bf16.mxu0 0
  %3551 = vmatpush1.bf16.msra.mxu0 0
  %3552 = vmatprep.subr.bf16.mxu0 0
  %3553 = vmatpush1.bf16.msra.mxu0 0
  %3554 = vmatprep.subr.bf16.mxu0 0
  %3555 = vmatpush1.bf16.msra.mxu0 0
  %3556 = vmatprep.subr.bf16.mxu0 0
  %3557 = vmatpush1.bf16.msra.mxu0 0
  %3558 = vmatprep.subr.bf16.mxu0 0
  %3559 = vmatpush1.bf16.msra.mxu0 0
  %3560 = vmatprep.subr.bf16.mxu0 0
  %3561 = vmatpush1.bf16.msra.mxu0 0
  %3562 = vmatprep.subr.bf16.mxu0 0
  %3563 = vmatpush1.bf16.msra.mxu0 0
  %3564 = vmatprep.subr.bf16.mxu0 0
  %3565 = vmatpush1.bf16.msra.mxu0 0
  %3566 = vmatprep.mubr.bf16.mxu0 0
  %3567 = vmatmul.mubr.bf16.gmra.mrb[0].mxu0 %v1570
  %v3568 = vpop.f32.mrb[0].mxu0
  %v3569 = vadd.f32 0.0, %v3568
  %v3570 = vpop.f32.mrb[0].mxu0
  %v3571 = vpop.f32.mrb[0].mxu0
  %v3572 = vadd.f32 0.0, %v3571
  %v3573 = vpop.f32.mrb[0].mxu0
  %3574 = vmatprep.mubr.bf16.mxu0 0
  %3575 = vmatmul.mubr.bf16.gmra.mrb[0].mxu0 %v1573
  %v3576 = vpop.f32.mrb[0].mxu0
  %v3577 = vadd.f32 0.0, %v3576
  %v3578 = vpop.f32.mrb[0].mxu0
  %v3579 = vpop.f32.mrb[0].mxu0
  %v3580 = vadd.f32 0.0, %v3579
  %v3581 = vpop.f32.mrb[0].mxu0
  %3582 = vmatprep.mubr.bf16.mxu0 0
  %3583 = vmatmul.mubr.bf16.gmra.mrb[0].mxu0 %v1576
  %v3584 = vpop.f32.mrb[0].mxu0
  %v3585 = vadd.f32 0.0, %v3584
  %v3586 = vpop.f32.mrb[0].mxu0
  %v3587 = vpop.f32.mrb[0].mxu0
  %v3588 = vadd.f32 0.0, %v3587
  %v3589 = vpop.f32.mrb[0].mxu0
  %3590 = vmatprep.mubr.bf16.mxu0 0
  %3591 = vmatmul.mubr.bf16.gmra.mrb[0].mxu0 %v1579
  %v3592 = vpop.f32.mrb[0].mxu0
  %v3593 = vadd.f32 0.0, %v3592
  %v3594 = vpop.f32.mrb[0].mxu0
  %v3595 = vpop.f32.mrb[0].mxu0
  %v3596 = vadd.f32 0.0, %v3595
  %v3597 = vpop.f32.mrb[0].mxu0
  %3598 = vmatprep.mubr.bf16.mxu0 0
  %3599 = vmatmul.mubr.bf16.gmra.mrb[0].mxu0 %v1582
  %v3600 = vpop.f32.mrb[0].mxu0
  %v3601 = vadd.f32 0.0, %v3600
  %v3602 = vpop.f32.mrb[0].mxu0
  %v3603 = vpop.f32.mrb[0].mxu0
  %v3604 = vadd.f32 0.0, %v3603
  %v3605 = vpop.f32.mrb[0].mxu0
  %3606 = vmatprep.mubr.bf16.mxu0 0
  %3607 = vmatmul.mubr.bf16.gmra.mrb[0].mxu0 %v1585
  %v3608 = vpop.f32.mrb[0].mxu0
  %v3609 = vadd.f32 0.0, %v3608
  %v3610 = vpop.f32.mrb[0].mxu0
  %v3611 = vpop.f32.mrb[0].mxu0
  %v3612 = vadd.f32 0.0, %v3611
  %v3613 = vpop.f32.mrb[0].mxu0
  %3614 = vmatprep.mubr.bf16.mxu0 0
  %3615 = vmatmul.mubr.bf16.gmra.mrb[0].mxu0 %v1588
  %v3616 = vpop.f32.mrb[0].mxu0
  %v3617 = vadd.f32 0.0, %v3616
  %v3618 = vpop.f32.mrb[0].mxu0
  %v3619 = vpop.f32.mrb[0].mxu0
  %v3620 = vadd.f32 0.0, %v3619
  %v3621 = vpop.f32.mrb[0].mxu0
  %3622 = vmatprep.mubr.bf16.mxu0 0
  %3623 = vmatmul.mubr.bf16.gmra.mrb[0].mxu0 %v1591
  %v3624 = vpop.f32.mrb[0].mxu0
  %v3625 = vadd.f32 0.0, %v3624
  %v3626 = vpop.f32.mrb[0].mxu0
  %v3627 = vpop.f32.mrb[0].mxu0
  %v3628 = vadd.f32 0.0, %v3627
  %v3629 = vpop.f32.mrb[0].mxu0
  %3630 = vmatprep.mubr.bf16.mxu0 0
  %3631 = vmatmul.mubr.bf16.gmra.mrb[0].mxu0 %v1594
  %v3632 = vpop.f32.mrb[0].mxu0
  %v3633 = vadd.f32 0.0, %v3632
  %v3634 = vpop.f32.mrb[0].mxu0
  %v3635 = vpop.f32.mrb[0].mxu0
  %v3636 = vadd.f32 0.0, %v3635
  %v3637 = vpop.f32.mrb[0].mxu0
  %3638 = vmatprep.mubr.bf16.mxu0 0
  %3639 = vmatmul.mubr.bf16.gmra.mrb[0].mxu0 %v1597
  %v3640 = vpop.f32.mrb[0].mxu0
  %v3641 = vadd.f32 0.0, %v3640
  %v3642 = vpop.f32.mrb[0].mxu0
  %v3643 = vpop.f32.mrb[0].mxu0
  %v3644 = vadd.f32 0.0, %v3643
  %v3645 = vpop.f32.mrb[0].mxu0
  %3646 = vmatprep.mubr.bf16.mxu0 0
  %3647 = vmatmul.mubr.bf16.gmra.mrb[0].mxu0 %v1600
  %v3648 = vpop.f32.mrb[0].mxu0
  %v3649 = vadd.f32 0.0, %v3648
  %v3650 = vpop.f32.mrb[0].mxu0
  %v3651 = vpop.f32.mrb[0].mxu0
  %v3652 = vadd.f32 0.0, %v3651
  %v3653 = vpop.f32.mrb[0].mxu0
  %3654 = vmatprep.mubr.bf16.mxu0 0
  %3655 = vmatmul.mubr.bf16.gmra.mrb[0].mxu0 %v1603
  %v3656 = vpop.f32.mrb[0].mxu0
  %v3657 = vadd.f32 0.0, %v3656
  %v3658 = vpop.f32.mrb[0].mxu0
  %v3659 = vpop.f32.mrb[0].mxu0
  %v3660 = vadd.f32 0.0, %v3659
  %v3661 = vpop.f32.mrb[0].mxu0
  %3662 = vmatprep.mubr.bf16.mxu0 0
  %3663 = vmatmul.mubr.bf16.gmra.mrb[0].mxu0 %v1606
  %v3664 = vpop.f32.mrb[0].mxu0
  %v3665 = vadd.f32 0.0, %v3664
  %v3666 = vpop.f32.mrb[0].mxu0
  %v3667 = vpop.f32.mrb[0].mxu0
  %v3668 = vadd.f32 0.0, %v3667
  %v3669 = vpop.f32.mrb[0].mxu0
  %3670 = vmatprep.mubr.bf16.mxu0 0
  %3671 = vmatmul.mubr.bf16.gmra.mrb[0].mxu0 %v1609
  %v3672 = vpop.f32.mrb[0].mxu0
  %v3673 = vadd.f32 0.0, %v3672
  %v3674 = vpop.f32.mrb[0].mxu0
  %v3675 = vpop.f32.mrb[0].mxu0
  %v3676 = vadd.f32 0.0, %v3675
  %v3677 = vpop.f32.mrb[0].mxu0
  %3678 = vmatprep.mubr.bf16.mxu0 0
  %3679 = vmatmul.mubr.bf16.gmra.mrb[0].mxu0 %v1612
  %v3680 = vpop.f32.mrb[0].mxu0
  %v3681 = vadd.f32 0.0, %v3680
  %v3682 = vpop.f32.mrb[0].mxu0
  %v3683 = vpop.f32.mrb[0].mxu0
  %v3684 = vadd.f32 0.0, %v3683
  %v3685 = vpop.f32.mrb[0].mxu0
  %3686 = vmatprep.mubr.bf16.mxu0 0
  %3687 = vmatmul.mubr.bf16.gmra.mrb[0].mxu0 %v1615
  %v3688 = vpop.f32.mrb[0].mxu0
  %v3689 = vadd.f32 0.0, %v3688
  %v3690 = vpop.f32.mrb[0].mxu0
  %v3691 = vpop.f32.mrb[0].mxu0
  %v3692 = vadd.f32 0.0, %v3691
  %v3693 = vpop.f32.mrb[0].mxu0
  %3694 = vdwg.mxu0
  %v3695 = vadd.f32 %v3502, %v3569
  %v3696 = vadd.f32 %v3503, %v3572
  %v3697 = vadd.f32 %v3504, %v3577
  %v3698 = vadd.f32 %v3505, %v3580
  %v3699 = vadd.f32 %v3506, %v3585
  %v3700 = vadd.f32 %v3507, %v3588
  %v3701 = vadd.f32 %v3508, %v3593
  %v3702 = vadd.f32 %v3509, %v3596
  %v3703 = vadd.f32 %v3510, %v3601
  %v3704 = vadd.f32 %v3511, %v3604
  %v3705 = vadd.f32 %v3512, %v3609
  %v3706 = vadd.f32 %v3513, %v3612
  %v3707 = vadd.f32 %v3514, %v3617
  %v3708 = vadd.f32 %v3515, %v3620
  %v3709 = vadd.f32 %v3516, %v3625
  %v3710 = vadd.f32 %v3517, %v3628
  %v3711 = vadd.f32 %v3518, %v3633
  %v3712 = vadd.f32 %v3519, %v3636
  %v3713 = vadd.f32 %v3520, %v3641
  %v3714 = vadd.f32 %v3521, %v3644
  %v3715 = vadd.f32 %v3522, %v3649
  %v3716 = vadd.f32 %v3523, %v3652
  %v3717 = vadd.f32 %v3524, %v3657
  %v3718 = vadd.f32 %v3525, %v3660
  %v3719 = vadd.f32 %v3526, %v3665
  %v3720 = vadd.f32 %v3527, %v3668
  %v3721 = vadd.f32 %v3528, %v3673
  %v3722 = vadd.f32 %v3529, %v3676
  %v3723 = vadd.f32 %v3530, %v3681
  %v3724 = vadd.f32 %v3531, %v3684
  %v3725 = vadd.f32 %v3532, %v3689
  %v3726 = vadd.f32 %v3533, %v3692
  %v3727 = vld [vmem:[%s1197 + $0x1] sm:$0xff]
  %v3728 = vld [vmem:[%s1197 + $0x11] sm:$0xff]
  %v3729 = vld [vmem:[%s1197 + $0x21] sm:$0xff]
  %v3730 = vld [vmem:[%s1197 + $0x31] sm:$0xff]
  %v3731 = vld [vmem:[%s1197 + $0x41] sm:$0xff]
  %v3732 = vld [vmem:[%s1197 + $0x51] sm:$0xff]
  %v3733 = vld [vmem:[%s1197 + $0x61] sm:$0xff]
  %v3734 = vld [vmem:[%s1197 + $0x71] sm:$0xff]
  %v3735 = vld [vmem:[%s1197 + $0x81] sm:$0xff]
  %v3736 = vld [vmem:[%s1197 + $0x91] sm:$0xff]
  %v3737 = vld [vmem:[%s1197 + $0xa1] sm:$0xff]
  %v3738 = vld [vmem:[%s1197 + $0xb1] sm:$0xff]
  %v3739 = vld [vmem:[%s1197 + $0xc1] sm:$0xff]
  %v3740 = vld [vmem:[%s1197 + $0xd1] sm:$0xff]
  %v3741 = vld [vmem:[%s1197 + $0xe1] sm:$0xff]
  %v3742 = vld [vmem:[%s1197 + $0xf1] sm:$0xff]
  %v3743 = vld [vmem:[%s1197 + $0x121] sm:$0xff]
  %v3744 = vld [vmem:[%s1197 + $0x131] sm:$0xff]
  %v3745 = vld [vmem:[%s1197 + $0x141] sm:$0xff]
  %v3746 = vld [vmem:[%s1197 + $0x151] sm:$0xff]
  %v3747 = vld [vmem:[%s1197 + $0x161] sm:$0xff]
  %v3748 = vld [vmem:[%s1197 + $0x171] sm:$0xff]
  %v3749 = vld [vmem:[%s1197 + $0x181] sm:$0xff]
  %v3750 = vld [vmem:[%s1197 + $0x191] sm:$0xff]
  %v3751 = vld [vmem:[%s1197 + $0x1a1] sm:$0xff]
  %v3752 = vld [vmem:[%s1197 + $0x1b1] sm:$0xff]
  %v3753 = vld [vmem:[%s1197 + $0x1c1] sm:$0xff]
  %v3754 = vld [vmem:[%s1197 + $0x1d1] sm:$0xff]
  %v3755 = vld [vmem:[%s1197 + $0x1e1] sm:$0xff]
  %v3756 = vld [vmem:[%s1197 + $0x1f1] sm:$0xff]
  %v3757 = vld [vmem:[%s1197 + $0x201] sm:$0xff]
  %v3758 = vld [vmem:[%s1197 + $0x211] sm:$0xff]
  %v3759 = vpack.c.bf16 %v3728, %v3727
  %v3760 = vpack.c.bf16 %v3730, %v3729
  %v3761 = vpack.c.bf16 %v3732, %v3731
  %v3762 = vpack.c.bf16 %v3734, %v3733
  %v3763 = vpack.c.bf16 %v3736, %v3735
  %v3764 = vpack.c.bf16 %v3738, %v3737
  %v3765 = vpack.c.bf16 %v3740, %v3739
  %v3766 = vpack.c.bf16 %v3742, %v3741
  %v3767 = vpack.c.bf16 %v3744, %v3743
  %v3768 = vpack.c.bf16 %v3746, %v3745
  %v3769 = vpack.c.bf16 %v3748, %v3747
  %v3770 = vpack.c.bf16 %v3750, %v3749
  %v3771 = vpack.c.bf16 %v3752, %v3751
  %v3772 = vpack.c.bf16 %v3754, %v3753
  %v3773 = vpack.c.bf16 %v3756, %v3755
  %v3774 = vpack.c.bf16 %v3758, %v3757
  %v3776 = vsel %vm153, %v3759, 0
  %v3779 = vsel %vm153, %v3760, 0
  %v3782 = vsel %vm153, %v3761, 0
  %v3785 = vsel %vm153, %v3762, 0
  %v3788 = vsel %vm153, %v3763, 0
  %v3791 = vsel %vm153, %v3764, 0
  %v3794 = vsel %vm153, %v3765, 0
  %v3797 = vsel %vm153, %v3766, 0
  %v3800 = vsel %vm153, %v3767, 0
  %v3803 = vsel %vm153, %v3768, 0
  %v3806 = vsel %vm153, %v3769, 0
  %v3809 = vsel %vm153, %v3770, 0
  %v3812 = vsel %vm153, %v3771, 0
  %v3815 = vsel %vm153, %v3772, 0
  %v3818 = vsel %vm153, %v3773, 0
  %v3821 = vsel %vm153, %v3774, 0
  %3823 = vmatprep.subr.bf16.mxu0 0
  %3824 = vmatpush1.bf16.msra.mxu0 %v1565
  %3825 = vmatprep.subr.bf16.mxu0 0
  %3826 = vmatpush1.bf16.msra.mxu0 %v1566
  %3827 = vmatprep.subr.bf16.mxu0 0
  %3828 = vmatpush1.bf16.msra.mxu0 0
  %3829 = vmatprep.subr.bf16.mxu0 0
  %3830 = vmatpush1.bf16.msra.mxu0 0
  %3831 = vmatprep.subr.bf16.mxu0 0
  %3832 = vmatpush1.bf16.msra.mxu0 0
  %3833 = vmatprep.subr.bf16.mxu0 0
  %3834 = vmatpush1.bf16.msra.mxu0 0
  %3835 = vmatprep.subr.bf16.mxu0 0
  %3836 = vmatpush1.bf16.msra.mxu0 0
  %3837 = vmatprep.subr.bf16.mxu0 0
  %3838 = vmatpush1.bf16.msra.mxu0 0
  %3839 = vmatprep.subr.bf16.mxu0 0
  %3840 = vmatpush1.bf16.msra.mxu0 0
  %3841 = vmatprep.subr.bf16.mxu0 0
  %3842 = vmatpush1.bf16.msra.mxu0 0
  %3843 = vmatprep.subr.bf16.mxu0 0
  %3844 = vmatpush1.bf16.msra.mxu0 0
  %3845 = vmatprep.subr.bf16.mxu0 0
  %3846 = vmatpush1.bf16.msra.mxu0 0
  %3847 = vmatprep.subr.bf16.mxu0 0
  %3848 = vmatpush1.bf16.msra.mxu0 0
  %3849 = vmatprep.subr.bf16.mxu0 0
  %3850 = vmatpush1.bf16.msra.mxu0 0
  %3851 = vmatprep.subr.bf16.mxu0 0
  %3852 = vmatpush1.bf16.msra.mxu0 0
  %3853 = vmatprep.subr.bf16.mxu0 0
  %3854 = vmatpush1.bf16.msra.mxu0 0
  %3855 = vmatprep.mubr.bf16.mxu0 0
  %3856 = vmatmul.mubr.bf16.gmra.mrb[0].mxu0 %v3776
  %v3857 = vpop.f32.mrb[0].mxu0
  %v3858 = vadd.f32 0.0, %v3857
  %v3859 = vpop.f32.mrb[0].mxu0
  %v3860 = vpop.f32.mrb[0].mxu0
  %v3861 = vadd.f32 0.0, %v3860
  %v3862 = vpop.f32.mrb[0].mxu0
  %3863 = vmatprep.mubr.bf16.mxu0 0
  %3864 = vmatmul.mubr.bf16.gmra.mrb[0].mxu0 %v3779
  %v3865 = vpop.f32.mrb[0].mxu0
  %v3866 = vadd.f32 0.0, %v3865
  %v3867 = vpop.f32.mrb[0].mxu0
  %v3868 = vpop.f32.mrb[0].mxu0
  %v3869 = vadd.f32 0.0, %v3868
  %v3870 = vpop.f32.mrb[0].mxu0
  %3871 = vmatprep.mubr.bf16.mxu0 0
  %3872 = vmatmul.mubr.bf16.gmra.mrb[0].mxu0 %v3782
  %v3873 = vpop.f32.mrb[0].mxu0
  %v3874 = vadd.f32 0.0, %v3873
  %v3875 = vpop.f32.mrb[0].mxu0
  %v3876 = vpop.f32.mrb[0].mxu0
  %v3877 = vadd.f32 0.0, %v3876
  %v3878 = vpop.f32.mrb[0].mxu0
  %3879 = vmatprep.mubr.bf16.mxu0 0
  %3880 = vmatmul.mubr.bf16.gmra.mrb[0].mxu0 %v3785
  %v3881 = vpop.f32.mrb[0].mxu0
  %v3882 = vadd.f32 0.0, %v3881
  %v3883 = vpop.f32.mrb[0].mxu0
  %v3884 = vpop.f32.mrb[0].mxu0
  %v3885 = vadd.f32 0.0, %v3884
  %v3886 = vpop.f32.mrb[0].mxu0
  %3887 = vmatprep.mubr.bf16.mxu0 0
  %3888 = vmatmul.mubr.bf16.gmra.mrb[0].mxu0 %v3788
  %v3889 = vpop.f32.mrb[0].mxu0
  %v3890 = vadd.f32 0.0, %v3889
  %v3891 = vpop.f32.mrb[0].mxu0
  %v3892 = vpop.f32.mrb[0].mxu0
  %v3893 = vadd.f32 0.0, %v3892
  %v3894 = vpop.f32.mrb[0].mxu0
  %3895 = vmatprep.mubr.bf16.mxu0 0
  %3896 = vmatmul.mubr.bf16.gmra.mrb[0].mxu0 %v3791
  %v3897 = vpop.f32.mrb[0].mxu0
  %v3898 = vadd.f32 0.0, %v3897
  %v3899 = vpop.f32.mrb[0].mxu0
  %v3900 = vpop.f32.mrb[0].mxu0
  %v3901 = vadd.f32 0.0, %v3900
  %v3902 = vpop.f32.mrb[0].mxu0
  %3903 = vmatprep.mubr.bf16.mxu0 0
  %3904 = vmatmul.mubr.bf16.gmra.mrb[0].mxu0 %v3794
  %v3905 = vpop.f32.mrb[0].mxu0
  %v3906 = vadd.f32 0.0, %v3905
  %v3907 = vpop.f32.mrb[0].mxu0
  %v3908 = vpop.f32.mrb[0].mxu0
  %v3909 = vadd.f32 0.0, %v3908
  %v3910 = vpop.f32.mrb[0].mxu0
  %3911 = vmatprep.mubr.bf16.mxu0 0
  %3912 = vmatmul.mubr.bf16.gmra.mrb[0].mxu0 %v3797
  %v3913 = vpop.f32.mrb[0].mxu0
  %v3914 = vadd.f32 0.0, %v3913
  %v3915 = vpop.f32.mrb[0].mxu0
  %v3916 = vpop.f32.mrb[0].mxu0
  %v3917 = vadd.f32 0.0, %v3916
  %v3918 = vpop.f32.mrb[0].mxu0
  %3919 = vmatprep.mubr.bf16.mxu0 0
  %3920 = vmatmul.mubr.bf16.gmra.mrb[0].mxu0 %v3800
  %v3921 = vpop.f32.mrb[0].mxu0
  %v3922 = vadd.f32 0.0, %v3921
  %v3923 = vpop.f32.mrb[0].mxu0
  %v3924 = vpop.f32.mrb[0].mxu0
  %v3925 = vadd.f32 0.0, %v3924
  %v3926 = vpop.f32.mrb[0].mxu0
  %3927 = vmatprep.mubr.bf16.mxu0 0
  %3928 = vmatmul.mubr.bf16.gmra.mrb[0].mxu0 %v3803
  %v3929 = vpop.f32.mrb[0].mxu0
  %v3930 = vadd.f32 0.0, %v3929
  %v3931 = vpop.f32.mrb[0].mxu0
  %v3932 = vpop.f32.mrb[0].mxu0
  %v3933 = vadd.f32 0.0, %v3932
  %v3934 = vpop.f32.mrb[0].mxu0
  %3935 = vmatprep.mubr.bf16.mxu0 0
  %3936 = vmatmul.mubr.bf16.gmra.mrb[0].mxu0 %v3806
  %v3937 = vpop.f32.mrb[0].mxu0
  %v3938 = vadd.f32 0.0, %v3937
  %v3939 = vpop.f32.mrb[0].mxu0
  %v3940 = vpop.f32.mrb[0].mxu0
  %v3941 = vadd.f32 0.0, %v3940
  %v3942 = vpop.f32.mrb[0].mxu0
  %3943 = vmatprep.mubr.bf16.mxu0 0
  %3944 = vmatmul.mubr.bf16.gmra.mrb[0].mxu0 %v3809
  %v3945 = vpop.f32.mrb[0].mxu0
  %v3946 = vadd.f32 0.0, %v3945
  %v3947 = vpop.f32.mrb[0].mxu0
  %v3948 = vpop.f32.mrb[0].mxu0
  %v3949 = vadd.f32 0.0, %v3948
  %v3950 = vpop.f32.mrb[0].mxu0
  %3951 = vmatprep.mubr.bf16.mxu0 0
  %3952 = vmatmul.mubr.bf16.gmra.mrb[0].mxu0 %v3812
  %v3953 = vpop.f32.mrb[0].mxu0
  %v3954 = vadd.f32 0.0, %v3953
  %v3955 = vpop.f32.mrb[0].mxu0
  %v3956 = vpop.f32.mrb[0].mxu0
  %v3957 = vadd.f32 0.0, %v3956
  %v3958 = vpop.f32.mrb[0].mxu0
  %3959 = vmatprep.mubr.bf16.mxu0 0
  %3960 = vmatmul.mubr.bf16.gmra.mrb[0].mxu0 %v3815
  %v3961 = vpop.f32.mrb[0].mxu0
  %v3962 = vadd.f32 0.0, %v3961
  %v3963 = vpop.f32.mrb[0].mxu0
  %v3964 = vpop.f32.mrb[0].mxu0
  %v3965 = vadd.f32 0.0, %v3964
  %v3966 = vpop.f32.mrb[0].mxu0
  %3967 = vmatprep.mubr.bf16.mxu0 0
  %3968 = vmatmul.mubr.bf16.gmra.mrb[0].mxu0 %v3818
  %v3969 = vpop.f32.mrb[0].mxu0
  %v3970 = vadd.f32 0.0, %v3969
  %v3971 = vpop.f32.mrb[0].mxu0
  %v3972 = vpop.f32.mrb[0].mxu0
  %v3973 = vadd.f32 0.0, %v3972
  %v3974 = vpop.f32.mrb[0].mxu0
  %3975 = vmatprep.mubr.bf16.mxu0 0
  %3976 = vmatmul.mubr.bf16.gmra.mrb[0].mxu0 %v3821
  %v3977 = vpop.f32.mrb[0].mxu0
  %v3978 = vadd.f32 0.0, %v3977
  %v3979 = vpop.f32.mrb[0].mxu0
  %v3980 = vpop.f32.mrb[0].mxu0
  %v3981 = vadd.f32 0.0, %v3980
  %v3982 = vpop.f32.mrb[0].mxu0
  %3983 = vdwg.mxu0
  %v3984 = vadd.f32 %v3695, %v3858
  %v3985 = vadd.f32 %v3696, %v3861
  %v3986 = vadd.f32 %v3697, %v3866
  %v3987 = vadd.f32 %v3698, %v3869
  %v3988 = vadd.f32 %v3699, %v3874
  %v3989 = vadd.f32 %v3700, %v3877
  %v3990 = vadd.f32 %v3701, %v3882
  %v3991 = vadd.f32 %v3702, %v3885
  %v3992 = vadd.f32 %v3703, %v3890
  %v3993 = vadd.f32 %v3704, %v3893
  %v3994 = vadd.f32 %v3705, %v3898
  %v3995 = vadd.f32 %v3706, %v3901
  %v3996 = vadd.f32 %v3707, %v3906
  %v3997 = vadd.f32 %v3708, %v3909
  %v3998 = vadd.f32 %v3709, %v3914
  %v3999 = vadd.f32 %v3710, %v3917
  %v4000 = vadd.f32 %v3711, %v3922
  %v4001 = vadd.f32 %v3712, %v3925
  %v4002 = vadd.f32 %v3713, %v3930
  %v4003 = vadd.f32 %v3714, %v3933
  %v4004 = vadd.f32 %v3715, %v3938
  %v4005 = vadd.f32 %v3716, %v3941
  %v4006 = vadd.f32 %v3717, %v3946
  %v4007 = vadd.f32 %v3718, %v3949
  %v4008 = vadd.f32 %v3719, %v3954
  %v4009 = vadd.f32 %v3720, %v3957
  %v4010 = vadd.f32 %v3721, %v3962
  %v4011 = vadd.f32 %v3722, %v3965
  %v4012 = vadd.f32 %v3723, %v3970
  %v4013 = vadd.f32 %v3724, %v3973
  %v4014 = vadd.f32 %v3725, %v3978
  %v4015 = vadd.f32 %v3726, %v3981
  %4016 = vmatprep.subr.bf16.mxu0 0
  %4017 = vmatpush1.bf16.msra.mxu0 %v1872
  %4018 = vmatprep.subr.bf16.mxu0 0
  %4019 = vmatpush1.bf16.msra.mxu0 %v1873
  %4020 = vmatprep.subr.bf16.mxu0 0
  %4021 = vmatpush1.bf16.msra.mxu0 0
  %4022 = vmatprep.subr.bf16.mxu0 0
  %4023 = vmatpush1.bf16.msra.mxu0 0
  %4024 = vmatprep.subr.bf16.mxu0 0
  %4025 = vmatpush1.bf16.msra.mxu0 0
  %4026 = vmatprep.subr.bf16.mxu0 0
  %4027 = vmatpush1.bf16.msra.mxu0 0
  %4028 = vmatprep.subr.bf16.mxu0 0
  %4029 = vmatpush1.bf16.msra.mxu0 0
  %4030 = vmatprep.subr.bf16.mxu0 0
  %4031 = vmatpush1.bf16.msra.mxu0 0
  %4032 = vmatprep.subr.bf16.mxu0 0
  %4033 = vmatpush1.bf16.msra.mxu0 0
  %4034 = vmatprep.subr.bf16.mxu0 0
  %4035 = vmatpush1.bf16.msra.mxu0 0
  %4036 = vmatprep.subr.bf16.mxu0 0
  %4037 = vmatpush1.bf16.msra.mxu0 0
  %4038 = vmatprep.subr.bf16.mxu0 0
  %4039 = vmatpush1.bf16.msra.mxu0 0
  %4040 = vmatprep.subr.bf16.mxu0 0
  %4041 = vmatpush1.bf16.msra.mxu0 0
  %4042 = vmatprep.subr.bf16.mxu0 0
  %4043 = vmatpush1.bf16.msra.mxu0 0
  %4044 = vmatprep.subr.bf16.mxu0 0
  %4045 = vmatpush1.bf16.msra.mxu0 0
  %4046 = vmatprep.subr.bf16.mxu0 0
  %4047 = vmatpush1.bf16.msra.mxu0 0
  %4048 = vmatprep.mubr.bf16.mxu0 0
  %4049 = vmatmul.mubr.bf16.gmra.mrb[0].mxu0 %v2184
  %v4050 = vpop.f32.mrb[0].mxu0
  %v4051 = vadd.f32 0.0, %v4050
  %v4052 = vpop.f32.mrb[0].mxu0
  %v4053 = vpop.f32.mrb[0].mxu0
  %v4054 = vadd.f32 0.0, %v4053
  %v4055 = vpop.f32.mrb[0].mxu0
  %4056 = vmatprep.mubr.bf16.mxu0 0
  %4057 = vmatmul.mubr.bf16.gmra.mrb[0].mxu0 %v2187
  %v4058 = vpop.f32.mrb[0].mxu0
  %v4059 = vadd.f32 0.0, %v4058
  %v4060 = vpop.f32.mrb[0].mxu0
  %v4061 = vpop.f32.mrb[0].mxu0
  %v4062 = vadd.f32 0.0, %v4061
  %v4063 = vpop.f32.mrb[0].mxu0
  %4064 = vmatprep.mubr.bf16.mxu0 0
  %4065 = vmatmul.mubr.bf16.gmra.mrb[0].mxu0 %v2190
  %v4066 = vpop.f32.mrb[0].mxu0
  %v4067 = vadd.f32 0.0, %v4066
  %v4068 = vpop.f32.mrb[0].mxu0
  %v4069 = vpop.f32.mrb[0].mxu0
  %v4070 = vadd.f32 0.0, %v4069
  %v4071 = vpop.f32.mrb[0].mxu0
  %4072 = vmatprep.mubr.bf16.mxu0 0
  %4073 = vmatmul.mubr.bf16.gmra.mrb[0].mxu0 %v2193
  %v4074 = vpop.f32.mrb[0].mxu0
  %v4075 = vadd.f32 0.0, %v4074
  %v4076 = vpop.f32.mrb[0].mxu0
  %v4077 = vpop.f32.mrb[0].mxu0
  %v4078 = vadd.f32 0.0, %v4077
  %v4079 = vpop.f32.mrb[0].mxu0
  %4080 = vmatprep.mubr.bf16.mxu0 0
  %4081 = vmatmul.mubr.bf16.gmra.mrb[0].mxu0 %v2196
  %v4082 = vpop.f32.mrb[0].mxu0
  %v4083 = vadd.f32 0.0, %v4082
  %v4084 = vpop.f32.mrb[0].mxu0
  %v4085 = vpop.f32.mrb[0].mxu0
  %v4086 = vadd.f32 0.0, %v4085
  %v4087 = vpop.f32.mrb[0].mxu0
  %4088 = vmatprep.mubr.bf16.mxu0 0
  %4089 = vmatmul.mubr.bf16.gmra.mrb[0].mxu0 %v2199
  %v4090 = vpop.f32.mrb[0].mxu0
  %v4091 = vadd.f32 0.0, %v4090
  %v4092 = vpop.f32.mrb[0].mxu0
  %v4093 = vpop.f32.mrb[0].mxu0
  %v4094 = vadd.f32 0.0, %v4093
  %v4095 = vpop.f32.mrb[0].mxu0
  %4096 = vmatprep.mubr.bf16.mxu0 0
  %4097 = vmatmul.mubr.bf16.gmra.mrb[0].mxu0 %v2202
  %v4098 = vpop.f32.mrb[0].mxu0
  %v4099 = vadd.f32 0.0, %v4098
  %v4100 = vpop.f32.mrb[0].mxu0
  %v4101 = vpop.f32.mrb[0].mxu0
  %v4102 = vadd.f32 0.0, %v4101
  %v4103 = vpop.f32.mrb[0].mxu0
  %4104 = vmatprep.mubr.bf16.mxu0 0
  %4105 = vmatmul.mubr.bf16.gmra.mrb[0].mxu0 %v2205
  %v4106 = vpop.f32.mrb[0].mxu0
  %v4107 = vadd.f32 0.0, %v4106
  %v4108 = vpop.f32.mrb[0].mxu0
  %v4109 = vpop.f32.mrb[0].mxu0
  %v4110 = vadd.f32 0.0, %v4109
  %v4111 = vpop.f32.mrb[0].mxu0
  %4112 = vmatprep.mubr.bf16.mxu0 0
  %4113 = vmatmul.mubr.bf16.gmra.mrb[0].mxu0 %v2208
  %v4114 = vpop.f32.mrb[0].mxu0
  %v4115 = vadd.f32 0.0, %v4114
  %v4116 = vpop.f32.mrb[0].mxu0
  %v4117 = vpop.f32.mrb[0].mxu0
  %v4118 = vadd.f32 0.0, %v4117
  %v4119 = vpop.f32.mrb[0].mxu0
  %4120 = vmatprep.mubr.bf16.mxu0 0
  %4121 = vmatmul.mubr.bf16.gmra.mrb[0].mxu0 %v2211
  %v4122 = vpop.f32.mrb[0].mxu0
  %v4123 = vadd.f32 0.0, %v4122
  %v4124 = vpop.f32.mrb[0].mxu0
  %v4125 = vpop.f32.mrb[0].mxu0
  %v4126 = vadd.f32 0.0, %v4125
  %v4127 = vpop.f32.mrb[0].mxu0
  %4128 = vmatprep.mubr.bf16.mxu0 0
  %4129 = vmatmul.mubr.bf16.gmra.mrb[0].mxu0 %v2214
  %v4130 = vpop.f32.mrb[0].mxu0
  %v4131 = vadd.f32 0.0, %v4130
  %v4132 = vpop.f32.mrb[0].mxu0
  %v4133 = vpop.f32.mrb[0].mxu0
  %v4134 = vadd.f32 0.0, %v4133
  %v4135 = vpop.f32.mrb[0].mxu0
  %4136 = vmatprep.mubr.bf16.mxu0 0
  %4137 = vmatmul.mubr.bf16.gmra.mrb[0].mxu0 %v2217
  %v4138 = vpop.f32.mrb[0].mxu0
  %v4139 = vadd.f32 0.0, %v4138
  %v4140 = vpop.f32.mrb[0].mxu0
  %v4141 = vpop.f32.mrb[0].mxu0
  %v4142 = vadd.f32 0.0, %v4141
  %v4143 = vpop.f32.mrb[0].mxu0
  %4144 = vmatprep.mubr.bf16.mxu0 0
  %4145 = vmatmul.mubr.bf16.gmra.mrb[0].mxu0 %v2220
  %v4146 = vpop.f32.mrb[0].mxu0
  %v4147 = vadd.f32 0.0, %v4146
  %v4148 = vpop.f32.mrb[0].mxu0
  %v4149 = vpop.f32.mrb[0].mxu0
  %v4150 = vadd.f32 0.0, %v4149
  %v4151 = vpop.f32.mrb[0].mxu0
  %4152 = vmatprep.mubr.bf16.mxu0 0
  %4153 = vmatmul.mubr.bf16.gmra.mrb[0].mxu0 %v2223
  %v4154 = vpop.f32.mrb[0].mxu0
  %v4155 = vadd.f32 0.0, %v4154
  %v4156 = vpop.f32.mrb[0].mxu0
  %v4157 = vpop.f32.mrb[0].mxu0
  %v4158 = vadd.f32 0.0, %v4157
  %v4159 = vpop.f32.mrb[0].mxu0
  %4160 = vmatprep.mubr.bf16.mxu0 0
  %4161 = vmatmul.mubr.bf16.gmra.mrb[0].mxu0 %v2226
  %v4162 = vpop.f32.mrb[0].mxu0
  %v4163 = vadd.f32 0.0, %v4162
  %v4164 = vpop.f32.mrb[0].mxu0
  %v4165 = vpop.f32.mrb[0].mxu0
  %v4166 = vadd.f32 0.0, %v4165
  %v4167 = vpop.f32.mrb[0].mxu0
  %4168 = vmatprep.mubr.bf16.mxu0 0
  %4169 = vmatmul.mubr.bf16.gmra.mrb[0].mxu0 %v2229
  %v4170 = vpop.f32.mrb[0].mxu0
  %v4171 = vadd.f32 0.0, %v4170
  %v4172 = vpop.f32.mrb[0].mxu0
  %v4173 = vpop.f32.mrb[0].mxu0
  %v4174 = vadd.f32 0.0, %v4173
  %v4175 = vpop.f32.mrb[0].mxu0
  %4176 = vdwg.mxu0
  %v4177 = vadd.f32 %v3984, %v4051
  %v4178 = vadd.f32 %v3985, %v4054
  %v4179 = vadd.f32 %v3986, %v4059
  %v4180 = vadd.f32 %v3987, %v4062
  %v4181 = vadd.f32 %v3988, %v4067
  %v4182 = vadd.f32 %v3989, %v4070
  %v4183 = vadd.f32 %v3990, %v4075
  %v4184 = vadd.f32 %v3991, %v4078
  %v4185 = vadd.f32 %v3992, %v4083
  %v4186 = vadd.f32 %v3993, %v4086
  %v4187 = vadd.f32 %v3994, %v4091
  %v4188 = vadd.f32 %v3995, %v4094
  %v4189 = vadd.f32 %v3996, %v4099
  %v4190 = vadd.f32 %v3997, %v4102
  %v4191 = vadd.f32 %v3998, %v4107
  %v4192 = vadd.f32 %v3999, %v4110
  %v4193 = vadd.f32 %v4000, %v4115
  %v4194 = vadd.f32 %v4001, %v4118
  %v4195 = vadd.f32 %v4002, %v4123
  %v4196 = vadd.f32 %v4003, %v4126
  %v4197 = vadd.f32 %v4004, %v4131
  %v4198 = vadd.f32 %v4005, %v4134
  %v4199 = vadd.f32 %v4006, %v4139
  %v4200 = vadd.f32 %v4007, %v4142
  %v4201 = vadd.f32 %v4008, %v4147
  %v4202 = vadd.f32 %v4009, %v4150
  %v4203 = vadd.f32 %v4010, %v4155
  %v4204 = vadd.f32 %v4011, %v4158
  %v4205 = vadd.f32 %v4012, %v4163
  %v4206 = vadd.f32 %v4013, %v4166
  %v4207 = vadd.f32 %v4014, %v4171
  %v4208 = vadd.f32 %v4015, %v4174
  %4209 = vmatprep.subr.bf16.mxu0 0
  %4210 = vmatpush1.bf16.msra.mxu0 %v2179
  %4211 = vmatprep.subr.bf16.mxu0 0
  %4212 = vmatpush1.bf16.msra.mxu0 %v2180
  %4213 = vmatprep.subr.bf16.mxu0 0
  %4214 = vmatpush1.bf16.msra.mxu0 0
  %4215 = vmatprep.subr.bf16.mxu0 0
  %4216 = vmatpush1.bf16.msra.mxu0 0
  %4217 = vmatprep.subr.bf16.mxu0 0
  %4218 = vmatpush1.bf16.msra.mxu0 0
  %4219 = vmatprep.subr.bf16.mxu0 0
  %4220 = vmatpush1.bf16.msra.mxu0 0
  %4221 = vmatprep.subr.bf16.mxu0 0
  %4222 = vmatpush1.bf16.msra.mxu0 0
  %4223 = vmatprep.subr.bf16.mxu0 0
  %4224 = vmatpush1.bf16.msra.mxu0 0
  %4225 = vmatprep.subr.bf16.mxu0 0
  %4226 = vmatpush1.bf16.msra.mxu0 0
  %4227 = vmatprep.subr.bf16.mxu0 0
  %4228 = vmatpush1.bf16.msra.mxu0 0
  %4229 = vmatprep.subr.bf16.mxu0 0
  %4230 = vmatpush1.bf16.msra.mxu0 0
  %4231 = vmatprep.subr.bf16.mxu0 0
  %4232 = vmatpush1.bf16.msra.mxu0 0
  %4233 = vmatprep.subr.bf16.mxu0 0
  %4234 = vmatpush1.bf16.msra.mxu0 0
  %4235 = vmatprep.subr.bf16.mxu0 0
  %4236 = vmatpush1.bf16.msra.mxu0 0
  %4237 = vmatprep.subr.bf16.mxu0 0
  %4238 = vmatpush1.bf16.msra.mxu0 0
  %4239 = vmatprep.subr.bf16.mxu0 0
  %4240 = vmatpush1.bf16.msra.mxu0 0
  %4241 = vmatprep.mubr.bf16.mxu0 0
  %4242 = vmatmul.mubr.bf16.gmra.mrb[0].mxu0 %v2490
  %v4243 = vpop.f32.mrb[0].mxu0
  %v4244 = vadd.f32 0.0, %v4243
  %v4245 = vpop.f32.mrb[0].mxu0
  %v4246 = vpop.f32.mrb[0].mxu0
  %v4247 = vadd.f32 0.0, %v4246
  %v4248 = vpop.f32.mrb[0].mxu0
  %4249 = vmatprep.mubr.bf16.mxu0 0
  %4250 = vmatmul.mubr.bf16.gmra.mrb[0].mxu0 %v2493
  %v4251 = vpop.f32.mrb[0].mxu0
  %v4252 = vadd.f32 0.0, %v4251
  %v4253 = vpop.f32.mrb[0].mxu0
  %v4254 = vpop.f32.mrb[0].mxu0
  %v4255 = vadd.f32 0.0, %v4254
  %v4256 = vpop.f32.mrb[0].mxu0
  %4257 = vmatprep.mubr.bf16.mxu0 0
  %4258 = vmatmul.mubr.bf16.gmra.mrb[0].mxu0 %v2496
  %v4259 = vpop.f32.mrb[0].mxu0
  %v4260 = vadd.f32 0.0, %v4259
  %v4261 = vpop.f32.mrb[0].mxu0
  %v4262 = vpop.f32.mrb[0].mxu0
  %v4263 = vadd.f32 0.0, %v4262
  %v4264 = vpop.f32.mrb[0].mxu0
  %4265 = vmatprep.mubr.bf16.mxu0 0
  %4266 = vmatmul.mubr.bf16.gmra.mrb[0].mxu0 %v2499
  %v4267 = vpop.f32.mrb[0].mxu0
  %v4268 = vadd.f32 0.0, %v4267
  %v4269 = vpop.f32.mrb[0].mxu0
  %v4270 = vpop.f32.mrb[0].mxu0
  %v4271 = vadd.f32 0.0, %v4270
  %v4272 = vpop.f32.mrb[0].mxu0
  %4273 = vmatprep.mubr.bf16.mxu0 0
  %4274 = vmatmul.mubr.bf16.gmra.mrb[0].mxu0 %v2502
  %v4275 = vpop.f32.mrb[0].mxu0
  %v4276 = vadd.f32 0.0, %v4275
  %v4277 = vpop.f32.mrb[0].mxu0
  %v4278 = vpop.f32.mrb[0].mxu0
  %v4279 = vadd.f32 0.0, %v4278
  %v4280 = vpop.f32.mrb[0].mxu0
  %4281 = vmatprep.mubr.bf16.mxu0 0
  %4282 = vmatmul.mubr.bf16.gmra.mrb[0].mxu0 %v2505
  %v4283 = vpop.f32.mrb[0].mxu0
  %v4284 = vadd.f32 0.0, %v4283
  %v4285 = vpop.f32.mrb[0].mxu0
  %v4286 = vpop.f32.mrb[0].mxu0
  %v4287 = vadd.f32 0.0, %v4286
  %v4288 = vpop.f32.mrb[0].mxu0
  %4289 = vmatprep.mubr.bf16.mxu0 0
  %4290 = vmatmul.mubr.bf16.gmra.mrb[0].mxu0 %v2508
  %v4291 = vpop.f32.mrb[0].mxu0
  %v4292 = vadd.f32 0.0, %v4291
  %v4293 = vpop.f32.mrb[0].mxu0
  %v4294 = vpop.f32.mrb[0].mxu0
  %v4295 = vadd.f32 0.0, %v4294
  %v4296 = vpop.f32.mrb[0].mxu0
  %4297 = vmatprep.mubr.bf16.mxu0 0
  %4298 = vmatmul.mubr.bf16.gmra.mrb[0].mxu0 %v2511
  %v4299 = vpop.f32.mrb[0].mxu0
  %v4300 = vadd.f32 0.0, %v4299
  %v4301 = vpop.f32.mrb[0].mxu0
  %v4302 = vpop.f32.mrb[0].mxu0
  %v4303 = vadd.f32 0.0, %v4302
  %v4304 = vpop.f32.mrb[0].mxu0
  %4305 = vmatprep.mubr.bf16.mxu0 0
  %4306 = vmatmul.mubr.bf16.gmra.mrb[0].mxu0 %v2514
  %v4307 = vpop.f32.mrb[0].mxu0
  %v4308 = vadd.f32 0.0, %v4307
  %v4309 = vpop.f32.mrb[0].mxu0
  %v4310 = vpop.f32.mrb[0].mxu0
  %v4311 = vadd.f32 0.0, %v4310
  %v4312 = vpop.f32.mrb[0].mxu0
  %4313 = vmatprep.mubr.bf16.mxu0 0
  %4314 = vmatmul.mubr.bf16.gmra.mrb[0].mxu0 %v2517
  %v4315 = vpop.f32.mrb[0].mxu0
  %v4316 = vadd.f32 0.0, %v4315
  %v4317 = vpop.f32.mrb[0].mxu0
  %v4318 = vpop.f32.mrb[0].mxu0
  %v4319 = vadd.f32 0.0, %v4318
  %v4320 = vpop.f32.mrb[0].mxu0
  %4321 = vmatprep.mubr.bf16.mxu0 0
  %4322 = vmatmul.mubr.bf16.gmra.mrb[0].mxu0 %v2520
  %v4323 = vpop.f32.mrb[0].mxu0
  %v4324 = vadd.f32 0.0, %v4323
  %v4325 = vpop.f32.mrb[0].mxu0
  %v4326 = vpop.f32.mrb[0].mxu0
  %v4327 = vadd.f32 0.0, %v4326
  %v4328 = vpop.f32.mrb[0].mxu0
  %4329 = vmatprep.mubr.bf16.mxu0 0
  %4330 = vmatmul.mubr.bf16.gmra.mrb[0].mxu0 %v2523
  %v4331 = vpop.f32.mrb[0].mxu0
  %v4332 = vadd.f32 0.0, %v4331
  %v4333 = vpop.f32.mrb[0].mxu0
  %v4334 = vpop.f32.mrb[0].mxu0
  %v4335 = vadd.f32 0.0, %v4334
  %v4336 = vpop.f32.mrb[0].mxu0
  %4337 = vmatprep.mubr.bf16.mxu0 0
  %4338 = vmatmul.mubr.bf16.gmra.mrb[0].mxu0 %v2526
  %v4339 = vpop.f32.mrb[0].mxu0
  %v4340 = vadd.f32 0.0, %v4339
  %v4341 = vpop.f32.mrb[0].mxu0
  %v4342 = vpop.f32.mrb[0].mxu0
  %v4343 = vadd.f32 0.0, %v4342
  %v4344 = vpop.f32.mrb[0].mxu0
  %4345 = vmatprep.mubr.bf16.mxu0 0
  %4346 = vmatmul.mubr.bf16.gmra.mrb[0].mxu0 %v2529
  %v4347 = vpop.f32.mrb[0].mxu0
  %v4348 = vadd.f32 0.0, %v4347
  %v4349 = vpop.f32.mrb[0].mxu0
  %v4350 = vpop.f32.mrb[0].mxu0
  %v4351 = vadd.f32 0.0, %v4350
  %v4352 = vpop.f32.mrb[0].mxu0
  %4353 = vmatprep.mubr.bf16.mxu0 0
  %4354 = vmatmul.mubr.bf16.gmra.mrb[0].mxu0 %v2532
  %v4355 = vpop.f32.mrb[0].mxu0
  %v4356 = vadd.f32 0.0, %v4355
  %v4357 = vpop.f32.mrb[0].mxu0
  %v4358 = vpop.f32.mrb[0].mxu0
  %v4359 = vadd.f32 0.0, %v4358
  %v4360 = vpop.f32.mrb[0].mxu0
  %4361 = vmatprep.mubr.bf16.mxu0 0
  %4362 = vmatmul.mubr.bf16.gmra.mrb[0].mxu0 %v2535
  %v4363 = vpop.f32.mrb[0].mxu0
  %v4364 = vadd.f32 0.0, %v4363
  %v4365 = vpop.f32.mrb[0].mxu0
  %v4366 = vpop.f32.mrb[0].mxu0
  %v4367 = vadd.f32 0.0, %v4366
  %v4368 = vpop.f32.mrb[0].mxu0
  %4369 = vdwg.mxu0
  %v4370 = vadd.f32 %v4177, %v4244
  %v4371 = vadd.f32 %v4178, %v4247
  %v4372 = vadd.f32 %v4179, %v4252
  %v4373 = vadd.f32 %v4180, %v4255
  %v4374 = vadd.f32 %v4181, %v4260
  %v4375 = vadd.f32 %v4182, %v4263
  %v4376 = vadd.f32 %v4183, %v4268
  %v4377 = vadd.f32 %v4184, %v4271
  %v4378 = vadd.f32 %v4185, %v4276
  %v4379 = vadd.f32 %v4186, %v4279
  %v4380 = vadd.f32 %v4187, %v4284
  %v4381 = vadd.f32 %v4188, %v4287
  %v4382 = vadd.f32 %v4189, %v4292
  %v4383 = vadd.f32 %v4190, %v4295
  %v4384 = vadd.f32 %v4191, %v4300
  %v4385 = vadd.f32 %v4192, %v4303
  %v4386 = vadd.f32 %v4193, %v4308
  %v4387 = vadd.f32 %v4194, %v4311
  %v4388 = vadd.f32 %v4195, %v4316
  %v4389 = vadd.f32 %v4196, %v4319
  %v4390 = vadd.f32 %v4197, %v4324
  %v4391 = vadd.f32 %v4198, %v4327
  %v4392 = vadd.f32 %v4199, %v4332
  %v4393 = vadd.f32 %v4200, %v4335
  %v4394 = vadd.f32 %v4201, %v4340
  %v4395 = vadd.f32 %v4202, %v4343
  %v4396 = vadd.f32 %v4203, %v4348
  %v4397 = vadd.f32 %v4204, %v4351
  %v4398 = vadd.f32 %v4205, %v4356
  %v4399 = vadd.f32 %v4206, %v4359
  %v4400 = vadd.f32 %v4207, %v4364
  %v4401 = vadd.f32 %v4208, %v4367
  %v4402 = vld [vmem:[%s2117 + $0x1] sm:$0xff]
  %v4403 = vld [vmem:[%s2117 + $0x11] sm:$0xff]
  %v4404 = vld [vmem:[%s2117 + $0x21] sm:$0xff]
  %v4405 = vld [vmem:[%s2117 + $0x31] sm:$0xff]
  %v4406 = vld [vmem:[%s2117 + $0x41] sm:$0xff]
  %v4407 = vld [vmem:[%s2117 + $0x51] sm:$0xff]
  %v4408 = vld [vmem:[%s2117 + $0x61] sm:$0xff]
  %v4409 = vld [vmem:[%s2117 + $0x71] sm:$0xff]
  %v4410 = vld [vmem:[%s2117 + $0x81] sm:$0xff]
  %v4411 = vld [vmem:[%s2117 + $0x91] sm:$0xff]
  %v4412 = vld [vmem:[%s2117 + $0xa1] sm:$0xff]
  %v4413 = vld [vmem:[%s2117 + $0xb1] sm:$0xff]
  %v4414 = vld [vmem:[%s2117 + $0xc1] sm:$0xff]
  %v4415 = vld [vmem:[%s2117 + $0xd1] sm:$0xff]
  %v4416 = vld [vmem:[%s2117 + $0xe1] sm:$0xff]
  %v4417 = vld [vmem:[%s2117 + $0xf1] sm:$0xff]
  %v4418 = vld [vmem:[%s2117 + $0x121] sm:$0xff]
  %v4419 = vld [vmem:[%s2117 + $0x131] sm:$0xff]
  %v4420 = vld [vmem:[%s2117 + $0x141] sm:$0xff]
  %v4421 = vld [vmem:[%s2117 + $0x151] sm:$0xff]
  %v4422 = vld [vmem:[%s2117 + $0x161] sm:$0xff]
  %v4423 = vld [vmem:[%s2117 + $0x171] sm:$0xff]
  %v4424 = vld [vmem:[%s2117 + $0x181] sm:$0xff]
  %v4425 = vld [vmem:[%s2117 + $0x191] sm:$0xff]
  %v4426 = vld [vmem:[%s2117 + $0x1a1] sm:$0xff]
  %v4427 = vld [vmem:[%s2117 + $0x1b1] sm:$0xff]
  %v4428 = vld [vmem:[%s2117 + $0x1c1] sm:$0xff]
  %v4429 = vld [vmem:[%s2117 + $0x1d1] sm:$0xff]
  %v4430 = vld [vmem:[%s2117 + $0x1e1] sm:$0xff]
  %v4431 = vld [vmem:[%s2117 + $0x1f1] sm:$0xff]
  %v4432 = vld [vmem:[%s2117 + $0x201] sm:$0xff]
  %v4433 = vld [vmem:[%s2117 + $0x211] sm:$0xff]
  %v4434 = vpack.c.bf16 %v4403, %v4402
  %v4435 = vpack.c.bf16 %v4405, %v4404
  %v4436 = vpack.c.bf16 %v4407, %v4406
  %v4437 = vpack.c.bf16 %v4409, %v4408
  %v4438 = vpack.c.bf16 %v4411, %v4410
  %v4439 = vpack.c.bf16 %v4413, %v4412
  %v4440 = vpack.c.bf16 %v4415, %v4414
  %v4441 = vpack.c.bf16 %v4417, %v4416
  %v4442 = vpack.c.bf16 %v4419, %v4418
  %v4443 = vpack.c.bf16 %v4421, %v4420
  %v4444 = vpack.c.bf16 %v4423, %v4422
  %v4445 = vpack.c.bf16 %v4425, %v4424
  %v4446 = vpack.c.bf16 %v4427, %v4426
  %v4447 = vpack.c.bf16 %v4429, %v4428
  %v4448 = vpack.c.bf16 %v4431, %v4430
  %v4449 = vpack.c.bf16 %v4433, %v4432
  %v4451 = vsel %vm153, %v4434, 0
  %v4454 = vsel %vm153, %v4435, 0
  %v4457 = vsel %vm153, %v4436, 0
  %v4460 = vsel %vm153, %v4437, 0
  %v4463 = vsel %vm153, %v4438, 0
  %v4466 = vsel %vm153, %v4439, 0
  %v4469 = vsel %vm153, %v4440, 0
  %v4472 = vsel %vm153, %v4441, 0
  %v4475 = vsel %vm153, %v4442, 0
  %v4478 = vsel %vm153, %v4443, 0
  %v4481 = vsel %vm153, %v4444, 0
  %v4484 = vsel %vm153, %v4445, 0
  %v4487 = vsel %vm153, %v4446, 0
  %v4490 = vsel %vm153, %v4447, 0
  %v4493 = vsel %vm153, %v4448, 0
  %v4496 = vsel %vm153, %v4449, 0
  %4498 = vmatprep.subr.bf16.mxu0 0
  %4499 = vmatpush1.bf16.msra.mxu0 %v2485
  %4500 = vmatprep.subr.bf16.mxu0 0
  %4501 = vmatpush1.bf16.msra.mxu0 %v2486
  %4502 = vmatprep.subr.bf16.mxu0 0
  %4503 = vmatpush1.bf16.msra.mxu0 0
  %4504 = vmatprep.subr.bf16.mxu0 0
  %4505 = vmatpush1.bf16.msra.mxu0 0
  %4506 = vmatprep.subr.bf16.mxu0 0
  %4507 = vmatpush1.bf16.msra.mxu0 0
  %4508 = vmatprep.subr.bf16.mxu0 0
  %4509 = vmatpush1.bf16.msra.mxu0 0
  %4510 = vmatprep.subr.bf16.mxu0 0
  %4511 = vmatpush1.bf16.msra.mxu0 0
  %4512 = vmatprep.subr.bf16.mxu0 0
  %4513 = vmatpush1.bf16.msra.mxu0 0
  %4514 = vmatprep.subr.bf16.mxu0 0
  %4515 = vmatpush1.bf16.msra.mxu0 0
  %4516 = vmatprep.subr.bf16.mxu0 0
  %4517 = vmatpush1.bf16.msra.mxu0 0
  %4518 = vmatprep.subr.bf16.mxu0 0
  %4519 = vmatpush1.bf16.msra.mxu0 0
  %4520 = vmatprep.subr.bf16.mxu0 0
  %4521 = vmatpush1.bf16.msra.mxu0 0
  %4522 = vmatprep.subr.bf16.mxu0 0
  %4523 = vmatpush1.bf16.msra.mxu0 0
  %4524 = vmatprep.subr.bf16.mxu0 0
  %4525 = vmatpush1.bf16.msra.mxu0 0
  %4526 = vmatprep.subr.bf16.mxu0 0
  %4527 = vmatpush1.bf16.msra.mxu0 0
  %4528 = vmatprep.subr.bf16.mxu0 0
  %4529 = vmatpush1.bf16.msra.mxu0 0
  %4530 = vmatprep.mubr.bf16.mxu0 0
  %4531 = vmatmul.mubr.bf16.gmra.mrb[0].mxu0 %v4451
  %v4532 = vpop.f32.mrb[0].mxu0
  %v4533 = vadd.f32 0.0, %v4532
  %v4534 = vpop.f32.mrb[0].mxu0
  %v4535 = vpop.f32.mrb[0].mxu0
  %v4536 = vadd.f32 0.0, %v4535
  %v4537 = vpop.f32.mrb[0].mxu0
  %4538 = vmatprep.mubr.bf16.mxu0 0
  %4539 = vmatmul.mubr.bf16.gmra.mrb[0].mxu0 %v4454
  %v4540 = vpop.f32.mrb[0].mxu0
  %v4541 = vadd.f32 0.0, %v4540
  %v4542 = vpop.f32.mrb[0].mxu0
  %v4543 = vpop.f32.mrb[0].mxu0
  %v4544 = vadd.f32 0.0, %v4543
  %v4545 = vpop.f32.mrb[0].mxu0
  %4546 = vmatprep.mubr.bf16.mxu0 0
  %4547 = vmatmul.mubr.bf16.gmra.mrb[0].mxu0 %v4457
  %v4548 = vpop.f32.mrb[0].mxu0
  %v4549 = vadd.f32 0.0, %v4548
  %v4550 = vpop.f32.mrb[0].mxu0
  %v4551 = vpop.f32.mrb[0].mxu0
  %v4552 = vadd.f32 0.0, %v4551
  %v4553 = vpop.f32.mrb[0].mxu0
  %4554 = vmatprep.mubr.bf16.mxu0 0
  %4555 = vmatmul.mubr.bf16.gmra.mrb[0].mxu0 %v4460
  %v4556 = vpop.f32.mrb[0].mxu0
  %v4557 = vadd.f32 0.0, %v4556
  %v4558 = vpop.f32.mrb[0].mxu0
  %v4559 = vpop.f32.mrb[0].mxu0
  %v4560 = vadd.f32 0.0, %v4559
  %v4561 = vpop.f32.mrb[0].mxu0
  %4562 = vmatprep.mubr.bf16.mxu0 0
  %4563 = vmatmul.mubr.bf16.gmra.mrb[0].mxu0 %v4463
  %v4564 = vpop.f32.mrb[0].mxu0
  %v4565 = vadd.f32 0.0, %v4564
  %v4566 = vpop.f32.mrb[0].mxu0
  %v4567 = vpop.f32.mrb[0].mxu0
  %v4568 = vadd.f32 0.0, %v4567
  %v4569 = vpop.f32.mrb[0].mxu0
  %4570 = vmatprep.mubr.bf16.mxu0 0
  %4571 = vmatmul.mubr.bf16.gmra.mrb[0].mxu0 %v4466
  %v4572 = vpop.f32.mrb[0].mxu0
  %v4573 = vadd.f32 0.0, %v4572
  %v4574 = vpop.f32.mrb[0].mxu0
  %v4575 = vpop.f32.mrb[0].mxu0
  %v4576 = vadd.f32 0.0, %v4575
  %v4577 = vpop.f32.mrb[0].mxu0
  %4578 = vmatprep.mubr.bf16.mxu0 0
  %4579 = vmatmul.mubr.bf16.gmra.mrb[0].mxu0 %v4469
  %v4580 = vpop.f32.mrb[0].mxu0
  %v4581 = vadd.f32 0.0, %v4580
  %v4582 = vpop.f32.mrb[0].mxu0
  %v4583 = vpop.f32.mrb[0].mxu0
  %v4584 = vadd.f32 0.0, %v4583
  %v4585 = vpop.f32.mrb[0].mxu0
  %4586 = vmatprep.mubr.bf16.mxu0 0
  %4587 = vmatmul.mubr.bf16.gmra.mrb[0].mxu0 %v4472
  %v4588 = vpop.f32.mrb[0].mxu0
  %v4589 = vadd.f32 0.0, %v4588
  %v4590 = vpop.f32.mrb[0].mxu0
  %v4591 = vpop.f32.mrb[0].mxu0
  %v4592 = vadd.f32 0.0, %v4591
  %v4593 = vpop.f32.mrb[0].mxu0
  %4594 = vmatprep.mubr.bf16.mxu0 0
  %4595 = vmatmul.mubr.bf16.gmra.mrb[0].mxu0 %v4475
  %v4596 = vpop.f32.mrb[0].mxu0
  %v4597 = vadd.f32 0.0, %v4596
  %v4598 = vpop.f32.mrb[0].mxu0
  %v4599 = vpop.f32.mrb[0].mxu0
  %v4600 = vadd.f32 0.0, %v4599
  %v4601 = vpop.f32.mrb[0].mxu0
  %4602 = vmatprep.mubr.bf16.mxu0 0
  %4603 = vmatmul.mubr.bf16.gmra.mrb[0].mxu0 %v4478
  %v4604 = vpop.f32.mrb[0].mxu0
  %v4605 = vadd.f32 0.0, %v4604
  %v4606 = vpop.f32.mrb[0].mxu0
  %v4607 = vpop.f32.mrb[0].mxu0
  %v4608 = vadd.f32 0.0, %v4607
  %v4609 = vpop.f32.mrb[0].mxu0
  %4610 = vmatprep.mubr.bf16.mxu0 0
  %4611 = vmatmul.mubr.bf16.gmra.mrb[0].mxu0 %v4481
  %v4612 = vpop.f32.mrb[0].mxu0
  %v4613 = vadd.f32 0.0, %v4612
  %v4614 = vpop.f32.mrb[0].mxu0
  %v4615 = vpop.f32.mrb[0].mxu0
  %v4616 = vadd.f32 0.0, %v4615
  %v4617 = vpop.f32.mrb[0].mxu0
  %4618 = vmatprep.mubr.bf16.mxu0 0
  %4619 = vmatmul.mubr.bf16.gmra.mrb[0].mxu0 %v4484
  %v4620 = vpop.f32.mrb[0].mxu0
  %v4621 = vadd.f32 0.0, %v4620
  %v4622 = vpop.f32.mrb[0].mxu0
  %v4623 = vpop.f32.mrb[0].mxu0
  %v4624 = vadd.f32 0.0, %v4623
  %v4625 = vpop.f32.mrb[0].mxu0
  %4626 = vmatprep.mubr.bf16.mxu0 0
  %4627 = vmatmul.mubr.bf16.gmra.mrb[0].mxu0 %v4487
  %v4628 = vpop.f32.mrb[0].mxu0
  %v4629 = vadd.f32 0.0, %v4628
  %v4630 = vpop.f32.mrb[0].mxu0
  %v4631 = vpop.f32.mrb[0].mxu0
  %v4632 = vadd.f32 0.0, %v4631
  %v4633 = vpop.f32.mrb[0].mxu0
  %4634 = vmatprep.mubr.bf16.mxu0 0
  %4635 = vmatmul.mubr.bf16.gmra.mrb[0].mxu0 %v4490
  %v4636 = vpop.f32.mrb[0].mxu0
  %v4637 = vadd.f32 0.0, %v4636
  %v4638 = vpop.f32.mrb[0].mxu0
  %v4639 = vpop.f32.mrb[0].mxu0
  %v4640 = vadd.f32 0.0, %v4639
  %v4641 = vpop.f32.mrb[0].mxu0
  %4642 = vmatprep.mubr.bf16.mxu0 0
  %4643 = vmatmul.mubr.bf16.gmra.mrb[0].mxu0 %v4493
  %v4644 = vpop.f32.mrb[0].mxu0
  %v4645 = vadd.f32 0.0, %v4644
  %v4646 = vpop.f32.mrb[0].mxu0
  %v4647 = vpop.f32.mrb[0].mxu0
  %v4648 = vadd.f32 0.0, %v4647
  %v4649 = vpop.f32.mrb[0].mxu0
  %4650 = vmatprep.mubr.bf16.mxu0 0
  %4651 = vmatmul.mubr.bf16.gmra.mrb[0].mxu0 %v4496
  %v4652 = vpop.f32.mrb[0].mxu0
  %v4653 = vadd.f32 0.0, %v4652
  %v4654 = vpop.f32.mrb[0].mxu0
  %v4655 = vpop.f32.mrb[0].mxu0
  %v4656 = vadd.f32 0.0, %v4655
  %v4657 = vpop.f32.mrb[0].mxu0
  %4658 = vdwg.mxu0
  %v4659 = vadd.f32 %v4370, %v4533
  %v4660 = vadd.f32 %v4371, %v4536
  %v4661 = vadd.f32 %v4372, %v4541
  %v4662 = vadd.f32 %v4373, %v4544
  %v4663 = vadd.f32 %v4374, %v4549
  %v4664 = vadd.f32 %v4375, %v4552
  %v4665 = vadd.f32 %v4376, %v4557
  %v4666 = vadd.f32 %v4377, %v4560
  %v4667 = vadd.f32 %v4378, %v4565
  %v4668 = vadd.f32 %v4379, %v4568
  %v4669 = vadd.f32 %v4380, %v4573
  %v4670 = vadd.f32 %v4381, %v4576
  %v4671 = vadd.f32 %v4382, %v4581
  %v4672 = vadd.f32 %v4383, %v4584
  %v4673 = vadd.f32 %v4384, %v4589
  %v4674 = vadd.f32 %v4385, %v4592
  %v4675 = vadd.f32 %v4386, %v4597
  %v4676 = vadd.f32 %v4387, %v4600
  %v4677 = vadd.f32 %v4388, %v4605
  %v4678 = vadd.f32 %v4389, %v4608
  %v4679 = vadd.f32 %v4390, %v4613
  %v4680 = vadd.f32 %v4391, %v4616
  %v4681 = vadd.f32 %v4392, %v4621
  %v4682 = vadd.f32 %v4393, %v4624
  %v4683 = vadd.f32 %v4394, %v4629
  %v4684 = vadd.f32 %v4395, %v4632
  %v4685 = vadd.f32 %v4396, %v4637
  %v4686 = vadd.f32 %v4397, %v4640
  %v4687 = vadd.f32 %v4398, %v4645
  %v4688 = vadd.f32 %v4399, %v4648
  %v4689 = vadd.f32 %v4400, %v4653
  %v4690 = vadd.f32 %v4401, %v4656
  %v4691 = vadd.f32 %v2698, %v2699
  %v4692 = vadd.f32 %v4691, %v2700
  %v4693 = vadd.f32 %v4692, %v2701
  %v4694 = vadd.f32 %v4693, %v2702
  %v4695 = vadd.f32 %v4694, %v2703
  %v4696 = vadd.f32 %v4695, %v2704
  %v4697 = vadd.f32 %v4696, %v2705
  %v4698 = vadd.f32 %v4697, %v2706
  %v4699 = vadd.f32 %v4698, %v2707
  %v4700 = vadd.f32 %v4699, %v2708
  %v4701 = vadd.f32 %v4700, %v2709
  %v4702 = vadd.f32 %v4701, %v2710
  %v4703 = vadd.f32 %v4702, %v2711
  %v4704 = vadd.f32 %v4703, %v2712
  %v4705 = vadd.f32 %v4704, %v2713
  %v4706 = vadd.f32 %v4705, %v2714
  %v4707 = vadd.f32 %v4706, %v2715
  %v4708 = vadd.f32 %v4707, %v2716
  %v4709 = vadd.f32 %v4708, %v2717
  %v4710 = vadd.f32 %v4709, %v2718
  %v4711 = vadd.f32 %v4710, %v2719
  %v4712 = vadd.f32 %v4711, %v2720
  %v4713 = vadd.f32 %v4712, %v2721
  %v4714 = vadd.f32 %v4713, %v2722
  %v4715 = vadd.f32 %v4714, %v2723
  %v4716 = vadd.f32 %v4715, %v2724
  %v4717 = vadd.f32 %v4716, %v2725
  %v4718 = vadd.f32 %v4717, %v2726
  %v4719 = vadd.f32 %v4718, %v2727
  %v4720 = vadd.f32 %v4719, %v2728
  %v4721 = vadd.f32 %v4720, %v2729
  %v4722 = vrot.slane %v4721, 4
  %v4723 = vadd.f32 %v4721, %v4722
  %v4724 = vrot.slane %v4723, 2
  %v4725 = vadd.f32 %v4723, %v4724
  %v4726 = vrot.slane %v4725, 1
  %v4727 = vadd.f32 %v4725, %v4726
  %v4728 = vadd.f32 %v4659, %v4660
  %v4729 = vadd.f32 %v4728, %v4661
  %v4730 = vadd.f32 %v4729, %v4662
  %v4731 = vadd.f32 %v4730, %v4663
  %v4732 = vadd.f32 %v4731, %v4664
  %v4733 = vadd.f32 %v4732, %v4665
  %v4734 = vadd.f32 %v4733, %v4666
  %v4735 = vadd.f32 %v4734, %v4667
  %v4736 = vadd.f32 %v4735, %v4668
  %v4737 = vadd.f32 %v4736, %v4669
  %v4738 = vadd.f32 %v4737, %v4670
  %v4739 = vadd.f32 %v4738, %v4671
  %v4740 = vadd.f32 %v4739, %v4672
  %v4741 = vadd.f32 %v4740, %v4673
  %v4742 = vadd.f32 %v4741, %v4674
  %v4743 = vadd.f32 %v4742, %v4675
  %v4744 = vadd.f32 %v4743, %v4676
  %v4745 = vadd.f32 %v4744, %v4677
  %v4746 = vadd.f32 %v4745, %v4678
  %v4747 = vadd.f32 %v4746, %v4679
  %v4748 = vadd.f32 %v4747, %v4680
  %v4749 = vadd.f32 %v4748, %v4681
  %v4750 = vadd.f32 %v4749, %v4682
  %v4751 = vadd.f32 %v4750, %v4683
  %v4752 = vadd.f32 %v4751, %v4684
  %v4753 = vadd.f32 %v4752, %v4685
  %v4754 = vadd.f32 %v4753, %v4686
  %v4755 = vadd.f32 %v4754, %v4687
  %v4756 = vadd.f32 %v4755, %v4688
  %v4757 = vadd.f32 %v4756, %v4689
  %v4758 = vadd.f32 %v4757, %v4690
  %v4759 = vrot.slane %v4758, 4
  %v4760 = vadd.f32 %v4758, %v4759
  %v4761 = vrot.slane %v4760, 2
  %v4762 = vadd.f32 %v4760, %v4761
  %v4763 = vrot.slane %v4762, 1
  %v4764 = vadd.f32 %v4762, %v4763
  %v4765 = vadd.f32 %v4727, %v4764
  %v4766 = vrcp.pop 512.0
  %v4767 = vmul.f32 %v4765, %v4766
  %v4768 = vsub.f32 %v2698, %v4767
  %v4769 = vsub.f32 %v2699, %v4767
  %v4770 = vsub.f32 %v2700, %v4767
  %v4771 = vsub.f32 %v2701, %v4767
  %v4772 = vsub.f32 %v2702, %v4767
  %v4773 = vsub.f32 %v2703, %v4767
  %v4774 = vsub.f32 %v2704, %v4767
  %v4775 = vsub.f32 %v2705, %v4767
  %v4776 = vsub.f32 %v2706, %v4767
  %v4777 = vsub.f32 %v2707, %v4767
  %v4778 = vsub.f32 %v2708, %v4767
  %v4779 = vsub.f32 %v2709, %v4767
  %v4780 = vsub.f32 %v2710, %v4767
  %v4781 = vsub.f32 %v2711, %v4767
  %v4782 = vsub.f32 %v2712, %v4767
  %v4783 = vsub.f32 %v2713, %v4767
  %v4784 = vsub.f32 %v2714, %v4767
  %v4785 = vsub.f32 %v2715, %v4767
  %v4786 = vsub.f32 %v2716, %v4767
  %v4787 = vsub.f32 %v2717, %v4767
  %v4788 = vsub.f32 %v2718, %v4767
  %v4789 = vsub.f32 %v2719, %v4767
  %v4790 = vsub.f32 %v2720, %v4767
  %v4791 = vsub.f32 %v2721, %v4767
  %v4792 = vsub.f32 %v2722, %v4767
  %v4793 = vsub.f32 %v2723, %v4767
  %v4794 = vsub.f32 %v2724, %v4767
  %v4795 = vsub.f32 %v2725, %v4767
  %v4796 = vsub.f32 %v2726, %v4767
  %v4797 = vsub.f32 %v2727, %v4767
  %v4798 = vsub.f32 %v2728, %v4767
  %v4799 = vsub.f32 %v2729, %v4767
  %v4800 = vsub.f32 %v4659, %v4767
  %v4801 = vsub.f32 %v4660, %v4767
  %v4802 = vsub.f32 %v4661, %v4767
  %v4803 = vsub.f32 %v4662, %v4767
  %v4804 = vsub.f32 %v4663, %v4767
  %v4805 = vsub.f32 %v4664, %v4767
  %v4806 = vsub.f32 %v4665, %v4767
  %v4807 = vsub.f32 %v4666, %v4767
  %v4808 = vsub.f32 %v4667, %v4767
  %v4809 = vsub.f32 %v4668, %v4767
  %v4810 = vsub.f32 %v4669, %v4767
  %v4811 = vsub.f32 %v4670, %v4767
  %v4812 = vsub.f32 %v4671, %v4767
  %v4813 = vsub.f32 %v4672, %v4767
  %v4814 = vsub.f32 %v4673, %v4767
  %v4815 = vsub.f32 %v4674, %v4767
  %v4816 = vsub.f32 %v4675, %v4767
  %v4817 = vsub.f32 %v4676, %v4767
  %v4818 = vsub.f32 %v4677, %v4767
  %v4819 = vsub.f32 %v4678, %v4767
  %v4820 = vsub.f32 %v4679, %v4767
  %v4821 = vsub.f32 %v4680, %v4767
  %v4822 = vsub.f32 %v4681, %v4767
  %v4823 = vsub.f32 %v4682, %v4767
  %v4824 = vsub.f32 %v4683, %v4767
  %v4825 = vsub.f32 %v4684, %v4767
  %v4826 = vsub.f32 %v4685, %v4767
  %v4827 = vsub.f32 %v4686, %v4767
  %v4828 = vsub.f32 %v4687, %v4767
  %v4829 = vsub.f32 %v4688, %v4767
  %v4830 = vsub.f32 %v4689, %v4767
  %v4831 = vsub.f32 %v4690, %v4767
  %v4832 = vmul.f32 %v4768, %v4768
  %v4833 = vmul.f32 %v4769, %v4769
  %v4834 = vmul.f32 %v4770, %v4770
  %v4835 = vmul.f32 %v4771, %v4771
  %v4836 = vmul.f32 %v4772, %v4772
  %v4837 = vmul.f32 %v4773, %v4773
  %v4838 = vmul.f32 %v4774, %v4774
  %v4839 = vmul.f32 %v4775, %v4775
  %v4840 = vmul.f32 %v4776, %v4776
  %v4841 = vmul.f32 %v4777, %v4777
  %v4842 = vmul.f32 %v4778, %v4778
  %v4843 = vmul.f32 %v4779, %v4779
  %v4844 = vmul.f32 %v4780, %v4780
  %v4845 = vmul.f32 %v4781, %v4781
  %v4846 = vmul.f32 %v4782, %v4782
  %v4847 = vmul.f32 %v4783, %v4783
  %v4848 = vmul.f32 %v4784, %v4784
  %v4849 = vmul.f32 %v4785, %v4785
  %v4850 = vmul.f32 %v4786, %v4786
  %v4851 = vmul.f32 %v4787, %v4787
  %v4852 = vmul.f32 %v4788, %v4788
  %v4853 = vmul.f32 %v4789, %v4789
  %v4854 = vmul.f32 %v4790, %v4790
  %v4855 = vmul.f32 %v4791, %v4791
  %v4856 = vmul.f32 %v4792, %v4792
  %v4857 = vmul.f32 %v4793, %v4793
  %v4858 = vmul.f32 %v4794, %v4794
  %v4859 = vmul.f32 %v4795, %v4795
  %v4860 = vmul.f32 %v4796, %v4796
  %v4861 = vmul.f32 %v4797, %v4797
  %v4862 = vmul.f32 %v4798, %v4798
  %v4863 = vmul.f32 %v4799, %v4799
  %v4864 = vadd.f32 %v4832, %v4833
  %v4865 = vadd.f32 %v4864, %v4834
  %v4866 = vadd.f32 %v4865, %v4835
  %v4867 = vadd.f32 %v4866, %v4836
  %v4868 = vadd.f32 %v4867, %v4837
  %v4869 = vadd.f32 %v4868, %v4838
  %v4870 = vadd.f32 %v4869, %v4839
  %v4871 = vadd.f32 %v4870, %v4840
  %v4872 = vadd.f32 %v4871, %v4841
  %v4873 = vadd.f32 %v4872, %v4842
  %v4874 = vadd.f32 %v4873, %v4843
  %v4875 = vadd.f32 %v4874, %v4844
  %v4876 = vadd.f32 %v4875, %v4845
  %v4877 = vadd.f32 %v4876, %v4846
  %v4878 = vadd.f32 %v4877, %v4847
  %v4879 = vadd.f32 %v4878, %v4848
  %v4880 = vadd.f32 %v4879, %v4849
  %v4881 = vadd.f32 %v4880, %v4850
  %v4882 = vadd.f32 %v4881, %v4851
  %v4883 = vadd.f32 %v4882, %v4852
  %v4884 = vadd.f32 %v4883, %v4853
  %v4885 = vadd.f32 %v4884, %v4854
  %v4886 = vadd.f32 %v4885, %v4855
  %v4887 = vadd.f32 %v4886, %v4856
  %v4888 = vadd.f32 %v4887, %v4857
  %v4889 = vadd.f32 %v4888, %v4858
  %v4890 = vadd.f32 %v4889, %v4859
  %v4891 = vadd.f32 %v4890, %v4860
  %v4892 = vadd.f32 %v4891, %v4861
  %v4893 = vadd.f32 %v4892, %v4862
  %v4894 = vadd.f32 %v4893, %v4863
  %v4895 = vrot.slane %v4894, 4
  %v4896 = vadd.f32 %v4894, %v4895
  %v4897 = vrot.slane %v4896, 2
  %v4898 = vadd.f32 %v4896, %v4897
  %v4899 = vrot.slane %v4898, 1
  %v4900 = vadd.f32 %v4898, %v4899
  %v4901 = vmul.f32 %v4800, %v4800
  %v4902 = vmul.f32 %v4801, %v4801
  %v4903 = vmul.f32 %v4802, %v4802
  %v4904 = vmul.f32 %v4803, %v4803
  %v4905 = vmul.f32 %v4804, %v4804
  %v4906 = vmul.f32 %v4805, %v4805
  %v4907 = vmul.f32 %v4806, %v4806
  %v4908 = vmul.f32 %v4807, %v4807
  %v4909 = vmul.f32 %v4808, %v4808
  %v4910 = vmul.f32 %v4809, %v4809
  %v4911 = vmul.f32 %v4810, %v4810
  %v4912 = vmul.f32 %v4811, %v4811
  %v4913 = vmul.f32 %v4812, %v4812
  %v4914 = vmul.f32 %v4813, %v4813
  %v4915 = vmul.f32 %v4814, %v4814
  %v4916 = vmul.f32 %v4815, %v4815
  %v4917 = vmul.f32 %v4816, %v4816
  %v4918 = vmul.f32 %v4817, %v4817
  %v4919 = vmul.f32 %v4818, %v4818
  %v4920 = vmul.f32 %v4819, %v4819
  %v4921 = vmul.f32 %v4820, %v4820
  %v4922 = vmul.f32 %v4821, %v4821
  %v4923 = vmul.f32 %v4822, %v4822
  %v4924 = vmul.f32 %v4823, %v4823
  %v4925 = vmul.f32 %v4824, %v4824
  %v4926 = vmul.f32 %v4825, %v4825
  %v4927 = vmul.f32 %v4826, %v4826
  %v4928 = vmul.f32 %v4827, %v4827
  %v4929 = vmul.f32 %v4828, %v4828
  %v4930 = vmul.f32 %v4829, %v4829
  %v4931 = vmul.f32 %v4830, %v4830
  %v4932 = vmul.f32 %v4831, %v4831
  %v4933 = vadd.f32 %v4901, %v4902
  %v4934 = vadd.f32 %v4933, %v4903
  %v4935 = vadd.f32 %v4934, %v4904
  %v4936 = vadd.f32 %v4935, %v4905
  %v4937 = vadd.f32 %v4936, %v4906
  %v4938 = vadd.f32 %v4937, %v4907
  %v4939 = vadd.f32 %v4938, %v4908
  %v4940 = vadd.f32 %v4939, %v4909
  %v4941 = vadd.f32 %v4940, %v4910
  %v4942 = vadd.f32 %v4941, %v4911
  %v4943 = vadd.f32 %v4942, %v4912
  %v4944 = vadd.f32 %v4943, %v4913
  %v4945 = vadd.f32 %v4944, %v4914
  %v4946 = vadd.f32 %v4945, %v4915
  %v4947 = vadd.f32 %v4946, %v4916
  %v4948 = vadd.f32 %v4947, %v4917
  %v4949 = vadd.f32 %v4948, %v4918
  %v4950 = vadd.f32 %v4949, %v4919
  %v4951 = vadd.f32 %v4950, %v4920
  %v4952 = vadd.f32 %v4951, %v4921
  %v4953 = vadd.f32 %v4952, %v4922
  %v4954 = vadd.f32 %v4953, %v4923
  %v4955 = vadd.f32 %v4954, %v4924
  %v4956 = vadd.f32 %v4955, %v4925
  %v4957 = vadd.f32 %v4956, %v4926
  %v4958 = vadd.f32 %v4957, %v4927
  %v4959 = vadd.f32 %v4958, %v4928
  %v4960 = vadd.f32 %v4959, %v4929
  %v4961 = vadd.f32 %v4960, %v4930
  %v4962 = vadd.f32 %v4961, %v4931
  %v4963 = vadd.f32 %v4962, %v4932
  %v4964 = vrot.slane %v4963, 4
  %v4965 = vadd.f32 %v4963, %v4964
  %v4966 = vrot.slane %v4965, 2
  %v4967 = vadd.f32 %v4965, %v4966
  %v4968 = vrot.slane %v4967, 1
  %v4969 = vadd.f32 %v4967, %v4968
  %v4970 = vadd.f32 %v4900, %v4969
  %v4971 = vmul.f32 %v4970, %v4766
  %v4972 = vld [vmem:[%s6] sm:$0x1]
  %v4973 = vadd.f32 %v4971, 1e-05
  %v4974 = vrsqrt.pop %v4973
  %v4975 = vmul.f32 %v4972, %v4974
  %v4976 = vld [vmem:[%s7] sm:$0x1]
  %v4977 = vmul.f32 %v4767, %v4975
  %v4978 = vsub.f32 %v4976, %v4977
  %v4979 = vld [vmem:[%s4] sm:$0xff]
  %v4980 = vld [vmem:[%s4 + $0x8] sm:$0xff]
  %v4981 = vld [vmem:[%s4 + $0x10] sm:$0xff]
  %v4982 = vld [vmem:[%s4 + $0x18] sm:$0xff]
  %v4984 = vlaneseq
  %v4985 = vshrl.u32 %v4984, 7
  %v4986 = vsub.s32 0, %v4985
  %v4987 = vrot.slane %v4975, %v4986
  %v4989 = vmul.f32 %v2698, %v4987
  %v4990 = vmul.f32 %v2699, %v4987
  %v4991 = vmul.f32 %v2700, %v4987
  %v4992 = vmul.f32 %v2701, %v4987
  %v4993 = vmul.f32 %v2702, %v4987
  %v4994 = vmul.f32 %v2703, %v4987
  %v4995 = vmul.f32 %v2704, %v4987
  %v4996 = vmul.f32 %v2705, %v4987
  %v4997 = vmul.f32 %v2706, %v4987
  %v4998 = vmul.f32 %v2707, %v4987
  %v4999 = vmul.f32 %v2708, %v4987
  %v5000 = vmul.f32 %v2709, %v4987
  %v5001 = vmul.f32 %v2710, %v4987
  %v5002 = vmul.f32 %v2711, %v4987
  %v5003 = vmul.f32 %v2712, %v4987
  %v5004 = vmul.f32 %v2713, %v4987
  %v5005 = vmul.f32 %v2714, %v4987
  %v5006 = vmul.f32 %v2715, %v4987
  %v5007 = vmul.f32 %v2716, %v4987
  %v5008 = vmul.f32 %v2717, %v4987
  %v5009 = vmul.f32 %v2718, %v4987
  %v5010 = vmul.f32 %v2719, %v4987
  %v5011 = vmul.f32 %v2720, %v4987
  %v5012 = vmul.f32 %v2721, %v4987
  %v5013 = vmul.f32 %v2722, %v4987
  %v5014 = vmul.f32 %v2723, %v4987
  %v5015 = vmul.f32 %v2724, %v4987
  %v5016 = vmul.f32 %v2725, %v4987
  %v5017 = vmul.f32 %v2726, %v4987
  %v5018 = vmul.f32 %v2727, %v4987
  %v5019 = vmul.f32 %v2728, %v4987
  %v5020 = vmul.f32 %v2729, %v4987
  %v5022 = vlaneseq
  %v5023 = vshrl.u32 %v5022, 7
  %v5024 = vsub.s32 0, %v5023
  %v5025 = vrot.slane %v4978, %v5024
  %v5027 = vadd.f32 %v4989, %v5025
  %v5028 = vadd.f32 %v4990, %v5025
  %v5029 = vadd.f32 %v4991, %v5025
  %v5030 = vadd.f32 %v4992, %v5025
  %v5031 = vadd.f32 %v4993, %v5025
  %v5032 = vadd.f32 %v4994, %v5025
  %v5033 = vadd.f32 %v4995, %v5025
  %v5034 = vadd.f32 %v4996, %v5025
  %v5035 = vadd.f32 %v4997, %v5025
  %v5036 = vadd.f32 %v4998, %v5025
  %v5037 = vadd.f32 %v4999, %v5025
  %v5038 = vadd.f32 %v5000, %v5025
  %v5039 = vadd.f32 %v5001, %v5025
  %v5040 = vadd.f32 %v5002, %v5025
  %v5041 = vadd.f32 %v5003, %v5025
  %v5042 = vadd.f32 %v5004, %v5025
  %v5043 = vadd.f32 %v5005, %v5025
  %v5044 = vadd.f32 %v5006, %v5025
  %v5045 = vadd.f32 %v5007, %v5025
  %v5046 = vadd.f32 %v5008, %v5025
  %v5047 = vadd.f32 %v5009, %v5025
  %v5048 = vadd.f32 %v5010, %v5025
  %v5049 = vadd.f32 %v5011, %v5025
  %v5050 = vadd.f32 %v5012, %v5025
  %v5051 = vadd.f32 %v5013, %v5025
  %v5052 = vadd.f32 %v5014, %v5025
  %v5053 = vadd.f32 %v5015, %v5025
  %v5054 = vadd.f32 %v5016, %v5025
  %v5055 = vadd.f32 %v5017, %v5025
  %v5056 = vadd.f32 %v5018, %v5025
  %v5057 = vadd.f32 %v5019, %v5025
  %v5058 = vadd.f32 %v5020, %v5025
  %v5060 = vsel %vm153, %v1198, 0
  %v5063 = vsel %vm153, %v1199, 0
  %v5066 = vsel %vm153, %v1200, 0
  %v5069 = vsel %vm153, %v1201, 0
  %v5072 = vsel %vm153, %v1202, 0
  %v5075 = vsel %vm153, %v1203, 0
  %v5078 = vsel %vm153, %v1204, 0
  %v5081 = vsel %vm153, %v1205, 0
  %v5084 = vsel %vm153, %v1206, 0
  %v5087 = vsel %vm153, %v1207, 0
  %v5090 = vsel %vm153, %v1208, 0
  %v5093 = vsel %vm153, %v1209, 0
  %v5096 = vsel %vm153, %v1210, 0
  %v5099 = vsel %vm153, %v1211, 0
  %v5102 = vsel %vm153, %v1212, 0
  %v5105 = vsel %vm153, %v1213, 0
  %v5108 = vsel %vm153, %v1214, 0
  %v5111 = vsel %vm153, %v1215, 0
  %v5114 = vsel %vm153, %v1216, 0
  %v5117 = vsel %vm153, %v1217, 0
  %v5120 = vsel %vm153, %v1218, 0
  %v5123 = vsel %vm153, %v1219, 0
  %v5126 = vsel %vm153, %v1220, 0
  %v5129 = vsel %vm153, %v1221, 0
  %v5132 = vsel %vm153, %v1222, 0
  %v5135 = vsel %vm153, %v1223, 0
  %v5138 = vsel %vm153, %v1224, 0
  %v5141 = vsel %vm153, %v1225, 0
  %v5144 = vsel %vm153, %v1226, 0
  %v5147 = vsel %vm153, %v1227, 0
  %v5150 = vsel %vm153, %v1228, 0
  %v5153 = vsel %vm153, %v1229, 0
  %5155 = vmatprep.subr.mxu0 0.0
  %5156 = vmatpush1.msra.mxu0 %v4979
  %5157 = vmatprep.subr.mxu0 0.0
  %5158 = vmatpush1.msra.mxu0 %v4980
  %5159 = vmatprep.subr.mxu0 0.0
  %5160 = vmatpush1.msra.mxu0 %v4981
  %5161 = vmatprep.subr.mxu0 0.0
  %5162 = vmatpush1.msra.mxu0 %v4982
  %5163 = vmatprep.subr.mxu0 0.0
  %5164 = vmatpush1.msra.mxu0 0.0
  %5165 = vmatprep.subr.mxu0 0.0
  %5166 = vmatpush1.msra.mxu0 0.0
  %5167 = vmatprep.subr.mxu0 0.0
  %5168 = vmatpush1.msra.mxu0 0.0
  %5169 = vmatprep.subr.mxu0 0.0
  %5170 = vmatpush1.msra.mxu0 0.0
  %5171 = vmatprep.subr.mxu0 0.0
  %5172 = vmatpush1.msra.mxu0 0.0
  %5173 = vmatprep.subr.mxu0 0.0
  %5174 = vmatpush1.msra.mxu0 0.0
  %5175 = vmatprep.subr.mxu0 0.0
  %5176 = vmatpush1.msra.mxu0 0.0
  %5177 = vmatprep.subr.mxu0 0.0
  %5178 = vmatpush1.msra.mxu0 0.0
  %5179 = vmatprep.subr.mxu0 0.0
  %5180 = vmatpush1.msra.mxu0 0.0
  %5181 = vmatprep.subr.mxu0 0.0
  %5182 = vmatpush1.msra.mxu0 0.0
  %5183 = vmatprep.subr.mxu0 0.0
  %5184 = vmatpush1.msra.mxu0 0.0
  %5185 = vmatprep.subr.mxu0 0.0
  %5186 = vmatpush1.msra.mxu0 0.0
  %5187 = vmatprep.subr.mxu0 0.0
  %5188 = vmatpush1.msra.mxu0 0.0
  %5189 = vmatprep.subr.mxu0 0.0
  %5190 = vmatpush1.msra.mxu0 0.0
  %5191 = vmatprep.subr.mxu0 0.0
  %5192 = vmatpush1.msra.mxu0 0.0
  %5193 = vmatprep.subr.mxu0 0.0
  %5194 = vmatpush1.msra.mxu0 0.0
  %5195 = vmatprep.subr.mxu0 0.0
  %5196 = vmatpush1.msra.mxu0 0.0
  %5197 = vmatprep.subr.mxu0 0.0
  %5198 = vmatpush1.msra.mxu0 0.0
  %5199 = vmatprep.subr.mxu0 0.0
  %5200 = vmatpush1.msra.mxu0 0.0
  %5201 = vmatprep.subr.mxu0 0.0
  %5202 = vmatpush1.msra.mxu0 0.0
  %5203 = vmatprep.subr.mxu0 0.0
  %5204 = vmatpush1.msra.mxu0 0.0
  %5205 = vmatprep.subr.mxu0 0.0
  %5206 = vmatpush1.msra.mxu0 0.0
  %5207 = vmatprep.subr.mxu0 0.0
  %5208 = vmatpush1.msra.mxu0 0.0
  %5209 = vmatprep.subr.mxu0 0.0
  %5210 = vmatpush1.msra.mxu0 0.0
  %5211 = vmatprep.subr.mxu0 0.0
  %5212 = vmatpush1.msra.mxu0 0.0
  %5213 = vmatprep.subr.mxu0 0.0
  %5214 = vmatpush1.msra.mxu0 0.0
  %5215 = vmatprep.subr.mxu0 0.0
  %5216 = vmatpush1.msra.mxu0 0.0
  %5217 = vmatprep.subr.mxu0 0.0
  %5218 = vmatpush1.msra.mxu0 0.0
  %5219 = vmatprep.mubr.f32.mxu0 0.0
  %5220 = vmatmul.mubr.f32.gmra.mrb[0].mxu0 %v5060
  %v5221 = vpop.f32.mrb[0].mxu0
  %v5222 = vadd.f32 0.0, %v5221
  %v5223 = vpop.f32.mrb[0].mxu0
  %5224 = vmatprep.mubr.f32.mxu0 0.0
  %5225 = vmatmul.mubr.f32.gmra.mrb[0].mxu0 %v5063
  %v5226 = vpop.f32.mrb[0].mxu0
  %v5227 = vadd.f32 0.0, %v5226
  %v5228 = vpop.f32.mrb[0].mxu0
  %5229 = vmatprep.mubr.f32.mxu0 0.0
  %5230 = vmatmul.mubr.f32.gmra.mrb[0].mxu0 %v5066
  %v5231 = vpop.f32.mrb[0].mxu0
  %v5232 = vadd.f32 0.0, %v5231
  %v5233 = vpop.f32.mrb[0].mxu0
  %5234 = vmatprep.mubr.f32.mxu0 0.0
  %5235 = vmatmul.mubr.f32.gmra.mrb[0].mxu0 %v5069
  %v5236 = vpop.f32.mrb[0].mxu0
  %v5237 = vadd.f32 0.0, %v5236
  %v5238 = vpop.f32.mrb[0].mxu0
  %5239 = vmatprep.mubr.f32.mxu0 0.0
  %5240 = vmatmul.mubr.f32.gmra.mrb[0].mxu0 %v5072
  %v5241 = vpop.f32.mrb[0].mxu0
  %v5242 = vadd.f32 0.0, %v5241
  %v5243 = vpop.f32.mrb[0].mxu0
  %5244 = vmatprep.mubr.f32.mxu0 0.0
  %5245 = vmatmul.mubr.f32.gmra.mrb[0].mxu0 %v5075
  %v5246 = vpop.f32.mrb[0].mxu0
  %v5247 = vadd.f32 0.0, %v5246
  %v5248 = vpop.f32.mrb[0].mxu0
  %5249 = vmatprep.mubr.f32.mxu0 0.0
  %5250 = vmatmul.mubr.f32.gmra.mrb[0].mxu0 %v5078
  %v5251 = vpop.f32.mrb[0].mxu0
  %v5252 = vadd.f32 0.0, %v5251
  %v5253 = vpop.f32.mrb[0].mxu0
  %5254 = vmatprep.mubr.f32.mxu0 0.0
  %5255 = vmatmul.mubr.f32.gmra.mrb[0].mxu0 %v5081
  %v5256 = vpop.f32.mrb[0].mxu0
  %v5257 = vadd.f32 0.0, %v5256
  %v5258 = vpop.f32.mrb[0].mxu0
  %5259 = vmatprep.mubr.f32.mxu0 0.0
  %5260 = vmatmul.mubr.f32.gmra.mrb[0].mxu0 %v5084
  %v5261 = vpop.f32.mrb[0].mxu0
  %v5262 = vadd.f32 0.0, %v5261
  %v5263 = vpop.f32.mrb[0].mxu0
  %5264 = vmatprep.mubr.f32.mxu0 0.0
  %5265 = vmatmul.mubr.f32.gmra.mrb[0].mxu0 %v5087
  %v5266 = vpop.f32.mrb[0].mxu0
  %v5267 = vadd.f32 0.0, %v5266
  %v5268 = vpop.f32.mrb[0].mxu0
  %5269 = vmatprep.mubr.f32.mxu0 0.0
  %5270 = vmatmul.mubr.f32.gmra.mrb[0].mxu0 %v5090
  %v5271 = vpop.f32.mrb[0].mxu0
  %v5272 = vadd.f32 0.0, %v5271
  %v5273 = vpop.f32.mrb[0].mxu0
  %5274 = vmatprep.mubr.f32.mxu0 0.0
  %5275 = vmatmul.mubr.f32.gmra.mrb[0].mxu0 %v5093
  %v5276 = vpop.f32.mrb[0].mxu0
  %v5277 = vadd.f32 0.0, %v5276
  %v5278 = vpop.f32.mrb[0].mxu0
  %5279 = vmatprep.mubr.f32.mxu0 0.0
  %5280 = vmatmul.mubr.f32.gmra.mrb[0].mxu0 %v5096
  %v5281 = vpop.f32.mrb[0].mxu0
  %v5282 = vadd.f32 0.0, %v5281
  %v5283 = vpop.f32.mrb[0].mxu0
  %5284 = vmatprep.mubr.f32.mxu0 0.0
  %5285 = vmatmul.mubr.f32.gmra.mrb[0].mxu0 %v5099
  %v5286 = vpop.f32.mrb[0].mxu0
  %v5287 = vadd.f32 0.0, %v5286
  %v5288 = vpop.f32.mrb[0].mxu0
  %5289 = vmatprep.mubr.f32.mxu0 0.0
  %5290 = vmatmul.mubr.f32.gmra.mrb[0].mxu0 %v5102
  %v5291 = vpop.f32.mrb[0].mxu0
  %v5292 = vadd.f32 0.0, %v5291
  %v5293 = vpop.f32.mrb[0].mxu0
  %5294 = vmatprep.mubr.f32.mxu0 0.0
  %5295 = vmatmul.mubr.f32.gmra.mrb[0].mxu0 %v5105
  %v5296 = vpop.f32.mrb[0].mxu0
  %v5297 = vadd.f32 0.0, %v5296
  %v5298 = vpop.f32.mrb[0].mxu0
  %5299 = vmatprep.mubr.f32.mxu0 0.0
  %5300 = vmatmul.mubr.f32.gmra.mrb[0].mxu0 %v5108
  %v5301 = vpop.f32.mrb[0].mxu0
  %v5302 = vadd.f32 0.0, %v5301
  %v5303 = vpop.f32.mrb[0].mxu0
  %5304 = vmatprep.mubr.f32.mxu0 0.0
  %5305 = vmatmul.mubr.f32.gmra.mrb[0].mxu0 %v5111
  %v5306 = vpop.f32.mrb[0].mxu0
  %v5307 = vadd.f32 0.0, %v5306
  %v5308 = vpop.f32.mrb[0].mxu0
  %5309 = vmatprep.mubr.f32.mxu0 0.0
  %5310 = vmatmul.mubr.f32.gmra.mrb[0].mxu0 %v5114
  %v5311 = vpop.f32.mrb[0].mxu0
  %v5312 = vadd.f32 0.0, %v5311
  %v5313 = vpop.f32.mrb[0].mxu0
  %5314 = vmatprep.mubr.f32.mxu0 0.0
  %5315 = vmatmul.mubr.f32.gmra.mrb[0].mxu0 %v5117
  %v5316 = vpop.f32.mrb[0].mxu0
  %v5317 = vadd.f32 0.0, %v5316
  %v5318 = vpop.f32.mrb[0].mxu0
  %5319 = vmatprep.mubr.f32.mxu0 0.0
  %5320 = vmatmul.mubr.f32.gmra.mrb[0].mxu0 %v5120
  %v5321 = vpop.f32.mrb[0].mxu0
  %v5322 = vadd.f32 0.0, %v5321
  %v5323 = vpop.f32.mrb[0].mxu0
  %5324 = vmatprep.mubr.f32.mxu0 0.0
  %5325 = vmatmul.mubr.f32.gmra.mrb[0].mxu0 %v5123
  %v5326 = vpop.f32.mrb[0].mxu0
  %v5327 = vadd.f32 0.0, %v5326
  %v5328 = vpop.f32.mrb[0].mxu0
  %5329 = vmatprep.mubr.f32.mxu0 0.0
  %5330 = vmatmul.mubr.f32.gmra.mrb[0].mxu0 %v5126
  %v5331 = vpop.f32.mrb[0].mxu0
  %v5332 = vadd.f32 0.0, %v5331
  %v5333 = vpop.f32.mrb[0].mxu0
  %5334 = vmatprep.mubr.f32.mxu0 0.0
  %5335 = vmatmul.mubr.f32.gmra.mrb[0].mxu0 %v5129
  %v5336 = vpop.f32.mrb[0].mxu0
  %v5337 = vadd.f32 0.0, %v5336
  %v5338 = vpop.f32.mrb[0].mxu0
  %5339 = vmatprep.mubr.f32.mxu0 0.0
  %5340 = vmatmul.mubr.f32.gmra.mrb[0].mxu0 %v5132
  %v5341 = vpop.f32.mrb[0].mxu0
  %v5342 = vadd.f32 0.0, %v5341
  %v5343 = vpop.f32.mrb[0].mxu0
  %5344 = vmatprep.mubr.f32.mxu0 0.0
  %5345 = vmatmul.mubr.f32.gmra.mrb[0].mxu0 %v5135
  %v5346 = vpop.f32.mrb[0].mxu0
  %v5347 = vadd.f32 0.0, %v5346
  %v5348 = vpop.f32.mrb[0].mxu0
  %5349 = vmatprep.mubr.f32.mxu0 0.0
  %5350 = vmatmul.mubr.f32.gmra.mrb[0].mxu0 %v5138
  %v5351 = vpop.f32.mrb[0].mxu0
  %v5352 = vadd.f32 0.0, %v5351
  %v5353 = vpop.f32.mrb[0].mxu0
  %5354 = vmatprep.mubr.f32.mxu0 0.0
  %5355 = vmatmul.mubr.f32.gmra.mrb[0].mxu0 %v5141
  %v5356 = vpop.f32.mrb[0].mxu0
  %v5357 = vadd.f32 0.0, %v5356
  %v5358 = vpop.f32.mrb[0].mxu0
  %5359 = vmatprep.mubr.f32.mxu0 0.0
  %5360 = vmatmul.mubr.f32.gmra.mrb[0].mxu0 %v5144
  %v5361 = vpop.f32.mrb[0].mxu0
  %v5362 = vadd.f32 0.0, %v5361
  %v5363 = vpop.f32.mrb[0].mxu0
  %5364 = vmatprep.mubr.f32.mxu0 0.0
  %5365 = vmatmul.mubr.f32.gmra.mrb[0].mxu0 %v5147
  %v5366 = vpop.f32.mrb[0].mxu0
  %v5367 = vadd.f32 0.0, %v5366
  %v5368 = vpop.f32.mrb[0].mxu0
  %5369 = vmatprep.mubr.f32.mxu0 0.0
  %5370 = vmatmul.mubr.f32.gmra.mrb[0].mxu0 %v5150
  %v5371 = vpop.f32.mrb[0].mxu0
  %v5372 = vadd.f32 0.0, %v5371
  %v5373 = vpop.f32.mrb[0].mxu0
  %5374 = vmatprep.mubr.f32.mxu0 0.0
  %5375 = vmatmul.mubr.f32.gmra.mrb[0].mxu0 %v5153
  %v5376 = vpop.f32.mrb[0].mxu0
  %v5377 = vadd.f32 0.0, %v5376
  %v5378 = vpop.f32.mrb[0].mxu0
  %5379 = vdwg.mxu0
  %v5380 = vadd.f32 %v5027, %v5222
  %v5381 = vadd.f32 %v5028, %v5227
  %v5382 = vadd.f32 %v5029, %v5232
  %v5383 = vadd.f32 %v5030, %v5237
  %v5384 = vadd.f32 %v5031, %v5242
  %v5385 = vadd.f32 %v5032, %v5247
  %v5386 = vadd.f32 %v5033, %v5252
  %v5387 = vadd.f32 %v5034, %v5257
  %v5388 = vadd.f32 %v5035, %v5262
  %v5389 = vadd.f32 %v5036, %v5267
  %v5390 = vadd.f32 %v5037, %v5272
  %v5391 = vadd.f32 %v5038, %v5277
  %v5392 = vadd.f32 %v5039, %v5282
  %v5393 = vadd.f32 %v5040, %v5287
  %v5394 = vadd.f32 %v5041, %v5292
  %v5395 = vadd.f32 %v5042, %v5297
  %v5396 = vadd.f32 %v5043, %v5302
  %v5397 = vadd.f32 %v5044, %v5307
  %v5398 = vadd.f32 %v5045, %v5312
  %v5399 = vadd.f32 %v5046, %v5317
  %v5400 = vadd.f32 %v5047, %v5322
  %v5401 = vadd.f32 %v5048, %v5327
  %v5402 = vadd.f32 %v5049, %v5332
  %v5403 = vadd.f32 %v5050, %v5337
  %v5404 = vadd.f32 %v5051, %v5342
  %v5405 = vadd.f32 %v5052, %v5347
  %v5406 = vadd.f32 %v5053, %v5352
  %v5407 = vadd.f32 %v5054, %v5357
  %v5408 = vadd.f32 %v5055, %v5362
  %v5409 = vadd.f32 %v5056, %v5367
  %v5410 = vadd.f32 %v5057, %v5372
  %v5411 = vadd.f32 %v5058, %v5377
  %v5412 = vmax.f32 %v5380, 0.0
  %v5413 = vmax.f32 %v5381, 0.0
  %v5414 = vmax.f32 %v5382, 0.0
  %v5415 = vmax.f32 %v5383, 0.0
  %v5416 = vmax.f32 %v5384, 0.0
  %v5417 = vmax.f32 %v5385, 0.0
  %v5418 = vmax.f32 %v5386, 0.0
  %v5419 = vmax.f32 %v5387, 0.0
  %v5420 = vmax.f32 %v5388, 0.0
  %v5421 = vmax.f32 %v5389, 0.0
  %v5422 = vmax.f32 %v5390, 0.0
  %v5423 = vmax.f32 %v5391, 0.0
  %v5424 = vmax.f32 %v5392, 0.0
  %v5425 = vmax.f32 %v5393, 0.0
  %v5426 = vmax.f32 %v5394, 0.0
  %v5427 = vmax.f32 %v5395, 0.0
  %v5428 = vmax.f32 %v5396, 0.0
  %v5429 = vmax.f32 %v5397, 0.0
  %v5430 = vmax.f32 %v5398, 0.0
  %v5431 = vmax.f32 %v5399, 0.0
  %v5432 = vmax.f32 %v5400, 0.0
  %v5433 = vmax.f32 %v5401, 0.0
  %v5434 = vmax.f32 %v5402, 0.0
  %v5435 = vmax.f32 %v5403, 0.0
  %v5436 = vmax.f32 %v5404, 0.0
  %v5437 = vmax.f32 %v5405, 0.0
  %v5438 = vmax.f32 %v5406, 0.0
  %v5439 = vmax.f32 %v5407, 0.0
  %v5440 = vmax.f32 %v5408, 0.0
  %v5441 = vmax.f32 %v5409, 0.0
  %v5442 = vmax.f32 %v5410, 0.0
  %v5443 = vmax.f32 %v5411, 0.0
  %v5444 = vmul.f32 %v4659, %v4987
  %v5445 = vmul.f32 %v4660, %v4987
  %v5446 = vmul.f32 %v4661, %v4987
  %v5447 = vmul.f32 %v4662, %v4987
  %v5448 = vmul.f32 %v4663, %v4987
  %v5449 = vmul.f32 %v4664, %v4987
  %v5450 = vmul.f32 %v4665, %v4987
  %v5451 = vmul.f32 %v4666, %v4987
  %v5452 = vmul.f32 %v4667, %v4987
  %v5453 = vmul.f32 %v4668, %v4987
  %v5454 = vmul.f32 %v4669, %v4987
  %v5455 = vmul.f32 %v4670, %v4987
  %v5456 = vmul.f32 %v4671, %v4987
  %v5457 = vmul.f32 %v4672, %v4987
  %v5458 = vmul.f32 %v4673, %v4987
  %v5459 = vmul.f32 %v4674, %v4987
  %v5460 = vmul.f32 %v4675, %v4987
  %v5461 = vmul.f32 %v4676, %v4987
  %v5462 = vmul.f32 %v4677, %v4987
  %v5463 = vmul.f32 %v4678, %v4987
  %v5464 = vmul.f32 %v4679, %v4987
  %v5465 = vmul.f32 %v4680, %v4987
  %v5466 = vmul.f32 %v4681, %v4987
  %v5467 = vmul.f32 %v4682, %v4987
  %v5468 = vmul.f32 %v4683, %v4987
  %v5469 = vmul.f32 %v4684, %v4987
  %v5470 = vmul.f32 %v4685, %v4987
  %v5471 = vmul.f32 %v4686, %v4987
  %v5472 = vmul.f32 %v4687, %v4987
  %v5473 = vmul.f32 %v4688, %v4987
  %v5474 = vmul.f32 %v4689, %v4987
  %v5475 = vmul.f32 %v4690, %v4987
  %v5476 = vadd.f32 %v5444, %v5025
  %v5477 = vadd.f32 %v5445, %v5025
  %v5478 = vadd.f32 %v5446, %v5025
  %v5479 = vadd.f32 %v5447, %v5025
  %v5480 = vadd.f32 %v5448, %v5025
  %v5481 = vadd.f32 %v5449, %v5025
  %v5482 = vadd.f32 %v5450, %v5025
  %v5483 = vadd.f32 %v5451, %v5025
  %v5484 = vadd.f32 %v5452, %v5025
  %v5485 = vadd.f32 %v5453, %v5025
  %v5486 = vadd.f32 %v5454, %v5025
  %v5487 = vadd.f32 %v5455, %v5025
  %v5488 = vadd.f32 %v5456, %v5025
  %v5489 = vadd.f32 %v5457, %v5025
  %v5490 = vadd.f32 %v5458, %v5025
  %v5491 = vadd.f32 %v5459, %v5025
  %v5492 = vadd.f32 %v5460, %v5025
  %v5493 = vadd.f32 %v5461, %v5025
  %v5494 = vadd.f32 %v5462, %v5025
  %v5495 = vadd.f32 %v5463, %v5025
  %v5496 = vadd.f32 %v5464, %v5025
  %v5497 = vadd.f32 %v5465, %v5025
  %v5498 = vadd.f32 %v5466, %v5025
  %v5499 = vadd.f32 %v5467, %v5025
  %v5500 = vadd.f32 %v5468, %v5025
  %v5501 = vadd.f32 %v5469, %v5025
  %v5502 = vadd.f32 %v5470, %v5025
  %v5503 = vadd.f32 %v5471, %v5025
  %v5504 = vadd.f32 %v5472, %v5025
  %v5505 = vadd.f32 %v5473, %v5025
  %v5506 = vadd.f32 %v5474, %v5025
  %v5507 = vadd.f32 %v5475, %v5025
  %v5509 = vsel %vm153, %v1504, 0
  %v5512 = vsel %vm153, %v1505, 0
  %v5515 = vsel %vm153, %v1506, 0
  %v5518 = vsel %vm153, %v1507, 0
  %v5521 = vsel %vm153, %v1508, 0
  %v5524 = vsel %vm153, %v1509, 0
  %v5527 = vsel %vm153, %v1510, 0
  %v5530 = vsel %vm153, %v1511, 0
  %v5533 = vsel %vm153, %v1512, 0
  %v5536 = vsel %vm153, %v1513, 0
  %v5539 = vsel %vm153, %v1514, 0
  %v5542 = vsel %vm153, %v1515, 0
  %v5545 = vsel %vm153, %v1516, 0
  %v5548 = vsel %vm153, %v1517, 0
  %v5551 = vsel %vm153, %v1518, 0
  %v5554 = vsel %vm153, %v1519, 0
  %v5557 = vsel %vm153, %v1520, 0
  %v5560 = vsel %vm153, %v1521, 0
  %v5563 = vsel %vm153, %v1522, 0
  %v5566 = vsel %vm153, %v1523, 0
  %v5569 = vsel %vm153, %v1524, 0
  %v5572 = vsel %vm153, %v1525, 0
  %v5575 = vsel %vm153, %v1526, 0
  %v5578 = vsel %vm153, %v1527, 0
  %v5581 = vsel %vm153, %v1528, 0
  %v5584 = vsel %vm153, %v1529, 0
  %v5587 = vsel %vm153, %v1530, 0
  %v5590 = vsel %vm153, %v1531, 0
  %v5593 = vsel %vm153, %v1532, 0
  %v5596 = vsel %vm153, %v1533, 0
  %v5599 = vsel %vm153, %v1534, 0
  %v5602 = vsel %vm153, %v1535, 0
  %5604 = vmatprep.subr.mxu0 0.0
  %5605 = vmatpush1.msra.mxu0 %v4979
  %5606 = vmatprep.subr.mxu0 0.0
  %5607 = vmatpush1.msra.mxu0 %v4980
  %5608 = vmatprep.subr.mxu0 0.0
  %5609 = vmatpush1.msra.mxu0 %v4981
  %5610 = vmatprep.subr.mxu0 0.0
  %5611 = vmatpush1.msra.mxu0 %v4982
  %5612 = vmatprep.subr.mxu0 0.0
  %5613 = vmatpush1.msra.mxu0 0.0
  %5614 = vmatprep.subr.mxu0 0.0
  %5615 = vmatpush1.msra.mxu0 0.0
  %5616 = vmatprep.subr.mxu0 0.0
  %5617 = vmatpush1.msra.mxu0 0.0
  %5618 = vmatprep.subr.mxu0 0.0
  %5619 = vmatpush1.msra.mxu0 0.0
  %5620 = vmatprep.subr.mxu0 0.0
  %5621 = vmatpush1.msra.mxu0 0.0
  %5622 = vmatprep.subr.mxu0 0.0
  %5623 = vmatpush1.msra.mxu0 0.0
  %5624 = vmatprep.subr.mxu0 0.0
  %5625 = vmatpush1.msra.mxu0 0.0
  %5626 = vmatprep.subr.mxu0 0.0
  %5627 = vmatpush1.msra.mxu0 0.0
  %5628 = vmatprep.subr.mxu0 0.0
  %5629 = vmatpush1.msra.mxu0 0.0
  %5630 = vmatprep.subr.mxu0 0.0
  %5631 = vmatpush1.msra.mxu0 0.0
  %5632 = vmatprep.subr.mxu0 0.0
  %5633 = vmatpush1.msra.mxu0 0.0
  %5634 = vmatprep.subr.mxu0 0.0
  %5635 = vmatpush1.msra.mxu0 0.0
  %5636 = vmatprep.subr.mxu0 0.0
  %5637 = vmatpush1.msra.mxu0 0.0
  %5638 = vmatprep.subr.mxu0 0.0
  %5639 = vmatpush1.msra.mxu0 0.0
  %5640 = vmatprep.subr.mxu0 0.0
  %5641 = vmatpush1.msra.mxu0 0.0
  %5642 = vmatprep.subr.mxu0 0.0
  %5643 = vmatpush1.msra.mxu0 0.0
  %5644 = vmatprep.subr.mxu0 0.0
  %5645 = vmatpush1.msra.mxu0 0.0
  %5646 = vmatprep.subr.mxu0 0.0
  %5647 = vmatpush1.msra.mxu0 0.0
  %5648 = vmatprep.subr.mxu0 0.0
  %5649 = vmatpush1.msra.mxu0 0.0
  %5650 = vmatprep.subr.mxu0 0.0
  %5651 = vmatpush1.msra.mxu0 0.0
  %5652 = vmatprep.subr.mxu0 0.0
  %5653 = vmatpush1.msra.mxu0 0.0
  %5654 = vmatprep.subr.mxu0 0.0
  %5655 = vmatpush1.msra.mxu0 0.0
  %5656 = vmatprep.subr.mxu0 0.0
  %5657 = vmatpush1.msra.mxu0 0.0
  %5658 = vmatprep.subr.mxu0 0.0
  %5659 = vmatpush1.msra.mxu0 0.0
  %5660 = vmatprep.subr.mxu0 0.0
  %5661 = vmatpush1.msra.mxu0 0.0
  %5662 = vmatprep.subr.mxu0 0.0
  %5663 = vmatpush1.msra.mxu0 0.0
  %5664 = vmatprep.subr.mxu0 0.0
  %5665 = vmatpush1.msra.mxu0 0.0
  %5666 = vmatprep.subr.mxu0 0.0
  %5667 = vmatpush1.msra.mxu0 0.0
  %5668 = vmatprep.mubr.f32.mxu0 0.0
  %5669 = vmatmul.mubr.f32.gmra.mrb[0].mxu0 %v5509
  %v5670 = vpop.f32.mrb[0].mxu0
  %v5671 = vadd.f32 0.0, %v5670
  %v5672 = vpop.f32.mrb[0].mxu0
  %5673 = vmatprep.mubr.f32.mxu0 0.0
  %5674 = vmatmul.mubr.f32.gmra.mrb[0].mxu0 %v5512
  %v5675 = vpop.f32.mrb[0].mxu0
  %v5676 = vadd.f32 0.0, %v5675
  %v5677 = vpop.f32.mrb[0].mxu0
  %5678 = vmatprep.mubr.f32.mxu0 0.0
  %5679 = vmatmul.mubr.f32.gmra.mrb[0].mxu0 %v5515
  %v5680 = vpop.f32.mrb[0].mxu0
  %v5681 = vadd.f32 0.0, %v5680
  %v5682 = vpop.f32.mrb[0].mxu0
  %5683 = vmatprep.mubr.f32.mxu0 0.0
  %5684 = vmatmul.mubr.f32.gmra.mrb[0].mxu0 %v5518
  %v5685 = vpop.f32.mrb[0].mxu0
  %v5686 = vadd.f32 0.0, %v5685
  %v5687 = vpop.f32.mrb[0].mxu0
  %5688 = vmatprep.mubr.f32.mxu0 0.0
  %5689 = vmatmul.mubr.f32.gmra.mrb[0].mxu0 %v5521
  %v5690 = vpop.f32.mrb[0].mxu0
  %v5691 = vadd.f32 0.0, %v5690
  %v5692 = vpop.f32.mrb[0].mxu0
  %5693 = vmatprep.mubr.f32.mxu0 0.0
  %5694 = vmatmul.mubr.f32.gmra.mrb[0].mxu0 %v5524
  %v5695 = vpop.f32.mrb[0].mxu0
  %v5696 = vadd.f32 0.0, %v5695
  %v5697 = vpop.f32.mrb[0].mxu0
  %5698 = vmatprep.mubr.f32.mxu0 0.0
  %5699 = vmatmul.mubr.f32.gmra.mrb[0].mxu0 %v5527
  %v5700 = vpop.f32.mrb[0].mxu0
  %v5701 = vadd.f32 0.0, %v5700
  %v5702 = vpop.f32.mrb[0].mxu0
  %5703 = vmatprep.mubr.f32.mxu0 0.0
  %5704 = vmatmul.mubr.f32.gmra.mrb[0].mxu0 %v5530
  %v5705 = vpop.f32.mrb[0].mxu0
  %v5706 = vadd.f32 0.0, %v5705
  %v5707 = vpop.f32.mrb[0].mxu0
  %5708 = vmatprep.mubr.f32.mxu0 0.0
  %5709 = vmatmul.mubr.f32.gmra.mrb[0].mxu0 %v5533
  %v5710 = vpop.f32.mrb[0].mxu0
  %v5711 = vadd.f32 0.0, %v5710
  %v5712 = vpop.f32.mrb[0].mxu0
  %5713 = vmatprep.mubr.f32.mxu0 0.0
  %5714 = vmatmul.mubr.f32.gmra.mrb[0].mxu0 %v5536
  %v5715 = vpop.f32.mrb[0].mxu0
  %v5716 = vadd.f32 0.0, %v5715
  %v5717 = vpop.f32.mrb[0].mxu0
  %5718 = vmatprep.mubr.f32.mxu0 0.0
  %5719 = vmatmul.mubr.f32.gmra.mrb[0].mxu0 %v5539
  %v5720 = vpop.f32.mrb[0].mxu0
  %v5721 = vadd.f32 0.0, %v5720
  %v5722 = vpop.f32.mrb[0].mxu0
  %5723 = vmatprep.mubr.f32.mxu0 0.0
  %5724 = vmatmul.mubr.f32.gmra.mrb[0].mxu0 %v5542
  %v5725 = vpop.f32.mrb[0].mxu0
  %v5726 = vadd.f32 0.0, %v5725
  %v5727 = vpop.f32.mrb[0].mxu0
  %5728 = vmatprep.mubr.f32.mxu0 0.0
  %5729 = vmatmul.mubr.f32.gmra.mrb[0].mxu0 %v5545
  %v5730 = vpop.f32.mrb[0].mxu0
  %v5731 = vadd.f32 0.0, %v5730
  %v5732 = vpop.f32.mrb[0].mxu0
  %5733 = vmatprep.mubr.f32.mxu0 0.0
  %5734 = vmatmul.mubr.f32.gmra.mrb[0].mxu0 %v5548
  %v5735 = vpop.f32.mrb[0].mxu0
  %v5736 = vadd.f32 0.0, %v5735
  %v5737 = vpop.f32.mrb[0].mxu0
  %5738 = vmatprep.mubr.f32.mxu0 0.0
  %5739 = vmatmul.mubr.f32.gmra.mrb[0].mxu0 %v5551
  %v5740 = vpop.f32.mrb[0].mxu0
  %v5741 = vadd.f32 0.0, %v5740
  %v5742 = vpop.f32.mrb[0].mxu0
  %5743 = vmatprep.mubr.f32.mxu0 0.0
  %5744 = vmatmul.mubr.f32.gmra.mrb[0].mxu0 %v5554
  %v5745 = vpop.f32.mrb[0].mxu0
  %v5746 = vadd.f32 0.0, %v5745
  %v5747 = vpop.f32.mrb[0].mxu0
  %5748 = vmatprep.mubr.f32.mxu0 0.0
  %5749 = vmatmul.mubr.f32.gmra.mrb[0].mxu0 %v5557
  %v5750 = vpop.f32.mrb[0].mxu0
  %v5751 = vadd.f32 0.0, %v5750
  %v5752 = vpop.f32.mrb[0].mxu0
  %5753 = vmatprep.mubr.f32.mxu0 0.0
  %5754 = vmatmul.mubr.f32.gmra.mrb[0].mxu0 %v5560
  %v5755 = vpop.f32.mrb[0].mxu0
  %v5756 = vadd.f32 0.0, %v5755
  %v5757 = vpop.f32.mrb[0].mxu0
  %5758 = vmatprep.mubr.f32.mxu0 0.0
  %5759 = vmatmul.mubr.f32.gmra.mrb[0].mxu0 %v5563
  %v5760 = vpop.f32.mrb[0].mxu0
  %v5761 = vadd.f32 0.0, %v5760
  %v5762 = vpop.f32.mrb[0].mxu0
  %5763 = vmatprep.mubr.f32.mxu0 0.0
  %5764 = vmatmul.mubr.f32.gmra.mrb[0].mxu0 %v5566
  %v5765 = vpop.f32.mrb[0].mxu0
  %v5766 = vadd.f32 0.0, %v5765
  %v5767 = vpop.f32.mrb[0].mxu0
  %5768 = vmatprep.mubr.f32.mxu0 0.0
  %5769 = vmatmul.mubr.f32.gmra.mrb[0].mxu0 %v5569
  %v5770 = vpop.f32.mrb[0].mxu0
  %v5771 = vadd.f32 0.0, %v5770
  %v5772 = vpop.f32.mrb[0].mxu0
  %5773 = vmatprep.mubr.f32.mxu0 0.0
  %5774 = vmatmul.mubr.f32.gmra.mrb[0].mxu0 %v5572
  %v5775 = vpop.f32.mrb[0].mxu0
  %v5776 = vadd.f32 0.0, %v5775
  %v5777 = vpop.f32.mrb[0].mxu0
  %5778 = vmatprep.mubr.f32.mxu0 0.0
  %5779 = vmatmul.mubr.f32.gmra.mrb[0].mxu0 %v5575
  %v5780 = vpop.f32.mrb[0].mxu0
  %v5781 = vadd.f32 0.0, %v5780
  %v5782 = vpop.f32.mrb[0].mxu0
  %5783 = vmatprep.mubr.f32.mxu0 0.0
  %5784 = vmatmul.mubr.f32.gmra.mrb[0].mxu0 %v5578
  %v5785 = vpop.f32.mrb[0].mxu0
  %v5786 = vadd.f32 0.0, %v5785
  %v5787 = vpop.f32.mrb[0].mxu0
  %5788 = vmatprep.mubr.f32.mxu0 0.0
  %5789 = vmatmul.mubr.f32.gmra.mrb[0].mxu0 %v5581
  %v5790 = vpop.f32.mrb[0].mxu0
  %v5791 = vadd.f32 0.0, %v5790
  %v5792 = vpop.f32.mrb[0].mxu0
  %5793 = vmatprep.mubr.f32.mxu0 0.0
  %5794 = vmatmul.mubr.f32.gmra.mrb[0].mxu0 %v5584
  %v5795 = vpop.f32.mrb[0].mxu0
  %v5796 = vadd.f32 0.0, %v5795
  %v5797 = vpop.f32.mrb[0].mxu0
  %5798 = vmatprep.mubr.f32.mxu0 0.0
  %5799 = vmatmul.mubr.f32.gmra.mrb[0].mxu0 %v5587
  %v5800 = vpop.f32.mrb[0].mxu0
  %v5801 = vadd.f32 0.0, %v5800
  %v5802 = vpop.f32.mrb[0].mxu0
  %5803 = vmatprep.mubr.f32.mxu0 0.0
  %5804 = vmatmul.mubr.f32.gmra.mrb[0].mxu0 %v5590
  %v5805 = vpop.f32.mrb[0].mxu0
  %v5806 = vadd.f32 0.0, %v5805
  %v5807 = vpop.f32.mrb[0].mxu0
  %5808 = vmatprep.mubr.f32.mxu0 0.0
  %5809 = vmatmul.mubr.f32.gmra.mrb[0].mxu0 %v5593
  %v5810 = vpop.f32.mrb[0].mxu0
  %v5811 = vadd.f32 0.0, %v5810
  %v5812 = vpop.f32.mrb[0].mxu0
  %5813 = vmatprep.mubr.f32.mxu0 0.0
  %5814 = vmatmul.mubr.f32.gmra.mrb[0].mxu0 %v5596
  %v5815 = vpop.f32.mrb[0].mxu0
  %v5816 = vadd.f32 0.0, %v5815
  %v5817 = vpop.f32.mrb[0].mxu0
  %5818 = vmatprep.mubr.f32.mxu0 0.0
  %5819 = vmatmul.mubr.f32.gmra.mrb[0].mxu0 %v5599
  %v5820 = vpop.f32.mrb[0].mxu0
  %v5821 = vadd.f32 0.0, %v5820
  %v5822 = vpop.f32.mrb[0].mxu0
  %5823 = vmatprep.mubr.f32.mxu0 0.0
  %5824 = vmatmul.mubr.f32.gmra.mrb[0].mxu0 %v5602
  %v5825 = vpop.f32.mrb[0].mxu0
  %v5826 = vadd.f32 0.0, %v5825
  %v5827 = vpop.f32.mrb[0].mxu0
  %5828 = vdwg.mxu0
  %v5829 = vadd.f32 %v5476, %v5671
  %v5830 = vadd.f32 %v5477, %v5676
  %v5831 = vadd.f32 %v5478, %v5681
  %v5832 = vadd.f32 %v5479, %v5686
  %v5833 = vadd.f32 %v5480, %v5691
  %v5834 = vadd.f32 %v5481, %v5696
  %v5835 = vadd.f32 %v5482, %v5701
  %v5836 = vadd.f32 %v5483, %v5706
  %v5837 = vadd.f32 %v5484, %v5711
  %v5838 = vadd.f32 %v5485, %v5716
  %v5839 = vadd.f32 %v5486, %v5721
  %v5840 = vadd.f32 %v5487, %v5726
  %v5841 = vadd.f32 %v5488, %v5731
  %v5842 = vadd.f32 %v5489, %v5736
  %v5843 = vadd.f32 %v5490, %v5741
  %v5844 = vadd.f32 %v5491, %v5746
  %v5845 = vadd.f32 %v5492, %v5751
  %v5846 = vadd.f32 %v5493, %v5756
  %v5847 = vadd.f32 %v5494, %v5761
  %v5848 = vadd.f32 %v5495, %v5766
  %v5849 = vadd.f32 %v5496, %v5771
  %v5850 = vadd.f32 %v5497, %v5776
  %v5851 = vadd.f32 %v5498, %v5781
  %v5852 = vadd.f32 %v5499, %v5786
  %v5853 = vadd.f32 %v5500, %v5791
  %v5854 = vadd.f32 %v5501, %v5796
  %v5855 = vadd.f32 %v5502, %v5801
  %v5856 = vadd.f32 %v5503, %v5806
  %v5857 = vadd.f32 %v5504, %v5811
  %v5858 = vadd.f32 %v5505, %v5816
  %v5859 = vadd.f32 %v5506, %v5821
  %v5860 = vadd.f32 %v5507, %v5826
  %v5861 = vmax.f32 %v5829, 0.0
  %v5862 = vmax.f32 %v5830, 0.0
  %v5863 = vmax.f32 %v5831, 0.0
  %v5864 = vmax.f32 %v5832, 0.0
  %v5865 = vmax.f32 %v5833, 0.0
  %v5866 = vmax.f32 %v5834, 0.0
  %v5867 = vmax.f32 %v5835, 0.0
  %v5868 = vmax.f32 %v5836, 0.0
  %v5869 = vmax.f32 %v5837, 0.0
  %v5870 = vmax.f32 %v5838, 0.0
  %v5871 = vmax.f32 %v5839, 0.0
  %v5872 = vmax.f32 %v5840, 0.0
  %v5873 = vmax.f32 %v5841, 0.0
  %v5874 = vmax.f32 %v5842, 0.0
  %v5875 = vmax.f32 %v5843, 0.0
  %v5876 = vmax.f32 %v5844, 0.0
  %v5877 = vmax.f32 %v5845, 0.0
  %v5878 = vmax.f32 %v5846, 0.0
  %v5879 = vmax.f32 %v5847, 0.0
  %v5880 = vmax.f32 %v5848, 0.0
  %v5881 = vmax.f32 %v5849, 0.0
  %v5882 = vmax.f32 %v5850, 0.0
  %v5883 = vmax.f32 %v5851, 0.0
  %v5884 = vmax.f32 %v5852, 0.0
  %v5885 = vmax.f32 %v5853, 0.0
  %v5886 = vmax.f32 %v5854, 0.0
  %v5887 = vmax.f32 %v5855, 0.0
  %v5888 = vmax.f32 %v5856, 0.0
  %v5889 = vmax.f32 %v5857, 0.0
  %v5890 = vmax.f32 %v5858, 0.0
  %v5891 = vmax.f32 %v5859, 0.0
  %v5892 = vmax.f32 %v5860, 0.0
  %5893 = vst [vmem:[#allocation2] sm:$0xff] 0.0
  %5894 = vst [vmem:[#allocation2 + $0x8] sm:$0x1] 0.0
  %5895 = vst [vmem:[#allocation2 + $0x10] sm:$0xff] 0.0
  %5896 = vst [vmem:[#allocation2 + $0x18] sm:$0x1] 0.0
  %5897 = vst [vmem:[#allocation2 + $0x20] sm:$0xff] 0.0
  %5898 = vst [vmem:[#allocation2 + $0x28] sm:$0x1] 0.0
  %5899 = vst [vmem:[#allocation2 + $0x30] sm:$0xff] 0.0
  %5900 = vst [vmem:[#allocation2 + $0x38] sm:$0x1] 0.0
  %5901 = vst [vmem:[#allocation2 + $0x40] sm:$0xff] 0.0
  %5902 = vst [vmem:[#allocation2 + $0x48] sm:$0x1] 0.0
  %5903 = vst [vmem:[#allocation2 + $0x50] sm:$0xff] 0.0
  %5904 = vst [vmem:[#allocation2 + $0x58] sm:$0x1] 0.0
  %5905 = vst [vmem:[#allocation2 + $0x60] sm:$0xff] 0.0
  %5906 = vst [vmem:[#allocation2 + $0x68] sm:$0x1] 0.0
  %5907 = vst [vmem:[#allocation2 + $0x70] sm:$0xff] 0.0
  %5908 = vst [vmem:[#allocation2 + $0x78] sm:$0x1] 0.0
  %5909 = vst [vmem:[#allocation2 + $0x80] sm:$0xff] 0.0
  %5910 = vst [vmem:[#allocation2 + $0x88] sm:$0x1] 0.0
  %5911 = vst [vmem:[#allocation2 + $0x90] sm:$0xff] 0.0
  %5912 = vst [vmem:[#allocation2 + $0x98] sm:$0x1] 0.0
  %5913 = vst [vmem:[#allocation2 + $0xa0] sm:$0xff] 0.0
  %5914 = vst [vmem:[#allocation2 + $0xa8] sm:$0x1] 0.0
  %5915 = vst [vmem:[#allocation2 + $0xb0] sm:$0xff] 0.0
  %5916 = vst [vmem:[#allocation2 + $0xb8] sm:$0x1] 0.0
  %5917 = vst [vmem:[#allocation2 + $0xc0] sm:$0xff] 0.0
  %5918 = vst [vmem:[#allocation2 + $0xc8] sm:$0x1] 0.0
  %5919 = vst [vmem:[#allocation2 + $0xd0] sm:$0xff] 0.0
  %5920 = vst [vmem:[#allocation2 + $0xd8] sm:$0x1] 0.0
  %5921 = vst [vmem:[#allocation2 + $0xe0] sm:$0xff] 0.0
  %5922 = vst [vmem:[#allocation2 + $0xe8] sm:$0x1] 0.0
  %5923 = vst [vmem:[#allocation2 + $0xf0] sm:$0xff] 0.0
  %5924 = vst [vmem:[#allocation2 + $0xf8] sm:$0x1] 0.0
  %5925 = vst [vmem:[#allocation2 + $0x100] sm:$0xff] 0.0
  %5926 = vst [vmem:[#allocation2 + $0x108] sm:$0x1] 0.0
  %5927 = vst [vmem:[#allocation2 + $0x110] sm:$0xff] 0.0
  %5928 = vst [vmem:[#allocation2 + $0x118] sm:$0x1] 0.0
  %5929 = vst [vmem:[#allocation2 + $0x120] sm:$0xff] 0.0
  %5930 = vst [vmem:[#allocation2 + $0x128] sm:$0x1] 0.0
  %5931 = vst [vmem:[#allocation2 + $0x130] sm:$0xff] 0.0
  %5932 = vst [vmem:[#allocation2 + $0x138] sm:$0x1] 0.0
  %5933 = vst [vmem:[#allocation2 + $0x140] sm:$0xff] 0.0
  %5934 = vst [vmem:[#allocation2 + $0x148] sm:$0x1] 0.0
  %5935 = vst [vmem:[#allocation2 + $0x150] sm:$0xff] 0.0
  %5936 = vst [vmem:[#allocation2 + $0x158] sm:$0x1] 0.0
  %5937 = vst [vmem:[#allocation2 + $0x160] sm:$0xff] 0.0
  %5938 = vst [vmem:[#allocation2 + $0x168] sm:$0x1] 0.0
  %5939 = vst [vmem:[#allocation2 + $0x170] sm:$0xff] 0.0
  %5940 = vst [vmem:[#allocation2 + $0x178] sm:$0x1] 0.0
  %5941 = vst [vmem:[#allocation2 + $0x180] sm:$0xff] 0.0
  %5942 = vst [vmem:[#allocation2 + $0x188] sm:$0x1] 0.0
  %5943 = vst [vmem:[#allocation2 + $0x190] sm:$0xff] 0.0
  %5944 = vst [vmem:[#allocation2 + $0x198] sm:$0x1] 0.0
  %5945 = vst [vmem:[#allocation2 + $0x1a0] sm:$0xff] 0.0
  %5946 = vst [vmem:[#allocation2 + $0x1a8] sm:$0x1] 0.0
  %5947 = vst [vmem:[#allocation2 + $0x1b0] sm:$0xff] 0.0
  %5948 = vst [vmem:[#allocation2 + $0x1b8] sm:$0x1] 0.0
  %5949 = vst [vmem:[#allocation2 + $0x1c0] sm:$0xff] 0.0
  %5950 = vst [vmem:[#allocation2 + $0x1c8] sm:$0x1] 0.0
  %5951 = vst [vmem:[#allocation2 + $0x1d0] sm:$0xff] 0.0
  %5952 = vst [vmem:[#allocation2 + $0x1d8] sm:$0x1] 0.0
  %5953 = vst [vmem:[#allocation2 + $0x1e0] sm:$0xff] 0.0
  %5954 = vst [vmem:[#allocation2 + $0x1e8] sm:$0x1] 0.0
  %5955 = vst [vmem:[#allocation2 + $0x1f0] sm:$0xff] 0.0
  %5956 = vst [vmem:[#allocation2 + $0x1f8] sm:$0x1] 0.0
  %5957 = vst [vmem:[#allocation2 + $0x200] sm:$0xff] 0.0
  %5958 = vst [vmem:[#allocation2 + $0x208] sm:$0x1] 0.0
  %5959 = vst [vmem:[#allocation2 + $0x210] sm:$0xff] 0.0
  %5960 = vst [vmem:[#allocation2 + $0x218] sm:$0x1] 0.0
  %5961 = vst [vmem:[#allocation2 + $0x220] sm:$0xff] 0.0
  %5962 = vst [vmem:[#allocation2 + $0x228] sm:$0x1] 0.0
  %5963 = vst [vmem:[#allocation2 + $0x230] sm:$0xff] 0.0
  %5964 = vst [vmem:[#allocation2 + $0x238] sm:$0x1] 0.0
  %5965 = vst [vmem:[#allocation3] sm:$0xff] 0.0
  %5966 = vst [vmem:[#allocation3 + $0x8] sm:$0x1] 0.0
  %5967 = vst [vmem:[#allocation3 + $0x10] sm:$0xff] 0.0
  %5968 = vst [vmem:[#allocation3 + $0x18] sm:$0x1] 0.0
  %5969 = vst [vmem:[#allocation3 + $0x20] sm:$0xff] 0.0
  %5970 = vst [vmem:[#allocation3 + $0x28] sm:$0x1] 0.0
  %5971 = vst [vmem:[#allocation3 + $0x30] sm:$0xff] 0.0
  %5972 = vst [vmem:[#allocation3 + $0x38] sm:$0x1] 0.0
  %5973 = vst [vmem:[#allocation3 + $0x40] sm:$0xff] 0.0
  %5974 = vst [vmem:[#allocation3 + $0x48] sm:$0x1] 0.0
  %5975 = vst [vmem:[#allocation3 + $0x50] sm:$0xff] 0.0
  %5976 = vst [vmem:[#allocation3 + $0x58] sm:$0x1] 0.0
  %5977 = vst [vmem:[#allocation3 + $0x60] sm:$0xff] 0.0
  %5978 = vst [vmem:[#allocation3 + $0x68] sm:$0x1] 0.0
  %5979 = vst [vmem:[#allocation3 + $0x70] sm:$0xff] 0.0
  %5980 = vst [vmem:[#allocation3 + $0x78] sm:$0x1] 0.0
  %5981 = vst [vmem:[#allocation3 + $0x80] sm:$0xff] 0.0
  %5982 = vst [vmem:[#allocation3 + $0x88] sm:$0x1] 0.0
  %5983 = vst [vmem:[#allocation3 + $0x90] sm:$0xff] 0.0
  %5984 = vst [vmem:[#allocation3 + $0x98] sm:$0x1] 0.0
  %5985 = vst [vmem:[#allocation3 + $0xa0] sm:$0xff] 0.0
  %5986 = vst [vmem:[#allocation3 + $0xa8] sm:$0x1] 0.0
  %5987 = vst [vmem:[#allocation3 + $0xb0] sm:$0xff] 0.0
  %5988 = vst [vmem:[#allocation3 + $0xb8] sm:$0x1] 0.0
  %5989 = vst [vmem:[#allocation3 + $0xc0] sm:$0xff] 0.0
  %5990 = vst [vmem:[#allocation3 + $0xc8] sm:$0x1] 0.0
  %5991 = vst [vmem:[#allocation3 + $0xd0] sm:$0xff] 0.0
  %5992 = vst [vmem:[#allocation3 + $0xd8] sm:$0x1] 0.0
  %5993 = vst [vmem:[#allocation3 + $0xe0] sm:$0xff] 0.0
  %5994 = vst [vmem:[#allocation3 + $0xe8] sm:$0x1] 0.0
  %5995 = vst [vmem:[#allocation3 + $0xf0] sm:$0xff] 0.0
  %5996 = vst [vmem:[#allocation3 + $0xf8] sm:$0x1] 0.0
  %5997 = vst [vmem:[#allocation3 + $0x100] sm:$0xff] 0.0
  %5998 = vst [vmem:[#allocation3 + $0x108] sm:$0x1] 0.0
  %5999 = vst [vmem:[#allocation3 + $0x110] sm:$0xff] 0.0
  %6000 = vst [vmem:[#allocation3 + $0x118] sm:$0x1] 0.0
  %6001 = vst [vmem:[#allocation3 + $0x120] sm:$0xff] 0.0
  %6002 = vst [vmem:[#allocation3 + $0x128] sm:$0x1] 0.0
  %6003 = vst [vmem:[#allocation3 + $0x130] sm:$0xff] 0.0
  %6004 = vst [vmem:[#allocation3 + $0x138] sm:$0x1] 0.0
  %6005 = vst [vmem:[#allocation3 + $0x140] sm:$0xff] 0.0
  %6006 = vst [vmem:[#allocation3 + $0x148] sm:$0x1] 0.0
  %6007 = vst [vmem:[#allocation3 + $0x150] sm:$0xff] 0.0
  %6008 = vst [vmem:[#allocation3 + $0x158] sm:$0x1] 0.0
  %6009 = vst [vmem:[#allocation3 + $0x160] sm:$0xff] 0.0
  %6010 = vst [vmem:[#allocation3 + $0x168] sm:$0x1] 0.0
  %6011 = vst [vmem:[#allocation3 + $0x170] sm:$0xff] 0.0
  %6012 = vst [vmem:[#allocation3 + $0x178] sm:$0x1] 0.0
  %6013 = vst [vmem:[#allocation3 + $0x180] sm:$0xff] 0.0
  %6014 = vst [vmem:[#allocation3 + $0x188] sm:$0x1] 0.0
  %6015 = vst [vmem:[#allocation3 + $0x190] sm:$0xff] 0.0
  %6016 = vst [vmem:[#allocation3 + $0x198] sm:$0x1] 0.0
  %6017 = vst [vmem:[#allocation3 + $0x1a0] sm:$0xff] 0.0
  %6018 = vst [vmem:[#allocation3 + $0x1a8] sm:$0x1] 0.0
  %6019 = vst [vmem:[#allocation3 + $0x1b0] sm:$0xff] 0.0
  %6020 = vst [vmem:[#allocation3 + $0x1b8] sm:$0x1] 0.0
  %6021 = vst [vmem:[#allocation3 + $0x1c0] sm:$0xff] 0.0
  %6022 = vst [vmem:[#allocation3 + $0x1c8] sm:$0x1] 0.0
  %6023 = vst [vmem:[#allocation3 + $0x1d0] sm:$0xff] 0.0
  %6024 = vst [vmem:[#allocation3 + $0x1d8] sm:$0x1] 0.0
  %6025 = vst [vmem:[#allocation3 + $0x1e0] sm:$0xff] 0.0
  %6026 = vst [vmem:[#allocation3 + $0x1e8] sm:$0x1] 0.0
  %6027 = vst [vmem:[#allocation3 + $0x1f0] sm:$0xff] 0.0
  %6028 = vst [vmem:[#allocation3 + $0x1f8] sm:$0x1] 0.0
  %6029 = vst [vmem:[#allocation3 + $0x200] sm:$0xff] 0.0
  %6030 = vst [vmem:[#allocation3 + $0x208] sm:$0x1] 0.0
  %6031 = vst [vmem:[#allocation3 + $0x210] sm:$0xff] 0.0
  %6032 = vst [vmem:[#allocation3 + $0x218] sm:$0x1] 0.0
  %6033 = vst [vmem:[#allocation3 + $0x220] sm:$0xff] 0.0
  %6034 = vst [vmem:[#allocation3 + $0x228] sm:$0x1] 0.0
  %6035 = vst [vmem:[#allocation3 + $0x230] sm:$0xff] 0.0
  %6036 = vst [vmem:[#allocation3 + $0x238] sm:$0x1] 0.0
  %6037 = vst [vmem:[#allocation2] sm:$0xff] %v5412
  %6038 = vst [vmem:[#allocation2 + $0x10] sm:$0xff] %v5413
  %6039 = vst [vmem:[#allocation2 + $0x20] sm:$0xff] %v5414
  %6040 = vst [vmem:[#allocation2 + $0x30] sm:$0xff] %v5415
  %6041 = vst [vmem:[#allocation2 + $0x40] sm:$0xff] %v5416
  %6042 = vst [vmem:[#allocation2 + $0x50] sm:$0xff] %v5417
  %6043 = vst [vmem:[#allocation2 + $0x60] sm:$0xff] %v5418
  %6044 = vst [vmem:[#allocation2 + $0x70] sm:$0xff] %v5419
  %6045 = vst [vmem:[#allocation2 + $0x80] sm:$0xff] %v5420
  %6046 = vst [vmem:[#allocation2 + $0x90] sm:$0xff] %v5421
  %6047 = vst [vmem:[#allocation2 + $0xa0] sm:$0xff] %v5422
  %6048 = vst [vmem:[#allocation2 + $0xb0] sm:$0xff] %v5423
  %6049 = vst [vmem:[#allocation2 + $0xc0] sm:$0xff] %v5424
  %6050 = vst [vmem:[#allocation2 + $0xd0] sm:$0xff] %v5425
  %6051 = vst [vmem:[#allocation2 + $0xe0] sm:$0xff] %v5426
  %6052 = vst [vmem:[#allocation2 + $0xf0] sm:$0xff] %v5427
  %6053 = vst [vmem:[#allocation2 + $0x120] sm:$0xff] %v5428
  %6054 = vst [vmem:[#allocation2 + $0x130] sm:$0xff] %v5429
  %6055 = vst [vmem:[#allocation2 + $0x140] sm:$0xff] %v5430
  %6056 = vst [vmem:[#allocation2 + $0x150] sm:$0xff] %v5431
  %6057 = vst [vmem:[#allocation2 + $0x160] sm:$0xff] %v5432
  %6058 = vst [vmem:[#allocation2 + $0x170] sm:$0xff] %v5433
  %6059 = vst [vmem:[#allocation2 + $0x180] sm:$0xff] %v5434
  %6060 = vst [vmem:[#allocation2 + $0x190] sm:$0xff] %v5435
  %6061 = vst [vmem:[#allocation2 + $0x1a0] sm:$0xff] %v5436
  %6062 = vst [vmem:[#allocation2 + $0x1b0] sm:$0xff] %v5437
  %6063 = vst [vmem:[#allocation2 + $0x1c0] sm:$0xff] %v5438
  %6064 = vst [vmem:[#allocation2 + $0x1d0] sm:$0xff] %v5439
  %6065 = vst [vmem:[#allocation2 + $0x1e0] sm:$0xff] %v5440
  %6066 = vst [vmem:[#allocation2 + $0x1f0] sm:$0xff] %v5441
  %6067 = vst [vmem:[#allocation2 + $0x200] sm:$0xff] %v5442
  %6068 = vst [vmem:[#allocation2 + $0x210] sm:$0xff] %v5443
  %6069 = vst [vmem:[#allocation3] sm:$0xff] %v5861
  %6070 = vst [vmem:[#allocation3 + $0x10] sm:$0xff] %v5862
  %6071 = vst [vmem:[#allocation3 + $0x20] sm:$0xff] %v5863
  %6072 = vst [vmem:[#allocation3 + $0x30] sm:$0xff] %v5864
  %6073 = vst [vmem:[#allocation3 + $0x40] sm:$0xff] %v5865
  %6074 = vst [vmem:[#allocation3 + $0x50] sm:$0xff] %v5866
  %6075 = vst [vmem:[#allocation3 + $0x60] sm:$0xff] %v5867
  %6076 = vst [vmem:[#allocation3 + $0x70] sm:$0xff] %v5868
  %6077 = vst [vmem:[#allocation3 + $0x80] sm:$0xff] %v5869
  %6078 = vst [vmem:[#allocation3 + $0x90] sm:$0xff] %v5870
  %6079 = vst [vmem:[#allocation3 + $0xa0] sm:$0xff] %v5871
  %6080 = vst [vmem:[#allocation3 + $0xb0] sm:$0xff] %v5872
  %6081 = vst [vmem:[#allocation3 + $0xc0] sm:$0xff] %v5873
  %6082 = vst [vmem:[#allocation3 + $0xd0] sm:$0xff] %v5874
  %6083 = vst [vmem:[#allocation3 + $0xe0] sm:$0xff] %v5875
  %6084 = vst [vmem:[#allocation3 + $0xf0] sm:$0xff] %v5876
  %6085 = vst [vmem:[#allocation3 + $0x120] sm:$0xff] %v5877
  %6086 = vst [vmem:[#allocation3 + $0x130] sm:$0xff] %v5878
  %6087 = vst [vmem:[#allocation3 + $0x140] sm:$0xff] %v5879
  %6088 = vst [vmem:[#allocation3 + $0x150] sm:$0xff] %v5880
  %6089 = vst [vmem:[#allocation3 + $0x160] sm:$0xff] %v5881
  %6090 = vst [vmem:[#allocation3 + $0x170] sm:$0xff] %v5882
  %6091 = vst [vmem:[#allocation3 + $0x180] sm:$0xff] %v5883
  %6092 = vst [vmem:[#allocation3 + $0x190] sm:$0xff] %v5884
  %6093 = vst [vmem:[#allocation3 + $0x1a0] sm:$0xff] %v5885
  %6094 = vst [vmem:[#allocation3 + $0x1b0] sm:$0xff] %v5886
  %6095 = vst [vmem:[#allocation3 + $0x1c0] sm:$0xff] %v5887
  %6096 = vst [vmem:[#allocation3 + $0x1d0] sm:$0xff] %v5888
  %6097 = vst [vmem:[#allocation3 + $0x1e0] sm:$0xff] %v5889
  %6098 = vst [vmem:[#allocation3 + $0x1f0] sm:$0xff] %v5890
  %6099 = vst [vmem:[#allocation3 + $0x200] sm:$0xff] %v5891
  %6100 = vst [vmem:[#allocation3 + $0x210] sm:$0xff] %v5892
  %v6101 = vld [vmem:[#allocation2] sm:$0xff]
  %v6102 = vld [vmem:[#allocation2 + $0x20] sm:$0xff]
  %v6103 = vld [vmem:[#allocation2 + $0x40] sm:$0xff]
  %v6104 = vld [vmem:[#allocation2 + $0x60] sm:$0xff]
  %v6105 = vld [vmem:[#allocation2 + $0x80] sm:$0xff]
  %v6106 = vld [vmem:[#allocation2 + $0xa0] sm:$0xff]
  %v6107 = vld [vmem:[#allocation2 + $0xc0] sm:$0xff]
  %v6108 = vld [vmem:[#allocation2 + $0xe0] sm:$0xff]
  %v6109 = vld [vmem:[#allocation2 + $0x120] sm:$0xff]
  %v6110 = vld [vmem:[#allocation2 + $0x140] sm:$0xff]
  %v6111 = vld [vmem:[#allocation2 + $0x160] sm:$0xff]
  %v6112 = vld [vmem:[#allocation2 + $0x180] sm:$0xff]
  %v6113 = vld [vmem:[#allocation2 + $0x1a0] sm:$0xff]
  %v6114 = vld [vmem:[#allocation2 + $0x1c0] sm:$0xff]
  %v6115 = vld [vmem:[#allocation2 + $0x1e0] sm:$0xff]
  %v6116 = vld [vmem:[#allocation2 + $0x200] sm:$0xff]
  %v6117 = vpack.c.bf16 %v6102, %v6101
  %v6118 = vpack.c.bf16 %v6104, %v6103
  %v6119 = vpack.c.bf16 %v6106, %v6105
  %v6120 = vpack.c.bf16 %v6108, %v6107
  %v6121 = vpack.c.bf16 %v6110, %v6109
  %v6122 = vpack.c.bf16 %v6112, %v6111
  %v6123 = vpack.c.bf16 %v6114, %v6113
  %v6124 = vpack.c.bf16 %v6116, %v6115
  %v6125 = vld [vmem:[%s3] sm:$0xf]
  %v6126 = vld [vmem:[%s3 + $0x4] sm:$0xf]
  %v6127 = vld [vmem:[%s3 + $0x8] sm:$0xf]
  %v6128 = vld [vmem:[%s3 + $0xc] sm:$0xf]
  %v6129 = vld [vmem:[%s3 + $0x10] sm:$0xf]
  %v6130 = vld [vmem:[%s3 + $0x14] sm:$0xf]
  %v6131 = vld [vmem:[%s3 + $0x18] sm:$0xf]
  %v6132 = vld [vmem:[%s3 + $0x1c] sm:$0xf]
  %v6133 = vld [vmem:[%s3 + $0x20] sm:$0xf]
  %v6134 = vld [vmem:[%s3 + $0x24] sm:$0xf]
  %v6135 = vld [vmem:[%s3 + $0x28] sm:$0xf]
  %v6136 = vld [vmem:[%s3 + $0x2c] sm:$0xf]
  %v6137 = vld [vmem:[%s3 + $0x30] sm:$0xf]
  %v6138 = vld [vmem:[%s3 + $0x34] sm:$0xf]
  %v6139 = vld [vmem:[%s3 + $0x38] sm:$0xf]
  %v6140 = vld [vmem:[%s3 + $0x3c] sm:$0xf]
  %v6141 = vld [vmem:[#allocation3] sm:$0xff]
  %v6142 = vld [vmem:[#allocation3 + $0x20] sm:$0xff]
  %v6143 = vld [vmem:[#allocation3 + $0x40] sm:$0xff]
  %v6144 = vld [vmem:[#allocation3 + $0x60] sm:$0xff]
  %v6145 = vld [vmem:[#allocation3 + $0x80] sm:$0xff]
  %v6146 = vld [vmem:[#allocation3 + $0xa0] sm:$0xff]
  %v6147 = vld [vmem:[#allocation3 + $0xc0] sm:$0xff]
  %v6148 = vld [vmem:[#allocation3 + $0xe0] sm:$0xff]
  %v6149 = vld [vmem:[#allocation3 + $0x120] sm:$0xff]
  %v6150 = vld [vmem:[#allocation3 + $0x140] sm:$0xff]
  %v6151 = vld [vmem:[#allocation3 + $0x160] sm:$0xff]
  %v6152 = vld [vmem:[#allocation3 + $0x180] sm:$0xff]
  %v6153 = vld [vmem:[#allocation3 + $0x1a0] sm:$0xff]
  %v6154 = vld [vmem:[#allocation3 + $0x1c0] sm:$0xff]
  %v6155 = vld [vmem:[#allocation3 + $0x1e0] sm:$0xff]
  %v6156 = vld [vmem:[#allocation3 + $0x200] sm:$0xff]
  %v6157 = vpack.c.bf16 %v6142, %v6141
  %v6158 = vpack.c.bf16 %v6144, %v6143
  %v6159 = vpack.c.bf16 %v6146, %v6145
  %v6160 = vpack.c.bf16 %v6148, %v6147
  %v6161 = vpack.c.bf16 %v6150, %v6149
  %v6162 = vpack.c.bf16 %v6152, %v6151
  %v6163 = vpack.c.bf16 %v6154, %v6153
  %v6164 = vpack.c.bf16 %v6156, %v6155
  %s6165 = scalar_lea.vmem %s3, 64
  %v6166 = vld [vmem:[%s6165] sm:$0xf]
  %v6167 = vld [vmem:[%s6165 + $0x4] sm:$0xf]
  %v6168 = vld [vmem:[%s6165 + $0x8] sm:$0xf]
  %v6169 = vld [vmem:[%s6165 + $0xc] sm:$0xf]
  %v6170 = vld [vmem:[%s6165 + $0x10] sm:$0xf]
  %v6171 = vld [vmem:[%s6165 + $0x14] sm:$0xf]
  %v6172 = vld [vmem:[%s6165 + $0x18] sm:$0xf]
  %v6173 = vld [vmem:[%s6165 + $0x1c] sm:$0xf]
  %v6174 = vld [vmem:[%s6165 + $0x20] sm:$0xf]
  %v6175 = vld [vmem:[%s6165 + $0x24] sm:$0xf]
  %v6176 = vld [vmem:[%s6165 + $0x28] sm:$0xf]
  %v6177 = vld [vmem:[%s6165 + $0x2c] sm:$0xf]
  %v6178 = vld [vmem:[%s6165 + $0x30] sm:$0xf]
  %v6179 = vld [vmem:[%s6165 + $0x34] sm:$0xf]
  %v6180 = vld [vmem:[%s6165 + $0x38] sm:$0xf]
  %v6181 = vld [vmem:[%s6165 + $0x3c] sm:$0xf]
  %v6198 = vunpack.c.l.b16 %v6166
  %v6199 = vunpack.c.l.b16 %v6167
  %v6200 = vunpack.c.l.b16 %v6168
  %v6201 = vunpack.c.l.b16 %v6169
  %v6202 = vunpack.c.l.b16 %v6170
  %v6203 = vunpack.c.l.b16 %v6171
  %v6204 = vunpack.c.l.b16 %v6172
  %v6205 = vunpack.c.l.b16 %v6173
  %v6206 = vunpack.c.l.b16 %v6174
  %v6207 = vunpack.c.l.b16 %v6175
  %v6208 = vunpack.c.l.b16 %v6176
  %v6209 = vunpack.c.l.b16 %v6177
  %v6210 = vunpack.c.l.b16 %v6178
  %v6211 = vunpack.c.l.b16 %v6179
  %v6212 = vunpack.c.l.b16 %v6180
  %v6213 = vunpack.c.l.b16 %v6181
  %v6214 = vpack.c.b16 %v6199, %v6198
  %v6215 = vpack.c.b16 %v6201, %v6200
  %v6216 = vpack.c.b16 %v6203, %v6202
  %v6217 = vpack.c.b16 %v6205, %v6204
  %v6218 = vpack.c.b16 %v6207, %v6206
  %v6219 = vpack.c.b16 %v6209, %v6208
  %v6220 = vpack.c.b16 %v6211, %v6210
  %v6221 = vpack.c.b16 %v6213, %v6212
  %6230 = vmatprep.subr.bf16.mxu0 0
  %6231 = vmatpush1.bf16.msra.mxu0 %v6214
  %6232 = vmatprep.subr.bf16.mxu0 0
  %6233 = vmatpush1.bf16.msra.mxu0 %v6215
  %6234 = vmatprep.subr.bf16.mxu0 0
  %6235 = vmatpush1.bf16.msra.mxu0 %v6216
  %6236 = vmatprep.subr.bf16.mxu0 0
  %6237 = vmatpush1.bf16.msra.mxu0 %v6217
  %6238 = vmatprep.subr.bf16.mxu0 0
  %6239 = vmatpush1.bf16.msra.mxu0 %v6218
  %6240 = vmatprep.subr.bf16.mxu0 0
  %6241 = vmatpush1.bf16.msra.mxu0 %v6219
  %6242 = vmatprep.subr.bf16.mxu0 0
  %6243 = vmatpush1.bf16.msra.mxu0 %v6220
  %6244 = vmatprep.subr.bf16.mxu0 0
  %6245 = vmatpush1.bf16.msra.mxu0 %v6221
  %6246 = vmatprep.subr.bf16.mxu0 0
  %6247 = vmatpush1.bf16.msra.mxu0 0
  %6248 = vmatprep.subr.bf16.mxu0 0
  %6249 = vmatpush1.bf16.msra.mxu0 0
  %6250 = vmatprep.subr.bf16.mxu0 0
  %6251 = vmatpush1.bf16.msra.mxu0 0
  %6252 = vmatprep.subr.bf16.mxu0 0
  %6253 = vmatpush1.bf16.msra.mxu0 0
  %6254 = vmatprep.subr.bf16.mxu0 0
  %6255 = vmatpush1.bf16.msra.mxu0 0
  %6256 = vmatprep.subr.bf16.mxu0 0
  %6257 = vmatpush1.bf16.msra.mxu0 0
  %6258 = vmatprep.subr.bf16.mxu0 0
  %6259 = vmatpush1.bf16.msra.mxu0 0
  %6260 = vmatprep.subr.bf16.mxu0 0
  %6261 = vmatpush1.bf16.msra.mxu0 0
  %6262 = vmatprep.mubr.bf16.mxu0 0
  %6263 = vmatmul.mubr.bf16.gmra.mrb[0].mxu0 %v6157
  %v6264 = vpop.f32.mrb[0].mxu0
  %v6265 = vadd.f32 0.0, %v6264
  %v6266 = vpop.f32.mrb[0].mxu0
  %v6267 = vpop.f32.mrb[0].mxu0
  %v6268 = vadd.f32 0.0, %v6267
  %v6269 = vpop.f32.mrb[0].mxu0
  %6270 = vmatprep.mubr.bf16.mxu0 0
  %6271 = vmatmul.mubr.bf16.gmra.mrb[0].mxu0 %v6158
  %v6272 = vpop.f32.mrb[0].mxu0
  %v6273 = vadd.f32 0.0, %v6272
  %v6274 = vpop.f32.mrb[0].mxu0
  %v6275 = vpop.f32.mrb[0].mxu0
  %v6276 = vadd.f32 0.0, %v6275
  %v6277 = vpop.f32.mrb[0].mxu0
  %6278 = vmatprep.mubr.bf16.mxu0 0
  %6279 = vmatmul.mubr.bf16.gmra.mrb[0].mxu0 %v6159
  %v6280 = vpop.f32.mrb[0].mxu0
  %v6281 = vadd.f32 0.0, %v6280
  %v6282 = vpop.f32.mrb[0].mxu0
  %v6283 = vpop.f32.mrb[0].mxu0
  %v6284 = vadd.f32 0.0, %v6283
  %v6285 = vpop.f32.mrb[0].mxu0
  %6286 = vmatprep.mubr.bf16.mxu0 0
  %6287 = vmatmul.mubr.bf16.gmra.mrb[0].mxu0 %v6160
  %v6288 = vpop.f32.mrb[0].mxu0
  %v6289 = vadd.f32 0.0, %v6288
  %v6290 = vpop.f32.mrb[0].mxu0
  %v6291 = vpop.f32.mrb[0].mxu0
  %v6292 = vadd.f32 0.0, %v6291
  %v6293 = vpop.f32.mrb[0].mxu0
  %6294 = vmatprep.mubr.bf16.mxu0 0
  %6295 = vmatmul.mubr.bf16.gmra.mrb[0].mxu0 %v6161
  %v6296 = vpop.f32.mrb[0].mxu0
  %v6297 = vadd.f32 0.0, %v6296
  %v6298 = vpop.f32.mrb[0].mxu0
  %v6299 = vpop.f32.mrb[0].mxu0
  %v6300 = vadd.f32 0.0, %v6299
  %v6301 = vpop.f32.mrb[0].mxu0
  %6302 = vmatprep.mubr.bf16.mxu0 0
  %6303 = vmatmul.mubr.bf16.gmra.mrb[0].mxu0 %v6162
  %v6304 = vpop.f32.mrb[0].mxu0
  %v6305 = vadd.f32 0.0, %v6304
  %v6306 = vpop.f32.mrb[0].mxu0
  %v6307 = vpop.f32.mrb[0].mxu0
  %v6308 = vadd.f32 0.0, %v6307
  %v6309 = vpop.f32.mrb[0].mxu0
  %6310 = vmatprep.mubr.bf16.mxu0 0
  %6311 = vmatmul.mubr.bf16.gmra.mrb[0].mxu0 %v6163
  %v6312 = vpop.f32.mrb[0].mxu0
  %v6313 = vadd.f32 0.0, %v6312
  %v6314 = vpop.f32.mrb[0].mxu0
  %v6315 = vpop.f32.mrb[0].mxu0
  %v6316 = vadd.f32 0.0, %v6315
  %v6317 = vpop.f32.mrb[0].mxu0
  %6318 = vmatprep.mubr.bf16.mxu0 0
  %6319 = vmatmul.mubr.bf16.gmra.mrb[0].mxu0 %v6164
  %v6320 = vpop.f32.mrb[0].mxu0
  %v6321 = vadd.f32 0.0, %v6320
  %v6322 = vpop.f32.mrb[0].mxu0
  %v6323 = vpop.f32.mrb[0].mxu0
  %v6324 = vadd.f32 0.0, %v6323
  %v6325 = vpop.f32.mrb[0].mxu0
  %6326 = vdwg.mxu0
  %v6343 = vunpack.c.l.b16 %v6125
  %v6344 = vunpack.c.l.b16 %v6126
  %v6345 = vunpack.c.l.b16 %v6127
  %v6346 = vunpack.c.l.b16 %v6128
  %v6347 = vunpack.c.l.b16 %v6129
  %v6348 = vunpack.c.l.b16 %v6130
  %v6349 = vunpack.c.l.b16 %v6131
  %v6350 = vunpack.c.l.b16 %v6132
  %v6351 = vunpack.c.l.b16 %v6133
  %v6352 = vunpack.c.l.b16 %v6134
  %v6353 = vunpack.c.l.b16 %v6135
  %v6354 = vunpack.c.l.b16 %v6136
  %v6355 = vunpack.c.l.b16 %v6137
  %v6356 = vunpack.c.l.b16 %v6138
  %v6357 = vunpack.c.l.b16 %v6139
  %v6358 = vunpack.c.l.b16 %v6140
  %v6359 = vpack.c.b16 %v6344, %v6343
  %v6360 = vpack.c.b16 %v6346, %v6345
  %v6361 = vpack.c.b16 %v6348, %v6347
  %v6362 = vpack.c.b16 %v6350, %v6349
  %v6363 = vpack.c.b16 %v6352, %v6351
  %v6364 = vpack.c.b16 %v6354, %v6353
  %v6365 = vpack.c.b16 %v6356, %v6355
  %v6366 = vpack.c.b16 %v6358, %v6357
  %6375 = vmatprep.subr.bf16.mxu0 0
  %6376 = vmatpush1.bf16.msra.mxu0 %v6359
  %6377 = vmatprep.subr.bf16.mxu0 0
  %6378 = vmatpush1.bf16.msra.mxu0 %v6360
  %6379 = vmatprep.subr.bf16.mxu0 0
  %6380 = vmatpush1.bf16.msra.mxu0 %v6361
  %6381 = vmatprep.subr.bf16.mxu0 0
  %6382 = vmatpush1.bf16.msra.mxu0 %v6362
  %6383 = vmatprep.subr.bf16.mxu0 0
  %6384 = vmatpush1.bf16.msra.mxu0 %v6363
  %6385 = vmatprep.subr.bf16.mxu0 0
  %6386 = vmatpush1.bf16.msra.mxu0 %v6364
  %6387 = vmatprep.subr.bf16.mxu0 0
  %6388 = vmatpush1.bf16.msra.mxu0 %v6365
  %6389 = vmatprep.subr.bf16.mxu0 0
  %6390 = vmatpush1.bf16.msra.mxu0 %v6366
  %6391 = vmatprep.subr.bf16.mxu0 0
  %6392 = vmatpush1.bf16.msra.mxu0 0
  %6393 = vmatprep.subr.bf16.mxu0 0
  %6394 = vmatpush1.bf16.msra.mxu0 0
  %6395 = vmatprep.subr.bf16.mxu0 0
  %6396 = vmatpush1.bf16.msra.mxu0 0
  %6397 = vmatprep.subr.bf16.mxu0 0
  %6398 = vmatpush1.bf16.msra.mxu0 0
  %6399 = vmatprep.subr.bf16.mxu0 0
  %6400 = vmatpush1.bf16.msra.mxu0 0
  %6401 = vmatprep.subr.bf16.mxu0 0
  %6402 = vmatpush1.bf16.msra.mxu0 0
  %6403 = vmatprep.subr.bf16.mxu0 0
  %6404 = vmatpush1.bf16.msra.mxu0 0
  %6405 = vmatprep.subr.bf16.mxu0 0
  %6406 = vmatpush1.bf16.msra.mxu0 0
  %6407 = vmatprep.mubr.bf16.mxu0 0
  %6408 = vmatmul.mubr.bf16.gmra.mrb[0].mxu0 %v6117
  %v6409 = vpop.f32.mrb[0].mxu0
  %v6410 = vadd.f32 %v6265, %v6409
  %v6411 = vpop.f32.mrb[0].mxu0
  %v6412 = vpop.f32.mrb[0].mxu0
  %v6413 = vadd.f32 %v6268, %v6412
  %v6414 = vpop.f32.mrb[0].mxu0
  %6415 = vmatprep.mubr.bf16.mxu0 0
  %6416 = vmatmul.mubr.bf16.gmra.mrb[0].mxu0 %v6118
  %v6417 = vpop.f32.mrb[0].mxu0
  %v6418 = vadd.f32 %v6273, %v6417
  %v6419 = vpop.f32.mrb[0].mxu0
  %v6420 = vpop.f32.mrb[0].mxu0
  %v6421 = vadd.f32 %v6276, %v6420
  %v6422 = vpop.f32.mrb[0].mxu0
  %6423 = vmatprep.mubr.bf16.mxu0 0
  %6424 = vmatmul.mubr.bf16.gmra.mrb[0].mxu0 %v6119
  %v6425 = vpop.f32.mrb[0].mxu0
  %v6426 = vadd.f32 %v6281, %v6425
  %v6427 = vpop.f32.mrb[0].mxu0
  %v6428 = vpop.f32.mrb[0].mxu0
  %v6429 = vadd.f32 %v6284, %v6428
  %v6430 = vpop.f32.mrb[0].mxu0
  %6431 = vmatprep.mubr.bf16.mxu0 0
  %6432 = vmatmul.mubr.bf16.gmra.mrb[0].mxu0 %v6120
  %v6433 = vpop.f32.mrb[0].mxu0
  %v6434 = vadd.f32 %v6289, %v6433
  %v6435 = vpop.f32.mrb[0].mxu0
  %v6436 = vpop.f32.mrb[0].mxu0
  %v6437 = vadd.f32 %v6292, %v6436
  %v6438 = vpop.f32.mrb[0].mxu0
  %6439 = vmatprep.mubr.bf16.mxu0 0
  %6440 = vmatmul.mubr.bf16.gmra.mrb[0].mxu0 %v6121
  %v6441 = vpop.f32.mrb[0].mxu0
  %v6442 = vadd.f32 %v6297, %v6441
  %v6443 = vpop.f32.mrb[0].mxu0
  %v6444 = vpop.f32.mrb[0].mxu0
  %v6445 = vadd.f32 %v6300, %v6444
  %v6446 = vpop.f32.mrb[0].mxu0
  %6447 = vmatprep.mubr.bf16.mxu0 0
  %6448 = vmatmul.mubr.bf16.gmra.mrb[0].mxu0 %v6122
  %v6449 = vpop.f32.mrb[0].mxu0
  %v6450 = vadd.f32 %v6305, %v6449
  %v6451 = vpop.f32.mrb[0].mxu0
  %v6452 = vpop.f32.mrb[0].mxu0
  %v6453 = vadd.f32 %v6308, %v6452
  %v6454 = vpop.f32.mrb[0].mxu0
  %6455 = vmatprep.mubr.bf16.mxu0 0
  %6456 = vmatmul.mubr.bf16.gmra.mrb[0].mxu0 %v6123
  %v6457 = vpop.f32.mrb[0].mxu0
  %v6458 = vadd.f32 %v6313, %v6457
  %v6459 = vpop.f32.mrb[0].mxu0
  %v6460 = vpop.f32.mrb[0].mxu0
  %v6461 = vadd.f32 %v6316, %v6460
  %v6462 = vpop.f32.mrb[0].mxu0
  %6463 = vmatprep.mubr.bf16.mxu0 0
  %6464 = vmatmul.mubr.bf16.gmra.mrb[0].mxu0 %v6124
  %v6465 = vpop.f32.mrb[0].mxu0
  %v6466 = vadd.f32 %v6321, %v6465
  %v6467 = vpop.f32.mrb[0].mxu0
  %v6468 = vpop.f32.mrb[0].mxu0
  %v6469 = vadd.f32 %v6324, %v6468
  %v6470 = vpop.f32.mrb[0].mxu0
  %6471 = vdwg.mxu0
  %v6472 = vld [vmem:[#allocation2 + $0x1] sm:$0xff]
  %v6473 = vld [vmem:[#allocation2 + $0x21] sm:$0xff]
  %v6474 = vld [vmem:[#allocation2 + $0x41] sm:$0xff]
  %v6475 = vld [vmem:[#allocation2 + $0x61] sm:$0xff]
  %v6476 = vld [vmem:[#allocation2 + $0x81] sm:$0xff]
  %v6477 = vld [vmem:[#allocation2 + $0xa1] sm:$0xff]
  %v6478 = vld [vmem:[#allocation2 + $0xc1] sm:$0xff]
  %v6479 = vld [vmem:[#allocation2 + $0xe1] sm:$0xff]
  %v6480 = vld [vmem:[#allocation2 + $0x121] sm:$0xff]
  %v6481 = vld [vmem:[#allocation2 + $0x141] sm:$0xff]
  %v6482 = vld [vmem:[#allocation2 + $0x161] sm:$0xff]
  %v6483 = vld [vmem:[#allocation2 + $0x181] sm:$0xff]
  %v6484 = vld [vmem:[#allocation2 + $0x1a1] sm:$0xff]
  %v6485 = vld [vmem:[#allocation2 + $0x1c1] sm:$0xff]
  %v6486 = vld [vmem:[#allocation2 + $0x1e1] sm:$0xff]
  %v6487 = vld [vmem:[#allocation2 + $0x201] sm:$0xff]
  %v6488 = vpack.c.bf16 %v6473, %v6472
  %v6489 = vpack.c.bf16 %v6475, %v6474
  %v6490 = vpack.c.bf16 %v6477, %v6476
  %v6491 = vpack.c.bf16 %v6479, %v6478
  %v6492 = vpack.c.bf16 %v6481, %v6480
  %v6493 = vpack.c.bf16 %v6483, %v6482
  %v6494 = vpack.c.bf16 %v6485, %v6484
  %v6495 = vpack.c.bf16 %v6487, %v6486
  %s6496 = scalar_lea.vmem %s3, 128
  %v6497 = vld [vmem:[%s6496] sm:$0xf]
  %v6498 = vld [vmem:[%s6496 + $0x4] sm:$0xf]
  %v6499 = vld [vmem:[%s6496 + $0x8] sm:$0xf]
  %v6500 = vld [vmem:[%s6496 + $0xc] sm:$0xf]
  %v6501 = vld [vmem:[%s6496 + $0x10] sm:$0xf]
  %v6502 = vld [vmem:[%s6496 + $0x14] sm:$0xf]
  %v6503 = vld [vmem:[%s6496 + $0x18] sm:$0xf]
  %v6504 = vld [vmem:[%s6496 + $0x1c] sm:$0xf]
  %v6505 = vld [vmem:[%s6496 + $0x20] sm:$0xf]
  %v6506 = vld [vmem:[%s6496 + $0x24] sm:$0xf]
  %v6507 = vld [vmem:[%s6496 + $0x28] sm:$0xf]
  %v6508 = vld [vmem:[%s6496 + $0x2c] sm:$0xf]
  %v6509 = vld [vmem:[%s6496 + $0x30] sm:$0xf]
  %v6510 = vld [vmem:[%s6496 + $0x34] sm:$0xf]
  %v6511 = vld [vmem:[%s6496 + $0x38] sm:$0xf]
  %v6512 = vld [vmem:[%s6496 + $0x3c] sm:$0xf]
  %v6529 = vunpack.c.l.b16 %v6497
  %v6530 = vunpack.c.l.b16 %v6498
  %v6531 = vunpack.c.l.b16 %v6499
  %v6532 = vunpack.c.l.b16 %v6500
  %v6533 = vunpack.c.l.b16 %v6501
  %v6534 = vunpack.c.l.b16 %v6502
  %v6535 = vunpack.c.l.b16 %v6503
  %v6536 = vunpack.c.l.b16 %v6504
  %v6537 = vunpack.c.l.b16 %v6505
  %v6538 = vunpack.c.l.b16 %v6506
  %v6539 = vunpack.c.l.b16 %v6507
  %v6540 = vunpack.c.l.b16 %v6508
  %v6541 = vunpack.c.l.b16 %v6509
  %v6542 = vunpack.c.l.b16 %v6510
  %v6543 = vunpack.c.l.b16 %v6511
  %v6544 = vunpack.c.l.b16 %v6512
  %v6545 = vpack.c.b16 %v6530, %v6529
  %v6546 = vpack.c.b16 %v6532, %v6531
  %v6547 = vpack.c.b16 %v6534, %v6533
  %v6548 = vpack.c.b16 %v6536, %v6535
  %v6549 = vpack.c.b16 %v6538, %v6537
  %v6550 = vpack.c.b16 %v6540, %v6539
  %v6551 = vpack.c.b16 %v6542, %v6541
  %v6552 = vpack.c.b16 %v6544, %v6543
  %6561 = vmatprep.subr.bf16.mxu0 0
  %6562 = vmatpush1.bf16.msra.mxu0 %v6545
  %6563 = vmatprep.subr.bf16.mxu0 0
  %6564 = vmatpush1.bf16.msra.mxu0 %v6546
  %6565 = vmatprep.subr.bf16.mxu0 0
  %6566 = vmatpush1.bf16.msra.mxu0 %v6547
  %6567 = vmatprep.subr.bf16.mxu0 0
  %6568 = vmatpush1.bf16.msra.mxu0 %v6548
  %6569 = vmatprep.subr.bf16.mxu0 0
  %6570 = vmatpush1.bf16.msra.mxu0 %v6549
  %6571 = vmatprep.subr.bf16.mxu0 0
  %6572 = vmatpush1.bf16.msra.mxu0 %v6550
  %6573 = vmatprep.subr.bf16.mxu0 0
  %6574 = vmatpush1.bf16.msra.mxu0 %v6551
  %6575 = vmatprep.subr.bf16.mxu0 0
  %6576 = vmatpush1.bf16.msra.mxu0 %v6552
  %6577 = vmatprep.subr.bf16.mxu0 0
  %6578 = vmatpush1.bf16.msra.mxu0 0
  %6579 = vmatprep.subr.bf16.mxu0 0
  %6580 = vmatpush1.bf16.msra.mxu0 0
  %6581 = vmatprep.subr.bf16.mxu0 0
  %6582 = vmatpush1.bf16.msra.mxu0 0
  %6583 = vmatprep.subr.bf16.mxu0 0
  %6584 = vmatpush1.bf16.msra.mxu0 0
  %6585 = vmatprep.subr.bf16.mxu0 0
  %6586 = vmatpush1.bf16.msra.mxu0 0
  %6587 = vmatprep.subr.bf16.mxu0 0
  %6588 = vmatpush1.bf16.msra.mxu0 0
  %6589 = vmatprep.subr.bf16.mxu0 0
  %6590 = vmatpush1.bf16.msra.mxu0 0
  %6591 = vmatprep.subr.bf16.mxu0 0
  %6592 = vmatpush1.bf16.msra.mxu0 0
  %6593 = vmatprep.mubr.bf16.mxu0 0
  %6594 = vmatmul.mubr.bf16.gmra.mrb[0].mxu0 %v6488
  %v6595 = vpop.f32.mrb[0].mxu0
  %v6596 = vadd.f32 0.0, %v6595
  %v6597 = vpop.f32.mrb[0].mxu0
  %v6598 = vpop.f32.mrb[0].mxu0
  %v6599 = vadd.f32 0.0, %v6598
  %v6600 = vpop.f32.mrb[0].mxu0
  %6601 = vmatprep.mubr.bf16.mxu0 0
  %6602 = vmatmul.mubr.bf16.gmra.mrb[0].mxu0 %v6489
  %v6603 = vpop.f32.mrb[0].mxu0
  %v6604 = vadd.f32 0.0, %v6603
  %v6605 = vpop.f32.mrb[0].mxu0
  %v6606 = vpop.f32.mrb[0].mxu0
  %v6607 = vadd.f32 0.0, %v6606
  %v6608 = vpop.f32.mrb[0].mxu0
  %6609 = vmatprep.mubr.bf16.mxu0 0
  %6610 = vmatmul.mubr.bf16.gmra.mrb[0].mxu0 %v6490
  %v6611 = vpop.f32.mrb[0].mxu0
  %v6612 = vadd.f32 0.0, %v6611
  %v6613 = vpop.f32.mrb[0].mxu0
  %v6614 = vpop.f32.mrb[0].mxu0
  %v6615 = vadd.f32 0.0, %v6614
  %v6616 = vpop.f32.mrb[0].mxu0
  %6617 = vmatprep.mubr.bf16.mxu0 0
  %6618 = vmatmul.mubr.bf16.gmra.mrb[0].mxu0 %v6491
  %v6619 = vpop.f32.mrb[0].mxu0
  %v6620 = vadd.f32 0.0, %v6619
  %v6621 = vpop.f32.mrb[0].mxu0
  %v6622 = vpop.f32.mrb[0].mxu0
  %v6623 = vadd.f32 0.0, %v6622
  %v6624 = vpop.f32.mrb[0].mxu0
  %6625 = vmatprep.mubr.bf16.mxu0 0
  %6626 = vmatmul.mubr.bf16.gmra.mrb[0].mxu0 %v6492
  %v6627 = vpop.f32.mrb[0].mxu0
  %v6628 = vadd.f32 0.0, %v6627
  %v6629 = vpop.f32.mrb[0].mxu0
  %v6630 = vpop.f32.mrb[0].mxu0
  %v6631 = vadd.f32 0.0, %v6630
  %v6632 = vpop.f32.mrb[0].mxu0
  %6633 = vmatprep.mubr.bf16.mxu0 0
  %6634 = vmatmul.mubr.bf16.gmra.mrb[0].mxu0 %v6493
  %v6635 = vpop.f32.mrb[0].mxu0
  %v6636 = vadd.f32 0.0, %v6635
  %v6637 = vpop.f32.mrb[0].mxu0
  %v6638 = vpop.f32.mrb[0].mxu0
  %v6639 = vadd.f32 0.0, %v6638
  %v6640 = vpop.f32.mrb[0].mxu0
  %6641 = vmatprep.mubr.bf16.mxu0 0
  %6642 = vmatmul.mubr.bf16.gmra.mrb[0].mxu0 %v6494
  %v6643 = vpop.f32.mrb[0].mxu0
  %v6644 = vadd.f32 0.0, %v6643
  %v6645 = vpop.f32.mrb[0].mxu0
  %v6646 = vpop.f32.mrb[0].mxu0
  %v6647 = vadd.f32 0.0, %v6646
  %v6648 = vpop.f32.mrb[0].mxu0
  %6649 = vmatprep.mubr.bf16.mxu0 0
  %6650 = vmatmul.mubr.bf16.gmra.mrb[0].mxu0 %v6495
  %v6651 = vpop.f32.mrb[0].mxu0
  %v6652 = vadd.f32 0.0, %v6651
  %v6653 = vpop.f32.mrb[0].mxu0
  %v6654 = vpop.f32.mrb[0].mxu0
  %v6655 = vadd.f32 0.0, %v6654
  %v6656 = vpop.f32.mrb[0].mxu0
  %6657 = vdwg.mxu0
  %v6658 = vadd.f32 %v6410, %v6596
  %v6659 = vadd.f32 %v6413, %v6599
  %v6660 = vadd.f32 %v6418, %v6604
  %v6661 = vadd.f32 %v6421, %v6607
  %v6662 = vadd.f32 %v6426, %v6612
  %v6663 = vadd.f32 %v6429, %v6615
  %v6664 = vadd.f32 %v6434, %v6620
  %v6665 = vadd.f32 %v6437, %v6623
  %v6666 = vadd.f32 %v6442, %v6628
  %v6667 = vadd.f32 %v6445, %v6631
  %v6668 = vadd.f32 %v6450, %v6636
  %v6669 = vadd.f32 %v6453, %v6639
  %v6670 = vadd.f32 %v6458, %v6644
  %v6671 = vadd.f32 %v6461, %v6647
  %v6672 = vadd.f32 %v6466, %v6652
  %v6673 = vadd.f32 %v6469, %v6655
  %v6674 = vld [vmem:[#allocation3 + $0x1] sm:$0xff]
  %v6675 = vld [vmem:[#allocation3 + $0x21] sm:$0xff]
  %v6676 = vld [vmem:[#allocation3 + $0x41] sm:$0xff]
  %v6677 = vld [vmem:[#allocation3 + $0x61] sm:$0xff]
  %v6678 = vld [vmem:[#allocation3 + $0x81] sm:$0xff]
  %v6679 = vld [vmem:[#allocation3 + $0xa1] sm:$0xff]
  %v6680 = vld [vmem:[#allocation3 + $0xc1] sm:$0xff]
  %v6681 = vld [vmem:[#allocation3 + $0xe1] sm:$0xff]
  %v6682 = vld [vmem:[#allocation3 + $0x121] sm:$0xff]
  %v6683 = vld [vmem:[#allocation3 + $0x141] sm:$0xff]
  %v6684 = vld [vmem:[#allocation3 + $0x161] sm:$0xff]
  %v6685 = vld [vmem:[#allocation3 + $0x181] sm:$0xff]
  %v6686 = vld [vmem:[#allocation3 + $0x1a1] sm:$0xff]
  %v6687 = vld [vmem:[#allocation3 + $0x1c1] sm:$0xff]
  %v6688 = vld [vmem:[#allocation3 + $0x1e1] sm:$0xff]
  %v6689 = vld [vmem:[#allocation3 + $0x201] sm:$0xff]
  %v6690 = vpack.c.bf16 %v6675, %v6674
  %v6691 = vpack.c.bf16 %v6677, %v6676
  %v6692 = vpack.c.bf16 %v6679, %v6678
  %v6693 = vpack.c.bf16 %v6681, %v6680
  %v6694 = vpack.c.bf16 %v6683, %v6682
  %v6695 = vpack.c.bf16 %v6685, %v6684
  %v6696 = vpack.c.bf16 %v6687, %v6686
  %v6697 = vpack.c.bf16 %v6689, %v6688
  %s6698 = scalar_lea.vmem %s3, 192
  %v6699 = vld [vmem:[%s6698] sm:$0xf]
  %v6700 = vld [vmem:[%s6698 + $0x4] sm:$0xf]
  %v6701 = vld [vmem:[%s6698 + $0x8] sm:$0xf]
  %v6702 = vld [vmem:[%s6698 + $0xc] sm:$0xf]
  %v6703 = vld [vmem:[%s6698 + $0x10] sm:$0xf]
  %v6704 = vld [vmem:[%s6698 + $0x14] sm:$0xf]
  %v6705 = vld [vmem:[%s6698 + $0x18] sm:$0xf]
  %v6706 = vld [vmem:[%s6698 + $0x1c] sm:$0xf]
  %v6707 = vld [vmem:[%s6698 + $0x20] sm:$0xf]
  %v6708 = vld [vmem:[%s6698 + $0x24] sm:$0xf]
  %v6709 = vld [vmem:[%s6698 + $0x28] sm:$0xf]
  %v6710 = vld [vmem:[%s6698 + $0x2c] sm:$0xf]
  %v6711 = vld [vmem:[%s6698 + $0x30] sm:$0xf]
  %v6712 = vld [vmem:[%s6698 + $0x34] sm:$0xf]
  %v6713 = vld [vmem:[%s6698 + $0x38] sm:$0xf]
  %v6714 = vld [vmem:[%s6698 + $0x3c] sm:$0xf]
  %v6731 = vunpack.c.l.b16 %v6699
  %v6732 = vunpack.c.l.b16 %v6700
  %v6733 = vunpack.c.l.b16 %v6701
  %v6734 = vunpack.c.l.b16 %v6702
  %v6735 = vunpack.c.l.b16 %v6703
  %v6736 = vunpack.c.l.b16 %v6704
  %v6737 = vunpack.c.l.b16 %v6705
  %v6738 = vunpack.c.l.b16 %v6706
  %v6739 = vunpack.c.l.b16 %v6707
  %v6740 = vunpack.c.l.b16 %v6708
  %v6741 = vunpack.c.l.b16 %v6709
  %v6742 = vunpack.c.l.b16 %v6710
  %v6743 = vunpack.c.l.b16 %v6711
  %v6744 = vunpack.c.l.b16 %v6712
  %v6745 = vunpack.c.l.b16 %v6713
  %v6746 = vunpack.c.l.b16 %v6714
  %v6747 = vpack.c.b16 %v6732, %v6731
  %v6748 = vpack.c.b16 %v6734, %v6733
  %v6749 = vpack.c.b16 %v6736, %v6735
  %v6750 = vpack.c.b16 %v6738, %v6737
  %v6751 = vpack.c.b16 %v6740, %v6739
  %v6752 = vpack.c.b16 %v6742, %v6741
  %v6753 = vpack.c.b16 %v6744, %v6743
  %v6754 = vpack.c.b16 %v6746, %v6745
  %6763 = vmatprep.subr.bf16.mxu0 0
  %6764 = vmatpush1.bf16.msra.mxu0 %v6747
  %6765 = vmatprep.subr.bf16.mxu0 0
  %6766 = vmatpush1.bf16.msra.mxu0 %v6748
  %6767 = vmatprep.subr.bf16.mxu0 0
  %6768 = vmatpush1.bf16.msra.mxu0 %v6749
  %6769 = vmatprep.subr.bf16.mxu0 0
  %6770 = vmatpush1.bf16.msra.mxu0 %v6750
  %6771 = vmatprep.subr.bf16.mxu0 0
  %6772 = vmatpush1.bf16.msra.mxu0 %v6751
  %6773 = vmatprep.subr.bf16.mxu0 0
  %6774 = vmatpush1.bf16.msra.mxu0 %v6752
  %6775 = vmatprep.subr.bf16.mxu0 0
  %6776 = vmatpush1.bf16.msra.mxu0 %v6753
  %6777 = vmatprep.subr.bf16.mxu0 0
  %6778 = vmatpush1.bf16.msra.mxu0 %v6754
  %6779 = vmatprep.subr.bf16.mxu0 0
  %6780 = vmatpush1.bf16.msra.mxu0 0
  %6781 = vmatprep.subr.bf16.mxu0 0
  %6782 = vmatpush1.bf16.msra.mxu0 0
  %6783 = vmatprep.subr.bf16.mxu0 0
  %6784 = vmatpush1.bf16.msra.mxu0 0
  %6785 = vmatprep.subr.bf16.mxu0 0
  %6786 = vmatpush1.bf16.msra.mxu0 0
  %6787 = vmatprep.subr.bf16.mxu0 0
  %6788 = vmatpush1.bf16.msra.mxu0 0
  %6789 = vmatprep.subr.bf16.mxu0 0
  %6790 = vmatpush1.bf16.msra.mxu0 0
  %6791 = vmatprep.subr.bf16.mxu0 0
  %6792 = vmatpush1.bf16.msra.mxu0 0
  %6793 = vmatprep.subr.bf16.mxu0 0
  %6794 = vmatpush1.bf16.msra.mxu0 0
  %6795 = vmatprep.mubr.bf16.mxu0 0
  %6796 = vmatmul.mubr.bf16.gmra.mrb[0].mxu0 %v6690
  %v6797 = vpop.f32.mrb[0].mxu0
  %v6798 = vadd.f32 0.0, %v6797
  %v6799 = vpop.f32.mrb[0].mxu0
  %v6800 = vpop.f32.mrb[0].mxu0
  %v6801 = vadd.f32 0.0, %v6800
  %v6802 = vpop.f32.mrb[0].mxu0
  %6803 = vmatprep.mubr.bf16.mxu0 0
  %6804 = vmatmul.mubr.bf16.gmra.mrb[0].mxu0 %v6691
  %v6805 = vpop.f32.mrb[0].mxu0
  %v6806 = vadd.f32 0.0, %v6805
  %v6807 = vpop.f32.mrb[0].mxu0
  %v6808 = vpop.f32.mrb[0].mxu0
  %v6809 = vadd.f32 0.0, %v6808
  %v6810 = vpop.f32.mrb[0].mxu0
  %6811 = vmatprep.mubr.bf16.mxu0 0
  %6812 = vmatmul.mubr.bf16.gmra.mrb[0].mxu0 %v6692
  %v6813 = vpop.f32.mrb[0].mxu0
  %v6814 = vadd.f32 0.0, %v6813
  %v6815 = vpop.f32.mrb[0].mxu0
  %v6816 = vpop.f32.mrb[0].mxu0
  %v6817 = vadd.f32 0.0, %v6816
  %v6818 = vpop.f32.mrb[0].mxu0
  %6819 = vmatprep.mubr.bf16.mxu0 0
  %6820 = vmatmul.mubr.bf16.gmra.mrb[0].mxu0 %v6693
  %v6821 = vpop.f32.mrb[0].mxu0
  %v6822 = vadd.f32 0.0, %v6821
  %v6823 = vpop.f32.mrb[0].mxu0
  %v6824 = vpop.f32.mrb[0].mxu0
  %v6825 = vadd.f32 0.0, %v6824
  %v6826 = vpop.f32.mrb[0].mxu0
  %6827 = vmatprep.mubr.bf16.mxu0 0
  %6828 = vmatmul.mubr.bf16.gmra.mrb[0].mxu0 %v6694
  %v6829 = vpop.f32.mrb[0].mxu0
  %v6830 = vadd.f32 0.0, %v6829
  %v6831 = vpop.f32.mrb[0].mxu0
  %v6832 = vpop.f32.mrb[0].mxu0
  %v6833 = vadd.f32 0.0, %v6832
  %v6834 = vpop.f32.mrb[0].mxu0
  %6835 = vmatprep.mubr.bf16.mxu0 0
  %6836 = vmatmul.mubr.bf16.gmra.mrb[0].mxu0 %v6695
  %v6837 = vpop.f32.mrb[0].mxu0
  %v6838 = vadd.f32 0.0, %v6837
  %v6839 = vpop.f32.mrb[0].mxu0
  %v6840 = vpop.f32.mrb[0].mxu0
  %v6841 = vadd.f32 0.0, %v6840
  %v6842 = vpop.f32.mrb[0].mxu0
  %6843 = vmatprep.mubr.bf16.mxu0 0
  %6844 = vmatmul.mubr.bf16.gmra.mrb[0].mxu0 %v6696
  %v6845 = vpop.f32.mrb[0].mxu0
  %v6846 = vadd.f32 0.0, %v6845
  %v6847 = vpop.f32.mrb[0].mxu0
  %v6848 = vpop.f32.mrb[0].mxu0
  %v6849 = vadd.f32 0.0, %v6848
  %v6850 = vpop.f32.mrb[0].mxu0
  %6851 = vmatprep.mubr.bf16.mxu0 0
  %6852 = vmatmul.mubr.bf16.gmra.mrb[0].mxu0 %v6697
  %v6853 = vpop.f32.mrb[0].mxu0
  %v6854 = vadd.f32 0.0, %v6853
  %v6855 = vpop.f32.mrb[0].mxu0
  %v6856 = vpop.f32.mrb[0].mxu0
  %v6857 = vadd.f32 0.0, %v6856
  %v6858 = vpop.f32.mrb[0].mxu0
  %6859 = vdwg.mxu0
  %v6860 = vadd.f32 %v6658, %v6798
  %v6861 = vadd.f32 %v6659, %v6801
  %v6862 = vadd.f32 %v6660, %v6806
  %v6863 = vadd.f32 %v6661, %v6809
  %v6864 = vadd.f32 %v6662, %v6814
  %v6865 = vadd.f32 %v6663, %v6817
  %v6866 = vadd.f32 %v6664, %v6822
  %v6867 = vadd.f32 %v6665, %v6825
  %v6868 = vadd.f32 %v6666, %v6830
  %v6869 = vadd.f32 %v6667, %v6833
  %v6870 = vadd.f32 %v6668, %v6838
  %v6871 = vadd.f32 %v6669, %v6841
  %v6872 = vadd.f32 %v6670, %v6846
  %v6873 = vadd.f32 %v6671, %v6849
  %v6874 = vadd.f32 %v6672, %v6854
  %v6875 = vadd.f32 %v6673, %v6857
  %s6876 = scalar_lea.vmem [#allocation2], 16
  %v6877 = vld [vmem:[%s6876] sm:$0xff]
  %v6878 = vld [vmem:[%s6876 + $0x20] sm:$0xff]
  %v6879 = vld [vmem:[%s6876 + $0x40] sm:$0xff]
  %v6880 = vld [vmem:[%s6876 + $0x60] sm:$0xff]
  %v6881 = vld [vmem:[%s6876 + $0x80] sm:$0xff]
  %v6882 = vld [vmem:[%s6876 + $0xa0] sm:$0xff]
  %v6883 = vld [vmem:[%s6876 + $0xc0] sm:$0xff]
  %v6884 = vld [vmem:[%s6876 + $0xe0] sm:$0xff]
  %v6885 = vld [vmem:[%s6876 + $0x120] sm:$0xff]
  %v6886 = vld [vmem:[%s6876 + $0x140] sm:$0xff]
  %v6887 = vld [vmem:[%s6876 + $0x160] sm:$0xff]
  %v6888 = vld [vmem:[%s6876 + $0x180] sm:$0xff]
  %v6889 = vld [vmem:[%s6876 + $0x1a0] sm:$0xff]
  %v6890 = vld [vmem:[%s6876 + $0x1c0] sm:$0xff]
  %v6891 = vld [vmem:[%s6876 + $0x1e0] sm:$0xff]
  %v6892 = vld [vmem:[%s6876 + $0x200] sm:$0xff]
  %v6893 = vpack.c.bf16 %v6878, %v6877
  %v6894 = vpack.c.bf16 %v6880, %v6879
  %v6895 = vpack.c.bf16 %v6882, %v6881
  %v6896 = vpack.c.bf16 %v6884, %v6883
  %v6897 = vpack.c.bf16 %v6886, %v6885
  %v6898 = vpack.c.bf16 %v6888, %v6887
  %v6899 = vpack.c.bf16 %v6890, %v6889
  %v6900 = vpack.c.bf16 %v6892, %v6891
  %s6901 = scalar_lea.vmem %s3, 256
  %v6902 = vld [vmem:[%s6901] sm:$0xf]
  %v6903 = vld [vmem:[%s6901 + $0x4] sm:$0xf]
  %v6904 = vld [vmem:[%s6901 + $0x8] sm:$0xf]
  %v6905 = vld [vmem:[%s6901 + $0xc] sm:$0xf]
  %v6906 = vld [vmem:[%s6901 + $0x10] sm:$0xf]
  %v6907 = vld [vmem:[%s6901 + $0x14] sm:$0xf]
  %v6908 = vld [vmem:[%s6901 + $0x18] sm:$0xf]
  %v6909 = vld [vmem:[%s6901 + $0x1c] sm:$0xf]
  %v6910 = vld [vmem:[%s6901 + $0x20] sm:$0xf]
  %v6911 = vld [vmem:[%s6901 + $0x24] sm:$0xf]
  %v6912 = vld [vmem:[%s6901 + $0x28] sm:$0xf]
  %v6913 = vld [vmem:[%s6901 + $0x2c] sm:$0xf]
  %v6914 = vld [vmem:[%s6901 + $0x30] sm:$0xf]
  %v6915 = vld [vmem:[%s6901 + $0x34] sm:$0xf]
  %v6916 = vld [vmem:[%s6901 + $0x38] sm:$0xf]
  %v6917 = vld [vmem:[%s6901 + $0x3c] sm:$0xf]
  %v6934 = vunpack.c.l.b16 %v6902
  %v6935 = vunpack.c.l.b16 %v6903
  %v6936 = vunpack.c.l.b16 %v6904
  %v6937 = vunpack.c.l.b16 %v6905
  %v6938 = vunpack.c.l.b16 %v6906
  %v6939 = vunpack.c.l.b16 %v6907
  %v6940 = vunpack.c.l.b16 %v6908
  %v6941 = vunpack.c.l.b16 %v6909
  %v6942 = vunpack.c.l.b16 %v6910
  %v6943 = vunpack.c.l.b16 %v6911
  %v6944 = vunpack.c.l.b16 %v6912
  %v6945 = vunpack.c.l.b16 %v6913
  %v6946 = vunpack.c.l.b16 %v6914
  %v6947 = vunpack.c.l.b16 %v6915
  %v6948 = vunpack.c.l.b16 %v6916
  %v6949 = vunpack.c.l.b16 %v6917
  %v6950 = vpack.c.b16 %v6935, %v6934
  %v6951 = vpack.c.b16 %v6937, %v6936
  %v6952 = vpack.c.b16 %v6939, %v6938
  %v6953 = vpack.c.b16 %v6941, %v6940
  %v6954 = vpack.c.b16 %v6943, %v6942
  %v6955 = vpack.c.b16 %v6945, %v6944
  %v6956 = vpack.c.b16 %v6947, %v6946
  %v6957 = vpack.c.b16 %v6949, %v6948
  %6966 = vmatprep.subr.bf16.mxu0 0
  %6967 = vmatpush1.bf16.msra.mxu0 %v6950
  %6968 = vmatprep.subr.bf16.mxu0 0
  %6969 = vmatpush1.bf16.msra.mxu0 %v6951
  %6970 = vmatprep.subr.bf16.mxu0 0
  %6971 = vmatpush1.bf16.msra.mxu0 %v6952
  %6972 = vmatprep.subr.bf16.mxu0 0
  %6973 = vmatpush1.bf16.msra.mxu0 %v6953
  %6974 = vmatprep.subr.bf16.mxu0 0
  %6975 = vmatpush1.bf16.msra.mxu0 %v6954
  %6976 = vmatprep.subr.bf16.mxu0 0
  %6977 = vmatpush1.bf16.msra.mxu0 %v6955
  %6978 = vmatprep.subr.bf16.mxu0 0
  %6979 = vmatpush1.bf16.msra.mxu0 %v6956
  %6980 = vmatprep.subr.bf16.mxu0 0
  %6981 = vmatpush1.bf16.msra.mxu0 %v6957
  %6982 = vmatprep.subr.bf16.mxu0 0
  %6983 = vmatpush1.bf16.msra.mxu0 0
  %6984 = vmatprep.subr.bf16.mxu0 0
  %6985 = vmatpush1.bf16.msra.mxu0 0
  %6986 = vmatprep.subr.bf16.mxu0 0
  %6987 = vmatpush1.bf16.msra.mxu0 0
  %6988 = vmatprep.subr.bf16.mxu0 0
  %6989 = vmatpush1.bf16.msra.mxu0 0
  %6990 = vmatprep.subr.bf16.mxu0 0
  %6991 = vmatpush1.bf16.msra.mxu0 0
  %6992 = vmatprep.subr.bf16.mxu0 0
  %6993 = vmatpush1.bf16.msra.mxu0 0
  %6994 = vmatprep.subr.bf16.mxu0 0
  %6995 = vmatpush1.bf16.msra.mxu0 0
  %6996 = vmatprep.subr.bf16.mxu0 0
  %6997 = vmatpush1.bf16.msra.mxu0 0
  %6998 = vmatprep.mubr.bf16.mxu0 0
  %6999 = vmatmul.mubr.bf16.gmra.mrb[0].mxu0 %v6893
  %v7000 = vpop.f32.mrb[0].mxu0
  %v7001 = vadd.f32 0.0, %v7000
  %v7002 = vpop.f32.mrb[0].mxu0
  %v7003 = vpop.f32.mrb[0].mxu0
  %v7004 = vadd.f32 0.0, %v7003
  %v7005 = vpop.f32.mrb[0].mxu0
  %7006 = vmatprep.mubr.bf16.mxu0 0
  %7007 = vmatmul.mubr.bf16.gmra.mrb[0].mxu0 %v6894
  %v7008 = vpop.f32.mrb[0].mxu0
  %v7009 = vadd.f32 0.0, %v7008
  %v7010 = vpop.f32.mrb[0].mxu0
  %v7011 = vpop.f32.mrb[0].mxu0
  %v7012 = vadd.f32 0.0, %v7011
  %v7013 = vpop.f32.mrb[0].mxu0
  %7014 = vmatprep.mubr.bf16.mxu0 0
  %7015 = vmatmul.mubr.bf16.gmra.mrb[0].mxu0 %v6895
  %v7016 = vpop.f32.mrb[0].mxu0
  %v7017 = vadd.f32 0.0, %v7016
  %v7018 = vpop.f32.mrb[0].mxu0
  %v7019 = vpop.f32.mrb[0].mxu0
  %v7020 = vadd.f32 0.0, %v7019
  %v7021 = vpop.f32.mrb[0].mxu0
  %7022 = vmatprep.mubr.bf16.mxu0 0
  %7023 = vmatmul.mubr.bf16.gmra.mrb[0].mxu0 %v6896
  %v7024 = vpop.f32.mrb[0].mxu0
  %v7025 = vadd.f32 0.0, %v7024
  %v7026 = vpop.f32.mrb[0].mxu0
  %v7027 = vpop.f32.mrb[0].mxu0
  %v7028 = vadd.f32 0.0, %v7027
  %v7029 = vpop.f32.mrb[0].mxu0
  %7030 = vmatprep.mubr.bf16.mxu0 0
  %7031 = vmatmul.mubr.bf16.gmra.mrb[0].mxu0 %v6897
  %v7032 = vpop.f32.mrb[0].mxu0
  %v7033 = vadd.f32 0.0, %v7032
  %v7034 = vpop.f32.mrb[0].mxu0
  %v7035 = vpop.f32.mrb[0].mxu0
  %v7036 = vadd.f32 0.0, %v7035
  %v7037 = vpop.f32.mrb[0].mxu0
  %7038 = vmatprep.mubr.bf16.mxu0 0
  %7039 = vmatmul.mubr.bf16.gmra.mrb[0].mxu0 %v6898
  %v7040 = vpop.f32.mrb[0].mxu0
  %v7041 = vadd.f32 0.0, %v7040
  %v7042 = vpop.f32.mrb[0].mxu0
  %v7043 = vpop.f32.mrb[0].mxu0
  %v7044 = vadd.f32 0.0, %v7043
  %v7045 = vpop.f32.mrb[0].mxu0
  %7046 = vmatprep.mubr.bf16.mxu0 0
  %7047 = vmatmul.mubr.bf16.gmra.mrb[0].mxu0 %v6899
  %v7048 = vpop.f32.mrb[0].mxu0
  %v7049 = vadd.f32 0.0, %v7048
  %v7050 = vpop.f32.mrb[0].mxu0
  %v7051 = vpop.f32.mrb[0].mxu0
  %v7052 = vadd.f32 0.0, %v7051
  %v7053 = vpop.f32.mrb[0].mxu0
  %7054 = vmatprep.mubr.bf16.mxu0 0
  %7055 = vmatmul.mubr.bf16.gmra.mrb[0].mxu0 %v6900
  %v7056 = vpop.f32.mrb[0].mxu0
  %v7057 = vadd.f32 0.0, %v7056
  %v7058 = vpop.f32.mrb[0].mxu0
  %v7059 = vpop.f32.mrb[0].mxu0
  %v7060 = vadd.f32 0.0, %v7059
  %v7061 = vpop.f32.mrb[0].mxu0
  %7062 = vdwg.mxu0
  %v7063 = vadd.f32 %v6860, %v7001
  %v7064 = vadd.f32 %v6861, %v7004
  %v7065 = vadd.f32 %v6862, %v7009
  %v7066 = vadd.f32 %v6863, %v7012
  %v7067 = vadd.f32 %v6864, %v7017
  %v7068 = vadd.f32 %v6865, %v7020
  %v7069 = vadd.f32 %v6866, %v7025
  %v7070 = vadd.f32 %v6867, %v7028
  %v7071 = vadd.f32 %v6868, %v7033
  %v7072 = vadd.f32 %v6869, %v7036
  %v7073 = vadd.f32 %v6870, %v7041
  %v7074 = vadd.f32 %v6871, %v7044
  %v7075 = vadd.f32 %v6872, %v7049
  %v7076 = vadd.f32 %v6873, %v7052
  %v7077 = vadd.f32 %v6874, %v7057
  %v7078 = vadd.f32 %v6875, %v7060
  %s7079 = scalar_lea.vmem [#allocation3], 16
  %v7080 = vld [vmem:[%s7079] sm:$0xff]
  %v7081 = vld [vmem:[%s7079 + $0x20] sm:$0xff]
  %v7082 = vld [vmem:[%s7079 + $0x40] sm:$0xff]
  %v7083 = vld [vmem:[%s7079 + $0x60] sm:$0xff]
  %v7084 = vld [vmem:[%s7079 + $0x80] sm:$0xff]
  %v7085 = vld [vmem:[%s7079 + $0xa0] sm:$0xff]
  %v7086 = vld [vmem:[%s7079 + $0xc0] sm:$0xff]
  %v7087 = vld [vmem:[%s7079 + $0xe0] sm:$0xff]
  %v7088 = vld [vmem:[%s7079 + $0x120] sm:$0xff]
  %v7089 = vld [vmem:[%s7079 + $0x140] sm:$0xff]
  %v7090 = vld [vmem:[%s7079 + $0x160] sm:$0xff]
  %v7091 = vld [vmem:[%s7079 + $0x180] sm:$0xff]
  %v7092 = vld [vmem:[%s7079 + $0x1a0] sm:$0xff]
  %v7093 = vld [vmem:[%s7079 + $0x1c0] sm:$0xff]
  %v7094 = vld [vmem:[%s7079 + $0x1e0] sm:$0xff]
  %v7095 = vld [vmem:[%s7079 + $0x200] sm:$0xff]
  %v7096 = vpack.c.bf16 %v7081, %v7080
  %v7097 = vpack.c.bf16 %v7083, %v7082
  %v7098 = vpack.c.bf16 %v7085, %v7084
  %v7099 = vpack.c.bf16 %v7087, %v7086
  %v7100 = vpack.c.bf16 %v7089, %v7088
  %v7101 = vpack.c.bf16 %v7091, %v7090
  %v7102 = vpack.c.bf16 %v7093, %v7092
  %v7103 = vpack.c.bf16 %v7095, %v7094
  %s7104 = scalar_lea.vmem %s3, 320
  %v7105 = vld [vmem:[%s7104] sm:$0xf]
  %v7106 = vld [vmem:[%s7104 + $0x4] sm:$0xf]
  %v7107 = vld [vmem:[%s7104 + $0x8] sm:$0xf]
  %v7108 = vld [vmem:[%s7104 + $0xc] sm:$0xf]
  %v7109 = vld [vmem:[%s7104 + $0x10] sm:$0xf]
  %v7110 = vld [vmem:[%s7104 + $0x14] sm:$0xf]
  %v7111 = vld [vmem:[%s7104 + $0x18] sm:$0xf]
  %v7112 = vld [vmem:[%s7104 + $0x1c] sm:$0xf]
  %v7113 = vld [vmem:[%s7104 + $0x20] sm:$0xf]
  %v7114 = vld [vmem:[%s7104 + $0x24] sm:$0xf]
  %v7115 = vld [vmem:[%s7104 + $0x28] sm:$0xf]
  %v7116 = vld [vmem:[%s7104 + $0x2c] sm:$0xf]
  %v7117 = vld [vmem:[%s7104 + $0x30] sm:$0xf]
  %v7118 = vld [vmem:[%s7104 + $0x34] sm:$0xf]
  %v7119 = vld [vmem:[%s7104 + $0x38] sm:$0xf]
  %v7120 = vld [vmem:[%s7104 + $0x3c] sm:$0xf]
  %v7137 = vunpack.c.l.b16 %v7105
  %v7138 = vunpack.c.l.b16 %v7106
  %v7139 = vunpack.c.l.b16 %v7107
  %v7140 = vunpack.c.l.b16 %v7108
  %v7141 = vunpack.c.l.b16 %v7109
  %v7142 = vunpack.c.l.b16 %v7110
  %v7143 = vunpack.c.l.b16 %v7111
  %v7144 = vunpack.c.l.b16 %v7112
  %v7145 = vunpack.c.l.b16 %v7113
  %v7146 = vunpack.c.l.b16 %v7114
  %v7147 = vunpack.c.l.b16 %v7115
  %v7148 = vunpack.c.l.b16 %v7116
  %v7149 = vunpack.c.l.b16 %v7117
  %v7150 = vunpack.c.l.b16 %v7118
  %v7151 = vunpack.c.l.b16 %v7119
  %v7152 = vunpack.c.l.b16 %v7120
  %v7153 = vpack.c.b16 %v7138, %v7137
  %v7154 = vpack.c.b16 %v7140, %v7139
  %v7155 = vpack.c.b16 %v7142, %v7141
  %v7156 = vpack.c.b16 %v7144, %v7143
  %v7157 = vpack.c.b16 %v7146, %v7145
  %v7158 = vpack.c.b16 %v7148, %v7147
  %v7159 = vpack.c.b16 %v7150, %v7149
  %v7160 = vpack.c.b16 %v7152, %v7151
  %7169 = vmatprep.subr.bf16.mxu0 0
  %7170 = vmatpush1.bf16.msra.mxu0 %v7153
  %7171 = vmatprep.subr.bf16.mxu0 0
  %7172 = vmatpush1.bf16.msra.mxu0 %v7154
  %7173 = vmatprep.subr.bf16.mxu0 0
  %7174 = vmatpush1.bf16.msra.mxu0 %v7155
  %7175 = vmatprep.subr.bf16.mxu0 0
  %7176 = vmatpush1.bf16.msra.mxu0 %v7156
  %7177 = vmatprep.subr.bf16.mxu0 0
  %7178 = vmatpush1.bf16.msra.mxu0 %v7157
  %7179 = vmatprep.subr.bf16.mxu0 0
  %7180 = vmatpush1.bf16.msra.mxu0 %v7158
  %7181 = vmatprep.subr.bf16.mxu0 0
  %7182 = vmatpush1.bf16.msra.mxu0 %v7159
  %7183 = vmatprep.subr.bf16.mxu0 0
  %7184 = vmatpush1.bf16.msra.mxu0 %v7160
  %7185 = vmatprep.subr.bf16.mxu0 0
  %7186 = vmatpush1.bf16.msra.mxu0 0
  %7187 = vmatprep.subr.bf16.mxu0 0
  %7188 = vmatpush1.bf16.msra.mxu0 0
  %7189 = vmatprep.subr.bf16.mxu0 0
  %7190 = vmatpush1.bf16.msra.mxu0 0
  %7191 = vmatprep.subr.bf16.mxu0 0
  %7192 = vmatpush1.bf16.msra.mxu0 0
  %7193 = vmatprep.subr.bf16.mxu0 0
  %7194 = vmatpush1.bf16.msra.mxu0 0
  %7195 = vmatprep.subr.bf16.mxu0 0
  %7196 = vmatpush1.bf16.msra.mxu0 0
  %7197 = vmatprep.subr.bf16.mxu0 0
  %7198 = vmatpush1.bf16.msra.mxu0 0
  %7199 = vmatprep.subr.bf16.mxu0 0
  %7200 = vmatpush1.bf16.msra.mxu0 0
  %7201 = vmatprep.mubr.bf16.mxu0 0
  %7202 = vmatmul.mubr.bf16.gmra.mrb[0].mxu0 %v7096
  %v7203 = vpop.f32.mrb[0].mxu0
  %v7204 = vadd.f32 0.0, %v7203
  %v7205 = vpop.f32.mrb[0].mxu0
  %v7206 = vpop.f32.mrb[0].mxu0
  %v7207 = vadd.f32 0.0, %v7206
  %v7208 = vpop.f32.mrb[0].mxu0
  %7209 = vmatprep.mubr.bf16.mxu0 0
  %7210 = vmatmul.mubr.bf16.gmra.mrb[0].mxu0 %v7097
  %v7211 = vpop.f32.mrb[0].mxu0
  %v7212 = vadd.f32 0.0, %v7211
  %v7213 = vpop.f32.mrb[0].mxu0
  %v7214 = vpop.f32.mrb[0].mxu0
  %v7215 = vadd.f32 0.0, %v7214
  %v7216 = vpop.f32.mrb[0].mxu0
  %7217 = vmatprep.mubr.bf16.mxu0 0
  %7218 = vmatmul.mubr.bf16.gmra.mrb[0].mxu0 %v7098
  %v7219 = vpop.f32.mrb[0].mxu0
  %v7220 = vadd.f32 0.0, %v7219
  %v7221 = vpop.f32.mrb[0].mxu0
  %v7222 = vpop.f32.mrb[0].mxu0
  %v7223 = vadd.f32 0.0, %v7222
  %v7224 = vpop.f32.mrb[0].mxu0
  %7225 = vmatprep.mubr.bf16.mxu0 0
  %7226 = vmatmul.mubr.bf16.gmra.mrb[0].mxu0 %v7099
  %v7227 = vpop.f32.mrb[0].mxu0
  %v7228 = vadd.f32 0.0, %v7227
  %v7229 = vpop.f32.mrb[0].mxu0
  %v7230 = vpop.f32.mrb[0].mxu0
  %v7231 = vadd.f32 0.0, %v7230
  %v7232 = vpop.f32.mrb[0].mxu0
  %7233 = vmatprep.mubr.bf16.mxu0 0
  %7234 = vmatmul.mubr.bf16.gmra.mrb[0].mxu0 %v7100
  %v7235 = vpop.f32.mrb[0].mxu0
  %v7236 = vadd.f32 0.0, %v7235
  %v7237 = vpop.f32.mrb[0].mxu0
  %v7238 = vpop.f32.mrb[0].mxu0
  %v7239 = vadd.f32 0.0, %v7238
  %v7240 = vpop.f32.mrb[0].mxu0
  %7241 = vmatprep.mubr.bf16.mxu0 0
  %7242 = vmatmul.mubr.bf16.gmra.mrb[0].mxu0 %v7101
  %v7243 = vpop.f32.mrb[0].mxu0
  %v7244 = vadd.f32 0.0, %v7243
  %v7245 = vpop.f32.mrb[0].mxu0
  %v7246 = vpop.f32.mrb[0].mxu0
  %v7247 = vadd.f32 0.0, %v7246
  %v7248 = vpop.f32.mrb[0].mxu0
  %7249 = vmatprep.mubr.bf16.mxu0 0
  %7250 = vmatmul.mubr.bf16.gmra.mrb[0].mxu0 %v7102
  %v7251 = vpop.f32.mrb[0].mxu0
  %v7252 = vadd.f32 0.0, %v7251
  %v7253 = vpop.f32.mrb[0].mxu0
  %v7254 = vpop.f32.mrb[0].mxu0
  %v7255 = vadd.f32 0.0, %v7254
  %v7256 = vpop.f32.mrb[0].mxu0
  %7257 = vmatprep.mubr.bf16.mxu0 0
  %7258 = vmatmul.mubr.bf16.gmra.mrb[0].mxu0 %v7103
  %v7259 = vpop.f32.mrb[0].mxu0
  %v7260 = vadd.f32 0.0, %v7259
  %v7261 = vpop.f32.mrb[0].mxu0
  %v7262 = vpop.f32.mrb[0].mxu0
  %v7263 = vadd.f32 0.0, %v7262
  %v7264 = vpop.f32.mrb[0].mxu0
  %7265 = vdwg.mxu0
  %v7266 = vadd.f32 %v7063, %v7204
  %v7267 = vadd.f32 %v7064, %v7207
  %v7268 = vadd.f32 %v7065, %v7212
  %v7269 = vadd.f32 %v7066, %v7215
  %v7270 = vadd.f32 %v7067, %v7220
  %v7271 = vadd.f32 %v7068, %v7223
  %v7272 = vadd.f32 %v7069, %v7228
  %v7273 = vadd.f32 %v7070, %v7231
  %v7274 = vadd.f32 %v7071, %v7236
  %v7275 = vadd.f32 %v7072, %v7239
  %v7276 = vadd.f32 %v7073, %v7244
  %v7277 = vadd.f32 %v7074, %v7247
  %v7278 = vadd.f32 %v7075, %v7252
  %v7279 = vadd.f32 %v7076, %v7255
  %v7280 = vadd.f32 %v7077, %v7260
  %v7281 = vadd.f32 %v7078, %v7263
  %v7282 = vld [vmem:[%s6876 + $0x1] sm:$0xff]
  %v7283 = vld [vmem:[%s6876 + $0x21] sm:$0xff]
  %v7284 = vld [vmem:[%s6876 + $0x41] sm:$0xff]
  %v7285 = vld [vmem:[%s6876 + $0x61] sm:$0xff]
  %v7286 = vld [vmem:[%s6876 + $0x81] sm:$0xff]
  %v7287 = vld [vmem:[%s6876 + $0xa1] sm:$0xff]
  %v7288 = vld [vmem:[%s6876 + $0xc1] sm:$0xff]
  %v7289 = vld [vmem:[%s6876 + $0xe1] sm:$0xff]
  %v7290 = vld [vmem:[%s6876 + $0x121] sm:$0xff]
  %v7291 = vld [vmem:[%s6876 + $0x141] sm:$0xff]
  %v7292 = vld [vmem:[%s6876 + $0x161] sm:$0xff]
  %v7293 = vld [vmem:[%s6876 + $0x181] sm:$0xff]
  %v7294 = vld [vmem:[%s6876 + $0x1a1] sm:$0xff]
  %v7295 = vld [vmem:[%s6876 + $0x1c1] sm:$0xff]
  %v7296 = vld [vmem:[%s6876 + $0x1e1] sm:$0xff]
  %v7297 = vld [vmem:[%s6876 + $0x201] sm:$0xff]
  %v7298 = vpack.c.bf16 %v7283, %v7282
  %v7299 = vpack.c.bf16 %v7285, %v7284
  %v7300 = vpack.c.bf16 %v7287, %v7286
  %v7301 = vpack.c.bf16 %v7289, %v7288
  %v7302 = vpack.c.bf16 %v7291, %v7290
  %v7303 = vpack.c.bf16 %v7293, %v7292
  %v7304 = vpack.c.bf16 %v7295, %v7294
  %v7305 = vpack.c.bf16 %v7297, %v7296
  %s7306 = scalar_lea.vmem %s3, 384
  %v7307 = vld [vmem:[%s7306] sm:$0xf]
  %v7308 = vld [vmem:[%s7306 + $0x4] sm:$0xf]
  %v7309 = vld [vmem:[%s7306 + $0x8] sm:$0xf]
  %v7310 = vld [vmem:[%s7306 + $0xc] sm:$0xf]
  %v7311 = vld [vmem:[%s7306 + $0x10] sm:$0xf]
  %v7312 = vld [vmem:[%s7306 + $0x14] sm:$0xf]
  %v7313 = vld [vmem:[%s7306 + $0x18] sm:$0xf]
  %v7314 = vld [vmem:[%s7306 + $0x1c] sm:$0xf]
  %v7315 = vld [vmem:[%s7306 + $0x20] sm:$0xf]
  %v7316 = vld [vmem:[%s7306 + $0x24] sm:$0xf]
  %v7317 = vld [vmem:[%s7306 + $0x28] sm:$0xf]
  %v7318 = vld [vmem:[%s7306 + $0x2c] sm:$0xf]
  %v7319 = vld [vmem:[%s7306 + $0x30] sm:$0xf]
  %v7320 = vld [vmem:[%s7306 + $0x34] sm:$0xf]
  %v7321 = vld [vmem:[%s7306 + $0x38] sm:$0xf]
  %v7322 = vld [vmem:[%s7306 + $0x3c] sm:$0xf]
  %v7339 = vunpack.c.l.b16 %v7307
  %v7340 = vunpack.c.l.b16 %v7308
  %v7341 = vunpack.c.l.b16 %v7309
  %v7342 = vunpack.c.l.b16 %v7310
  %v7343 = vunpack.c.l.b16 %v7311
  %v7344 = vunpack.c.l.b16 %v7312
  %v7345 = vunpack.c.l.b16 %v7313
  %v7346 = vunpack.c.l.b16 %v7314
  %v7347 = vunpack.c.l.b16 %v7315
  %v7348 = vunpack.c.l.b16 %v7316
  %v7349 = vunpack.c.l.b16 %v7317
  %v7350 = vunpack.c.l.b16 %v7318
  %v7351 = vunpack.c.l.b16 %v7319
  %v7352 = vunpack.c.l.b16 %v7320
  %v7353 = vunpack.c.l.b16 %v7321
  %v7354 = vunpack.c.l.b16 %v7322
  %v7355 = vpack.c.b16 %v7340, %v7339
  %v7356 = vpack.c.b16 %v7342, %v7341
  %v7357 = vpack.c.b16 %v7344, %v7343
  %v7358 = vpack.c.b16 %v7346, %v7345
  %v7359 = vpack.c.b16 %v7348, %v7347
  %v7360 = vpack.c.b16 %v7350, %v7349
  %v7361 = vpack.c.b16 %v7352, %v7351
  %v7362 = vpack.c.b16 %v7354, %v7353
  %7371 = vmatprep.subr.bf16.mxu0 0
  %7372 = vmatpush1.bf16.msra.mxu0 %v7355
  %7373 = vmatprep.subr.bf16.mxu0 0
  %7374 = vmatpush1.bf16.msra.mxu0 %v7356
  %7375 = vmatprep.subr.bf16.mxu0 0
  %7376 = vmatpush1.bf16.msra.mxu0 %v7357
  %7377 = vmatprep.subr.bf16.mxu0 0
  %7378 = vmatpush1.bf16.msra.mxu0 %v7358
  %7379 = vmatprep.subr.bf16.mxu0 0
  %7380 = vmatpush1.bf16.msra.mxu0 %v7359
  %7381 = vmatprep.subr.bf16.mxu0 0
  %7382 = vmatpush1.bf16.msra.mxu0 %v7360
  %7383 = vmatprep.subr.bf16.mxu0 0
  %7384 = vmatpush1.bf16.msra.mxu0 %v7361
  %7385 = vmatprep.subr.bf16.mxu0 0
  %7386 = vmatpush1.bf16.msra.mxu0 %v7362
  %7387 = vmatprep.subr.bf16.mxu0 0
  %7388 = vmatpush1.bf16.msra.mxu0 0
  %7389 = vmatprep.subr.bf16.mxu0 0
  %7390 = vmatpush1.bf16.msra.mxu0 0
  %7391 = vmatprep.subr.bf16.mxu0 0
  %7392 = vmatpush1.bf16.msra.mxu0 0
  %7393 = vmatprep.subr.bf16.mxu0 0
  %7394 = vmatpush1.bf16.msra.mxu0 0
  %7395 = vmatprep.subr.bf16.mxu0 0
  %7396 = vmatpush1.bf16.msra.mxu0 0
  %7397 = vmatprep.subr.bf16.mxu0 0
  %7398 = vmatpush1.bf16.msra.mxu0 0
  %7399 = vmatprep.subr.bf16.mxu0 0
  %7400 = vmatpush1.bf16.msra.mxu0 0
  %7401 = vmatprep.subr.bf16.mxu0 0
  %7402 = vmatpush1.bf16.msra.mxu0 0
  %7403 = vmatprep.mubr.bf16.mxu0 0
  %7404 = vmatmul.mubr.bf16.gmra.mrb[0].mxu0 %v7298
  %v7405 = vpop.f32.mrb[0].mxu0
  %v7406 = vadd.f32 0.0, %v7405
  %v7407 = vpop.f32.mrb[0].mxu0
  %v7408 = vpop.f32.mrb[0].mxu0
  %v7409 = vadd.f32 0.0, %v7408
  %v7410 = vpop.f32.mrb[0].mxu0
  %7411 = vmatprep.mubr.bf16.mxu0 0
  %7412 = vmatmul.mubr.bf16.gmra.mrb[0].mxu0 %v7299
  %v7413 = vpop.f32.mrb[0].mxu0
  %v7414 = vadd.f32 0.0, %v7413
  %v7415 = vpop.f32.mrb[0].mxu0
  %v7416 = vpop.f32.mrb[0].mxu0
  %v7417 = vadd.f32 0.0, %v7416
  %v7418 = vpop.f32.mrb[0].mxu0
  %7419 = vmatprep.mubr.bf16.mxu0 0
  %7420 = vmatmul.mubr.bf16.gmra.mrb[0].mxu0 %v7300
  %v7421 = vpop.f32.mrb[0].mxu0
  %v7422 = vadd.f32 0.0, %v7421
  %v7423 = vpop.f32.mrb[0].mxu0
  %v7424 = vpop.f32.mrb[0].mxu0
  %v7425 = vadd.f32 0.0, %v7424
  %v7426 = vpop.f32.mrb[0].mxu0
  %7427 = vmatprep.mubr.bf16.mxu0 0
  %7428 = vmatmul.mubr.bf16.gmra.mrb[0].mxu0 %v7301
  %v7429 = vpop.f32.mrb[0].mxu0
  %v7430 = vadd.f32 0.0, %v7429
  %v7431 = vpop.f32.mrb[0].mxu0
  %v7432 = vpop.f32.mrb[0].mxu0
  %v7433 = vadd.f32 0.0, %v7432
  %v7434 = vpop.f32.mrb[0].mxu0
  %7435 = vmatprep.mubr.bf16.mxu0 0
  %7436 = vmatmul.mubr.bf16.gmra.mrb[0].mxu0 %v7302
  %v7437 = vpop.f32.mrb[0].mxu0
  %v7438 = vadd.f32 0.0, %v7437
  %v7439 = vpop.f32.mrb[0].mxu0
  %v7440 = vpop.f32.mrb[0].mxu0
  %v7441 = vadd.f32 0.0, %v7440
  %v7442 = vpop.f32.mrb[0].mxu0
  %7443 = vmatprep.mubr.bf16.mxu0 0
  %7444 = vmatmul.mubr.bf16.gmra.mrb[0].mxu0 %v7303
  %v7445 = vpop.f32.mrb[0].mxu0
  %v7446 = vadd.f32 0.0, %v7445
  %v7447 = vpop.f32.mrb[0].mxu0
  %v7448 = vpop.f32.mrb[0].mxu0
  %v7449 = vadd.f32 0.0, %v7448
  %v7450 = vpop.f32.mrb[0].mxu0
  %7451 = vmatprep.mubr.bf16.mxu0 0
  %7452 = vmatmul.mubr.bf16.gmra.mrb[0].mxu0 %v7304
  %v7453 = vpop.f32.mrb[0].mxu0
  %v7454 = vadd.f32 0.0, %v7453
  %v7455 = vpop.f32.mrb[0].mxu0
  %v7456 = vpop.f32.mrb[0].mxu0
  %v7457 = vadd.f32 0.0, %v7456
  %v7458 = vpop.f32.mrb[0].mxu0
  %7459 = vmatprep.mubr.bf16.mxu0 0
  %7460 = vmatmul.mubr.bf16.gmra.mrb[0].mxu0 %v7305
  %v7461 = vpop.f32.mrb[0].mxu0
  %v7462 = vadd.f32 0.0, %v7461
  %v7463 = vpop.f32.mrb[0].mxu0
  %v7464 = vpop.f32.mrb[0].mxu0
  %v7465 = vadd.f32 0.0, %v7464
  %v7466 = vpop.f32.mrb[0].mxu0
  %7467 = vdwg.mxu0
  %v7468 = vadd.f32 %v7266, %v7406
  %v7469 = vadd.f32 %v7267, %v7409
  %v7470 = vadd.f32 %v7268, %v7414
  %v7471 = vadd.f32 %v7269, %v7417
  %v7472 = vadd.f32 %v7270, %v7422
  %v7473 = vadd.f32 %v7271, %v7425
  %v7474 = vadd.f32 %v7272, %v7430
  %v7475 = vadd.f32 %v7273, %v7433
  %v7476 = vadd.f32 %v7274, %v7438
  %v7477 = vadd.f32 %v7275, %v7441
  %v7478 = vadd.f32 %v7276, %v7446
  %v7479 = vadd.f32 %v7277, %v7449
  %v7480 = vadd.f32 %v7278, %v7454
  %v7481 = vadd.f32 %v7279, %v7457
  %v7482 = vadd.f32 %v7280, %v7462
  %v7483 = vadd.f32 %v7281, %v7465
  %v7484 = vld [vmem:[%s7079 + $0x1] sm:$0xff]
  %v7485 = vld [vmem:[%s7079 + $0x21] sm:$0xff]
  %v7486 = vld [vmem:[%s7079 + $0x41] sm:$0xff]
  %v7487 = vld [vmem:[%s7079 + $0x61] sm:$0xff]
  %v7488 = vld [vmem:[%s7079 + $0x81] sm:$0xff]
  %v7489 = vld [vmem:[%s7079 + $0xa1] sm:$0xff]
  %v7490 = vld [vmem:[%s7079 + $0xc1] sm:$0xff]
  %v7491 = vld [vmem:[%s7079 + $0xe1] sm:$0xff]
  %v7492 = vld [vmem:[%s7079 + $0x121] sm:$0xff]
  %v7493 = vld [vmem:[%s7079 + $0x141] sm:$0xff]
  %v7494 = vld [vmem:[%s7079 + $0x161] sm:$0xff]
  %v7495 = vld [vmem:[%s7079 + $0x181] sm:$0xff]
  %v7496 = vld [vmem:[%s7079 + $0x1a1] sm:$0xff]
  %v7497 = vld [vmem:[%s7079 + $0x1c1] sm:$0xff]
  %v7498 = vld [vmem:[%s7079 + $0x1e1] sm:$0xff]
  %v7499 = vld [vmem:[%s7079 + $0x201] sm:$0xff]
  %v7500 = vpack.c.bf16 %v7485, %v7484
  %v7501 = vpack.c.bf16 %v7487, %v7486
  %v7502 = vpack.c.bf16 %v7489, %v7488
  %v7503 = vpack.c.bf16 %v7491, %v7490
  %v7504 = vpack.c.bf16 %v7493, %v7492
  %v7505 = vpack.c.bf16 %v7495, %v7494
  %v7506 = vpack.c.bf16 %v7497, %v7496
  %v7507 = vpack.c.bf16 %v7499, %v7498
  %s7508 = scalar_lea.vmem %s3, 448
  %v7509 = vld [vmem:[%s7508] sm:$0xf]
  %v7510 = vld [vmem:[%s7508 + $0x4] sm:$0xf]
  %v7511 = vld [vmem:[%s7508 + $0x8] sm:$0xf]
  %v7512 = vld [vmem:[%s7508 + $0xc] sm:$0xf]
  %v7513 = vld [vmem:[%s7508 + $0x10] sm:$0xf]
  %v7514 = vld [vmem:[%s7508 + $0x14] sm:$0xf]
  %v7515 = vld [vmem:[%s7508 + $0x18] sm:$0xf]
  %v7516 = vld [vmem:[%s7508 + $0x1c] sm:$0xf]
  %v7517 = vld [vmem:[%s7508 + $0x20] sm:$0xf]
  %v7518 = vld [vmem:[%s7508 + $0x24] sm:$0xf]
  %v7519 = vld [vmem:[%s7508 + $0x28] sm:$0xf]
  %v7520 = vld [vmem:[%s7508 + $0x2c] sm:$0xf]
  %v7521 = vld [vmem:[%s7508 + $0x30] sm:$0xf]
  %v7522 = vld [vmem:[%s7508 + $0x34] sm:$0xf]
  %v7523 = vld [vmem:[%s7508 + $0x38] sm:$0xf]
  %v7524 = vld [vmem:[%s7508 + $0x3c] sm:$0xf]
  %v7541 = vunpack.c.l.b16 %v7509
  %v7542 = vunpack.c.l.b16 %v7510
  %v7543 = vunpack.c.l.b16 %v7511
  %v7544 = vunpack.c.l.b16 %v7512
  %v7545 = vunpack.c.l.b16 %v7513
  %v7546 = vunpack.c.l.b16 %v7514
  %v7547 = vunpack.c.l.b16 %v7515
  %v7548 = vunpack.c.l.b16 %v7516
  %v7549 = vunpack.c.l.b16 %v7517
  %v7550 = vunpack.c.l.b16 %v7518
  %v7551 = vunpack.c.l.b16 %v7519
  %v7552 = vunpack.c.l.b16 %v7520
  %v7553 = vunpack.c.l.b16 %v7521
  %v7554 = vunpack.c.l.b16 %v7522
  %v7555 = vunpack.c.l.b16 %v7523
  %v7556 = vunpack.c.l.b16 %v7524
  %v7557 = vpack.c.b16 %v7542, %v7541
  %v7558 = vpack.c.b16 %v7544, %v7543
  %v7559 = vpack.c.b16 %v7546, %v7545
  %v7560 = vpack.c.b16 %v7548, %v7547
  %v7561 = vpack.c.b16 %v7550, %v7549
  %v7562 = vpack.c.b16 %v7552, %v7551
  %v7563 = vpack.c.b16 %v7554, %v7553
  %v7564 = vpack.c.b16 %v7556, %v7555
  %7573 = vmatprep.subr.bf16.mxu0 0
  %7574 = vmatpush1.bf16.msra.mxu0 %v7557
  %7575 = vmatprep.subr.bf16.mxu0 0
  %7576 = vmatpush1.bf16.msra.mxu0 %v7558
  %7577 = vmatprep.subr.bf16.mxu0 0
  %7578 = vmatpush1.bf16.msra.mxu0 %v7559
  %7579 = vmatprep.subr.bf16.mxu0 0
  %7580 = vmatpush1.bf16.msra.mxu0 %v7560
  %7581 = vmatprep.subr.bf16.mxu0 0
  %7582 = vmatpush1.bf16.msra.mxu0 %v7561
  %7583 = vmatprep.subr.bf16.mxu0 0
  %7584 = vmatpush1.bf16.msra.mxu0 %v7562
  %7585 = vmatprep.subr.bf16.mxu0 0
  %7586 = vmatpush1.bf16.msra.mxu0 %v7563
  %7587 = vmatprep.subr.bf16.mxu0 0
  %7588 = vmatpush1.bf16.msra.mxu0 %v7564
  %7589 = vmatprep.subr.bf16.mxu0 0
  %7590 = vmatpush1.bf16.msra.mxu0 0
  %7591 = vmatprep.subr.bf16.mxu0 0
  %7592 = vmatpush1.bf16.msra.mxu0 0
  %7593 = vmatprep.subr.bf16.mxu0 0
  %7594 = vmatpush1.bf16.msra.mxu0 0
  %7595 = vmatprep.subr.bf16.mxu0 0
  %7596 = vmatpush1.bf16.msra.mxu0 0
  %7597 = vmatprep.subr.bf16.mxu0 0
  %7598 = vmatpush1.bf16.msra.mxu0 0
  %7599 = vmatprep.subr.bf16.mxu0 0
  %7600 = vmatpush1.bf16.msra.mxu0 0
  %7601 = vmatprep.subr.bf16.mxu0 0
  %7602 = vmatpush1.bf16.msra.mxu0 0
  %7603 = vmatprep.subr.bf16.mxu0 0
  %7604 = vmatpush1.bf16.msra.mxu0 0
  %7605 = vmatprep.mubr.bf16.mxu0 0
  %7606 = vmatmul.mubr.bf16.gmra.mrb[0].mxu0 %v7500
  %v7607 = vpop.f32.mrb[0].mxu0
  %v7608 = vadd.f32 0.0, %v7607
  %v7609 = vpop.f32.mrb[0].mxu0
  %v7610 = vpop.f32.mrb[0].mxu0
  %v7611 = vadd.f32 0.0, %v7610
  %v7612 = vpop.f32.mrb[0].mxu0
  %7613 = vmatprep.mubr.bf16.mxu0 0
  %7614 = vmatmul.mubr.bf16.gmra.mrb[0].mxu0 %v7501
  %v7615 = vpop.f32.mrb[0].mxu0
  %v7616 = vadd.f32 0.0, %v7615
  %v7617 = vpop.f32.mrb[0].mxu0
  %v7618 = vpop.f32.mrb[0].mxu0
  %v7619 = vadd.f32 0.0, %v7618
  %v7620 = vpop.f32.mrb[0].mxu0
  %7621 = vmatprep.mubr.bf16.mxu0 0
  %7622 = vmatmul.mubr.bf16.gmra.mrb[0].mxu0 %v7502
  %v7623 = vpop.f32.mrb[0].mxu0
  %v7624 = vadd.f32 0.0, %v7623
  %v7625 = vpop.f32.mrb[0].mxu0
  %v7626 = vpop.f32.mrb[0].mxu0
  %v7627 = vadd.f32 0.0, %v7626
  %v7628 = vpop.f32.mrb[0].mxu0
  %7629 = vmatprep.mubr.bf16.mxu0 0
  %7630 = vmatmul.mubr.bf16.gmra.mrb[0].mxu0 %v7503
  %v7631 = vpop.f32.mrb[0].mxu0
  %v7632 = vadd.f32 0.0, %v7631
  %v7633 = vpop.f32.mrb[0].mxu0
  %v7634 = vpop.f32.mrb[0].mxu0
  %v7635 = vadd.f32 0.0, %v7634
  %v7636 = vpop.f32.mrb[0].mxu0
  %7637 = vmatprep.mubr.bf16.mxu0 0
  %7638 = vmatmul.mubr.bf16.gmra.mrb[0].mxu0 %v7504
  %v7639 = vpop.f32.mrb[0].mxu0
  %v7640 = vadd.f32 0.0, %v7639
  %v7641 = vpop.f32.mrb[0].mxu0
  %v7642 = vpop.f32.mrb[0].mxu0
  %v7643 = vadd.f32 0.0, %v7642
  %v7644 = vpop.f32.mrb[0].mxu0
  %7645 = vmatprep.mubr.bf16.mxu0 0
  %7646 = vmatmul.mubr.bf16.gmra.mrb[0].mxu0 %v7505
  %v7647 = vpop.f32.mrb[0].mxu0
  %v7648 = vadd.f32 0.0, %v7647
  %v7649 = vpop.f32.mrb[0].mxu0
  %v7650 = vpop.f32.mrb[0].mxu0
  %v7651 = vadd.f32 0.0, %v7650
  %v7652 = vpop.f32.mrb[0].mxu0
  %7653 = vmatprep.mubr.bf16.mxu0 0
  %7654 = vmatmul.mubr.bf16.gmra.mrb[0].mxu0 %v7506
  %v7655 = vpop.f32.mrb[0].mxu0
  %v7656 = vadd.f32 0.0, %v7655
  %v7657 = vpop.f32.mrb[0].mxu0
  %v7658 = vpop.f32.mrb[0].mxu0
  %v7659 = vadd.f32 0.0, %v7658
  %v7660 = vpop.f32.mrb[0].mxu0
  %7661 = vmatprep.mubr.bf16.mxu0 0
  %7662 = vmatmul.mubr.bf16.gmra.mrb[0].mxu0 %v7507
  %v7663 = vpop.f32.mrb[0].mxu0
  %v7664 = vadd.f32 0.0, %v7663
  %v7665 = vpop.f32.mrb[0].mxu0
  %v7666 = vpop.f32.mrb[0].mxu0
  %v7667 = vadd.f32 0.0, %v7666
  %v7668 = vpop.f32.mrb[0].mxu0
  %7669 = vdwg.mxu0
  %v7670 = vadd.f32 %v7468, %v7608
  %v7671 = vadd.f32 %v7469, %v7611
  %v7672 = vadd.f32 %v7470, %v7616
  %v7673 = vadd.f32 %v7471, %v7619
  %v7674 = vadd.f32 %v7472, %v7624
  %v7675 = vadd.f32 %v7473, %v7627
  %v7676 = vadd.f32 %v7474, %v7632
  %v7677 = vadd.f32 %v7475, %v7635
  %v7678 = vadd.f32 %v7476, %v7640
  %v7679 = vadd.f32 %v7477, %v7643
  %v7680 = vadd.f32 %v7478, %v7648
  %v7681 = vadd.f32 %v7479, %v7651
  %v7682 = vadd.f32 %v7480, %v7656
  %v7683 = vadd.f32 %v7481, %v7659
  %v7684 = vadd.f32 %v7482, %v7664
  %v7685 = vadd.f32 %v7483, %v7667
  %s7686 = scalar_lea.vmem [#allocation2], 32
  %v7687 = vld [vmem:[%s7686] sm:$0xff]
  %v7688 = vld [vmem:[%s7686 + $0x20] sm:$0xff]
  %v7689 = vld [vmem:[%s7686 + $0x40] sm:$0xff]
  %v7690 = vld [vmem:[%s7686 + $0x60] sm:$0xff]
  %v7691 = vld [vmem:[%s7686 + $0x80] sm:$0xff]
  %v7692 = vld [vmem:[%s7686 + $0xa0] sm:$0xff]
  %v7693 = vld [vmem:[%s7686 + $0xc0] sm:$0xff]
  %v7694 = vld [vmem:[%s7686 + $0xe0] sm:$0xff]
  %v7695 = vld [vmem:[%s7686 + $0x120] sm:$0xff]
  %v7696 = vld [vmem:[%s7686 + $0x140] sm:$0xff]
  %v7697 = vld [vmem:[%s7686 + $0x160] sm:$0xff]
  %v7698 = vld [vmem:[%s7686 + $0x180] sm:$0xff]
  %v7699 = vld [vmem:[%s7686 + $0x1a0] sm:$0xff]
  %v7700 = vld [vmem:[%s7686 + $0x1c0] sm:$0xff]
  %v7701 = vld [vmem:[%s7686 + $0x1e0] sm:$0xff]
  %v7702 = vld [vmem:[%s7686 + $0x200] sm:$0xff]
  %v7703 = vpack.c.bf16 %v7688, %v7687
  %v7704 = vpack.c.bf16 %v7690, %v7689
  %v7705 = vpack.c.bf16 %v7692, %v7691
  %v7706 = vpack.c.bf16 %v7694, %v7693
  %v7707 = vpack.c.bf16 %v7696, %v7695
  %v7708 = vpack.c.bf16 %v7698, %v7697
  %v7709 = vpack.c.bf16 %v7700, %v7699
  %v7710 = vpack.c.bf16 %v7702, %v7701
  %s7711 = scalar_lea.vmem %s3, 512
  %v7712 = vld [vmem:[%s7711] sm:$0xf]
  %v7713 = vld [vmem:[%s7711 + $0x4] sm:$0xf]
  %v7714 = vld [vmem:[%s7711 + $0x8] sm:$0xf]
  %v7715 = vld [vmem:[%s7711 + $0xc] sm:$0xf]
  %v7716 = vld [vmem:[%s7711 + $0x10] sm:$0xf]
  %v7717 = vld [vmem:[%s7711 + $0x14] sm:$0xf]
  %v7718 = vld [vmem:[%s7711 + $0x18] sm:$0xf]
  %v7719 = vld [vmem:[%s7711 + $0x1c] sm:$0xf]
  %v7720 = vld [vmem:[%s7711 + $0x20] sm:$0xf]
  %v7721 = vld [vmem:[%s7711 + $0x24] sm:$0xf]
  %v7722 = vld [vmem:[%s7711 + $0x28] sm:$0xf]
  %v7723 = vld [vmem:[%s7711 + $0x2c] sm:$0xf]
  %v7724 = vld [vmem:[%s7711 + $0x30] sm:$0xf]
  %v7725 = vld [vmem:[%s7711 + $0x34] sm:$0xf]
  %v7726 = vld [vmem:[%s7711 + $0x38] sm:$0xf]
  %v7727 = vld [vmem:[%s7711 + $0x3c] sm:$0xf]
  %v7744 = vunpack.c.l.b16 %v7712
  %v7745 = vunpack.c.l.b16 %v7713
  %v7746 = vunpack.c.l.b16 %v7714
  %v7747 = vunpack.c.l.b16 %v7715
  %v7748 = vunpack.c.l.b16 %v7716
  %v7749 = vunpack.c.l.b16 %v7717
  %v7750 = vunpack.c.l.b16 %v7718
  %v7751 = vunpack.c.l.b16 %v7719
  %v7752 = vunpack.c.l.b16 %v7720
  %v7753 = vunpack.c.l.b16 %v7721
  %v7754 = vunpack.c.l.b16 %v7722
  %v7755 = vunpack.c.l.b16 %v7723
  %v7756 = vunpack.c.l.b16 %v7724
  %v7757 = vunpack.c.l.b16 %v7725
  %v7758 = vunpack.c.l.b16 %v7726
  %v7759 = vunpack.c.l.b16 %v7727
  %v7760 = vpack.c.b16 %v7745, %v7744
  %v7761 = vpack.c.b16 %v7747, %v7746
  %v7762 = vpack.c.b16 %v7749, %v7748
  %v7763 = vpack.c.b16 %v7751, %v7750
  %v7764 = vpack.c.b16 %v7753, %v7752
  %v7765 = vpack.c.b16 %v7755, %v7754
  %v7766 = vpack.c.b16 %v7757, %v7756
  %v7767 = vpack.c.b16 %v7759, %v7758
  %7776 = vmatprep.subr.bf16.mxu0 0
  %7777 = vmatpush1.bf16.msra.mxu0 %v7760
  %7778 = vmatprep.subr.bf16.mxu0 0
  %7779 = vmatpush1.bf16.msra.mxu0 %v7761
  %7780 = vmatprep.subr.bf16.mxu0 0
  %7781 = vmatpush1.bf16.msra.mxu0 %v7762
  %7782 = vmatprep.subr.bf16.mxu0 0
  %7783 = vmatpush1.bf16.msra.mxu0 %v7763
  %7784 = vmatprep.subr.bf16.mxu0 0
  %7785 = vmatpush1.bf16.msra.mxu0 %v7764
  %7786 = vmatprep.subr.bf16.mxu0 0
  %7787 = vmatpush1.bf16.msra.mxu0 %v7765
  %7788 = vmatprep.subr.bf16.mxu0 0
  %7789 = vmatpush1.bf16.msra.mxu0 %v7766
  %7790 = vmatprep.subr.bf16.mxu0 0
  %7791 = vmatpush1.bf16.msra.mxu0 %v7767
  %7792 = vmatprep.subr.bf16.mxu0 0
  %7793 = vmatpush1.bf16.msra.mxu0 0
  %7794 = vmatprep.subr.bf16.mxu0 0
  %7795 = vmatpush1.bf16.msra.mxu0 0
  %7796 = vmatprep.subr.bf16.mxu0 0
  %7797 = vmatpush1.bf16.msra.mxu0 0
  %7798 = vmatprep.subr.bf16.mxu0 0
  %7799 = vmatpush1.bf16.msra.mxu0 0
  %7800 = vmatprep.subr.bf16.mxu0 0
  %7801 = vmatpush1.bf16.msra.mxu0 0
  %7802 = vmatprep.subr.bf16.mxu0 0
  %7803 = vmatpush1.bf16.msra.mxu0 0
  %7804 = vmatprep.subr.bf16.mxu0 0
  %7805 = vmatpush1.bf16.msra.mxu0 0
  %7806 = vmatprep.subr.bf16.mxu0 0
  %7807 = vmatpush1.bf16.msra.mxu0 0
  %7808 = vmatprep.mubr.bf16.mxu0 0
  %7809 = vmatmul.mubr.bf16.gmra.mrb[0].mxu0 %v7703
  %v7810 = vpop.f32.mrb[0].mxu0
  %v7811 = vadd.f32 0.0, %v7810
  %v7812 = vpop.f32.mrb[0].mxu0
  %v7813 = vpop.f32.mrb[0].mxu0
  %v7814 = vadd.f32 0.0, %v7813
  %v7815 = vpop.f32.mrb[0].mxu0
  %7816 = vmatprep.mubr.bf16.mxu0 0
  %7817 = vmatmul.mubr.bf16.gmra.mrb[0].mxu0 %v7704
  %v7818 = vpop.f32.mrb[0].mxu0
  %v7819 = vadd.f32 0.0, %v7818
  %v7820 = vpop.f32.mrb[0].mxu0
  %v7821 = vpop.f32.mrb[0].mxu0
  %v7822 = vadd.f32 0.0, %v7821
  %v7823 = vpop.f32.mrb[0].mxu0
  %7824 = vmatprep.mubr.bf16.mxu0 0
  %7825 = vmatmul.mubr.bf16.gmra.mrb[0].mxu0 %v7705
  %v7826 = vpop.f32.mrb[0].mxu0
  %v7827 = vadd.f32 0.0, %v7826
  %v7828 = vpop.f32.mrb[0].mxu0
  %v7829 = vpop.f32.mrb[0].mxu0
  %v7830 = vadd.f32 0.0, %v7829
  %v7831 = vpop.f32.mrb[0].mxu0
  %7832 = vmatprep.mubr.bf16.mxu0 0
  %7833 = vmatmul.mubr.bf16.gmra.mrb[0].mxu0 %v7706
  %v7834 = vpop.f32.mrb[0].mxu0
  %v7835 = vadd.f32 0.0, %v7834
  %v7836 = vpop.f32.mrb[0].mxu0
  %v7837 = vpop.f32.mrb[0].mxu0
  %v7838 = vadd.f32 0.0, %v7837
  %v7839 = vpop.f32.mrb[0].mxu0
  %7840 = vmatprep.mubr.bf16.mxu0 0
  %7841 = vmatmul.mubr.bf16.gmra.mrb[0].mxu0 %v7707
  %v7842 = vpop.f32.mrb[0].mxu0
  %v7843 = vadd.f32 0.0, %v7842
  %v7844 = vpop.f32.mrb[0].mxu0
  %v7845 = vpop.f32.mrb[0].mxu0
  %v7846 = vadd.f32 0.0, %v7845
  %v7847 = vpop.f32.mrb[0].mxu0
  %7848 = vmatprep.mubr.bf16.mxu0 0
  %7849 = vmatmul.mubr.bf16.gmra.mrb[0].mxu0 %v7708
  %v7850 = vpop.f32.mrb[0].mxu0
  %v7851 = vadd.f32 0.0, %v7850
  %v7852 = vpop.f32.mrb[0].mxu0
  %v7853 = vpop.f32.mrb[0].mxu0
  %v7854 = vadd.f32 0.0, %v7853
  %v7855 = vpop.f32.mrb[0].mxu0
  %7856 = vmatprep.mubr.bf16.mxu0 0
  %7857 = vmatmul.mubr.bf16.gmra.mrb[0].mxu0 %v7709
  %v7858 = vpop.f32.mrb[0].mxu0
  %v7859 = vadd.f32 0.0, %v7858
  %v7860 = vpop.f32.mrb[0].mxu0
  %v7861 = vpop.f32.mrb[0].mxu0
  %v7862 = vadd.f32 0.0, %v7861
  %v7863 = vpop.f32.mrb[0].mxu0
  %7864 = vmatprep.mubr.bf16.mxu0 0
  %7865 = vmatmul.mubr.bf16.gmra.mrb[0].mxu0 %v7710
  %v7866 = vpop.f32.mrb[0].mxu0
  %v7867 = vadd.f32 0.0, %v7866
  %v7868 = vpop.f32.mrb[0].mxu0
  %v7869 = vpop.f32.mrb[0].mxu0
  %v7870 = vadd.f32 0.0, %v7869
  %v7871 = vpop.f32.mrb[0].mxu0
  %7872 = vdwg.mxu0
  %v7873 = vadd.f32 %v7670, %v7811
  %v7874 = vadd.f32 %v7671, %v7814
  %v7875 = vadd.f32 %v7672, %v7819
  %v7876 = vadd.f32 %v7673, %v7822
  %v7877 = vadd.f32 %v7674, %v7827
  %v7878 = vadd.f32 %v7675, %v7830
  %v7879 = vadd.f32 %v7676, %v7835
  %v7880 = vadd.f32 %v7677, %v7838
  %v7881 = vadd.f32 %v7678, %v7843
  %v7882 = vadd.f32 %v7679, %v7846
  %v7883 = vadd.f32 %v7680, %v7851
  %v7884 = vadd.f32 %v7681, %v7854
  %v7885 = vadd.f32 %v7682, %v7859
  %v7886 = vadd.f32 %v7683, %v7862
  %v7887 = vadd.f32 %v7684, %v7867
  %v7888 = vadd.f32 %v7685, %v7870
  %s7889 = scalar_lea.vmem [#allocation3], 32
  %v7890 = vld [vmem:[%s7889] sm:$0xff]
  %v7891 = vld [vmem:[%s7889 + $0x20] sm:$0xff]
  %v7892 = vld [vmem:[%s7889 + $0x40] sm:$0xff]
  %v7893 = vld [vmem:[%s7889 + $0x60] sm:$0xff]
  %v7894 = vld [vmem:[%s7889 + $0x80] sm:$0xff]
  %v7895 = vld [vmem:[%s7889 + $0xa0] sm:$0xff]
  %v7896 = vld [vmem:[%s7889 + $0xc0] sm:$0xff]
  %v7897 = vld [vmem:[%s7889 + $0xe0] sm:$0xff]
  %v7898 = vld [vmem:[%s7889 + $0x120] sm:$0xff]
  %v7899 = vld [vmem:[%s7889 + $0x140] sm:$0xff]
  %v7900 = vld [vmem:[%s7889 + $0x160] sm:$0xff]
  %v7901 = vld [vmem:[%s7889 + $0x180] sm:$0xff]
  %v7902 = vld [vmem:[%s7889 + $0x1a0] sm:$0xff]
  %v7903 = vld [vmem:[%s7889 + $0x1c0] sm:$0xff]
  %v7904 = vld [vmem:[%s7889 + $0x1e0] sm:$0xff]
  %v7905 = vld [vmem:[%s7889 + $0x200] sm:$0xff]
  %v7906 = vpack.c.bf16 %v7891, %v7890
  %v7907 = vpack.c.bf16 %v7893, %v7892
  %v7908 = vpack.c.bf16 %v7895, %v7894
  %v7909 = vpack.c.bf16 %v7897, %v7896
  %v7910 = vpack.c.bf16 %v7899, %v7898
  %v7911 = vpack.c.bf16 %v7901, %v7900
  %v7912 = vpack.c.bf16 %v7903, %v7902
  %v7913 = vpack.c.bf16 %v7905, %v7904
  %s7914 = scalar_lea.vmem %s3, 576
  %v7915 = vld [vmem:[%s7914] sm:$0xf]
  %v7916 = vld [vmem:[%s7914 + $0x4] sm:$0xf]
  %v7917 = vld [vmem:[%s7914 + $0x8] sm:$0xf]
  %v7918 = vld [vmem:[%s7914 + $0xc] sm:$0xf]
  %v7919 = vld [vmem:[%s7914 + $0x10] sm:$0xf]
  %v7920 = vld [vmem:[%s7914 + $0x14] sm:$0xf]
  %v7921 = vld [vmem:[%s7914 + $0x18] sm:$0xf]
  %v7922 = vld [vmem:[%s7914 + $0x1c] sm:$0xf]
  %v7923 = vld [vmem:[%s7914 + $0x20] sm:$0xf]
  %v7924 = vld [vmem:[%s7914 + $0x24] sm:$0xf]
  %v7925 = vld [vmem:[%s7914 + $0x28] sm:$0xf]
  %v7926 = vld [vmem:[%s7914 + $0x2c] sm:$0xf]
  %v7927 = vld [vmem:[%s7914 + $0x30] sm:$0xf]
  %v7928 = vld [vmem:[%s7914 + $0x34] sm:$0xf]
  %v7929 = vld [vmem:[%s7914 + $0x38] sm:$0xf]
  %v7930 = vld [vmem:[%s7914 + $0x3c] sm:$0xf]
  %v7947 = vunpack.c.l.b16 %v7915
  %v7948 = vunpack.c.l.b16 %v7916
  %v7949 = vunpack.c.l.b16 %v7917
  %v7950 = vunpack.c.l.b16 %v7918
  %v7951 = vunpack.c.l.b16 %v7919
  %v7952 = vunpack.c.l.b16 %v7920
  %v7953 = vunpack.c.l.b16 %v7921
  %v7954 = vunpack.c.l.b16 %v7922
  %v7955 = vunpack.c.l.b16 %v7923
  %v7956 = vunpack.c.l.b16 %v7924
  %v7957 = vunpack.c.l.b16 %v7925
  %v7958 = vunpack.c.l.b16 %v7926
  %v7959 = vunpack.c.l.b16 %v7927
  %v7960 = vunpack.c.l.b16 %v7928
  %v7961 = vunpack.c.l.b16 %v7929
  %v7962 = vunpack.c.l.b16 %v7930
  %v7963 = vpack.c.b16 %v7948, %v7947
  %v7964 = vpack.c.b16 %v7950, %v7949
  %v7965 = vpack.c.b16 %v7952, %v7951
  %v7966 = vpack.c.b16 %v7954, %v7953
  %v7967 = vpack.c.b16 %v7956, %v7955
  %v7968 = vpack.c.b16 %v7958, %v7957
  %v7969 = vpack.c.b16 %v7960, %v7959
  %v7970 = vpack.c.b16 %v7962, %v7961
  %7979 = vmatprep.subr.bf16.mxu0 0
  %7980 = vmatpush1.bf16.msra.mxu0 %v7963
  %7981 = vmatprep.subr.bf16.mxu0 0
  %7982 = vmatpush1.bf16.msra.mxu0 %v7964
  %7983 = vmatprep.subr.bf16.mxu0 0
  %7984 = vmatpush1.bf16.msra.mxu0 %v7965
  %7985 = vmatprep.subr.bf16.mxu0 0
  %7986 = vmatpush1.bf16.msra.mxu0 %v7966
  %7987 = vmatprep.subr.bf16.mxu0 0
  %7988 = vmatpush1.bf16.msra.mxu0 %v7967
  %7989 = vmatprep.subr.bf16.mxu0 0
  %7990 = vmatpush1.bf16.msra.mxu0 %v7968
  %7991 = vmatprep.subr.bf16.mxu0 0
  %7992 = vmatpush1.bf16.msra.mxu0 %v7969
  %7993 = vmatprep.subr.bf16.mxu0 0
  %7994 = vmatpush1.bf16.msra.mxu0 %v7970
  %7995 = vmatprep.subr.bf16.mxu0 0
  %7996 = vmatpush1.bf16.msra.mxu0 0
  %7997 = vmatprep.subr.bf16.mxu0 0
  %7998 = vmatpush1.bf16.msra.mxu0 0
  %7999 = vmatprep.subr.bf16.mxu0 0
  %8000 = vmatpush1.bf16.msra.mxu0 0
  %8001 = vmatprep.subr.bf16.mxu0 0
  %8002 = vmatpush1.bf16.msra.mxu0 0
  %8003 = vmatprep.subr.bf16.mxu0 0
  %8004 = vmatpush1.bf16.msra.mxu0 0
  %8005 = vmatprep.subr.bf16.mxu0 0
  %8006 = vmatpush1.bf16.msra.mxu0 0
  %8007 = vmatprep.subr.bf16.mxu0 0
  %8008 = vmatpush1.bf16.msra.mxu0 0
  %8009 = vmatprep.subr.bf16.mxu0 0
  %8010 = vmatpush1.bf16.msra.mxu0 0
  %8011 = vmatprep.mubr.bf16.mxu0 0
  %8012 = vmatmul.mubr.bf16.gmra.mrb[0].mxu0 %v7906
  %v8013 = vpop.f32.mrb[0].mxu0
  %v8014 = vadd.f32 0.0, %v8013
  %v8015 = vpop.f32.mrb[0].mxu0
  %v8016 = vpop.f32.mrb[0].mxu0
  %v8017 = vadd.f32 0.0, %v8016
  %v8018 = vpop.f32.mrb[0].mxu0
  %8019 = vmatprep.mubr.bf16.mxu0 0
  %8020 = vmatmul.mubr.bf16.gmra.mrb[0].mxu0 %v7907
  %v8021 = vpop.f32.mrb[0].mxu0
  %v8022 = vadd.f32 0.0, %v8021
  %v8023 = vpop.f32.mrb[0].mxu0
  %v8024 = vpop.f32.mrb[0].mxu0
  %v8025 = vadd.f32 0.0, %v8024
  %v8026 = vpop.f32.mrb[0].mxu0
  %8027 = vmatprep.mubr.bf16.mxu0 0
  %8028 = vmatmul.mubr.bf16.gmra.mrb[0].mxu0 %v7908
  %v8029 = vpop.f32.mrb[0].mxu0
  %v8030 = vadd.f32 0.0, %v8029
  %v8031 = vpop.f32.mrb[0].mxu0
  %v8032 = vpop.f32.mrb[0].mxu0
  %v8033 = vadd.f32 0.0, %v8032
  %v8034 = vpop.f32.mrb[0].mxu0
  %8035 = vmatprep.mubr.bf16.mxu0 0
  %8036 = vmatmul.mubr.bf16.gmra.mrb[0].mxu0 %v7909
  %v8037 = vpop.f32.mrb[0].mxu0
  %v8038 = vadd.f32 0.0, %v8037
  %v8039 = vpop.f32.mrb[0].mxu0
  %v8040 = vpop.f32.mrb[0].mxu0
  %v8041 = vadd.f32 0.0, %v8040
  %v8042 = vpop.f32.mrb[0].mxu0
  %8043 = vmatprep.mubr.bf16.mxu0 0
  %8044 = vmatmul.mubr.bf16.gmra.mrb[0].mxu0 %v7910
  %v8045 = vpop.f32.mrb[0].mxu0
  %v8046 = vadd.f32 0.0, %v8045
  %v8047 = vpop.f32.mrb[0].mxu0
  %v8048 = vpop.f32.mrb[0].mxu0
  %v8049 = vadd.f32 0.0, %v8048
  %v8050 = vpop.f32.mrb[0].mxu0
  %8051 = vmatprep.mubr.bf16.mxu0 0
  %8052 = vmatmul.mubr.bf16.gmra.mrb[0].mxu0 %v7911
  %v8053 = vpop.f32.mrb[0].mxu0
  %v8054 = vadd.f32 0.0, %v8053
  %v8055 = vpop.f32.mrb[0].mxu0
  %v8056 = vpop.f32.mrb[0].mxu0
  %v8057 = vadd.f32 0.0, %v8056
  %v8058 = vpop.f32.mrb[0].mxu0
  %8059 = vmatprep.mubr.bf16.mxu0 0
  %8060 = vmatmul.mubr.bf16.gmra.mrb[0].mxu0 %v7912
  %v8061 = vpop.f32.mrb[0].mxu0
  %v8062 = vadd.f32 0.0, %v8061
  %v8063 = vpop.f32.mrb[0].mxu0
  %v8064 = vpop.f32.mrb[0].mxu0
  %v8065 = vadd.f32 0.0, %v8064
  %v8066 = vpop.f32.mrb[0].mxu0
  %8067 = vmatprep.mubr.bf16.mxu0 0
  %8068 = vmatmul.mubr.bf16.gmra.mrb[0].mxu0 %v7913
  %v8069 = vpop.f32.mrb[0].mxu0
  %v8070 = vadd.f32 0.0, %v8069
  %v8071 = vpop.f32.mrb[0].mxu0
  %v8072 = vpop.f32.mrb[0].mxu0
  %v8073 = vadd.f32 0.0, %v8072
  %v8074 = vpop.f32.mrb[0].mxu0
  %8075 = vdwg.mxu0
  %v8076 = vadd.f32 %v7873, %v8014
  %v8077 = vadd.f32 %v7874, %v8017
  %v8078 = vadd.f32 %v7875, %v8022
  %v8079 = vadd.f32 %v7876, %v8025
  %v8080 = vadd.f32 %v7877, %v8030
  %v8081 = vadd.f32 %v7878, %v8033
  %v8082 = vadd.f32 %v7879, %v8038
  %v8083 = vadd.f32 %v7880, %v8041
  %v8084 = vadd.f32 %v7881, %v8046
  %v8085 = vadd.f32 %v7882, %v8049
  %v8086 = vadd.f32 %v7883, %v8054
  %v8087 = vadd.f32 %v7884, %v8057
  %v8088 = vadd.f32 %v7885, %v8062
  %v8089 = vadd.f32 %v7886, %v8065
  %v8090 = vadd.f32 %v7887, %v8070
  %v8091 = vadd.f32 %v7888, %v8073
  %v8092 = vld [vmem:[%s7686 + $0x1] sm:$0xff]
  %v8093 = vld [vmem:[%s7686 + $0x21] sm:$0xff]
  %v8094 = vld [vmem:[%s7686 + $0x41] sm:$0xff]
  %v8095 = vld [vmem:[%s7686 + $0x61] sm:$0xff]
  %v8096 = vld [vmem:[%s7686 + $0x81] sm:$0xff]
  %v8097 = vld [vmem:[%s7686 + $0xa1] sm:$0xff]
  %v8098 = vld [vmem:[%s7686 + $0xc1] sm:$0xff]
  %v8099 = vld [vmem:[%s7686 + $0xe1] sm:$0xff]
  %v8100 = vld [vmem:[%s7686 + $0x121] sm:$0xff]
  %v8101 = vld [vmem:[%s7686 + $0x141] sm:$0xff]
  %v8102 = vld [vmem:[%s7686 + $0x161] sm:$0xff]
  %v8103 = vld [vmem:[%s7686 + $0x181] sm:$0xff]
  %v8104 = vld [vmem:[%s7686 + $0x1a1] sm:$0xff]
  %v8105 = vld [vmem:[%s7686 + $0x1c1] sm:$0xff]
  %v8106 = vld [vmem:[%s7686 + $0x1e1] sm:$0xff]
  %v8107 = vld [vmem:[%s7686 + $0x201] sm:$0xff]
  %v8108 = vpack.c.bf16 %v8093, %v8092
  %v8109 = vpack.c.bf16 %v8095, %v8094
  %v8110 = vpack.c.bf16 %v8097, %v8096
  %v8111 = vpack.c.bf16 %v8099, %v8098
  %v8112 = vpack.c.bf16 %v8101, %v8100
  %v8113 = vpack.c.bf16 %v8103, %v8102
  %v8114 = vpack.c.bf16 %v8105, %v8104
  %v8115 = vpack.c.bf16 %v8107, %v8106
  %s8116 = scalar_lea.vmem %s3, 640
  %v8117 = vld [vmem:[%s8116] sm:$0xf]
  %v8118 = vld [vmem:[%s8116 + $0x4] sm:$0xf]
  %v8119 = vld [vmem:[%s8116 + $0x8] sm:$0xf]
  %v8120 = vld [vmem:[%s8116 + $0xc] sm:$0xf]
  %v8121 = vld [vmem:[%s8116 + $0x10] sm:$0xf]
  %v8122 = vld [vmem:[%s8116 + $0x14] sm:$0xf]
  %v8123 = vld [vmem:[%s8116 + $0x18] sm:$0xf]
  %v8124 = vld [vmem:[%s8116 + $0x1c] sm:$0xf]
  %v8125 = vld [vmem:[%s8116 + $0x20] sm:$0xf]
  %v8126 = vld [vmem:[%s8116 + $0x24] sm:$0xf]
  %v8127 = vld [vmem:[%s8116 + $0x28] sm:$0xf]
  %v8128 = vld [vmem:[%s8116 + $0x2c] sm:$0xf]
  %v8129 = vld [vmem:[%s8116 + $0x30] sm:$0xf]
  %v8130 = vld [vmem:[%s8116 + $0x34] sm:$0xf]
  %v8131 = vld [vmem:[%s8116 + $0x38] sm:$0xf]
  %v8132 = vld [vmem:[%s8116 + $0x3c] sm:$0xf]
  %v8149 = vunpack.c.l.b16 %v8117
  %v8150 = vunpack.c.l.b16 %v8118
  %v8151 = vunpack.c.l.b16 %v8119
  %v8152 = vunpack.c.l.b16 %v8120
  %v8153 = vunpack.c.l.b16 %v8121
  %v8154 = vunpack.c.l.b16 %v8122
  %v8155 = vunpack.c.l.b16 %v8123
  %v8156 = vunpack.c.l.b16 %v8124
  %v8157 = vunpack.c.l.b16 %v8125
  %v8158 = vunpack.c.l.b16 %v8126
  %v8159 = vunpack.c.l.b16 %v8127
  %v8160 = vunpack.c.l.b16 %v8128
  %v8161 = vunpack.c.l.b16 %v8129
  %v8162 = vunpack.c.l.b16 %v8130
  %v8163 = vunpack.c.l.b16 %v8131
  %v8164 = vunpack.c.l.b16 %v8132
  %v8165 = vpack.c.b16 %v8150, %v8149
  %v8166 = vpack.c.b16 %v8152, %v8151
  %v8167 = vpack.c.b16 %v8154, %v8153
  %v8168 = vpack.c.b16 %v8156, %v8155
  %v8169 = vpack.c.b16 %v8158, %v8157
  %v8170 = vpack.c.b16 %v8160, %v8159
  %v8171 = vpack.c.b16 %v8162, %v8161
  %v8172 = vpack.c.b16 %v8164, %v8163
  %8181 = vmatprep.subr.bf16.mxu0 0
  %8182 = vmatpush1.bf16.msra.mxu0 %v8165
  %8183 = vmatprep.subr.bf16.mxu0 0
  %8184 = vmatpush1.bf16.msra.mxu0 %v8166
  %8185 = vmatprep.subr.bf16.mxu0 0
  %8186 = vmatpush1.bf16.msra.mxu0 %v8167
  %8187 = vmatprep.subr.bf16.mxu0 0
  %8188 = vmatpush1.bf16.msra.mxu0 %v8168
  %8189 = vmatprep.subr.bf16.mxu0 0
  %8190 = vmatpush1.bf16.msra.mxu0 %v8169
  %8191 = vmatprep.subr.bf16.mxu0 0
  %8192 = vmatpush1.bf16.msra.mxu0 %v8170
  %8193 = vmatprep.subr.bf16.mxu0 0
  %8194 = vmatpush1.bf16.msra.mxu0 %v8171
  %8195 = vmatprep.subr.bf16.mxu0 0
  %8196 = vmatpush1.bf16.msra.mxu0 %v8172
  %8197 = vmatprep.subr.bf16.mxu0 0
  %8198 = vmatpush1.bf16.msra.mxu0 0
  %8199 = vmatprep.subr.bf16.mxu0 0
  %8200 = vmatpush1.bf16.msra.mxu0 0
  %8201 = vmatprep.subr.bf16.mxu0 0
  %8202 = vmatpush1.bf16.msra.mxu0 0
  %8203 = vmatprep.subr.bf16.mxu0 0
  %8204 = vmatpush1.bf16.msra.mxu0 0
  %8205 = vmatprep.subr.bf16.mxu0 0
  %8206 = vmatpush1.bf16.msra.mxu0 0
  %8207 = vmatprep.subr.bf16.mxu0 0
  %8208 = vmatpush1.bf16.msra.mxu0 0
  %8209 = vmatprep.subr.bf16.mxu0 0
  %8210 = vmatpush1.bf16.msra.mxu0 0
  %8211 = vmatprep.subr.bf16.mxu0 0
  %8212 = vmatpush1.bf16.msra.mxu0 0
  %8213 = vmatprep.mubr.bf16.mxu0 0
  %8214 = vmatmul.mubr.bf16.gmra.mrb[0].mxu0 %v8108
  %v8215 = vpop.f32.mrb[0].mxu0
  %v8216 = vadd.f32 0.0, %v8215
  %v8217 = vpop.f32.mrb[0].mxu0
  %v8218 = vpop.f32.mrb[0].mxu0
  %v8219 = vadd.f32 0.0, %v8218
  %v8220 = vpop.f32.mrb[0].mxu0
  %8221 = vmatprep.mubr.bf16.mxu0 0
  %8222 = vmatmul.mubr.bf16.gmra.mrb[0].mxu0 %v8109
  %v8223 = vpop.f32.mrb[0].mxu0
  %v8224 = vadd.f32 0.0, %v8223
  %v8225 = vpop.f32.mrb[0].mxu0
  %v8226 = vpop.f32.mrb[0].mxu0
  %v8227 = vadd.f32 0.0, %v8226
  %v8228 = vpop.f32.mrb[0].mxu0
  %8229 = vmatprep.mubr.bf16.mxu0 0
  %8230 = vmatmul.mubr.bf16.gmra.mrb[0].mxu0 %v8110
  %v8231 = vpop.f32.mrb[0].mxu0
  %v8232 = vadd.f32 0.0, %v8231
  %v8233 = vpop.f32.mrb[0].mxu0
  %v8234 = vpop.f32.mrb[0].mxu0
  %v8235 = vadd.f32 0.0, %v8234
  %v8236 = vpop.f32.mrb[0].mxu0
  %8237 = vmatprep.mubr.bf16.mxu0 0
  %8238 = vmatmul.mubr.bf16.gmra.mrb[0].mxu0 %v8111
  %v8239 = vpop.f32.mrb[0].mxu0
  %v8240 = vadd.f32 0.0, %v8239
  %v8241 = vpop.f32.mrb[0].mxu0
  %v8242 = vpop.f32.mrb[0].mxu0
  %v8243 = vadd.f32 0.0, %v8242
  %v8244 = vpop.f32.mrb[0].mxu0
  %8245 = vmatprep.mubr.bf16.mxu0 0
  %8246 = vmatmul.mubr.bf16.gmra.mrb[0].mxu0 %v8112
  %v8247 = vpop.f32.mrb[0].mxu0
  %v8248 = vadd.f32 0.0, %v8247
  %v8249 = vpop.f32.mrb[0].mxu0
  %v8250 = vpop.f32.mrb[0].mxu0
  %v8251 = vadd.f32 0.0, %v8250
  %v8252 = vpop.f32.mrb[0].mxu0
  %8253 = vmatprep.mubr.bf16.mxu0 0
  %8254 = vmatmul.mubr.bf16.gmra.mrb[0].mxu0 %v8113
  %v8255 = vpop.f32.mrb[0].mxu0
  %v8256 = vadd.f32 0.0, %v8255
  %v8257 = vpop.f32.mrb[0].mxu0
  %v8258 = vpop.f32.mrb[0].mxu0
  %v8259 = vadd.f32 0.0, %v8258
  %v8260 = vpop.f32.mrb[0].mxu0
  %8261 = vmatprep.mubr.bf16.mxu0 0
  %8262 = vmatmul.mubr.bf16.gmra.mrb[0].mxu0 %v8114
  %v8263 = vpop.f32.mrb[0].mxu0
  %v8264 = vadd.f32 0.0, %v8263
  %v8265 = vpop.f32.mrb[0].mxu0
  %v8266 = vpop.f32.mrb[0].mxu0
  %v8267 = vadd.f32 0.0, %v8266
  %v8268 = vpop.f32.mrb[0].mxu0
  %8269 = vmatprep.mubr.bf16.mxu0 0
  %8270 = vmatmul.mubr.bf16.gmra.mrb[0].mxu0 %v8115
  %v8271 = vpop.f32.mrb[0].mxu0
  %v8272 = vadd.f32 0.0, %v8271
  %v8273 = vpop.f32.mrb[0].mxu0
  %v8274 = vpop.f32.mrb[0].mxu0
  %v8275 = vadd.f32 0.0, %v8274
  %v8276 = vpop.f32.mrb[0].mxu0
  %8277 = vdwg.mxu0
  %v8278 = vadd.f32 %v8076, %v8216
  %v8279 = vadd.f32 %v8077, %v8219
  %v8280 = vadd.f32 %v8078, %v8224
  %v8281 = vadd.f32 %v8079, %v8227
  %v8282 = vadd.f32 %v8080, %v8232
  %v8283 = vadd.f32 %v8081, %v8235
  %v8284 = vadd.f32 %v8082, %v8240
  %v8285 = vadd.f32 %v8083, %v8243
  %v8286 = vadd.f32 %v8084, %v8248
  %v8287 = vadd.f32 %v8085, %v8251
  %v8288 = vadd.f32 %v8086, %v8256
  %v8289 = vadd.f32 %v8087, %v8259
  %v8290 = vadd.f32 %v8088, %v8264
  %v8291 = vadd.f32 %v8089, %v8267
  %v8292 = vadd.f32 %v8090, %v8272
  %v8293 = vadd.f32 %v8091, %v8275
  %v8294 = vld [vmem:[%s7889 + $0x1] sm:$0xff]
  %v8295 = vld [vmem:[%s7889 + $0x21] sm:$0xff]
  %v8296 = vld [vmem:[%s7889 + $0x41] sm:$0xff]
  %v8297 = vld [vmem:[%s7889 + $0x61] sm:$0xff]
  %v8298 = vld [vmem:[%s7889 + $0x81] sm:$0xff]
  %v8299 = vld [vmem:[%s7889 + $0xa1] sm:$0xff]
  %v8300 = vld [vmem:[%s7889 + $0xc1] sm:$0xff]
  %v8301 = vld [vmem:[%s7889 + $0xe1] sm:$0xff]
  %v8302 = vld [vmem:[%s7889 + $0x121] sm:$0xff]
  %v8303 = vld [vmem:[%s7889 + $0x141] sm:$0xff]
  %v8304 = vld [vmem:[%s7889 + $0x161] sm:$0xff]
  %v8305 = vld [vmem:[%s7889 + $0x181] sm:$0xff]
  %v8306 = vld [vmem:[%s7889 + $0x1a1] sm:$0xff]
  %v8307 = vld [vmem:[%s7889 + $0x1c1] sm:$0xff]
  %v8308 = vld [vmem:[%s7889 + $0x1e1] sm:$0xff]
  %v8309 = vld [vmem:[%s7889 + $0x201] sm:$0xff]
  %v8310 = vpack.c.bf16 %v8295, %v8294
  %v8311 = vpack.c.bf16 %v8297, %v8296
  %v8312 = vpack.c.bf16 %v8299, %v8298
  %v8313 = vpack.c.bf16 %v8301, %v8300
  %v8314 = vpack.c.bf16 %v8303, %v8302
  %v8315 = vpack.c.bf16 %v8305, %v8304
  %v8316 = vpack.c.bf16 %v8307, %v8306
  %v8317 = vpack.c.bf16 %v8309, %v8308
  %s8318 = scalar_lea.vmem %s3, 704
  %v8319 = vld [vmem:[%s8318] sm:$0xf]
  %v8320 = vld [vmem:[%s8318 + $0x4] sm:$0xf]
  %v8321 = vld [vmem:[%s8318 + $0x8] sm:$0xf]
  %v8322 = vld [vmem:[%s8318 + $0xc] sm:$0xf]
  %v8323 = vld [vmem:[%s8318 + $0x10] sm:$0xf]
  %v8324 = vld [vmem:[%s8318 + $0x14] sm:$0xf]
  %v8325 = vld [vmem:[%s8318 + $0x18] sm:$0xf]
  %v8326 = vld [vmem:[%s8318 + $0x1c] sm:$0xf]
  %v8327 = vld [vmem:[%s8318 + $0x20] sm:$0xf]
  %v8328 = vld [vmem:[%s8318 + $0x24] sm:$0xf]
  %v8329 = vld [vmem:[%s8318 + $0x28] sm:$0xf]
  %v8330 = vld [vmem:[%s8318 + $0x2c] sm:$0xf]
  %v8331 = vld [vmem:[%s8318 + $0x30] sm:$0xf]
  %v8332 = vld [vmem:[%s8318 + $0x34] sm:$0xf]
  %v8333 = vld [vmem:[%s8318 + $0x38] sm:$0xf]
  %v8334 = vld [vmem:[%s8318 + $0x3c] sm:$0xf]
  %v8351 = vunpack.c.l.b16 %v8319
  %v8352 = vunpack.c.l.b16 %v8320
  %v8353 = vunpack.c.l.b16 %v8321
  %v8354 = vunpack.c.l.b16 %v8322
  %v8355 = vunpack.c.l.b16 %v8323
  %v8356 = vunpack.c.l.b16 %v8324
  %v8357 = vunpack.c.l.b16 %v8325
  %v8358 = vunpack.c.l.b16 %v8326
  %v8359 = vunpack.c.l.b16 %v8327
  %v8360 = vunpack.c.l.b16 %v8328
  %v8361 = vunpack.c.l.b16 %v8329
  %v8362 = vunpack.c.l.b16 %v8330
  %v8363 = vunpack.c.l.b16 %v8331
  %v8364 = vunpack.c.l.b16 %v8332
  %v8365 = vunpack.c.l.b16 %v8333
  %v8366 = vunpack.c.l.b16 %v8334
  %v8367 = vpack.c.b16 %v8352, %v8351
  %v8368 = vpack.c.b16 %v8354, %v8353
  %v8369 = vpack.c.b16 %v8356, %v8355
  %v8370 = vpack.c.b16 %v8358, %v8357
  %v8371 = vpack.c.b16 %v8360, %v8359
  %v8372 = vpack.c.b16 %v8362, %v8361
  %v8373 = vpack.c.b16 %v8364, %v8363
  %v8374 = vpack.c.b16 %v8366, %v8365
  %8383 = vmatprep.subr.bf16.mxu0 0
  %8384 = vmatpush1.bf16.msra.mxu0 %v8367
  %8385 = vmatprep.subr.bf16.mxu0 0
  %8386 = vmatpush1.bf16.msra.mxu0 %v8368
  %8387 = vmatprep.subr.bf16.mxu0 0
  %8388 = vmatpush1.bf16.msra.mxu0 %v8369
  %8389 = vmatprep.subr.bf16.mxu0 0
  %8390 = vmatpush1.bf16.msra.mxu0 %v8370
  %8391 = vmatprep.subr.bf16.mxu0 0
  %8392 = vmatpush1.bf16.msra.mxu0 %v8371
  %8393 = vmatprep.subr.bf16.mxu0 0
  %8394 = vmatpush1.bf16.msra.mxu0 %v8372
  %8395 = vmatprep.subr.bf16.mxu0 0
  %8396 = vmatpush1.bf16.msra.mxu0 %v8373
  %8397 = vmatprep.subr.bf16.mxu0 0
  %8398 = vmatpush1.bf16.msra.mxu0 %v8374
  %8399 = vmatprep.subr.bf16.mxu0 0
  %8400 = vmatpush1.bf16.msra.mxu0 0
  %8401 = vmatprep.subr.bf16.mxu0 0
  %8402 = vmatpush1.bf16.msra.mxu0 0
  %8403 = vmatprep.subr.bf16.mxu0 0
  %8404 = vmatpush1.bf16.msra.mxu0 0
  %8405 = vmatprep.subr.bf16.mxu0 0
  %8406 = vmatpush1.bf16.msra.mxu0 0
  %8407 = vmatprep.subr.bf16.mxu0 0
  %8408 = vmatpush1.bf16.msra.mxu0 0
  %8409 = vmatprep.subr.bf16.mxu0 0
  %8410 = vmatpush1.bf16.msra.mxu0 0
  %8411 = vmatprep.subr.bf16.mxu0 0
  %8412 = vmatpush1.bf16.msra.mxu0 0
  %8413 = vmatprep.subr.bf16.mxu0 0
  %8414 = vmatpush1.bf16.msra.mxu0 0
  %8415 = vmatprep.mubr.bf16.mxu0 0
  %8416 = vmatmul.mubr.bf16.gmra.mrb[0].mxu0 %v8310
  %v8417 = vpop.f32.mrb[0].mxu0
  %v8418 = vadd.f32 0.0, %v8417
  %v8419 = vpop.f32.mrb[0].mxu0
  %v8420 = vpop.f32.mrb[0].mxu0
  %v8421 = vadd.f32 0.0, %v8420
  %v8422 = vpop.f32.mrb[0].mxu0
  %8423 = vmatprep.mubr.bf16.mxu0 0
  %8424 = vmatmul.mubr.bf16.gmra.mrb[0].mxu0 %v8311
  %v8425 = vpop.f32.mrb[0].mxu0
  %v8426 = vadd.f32 0.0, %v8425
  %v8427 = vpop.f32.mrb[0].mxu0
  %v8428 = vpop.f32.mrb[0].mxu0
  %v8429 = vadd.f32 0.0, %v8428
  %v8430 = vpop.f32.mrb[0].mxu0
  %8431 = vmatprep.mubr.bf16.mxu0 0
  %8432 = vmatmul.mubr.bf16.gmra.mrb[0].mxu0 %v8312
  %v8433 = vpop.f32.mrb[0].mxu0
  %v8434 = vadd.f32 0.0, %v8433
  %v8435 = vpop.f32.mrb[0].mxu0
  %v8436 = vpop.f32.mrb[0].mxu0
  %v8437 = vadd.f32 0.0, %v8436
  %v8438 = vpop.f32.mrb[0].mxu0
  %8439 = vmatprep.mubr.bf16.mxu0 0
  %8440 = vmatmul.mubr.bf16.gmra.mrb[0].mxu0 %v8313
  %v8441 = vpop.f32.mrb[0].mxu0
  %v8442 = vadd.f32 0.0, %v8441
  %v8443 = vpop.f32.mrb[0].mxu0
  %v8444 = vpop.f32.mrb[0].mxu0
  %v8445 = vadd.f32 0.0, %v8444
  %v8446 = vpop.f32.mrb[0].mxu0
  %8447 = vmatprep.mubr.bf16.mxu0 0
  %8448 = vmatmul.mubr.bf16.gmra.mrb[0].mxu0 %v8314
  %v8449 = vpop.f32.mrb[0].mxu0
  %v8450 = vadd.f32 0.0, %v8449
  %v8451 = vpop.f32.mrb[0].mxu0
  %v8452 = vpop.f32.mrb[0].mxu0
  %v8453 = vadd.f32 0.0, %v8452
  %v8454 = vpop.f32.mrb[0].mxu0
  %8455 = vmatprep.mubr.bf16.mxu0 0
  %8456 = vmatmul.mubr.bf16.gmra.mrb[0].mxu0 %v8315
  %v8457 = vpop.f32.mrb[0].mxu0
  %v8458 = vadd.f32 0.0, %v8457
  %v8459 = vpop.f32.mrb[0].mxu0
  %v8460 = vpop.f32.mrb[0].mxu0
  %v8461 = vadd.f32 0.0, %v8460
  %v8462 = vpop.f32.mrb[0].mxu0
  %8463 = vmatprep.mubr.bf16.mxu0 0
  %8464 = vmatmul.mubr.bf16.gmra.mrb[0].mxu0 %v8316
  %v8465 = vpop.f32.mrb[0].mxu0
  %v8466 = vadd.f32 0.0, %v8465
  %v8467 = vpop.f32.mrb[0].mxu0
  %v8468 = vpop.f32.mrb[0].mxu0
  %v8469 = vadd.f32 0.0, %v8468
  %v8470 = vpop.f32.mrb[0].mxu0
  %8471 = vmatprep.mubr.bf16.mxu0 0
  %8472 = vmatmul.mubr.bf16.gmra.mrb[0].mxu0 %v8317
  %v8473 = vpop.f32.mrb[0].mxu0
  %v8474 = vadd.f32 0.0, %v8473
  %v8475 = vpop.f32.mrb[0].mxu0
  %v8476 = vpop.f32.mrb[0].mxu0
  %v8477 = vadd.f32 0.0, %v8476
  %v8478 = vpop.f32.mrb[0].mxu0
  %8479 = vdwg.mxu0
  %v8480 = vadd.f32 %v8278, %v8418
  %v8481 = vadd.f32 %v8279, %v8421
  %v8482 = vadd.f32 %v8280, %v8426
  %v8483 = vadd.f32 %v8281, %v8429
  %v8484 = vadd.f32 %v8282, %v8434
  %v8485 = vadd.f32 %v8283, %v8437
  %v8486 = vadd.f32 %v8284, %v8442
  %v8487 = vadd.f32 %v8285, %v8445
  %v8488 = vadd.f32 %v8286, %v8450
  %v8489 = vadd.f32 %v8287, %v8453
  %v8490 = vadd.f32 %v8288, %v8458
  %v8491 = vadd.f32 %v8289, %v8461
  %v8492 = vadd.f32 %v8290, %v8466
  %v8493 = vadd.f32 %v8291, %v8469
  %v8494 = vadd.f32 %v8292, %v8474
  %v8495 = vadd.f32 %v8293, %v8477
  %s8496 = scalar_lea.vmem [#allocation2], 48
  %v8497 = vld [vmem:[%s8496] sm:$0xff]
  %v8498 = vld [vmem:[%s8496 + $0x20] sm:$0xff]
  %v8499 = vld [vmem:[%s8496 + $0x40] sm:$0xff]
  %v8500 = vld [vmem:[%s8496 + $0x60] sm:$0xff]
  %v8501 = vld [vmem:[%s8496 + $0x80] sm:$0xff]
  %v8502 = vld [vmem:[%s8496 + $0xa0] sm:$0xff]
  %v8503 = vld [vmem:[%s8496 + $0xc0] sm:$0xff]
  %v8504 = vld [vmem:[%s8496 + $0xe0] sm:$0xff]
  %v8505 = vld [vmem:[%s8496 + $0x120] sm:$0xff]
  %v8506 = vld [vmem:[%s8496 + $0x140] sm:$0xff]
  %v8507 = vld [vmem:[%s8496 + $0x160] sm:$0xff]
  %v8508 = vld [vmem:[%s8496 + $0x180] sm:$0xff]
  %v8509 = vld [vmem:[%s8496 + $0x1a0] sm:$0xff]
  %v8510 = vld [vmem:[%s8496 + $0x1c0] sm:$0xff]
  %v8511 = vld [vmem:[%s8496 + $0x1e0] sm:$0xff]
  %v8512 = vld [vmem:[%s8496 + $0x200] sm:$0xff]
  %v8513 = vpack.c.bf16 %v8498, %v8497
  %v8514 = vpack.c.bf16 %v8500, %v8499
  %v8515 = vpack.c.bf16 %v8502, %v8501
  %v8516 = vpack.c.bf16 %v8504, %v8503
  %v8517 = vpack.c.bf16 %v8506, %v8505
  %v8518 = vpack.c.bf16 %v8508, %v8507
  %v8519 = vpack.c.bf16 %v8510, %v8509
  %v8520 = vpack.c.bf16 %v8512, %v8511
  %s8521 = scalar_lea.vmem %s3, 768
  %v8522 = vld [vmem:[%s8521] sm:$0xf]
  %v8523 = vld [vmem:[%s8521 + $0x4] sm:$0xf]
  %v8524 = vld [vmem:[%s8521 + $0x8] sm:$0xf]
  %v8525 = vld [vmem:[%s8521 + $0xc] sm:$0xf]
  %v8526 = vld [vmem:[%s8521 + $0x10] sm:$0xf]
  %v8527 = vld [vmem:[%s8521 + $0x14] sm:$0xf]
  %v8528 = vld [vmem:[%s8521 + $0x18] sm:$0xf]
  %v8529 = vld [vmem:[%s8521 + $0x1c] sm:$0xf]
  %v8530 = vld [vmem:[%s8521 + $0x20] sm:$0xf]
  %v8531 = vld [vmem:[%s8521 + $0x24] sm:$0xf]
  %v8532 = vld [vmem:[%s8521 + $0x28] sm:$0xf]
  %v8533 = vld [vmem:[%s8521 + $0x2c] sm:$0xf]
  %v8534 = vld [vmem:[%s8521 + $0x30] sm:$0xf]
  %v8535 = vld [vmem:[%s8521 + $0x34] sm:$0xf]
  %v8536 = vld [vmem:[%s8521 + $0x38] sm:$0xf]
  %v8537 = vld [vmem:[%s8521 + $0x3c] sm:$0xf]
  %v8554 = vunpack.c.l.b16 %v8522
  %v8555 = vunpack.c.l.b16 %v8523
  %v8556 = vunpack.c.l.b16 %v8524
  %v8557 = vunpack.c.l.b16 %v8525
  %v8558 = vunpack.c.l.b16 %v8526
  %v8559 = vunpack.c.l.b16 %v8527
  %v8560 = vunpack.c.l.b16 %v8528
  %v8561 = vunpack.c.l.b16 %v8529
  %v8562 = vunpack.c.l.b16 %v8530
  %v8563 = vunpack.c.l.b16 %v8531
  %v8564 = vunpack.c.l.b16 %v8532
  %v8565 = vunpack.c.l.b16 %v8533
  %v8566 = vunpack.c.l.b16 %v8534
  %v8567 = vunpack.c.l.b16 %v8535
  %v8568 = vunpack.c.l.b16 %v8536
  %v8569 = vunpack.c.l.b16 %v8537
  %v8570 = vpack.c.b16 %v8555, %v8554
  %v8571 = vpack.c.b16 %v8557, %v8556
  %v8572 = vpack.c.b16 %v8559, %v8558
  %v8573 = vpack.c.b16 %v8561, %v8560
  %v8574 = vpack.c.b16 %v8563, %v8562
  %v8575 = vpack.c.b16 %v8565, %v8564
  %v8576 = vpack.c.b16 %v8567, %v8566
  %v8577 = vpack.c.b16 %v8569, %v8568
  %8586 = vmatprep.subr.bf16.mxu0 0
  %8587 = vmatpush1.bf16.msra.mxu0 %v8570
  %8588 = vmatprep.subr.bf16.mxu0 0
  %8589 = vmatpush1.bf16.msra.mxu0 %v8571
  %8590 = vmatprep.subr.bf16.mxu0 0
  %8591 = vmatpush1.bf16.msra.mxu0 %v8572
  %8592 = vmatprep.subr.bf16.mxu0 0
  %8593 = vmatpush1.bf16.msra.mxu0 %v8573
  %8594 = vmatprep.subr.bf16.mxu0 0
  %8595 = vmatpush1.bf16.msra.mxu0 %v8574
  %8596 = vmatprep.subr.bf16.mxu0 0
  %8597 = vmatpush1.bf16.msra.mxu0 %v8575
  %8598 = vmatprep.subr.bf16.mxu0 0
  %8599 = vmatpush1.bf16.msra.mxu0 %v8576
  %8600 = vmatprep.subr.bf16.mxu0 0
  %8601 = vmatpush1.bf16.msra.mxu0 %v8577
  %8602 = vmatprep.subr.bf16.mxu0 0
  %8603 = vmatpush1.bf16.msra.mxu0 0
  %8604 = vmatprep.subr.bf16.mxu0 0
  %8605 = vmatpush1.bf16.msra.mxu0 0
  %8606 = vmatprep.subr.bf16.mxu0 0
  %8607 = vmatpush1.bf16.msra.mxu0 0
  %8608 = vmatprep.subr.bf16.mxu0 0
  %8609 = vmatpush1.bf16.msra.mxu0 0
  %8610 = vmatprep.subr.bf16.mxu0 0
  %8611 = vmatpush1.bf16.msra.mxu0 0
  %8612 = vmatprep.subr.bf16.mxu0 0
  %8613 = vmatpush1.bf16.msra.mxu0 0
  %8614 = vmatprep.subr.bf16.mxu0 0
  %8615 = vmatpush1.bf16.msra.mxu0 0
  %8616 = vmatprep.subr.bf16.mxu0 0
  %8617 = vmatpush1.bf16.msra.mxu0 0
  %8618 = vmatprep.mubr.bf16.mxu0 0
  %8619 = vmatmul.mubr.bf16.gmra.mrb[0].mxu0 %v8513
  %v8620 = vpop.f32.mrb[0].mxu0
  %v8621 = vadd.f32 0.0, %v8620
  %v8622 = vpop.f32.mrb[0].mxu0
  %v8623 = vpop.f32.mrb[0].mxu0
  %v8624 = vadd.f32 0.0, %v8623
  %v8625 = vpop.f32.mrb[0].mxu0
  %8626 = vmatprep.mubr.bf16.mxu0 0
  %8627 = vmatmul.mubr.bf16.gmra.mrb[0].mxu0 %v8514
  %v8628 = vpop.f32.mrb[0].mxu0
  %v8629 = vadd.f32 0.0, %v8628
  %v8630 = vpop.f32.mrb[0].mxu0
  %v8631 = vpop.f32.mrb[0].mxu0
  %v8632 = vadd.f32 0.0, %v8631
  %v8633 = vpop.f32.mrb[0].mxu0
  %8634 = vmatprep.mubr.bf16.mxu0 0
  %8635 = vmatmul.mubr.bf16.gmra.mrb[0].mxu0 %v8515
  %v8636 = vpop.f32.mrb[0].mxu0
  %v8637 = vadd.f32 0.0, %v8636
  %v8638 = vpop.f32.mrb[0].mxu0
  %v8639 = vpop.f32.mrb[0].mxu0
  %v8640 = vadd.f32 0.0, %v8639
  %v8641 = vpop.f32.mrb[0].mxu0
  %8642 = vmatprep.mubr.bf16.mxu0 0
  %8643 = vmatmul.mubr.bf16.gmra.mrb[0].mxu0 %v8516
  %v8644 = vpop.f32.mrb[0].mxu0
  %v8645 = vadd.f32 0.0, %v8644
  %v8646 = vpop.f32.mrb[0].mxu0
  %v8647 = vpop.f32.mrb[0].mxu0
  %v8648 = vadd.f32 0.0, %v8647
  %v8649 = vpop.f32.mrb[0].mxu0
  %8650 = vmatprep.mubr.bf16.mxu0 0
  %8651 = vmatmul.mubr.bf16.gmra.mrb[0].mxu0 %v8517
  %v8652 = vpop.f32.mrb[0].mxu0
  %v8653 = vadd.f32 0.0, %v8652
  %v8654 = vpop.f32.mrb[0].mxu0
  %v8655 = vpop.f32.mrb[0].mxu0
  %v8656 = vadd.f32 0.0, %v8655
  %v8657 = vpop.f32.mrb[0].mxu0
  %8658 = vmatprep.mubr.bf16.mxu0 0
  %8659 = vmatmul.mubr.bf16.gmra.mrb[0].mxu0 %v8518
  %v8660 = vpop.f32.mrb[0].mxu0
  %v8661 = vadd.f32 0.0, %v8660
  %v8662 = vpop.f32.mrb[0].mxu0
  %v8663 = vpop.f32.mrb[0].mxu0
  %v8664 = vadd.f32 0.0, %v8663
  %v8665 = vpop.f32.mrb[0].mxu0
  %8666 = vmatprep.mubr.bf16.mxu0 0
  %8667 = vmatmul.mubr.bf16.gmra.mrb[0].mxu0 %v8519
  %v8668 = vpop.f32.mrb[0].mxu0
  %v8669 = vadd.f32 0.0, %v8668
  %v8670 = vpop.f32.mrb[0].mxu0
  %v8671 = vpop.f32.mrb[0].mxu0
  %v8672 = vadd.f32 0.0, %v8671
  %v8673 = vpop.f32.mrb[0].mxu0
  %8674 = vmatprep.mubr.bf16.mxu0 0
  %8675 = vmatmul.mubr.bf16.gmra.mrb[0].mxu0 %v8520
  %v8676 = vpop.f32.mrb[0].mxu0
  %v8677 = vadd.f32 0.0, %v8676
  %v8678 = vpop.f32.mrb[0].mxu0
  %v8679 = vpop.f32.mrb[0].mxu0
  %v8680 = vadd.f32 0.0, %v8679
  %v8681 = vpop.f32.mrb[0].mxu0
  %8682 = vdwg.mxu0
  %v8683 = vadd.f32 %v8480, %v8621
  %v8684 = vadd.f32 %v8481, %v8624
  %v8685 = vadd.f32 %v8482, %v8629
  %v8686 = vadd.f32 %v8483, %v8632
  %v8687 = vadd.f32 %v8484, %v8637
  %v8688 = vadd.f32 %v8485, %v8640
  %v8689 = vadd.f32 %v8486, %v8645
  %v8690 = vadd.f32 %v8487, %v8648
  %v8691 = vadd.f32 %v8488, %v8653
  %v8692 = vadd.f32 %v8489, %v8656
  %v8693 = vadd.f32 %v8490, %v8661
  %v8694 = vadd.f32 %v8491, %v8664
  %v8695 = vadd.f32 %v8492, %v8669
  %v8696 = vadd.f32 %v8493, %v8672
  %v8697 = vadd.f32 %v8494, %v8677
  %v8698 = vadd.f32 %v8495, %v8680
  %s8699 = scalar_lea.vmem [#allocation3], 48
  %v8700 = vld [vmem:[%s8699] sm:$0xff]
  %v8701 = vld [vmem:[%s8699 + $0x20] sm:$0xff]
  %v8702 = vld [vmem:[%s8699 + $0x40] sm:$0xff]
  %v8703 = vld [vmem:[%s8699 + $0x60] sm:$0xff]
  %v8704 = vld [vmem:[%s8699 + $0x80] sm:$0xff]
  %v8705 = vld [vmem:[%s8699 + $0xa0] sm:$0xff]
  %v8706 = vld [vmem:[%s8699 + $0xc0] sm:$0xff]
  %v8707 = vld [vmem:[%s8699 + $0xe0] sm:$0xff]
  %v8708 = vld [vmem:[%s8699 + $0x120] sm:$0xff]
  %v8709 = vld [vmem:[%s8699 + $0x140] sm:$0xff]
  %v8710 = vld [vmem:[%s8699 + $0x160] sm:$0xff]
  %v8711 = vld [vmem:[%s8699 + $0x180] sm:$0xff]
  %v8712 = vld [vmem:[%s8699 + $0x1a0] sm:$0xff]
  %v8713 = vld [vmem:[%s8699 + $0x1c0] sm:$0xff]
  %v8714 = vld [vmem:[%s8699 + $0x1e0] sm:$0xff]
  %v8715 = vld [vmem:[%s8699 + $0x200] sm:$0xff]
  %v8716 = vpack.c.bf16 %v8701, %v8700
  %v8717 = vpack.c.bf16 %v8703, %v8702
  %v8718 = vpack.c.bf16 %v8705, %v8704
  %v8719 = vpack.c.bf16 %v8707, %v8706
  %v8720 = vpack.c.bf16 %v8709, %v8708
  %v8721 = vpack.c.bf16 %v8711, %v8710
  %v8722 = vpack.c.bf16 %v8713, %v8712
  %v8723 = vpack.c.bf16 %v8715, %v8714
  %s8724 = scalar_lea.vmem %s3, 832
  %v8725 = vld [vmem:[%s8724] sm:$0xf]
  %v8726 = vld [vmem:[%s8724 + $0x4] sm:$0xf]
  %v8727 = vld [vmem:[%s8724 + $0x8] sm:$0xf]
  %v8728 = vld [vmem:[%s8724 + $0xc] sm:$0xf]
  %v8729 = vld [vmem:[%s8724 + $0x10] sm:$0xf]
  %v8730 = vld [vmem:[%s8724 + $0x14] sm:$0xf]
  %v8731 = vld [vmem:[%s8724 + $0x18] sm:$0xf]
  %v8732 = vld [vmem:[%s8724 + $0x1c] sm:$0xf]
  %v8733 = vld [vmem:[%s8724 + $0x20] sm:$0xf]
  %v8734 = vld [vmem:[%s8724 + $0x24] sm:$0xf]
  %v8735 = vld [vmem:[%s8724 + $0x28] sm:$0xf]
  %v8736 = vld [vmem:[%s8724 + $0x2c] sm:$0xf]
  %v8737 = vld [vmem:[%s8724 + $0x30] sm:$0xf]
  %v8738 = vld [vmem:[%s8724 + $0x34] sm:$0xf]
  %v8739 = vld [vmem:[%s8724 + $0x38] sm:$0xf]
  %v8740 = vld [vmem:[%s8724 + $0x3c] sm:$0xf]
  %v8757 = vunpack.c.l.b16 %v8725
  %v8758 = vunpack.c.l.b16 %v8726
  %v8759 = vunpack.c.l.b16 %v8727
  %v8760 = vunpack.c.l.b16 %v8728
  %v8761 = vunpack.c.l.b16 %v8729
  %v8762 = vunpack.c.l.b16 %v8730
  %v8763 = vunpack.c.l.b16 %v8731
  %v8764 = vunpack.c.l.b16 %v8732
  %v8765 = vunpack.c.l.b16 %v8733
  %v8766 = vunpack.c.l.b16 %v8734
  %v8767 = vunpack.c.l.b16 %v8735
  %v8768 = vunpack.c.l.b16 %v8736
  %v8769 = vunpack.c.l.b16 %v8737
  %v8770 = vunpack.c.l.b16 %v8738
  %v8771 = vunpack.c.l.b16 %v8739
  %v8772 = vunpack.c.l.b16 %v8740
  %v8773 = vpack.c.b16 %v8758, %v8757
  %v8774 = vpack.c.b16 %v8760, %v8759
  %v8775 = vpack.c.b16 %v8762, %v8761
  %v8776 = vpack.c.b16 %v8764, %v8763
  %v8777 = vpack.c.b16 %v8766, %v8765
  %v8778 = vpack.c.b16 %v8768, %v8767
  %v8779 = vpack.c.b16 %v8770, %v8769
  %v8780 = vpack.c.b16 %v8772, %v8771
  %8789 = vmatprep.subr.bf16.mxu0 0
  %8790 = vmatpush1.bf16.msra.mxu0 %v8773
  %8791 = vmatprep.subr.bf16.mxu0 0
  %8792 = vmatpush1.bf16.msra.mxu0 %v8774
  %8793 = vmatprep.subr.bf16.mxu0 0
  %8794 = vmatpush1.bf16.msra.mxu0 %v8775
  %8795 = vmatprep.subr.bf16.mxu0 0
  %8796 = vmatpush1.bf16.msra.mxu0 %v8776
  %8797 = vmatprep.subr.bf16.mxu0 0
  %8798 = vmatpush1.bf16.msra.mxu0 %v8777
  %8799 = vmatprep.subr.bf16.mxu0 0
  %8800 = vmatpush1.bf16.msra.mxu0 %v8778
  %8801 = vmatprep.subr.bf16.mxu0 0
  %8802 = vmatpush1.bf16.msra.mxu0 %v8779
  %8803 = vmatprep.subr.bf16.mxu0 0
  %8804 = vmatpush1.bf16.msra.mxu0 %v8780
  %8805 = vmatprep.subr.bf16.mxu0 0
  %8806 = vmatpush1.bf16.msra.mxu0 0
  %8807 = vmatprep.subr.bf16.mxu0 0
  %8808 = vmatpush1.bf16.msra.mxu0 0
  %8809 = vmatprep.subr.bf16.mxu0 0
  %8810 = vmatpush1.bf16.msra.mxu0 0
  %8811 = vmatprep.subr.bf16.mxu0 0
  %8812 = vmatpush1.bf16.msra.mxu0 0
  %8813 = vmatprep.subr.bf16.mxu0 0
  %8814 = vmatpush1.bf16.msra.mxu0 0
  %8815 = vmatprep.subr.bf16.mxu0 0
  %8816 = vmatpush1.bf16.msra.mxu0 0
  %8817 = vmatprep.subr.bf16.mxu0 0
  %8818 = vmatpush1.bf16.msra.mxu0 0
  %8819 = vmatprep.subr.bf16.mxu0 0
  %8820 = vmatpush1.bf16.msra.mxu0 0
  %8821 = vmatprep.mubr.bf16.mxu0 0
  %8822 = vmatmul.mubr.bf16.gmra.mrb[0].mxu0 %v8716
  %v8823 = vpop.f32.mrb[0].mxu0
  %v8824 = vadd.f32 0.0, %v8823
  %v8825 = vpop.f32.mrb[0].mxu0
  %v8826 = vpop.f32.mrb[0].mxu0
  %v8827 = vadd.f32 0.0, %v8826
  %v8828 = vpop.f32.mrb[0].mxu0
  %8829 = vmatprep.mubr.bf16.mxu0 0
  %8830 = vmatmul.mubr.bf16.gmra.mrb[0].mxu0 %v8717
  %v8831 = vpop.f32.mrb[0].mxu0
  %v8832 = vadd.f32 0.0, %v8831
  %v8833 = vpop.f32.mrb[0].mxu0
  %v8834 = vpop.f32.mrb[0].mxu0
  %v8835 = vadd.f32 0.0, %v8834
  %v8836 = vpop.f32.mrb[0].mxu0
  %8837 = vmatprep.mubr.bf16.mxu0 0
  %8838 = vmatmul.mubr.bf16.gmra.mrb[0].mxu0 %v8718
  %v8839 = vpop.f32.mrb[0].mxu0
  %v8840 = vadd.f32 0.0, %v8839
  %v8841 = vpop.f32.mrb[0].mxu0
  %v8842 = vpop.f32.mrb[0].mxu0
  %v8843 = vadd.f32 0.0, %v8842
  %v8844 = vpop.f32.mrb[0].mxu0
  %8845 = vmatprep.mubr.bf16.mxu0 0
  %8846 = vmatmul.mubr.bf16.gmra.mrb[0].mxu0 %v8719
  %v8847 = vpop.f32.mrb[0].mxu0
  %v8848 = vadd.f32 0.0, %v8847
  %v8849 = vpop.f32.mrb[0].mxu0
  %v8850 = vpop.f32.mrb[0].mxu0
  %v8851 = vadd.f32 0.0, %v8850
  %v8852 = vpop.f32.mrb[0].mxu0
  %8853 = vmatprep.mubr.bf16.mxu0 0
  %8854 = vmatmul.mubr.bf16.gmra.mrb[0].mxu0 %v8720
  %v8855 = vpop.f32.mrb[0].mxu0
  %v8856 = vadd.f32 0.0, %v8855
  %v8857 = vpop.f32.mrb[0].mxu0
  %v8858 = vpop.f32.mrb[0].mxu0
  %v8859 = vadd.f32 0.0, %v8858
  %v8860 = vpop.f32.mrb[0].mxu0
  %8861 = vmatprep.mubr.bf16.mxu0 0
  %8862 = vmatmul.mubr.bf16.gmra.mrb[0].mxu0 %v8721
  %v8863 = vpop.f32.mrb[0].mxu0
  %v8864 = vadd.f32 0.0, %v8863
  %v8865 = vpop.f32.mrb[0].mxu0
  %v8866 = vpop.f32.mrb[0].mxu0
  %v8867 = vadd.f32 0.0, %v8866
  %v8868 = vpop.f32.mrb[0].mxu0
  %8869 = vmatprep.mubr.bf16.mxu0 0
  %8870 = vmatmul.mubr.bf16.gmra.mrb[0].mxu0 %v8722
  %v8871 = vpop.f32.mrb[0].mxu0
  %v8872 = vadd.f32 0.0, %v8871
  %v8873 = vpop.f32.mrb[0].mxu0
  %v8874 = vpop.f32.mrb[0].mxu0
  %v8875 = vadd.f32 0.0, %v8874
  %v8876 = vpop.f32.mrb[0].mxu0
  %8877 = vmatprep.mubr.bf16.mxu0 0
  %8878 = vmatmul.mubr.bf16.gmra.mrb[0].mxu0 %v8723
  %v8879 = vpop.f32.mrb[0].mxu0
  %v8880 = vadd.f32 0.0, %v8879
  %v8881 = vpop.f32.mrb[0].mxu0
  %v8882 = vpop.f32.mrb[0].mxu0
  %v8883 = vadd.f32 0.0, %v8882
  %v8884 = vpop.f32.mrb[0].mxu0
  %8885 = vdwg.mxu0
  %v8886 = vadd.f32 %v8683, %v8824
  %v8887 = vadd.f32 %v8684, %v8827
  %v8888 = vadd.f32 %v8685, %v8832
  %v8889 = vadd.f32 %v8686, %v8835
  %v8890 = vadd.f32 %v8687, %v8840
  %v8891 = vadd.f32 %v8688, %v8843
  %v8892 = vadd.f32 %v8689, %v8848
  %v8893 = vadd.f32 %v8690, %v8851
  %v8894 = vadd.f32 %v8691, %v8856
  %v8895 = vadd.f32 %v8692, %v8859
  %v8896 = vadd.f32 %v8693, %v8864
  %v8897 = vadd.f32 %v8694, %v8867
  %v8898 = vadd.f32 %v8695, %v8872
  %v8899 = vadd.f32 %v8696, %v8875
  %v8900 = vadd.f32 %v8697, %v8880
  %v8901 = vadd.f32 %v8698, %v8883
  %v8902 = vld [vmem:[%s8496 + $0x1] sm:$0xff]
  %v8903 = vld [vmem:[%s8496 + $0x21] sm:$0xff]
  %v8904 = vld [vmem:[%s8496 + $0x41] sm:$0xff]
  %v8905 = vld [vmem:[%s8496 + $0x61] sm:$0xff]
  %v8906 = vld [vmem:[%s8496 + $0x81] sm:$0xff]
  %v8907 = vld [vmem:[%s8496 + $0xa1] sm:$0xff]
  %v8908 = vld [vmem:[%s8496 + $0xc1] sm:$0xff]
  %v8909 = vld [vmem:[%s8496 + $0xe1] sm:$0xff]
  %v8910 = vld [vmem:[%s8496 + $0x121] sm:$0xff]
  %v8911 = vld [vmem:[%s8496 + $0x141] sm:$0xff]
  %v8912 = vld [vmem:[%s8496 + $0x161] sm:$0xff]
  %v8913 = vld [vmem:[%s8496 + $0x181] sm:$0xff]
  %v8914 = vld [vmem:[%s8496 + $0x1a1] sm:$0xff]
  %v8915 = vld [vmem:[%s8496 + $0x1c1] sm:$0xff]
  %v8916 = vld [vmem:[%s8496 + $0x1e1] sm:$0xff]
  %v8917 = vld [vmem:[%s8496 + $0x201] sm:$0xff]
  %v8918 = vpack.c.bf16 %v8903, %v8902
  %v8919 = vpack.c.bf16 %v8905, %v8904
  %v8920 = vpack.c.bf16 %v8907, %v8906
  %v8921 = vpack.c.bf16 %v8909, %v8908
  %v8922 = vpack.c.bf16 %v8911, %v8910
  %v8923 = vpack.c.bf16 %v8913, %v8912
  %v8924 = vpack.c.bf16 %v8915, %v8914
  %v8925 = vpack.c.bf16 %v8917, %v8916
  %s8926 = scalar_lea.vmem %s3, 896
  %v8927 = vld [vmem:[%s8926] sm:$0xf]
  %v8928 = vld [vmem:[%s8926 + $0x4] sm:$0xf]
  %v8929 = vld [vmem:[%s8926 + $0x8] sm:$0xf]
  %v8930 = vld [vmem:[%s8926 + $0xc] sm:$0xf]
  %v8931 = vld [vmem:[%s8926 + $0x10] sm:$0xf]
  %v8932 = vld [vmem:[%s8926 + $0x14] sm:$0xf]
  %v8933 = vld [vmem:[%s8926 + $0x18] sm:$0xf]
  %v8934 = vld [vmem:[%s8926 + $0x1c] sm:$0xf]
  %v8935 = vld [vmem:[%s8926 + $0x20] sm:$0xf]
  %v8936 = vld [vmem:[%s8926 + $0x24] sm:$0xf]
  %v8937 = vld [vmem:[%s8926 + $0x28] sm:$0xf]
  %v8938 = vld [vmem:[%s8926 + $0x2c] sm:$0xf]
  %v8939 = vld [vmem:[%s8926 + $0x30] sm:$0xf]
  %v8940 = vld [vmem:[%s8926 + $0x34] sm:$0xf]
  %v8941 = vld [vmem:[%s8926 + $0x38] sm:$0xf]
  %v8942 = vld [vmem:[%s8926 + $0x3c] sm:$0xf]
  %v8959 = vunpack.c.l.b16 %v8927
  %v8960 = vunpack.c.l.b16 %v8928
  %v8961 = vunpack.c.l.b16 %v8929
  %v8962 = vunpack.c.l.b16 %v8930
  %v8963 = vunpack.c.l.b16 %v8931
  %v8964 = vunpack.c.l.b16 %v8932
  %v8965 = vunpack.c.l.b16 %v8933
  %v8966 = vunpack.c.l.b16 %v8934
  %v8967 = vunpack.c.l.b16 %v8935
  %v8968 = vunpack.c.l.b16 %v8936
  %v8969 = vunpack.c.l.b16 %v8937
  %v8970 = vunpack.c.l.b16 %v8938
  %v8971 = vunpack.c.l.b16 %v8939
  %v8972 = vunpack.c.l.b16 %v8940
  %v8973 = vunpack.c.l.b16 %v8941
  %v8974 = vunpack.c.l.b16 %v8942
  %v8975 = vpack.c.b16 %v8960, %v8959
  %v8976 = vpack.c.b16 %v8962, %v8961
  %v8977 = vpack.c.b16 %v8964, %v8963
  %v8978 = vpack.c.b16 %v8966, %v8965
  %v8979 = vpack.c.b16 %v8968, %v8967
  %v8980 = vpack.c.b16 %v8970, %v8969
  %v8981 = vpack.c.b16 %v8972, %v8971
  %v8982 = vpack.c.b16 %v8974, %v8973
  %8991 = vmatprep.subr.bf16.mxu0 0
  %8992 = vmatpush1.bf16.msra.mxu0 %v8975
  %8993 = vmatprep.subr.bf16.mxu0 0
  %8994 = vmatpush1.bf16.msra.mxu0 %v8976
  %8995 = vmatprep.subr.bf16.mxu0 0
  %8996 = vmatpush1.bf16.msra.mxu0 %v8977
  %8997 = vmatprep.subr.bf16.mxu0 0
  %8998 = vmatpush1.bf16.msra.mxu0 %v8978
  %8999 = vmatprep.subr.bf16.mxu0 0
  %9000 = vmatpush1.bf16.msra.mxu0 %v8979
  %9001 = vmatprep.subr.bf16.mxu0 0
  %9002 = vmatpush1.bf16.msra.mxu0 %v8980
  %9003 = vmatprep.subr.bf16.mxu0 0
  %9004 = vmatpush1.bf16.msra.mxu0 %v8981
  %9005 = vmatprep.subr.bf16.mxu0 0
  %9006 = vmatpush1.bf16.msra.mxu0 %v8982
  %9007 = vmatprep.subr.bf16.mxu0 0
  %9008 = vmatpush1.bf16.msra.mxu0 0
  %9009 = vmatprep.subr.bf16.mxu0 0
  %9010 = vmatpush1.bf16.msra.mxu0 0
  %9011 = vmatprep.subr.bf16.mxu0 0
  %9012 = vmatpush1.bf16.msra.mxu0 0
  %9013 = vmatprep.subr.bf16.mxu0 0
  %9014 = vmatpush1.bf16.msra.mxu0 0
  %9015 = vmatprep.subr.bf16.mxu0 0
  %9016 = vmatpush1.bf16.msra.mxu0 0
  %9017 = vmatprep.subr.bf16.mxu0 0
  %9018 = vmatpush1.bf16.msra.mxu0 0
  %9019 = vmatprep.subr.bf16.mxu0 0
  %9020 = vmatpush1.bf16.msra.mxu0 0
  %9021 = vmatprep.subr.bf16.mxu0 0
  %9022 = vmatpush1.bf16.msra.mxu0 0
  %9023 = vmatprep.mubr.bf16.mxu0 0
  %9024 = vmatmul.mubr.bf16.gmra.mrb[0].mxu0 %v8918
  %v9025 = vpop.f32.mrb[0].mxu0
  %v9026 = vadd.f32 0.0, %v9025
  %v9027 = vpop.f32.mrb[0].mxu0
  %v9028 = vpop.f32.mrb[0].mxu0
  %v9029 = vadd.f32 0.0, %v9028
  %v9030 = vpop.f32.mrb[0].mxu0
  %9031 = vmatprep.mubr.bf16.mxu0 0
  %9032 = vmatmul.mubr.bf16.gmra.mrb[0].mxu0 %v8919
  %v9033 = vpop.f32.mrb[0].mxu0
  %v9034 = vadd.f32 0.0, %v9033
  %v9035 = vpop.f32.mrb[0].mxu0
  %v9036 = vpop.f32.mrb[0].mxu0
  %v9037 = vadd.f32 0.0, %v9036
  %v9038 = vpop.f32.mrb[0].mxu0
  %9039 = vmatprep.mubr.bf16.mxu0 0
  %9040 = vmatmul.mubr.bf16.gmra.mrb[0].mxu0 %v8920
  %v9041 = vpop.f32.mrb[0].mxu0
  %v9042 = vadd.f32 0.0, %v9041
  %v9043 = vpop.f32.mrb[0].mxu0
  %v9044 = vpop.f32.mrb[0].mxu0
  %v9045 = vadd.f32 0.0, %v9044
  %v9046 = vpop.f32.mrb[0].mxu0
  %9047 = vmatprep.mubr.bf16.mxu0 0
  %9048 = vmatmul.mubr.bf16.gmra.mrb[0].mxu0 %v8921
  %v9049 = vpop.f32.mrb[0].mxu0
  %v9050 = vadd.f32 0.0, %v9049
  %v9051 = vpop.f32.mrb[0].mxu0
  %v9052 = vpop.f32.mrb[0].mxu0
  %v9053 = vadd.f32 0.0, %v9052
  %v9054 = vpop.f32.mrb[0].mxu0
  %9055 = vmatprep.mubr.bf16.mxu0 0
  %9056 = vmatmul.mubr.bf16.gmra.mrb[0].mxu0 %v8922
  %v9057 = vpop.f32.mrb[0].mxu0
  %v9058 = vadd.f32 0.0, %v9057
  %v9059 = vpop.f32.mrb[0].mxu0
  %v9060 = vpop.f32.mrb[0].mxu0
  %v9061 = vadd.f32 0.0, %v9060
  %v9062 = vpop.f32.mrb[0].mxu0
  %9063 = vmatprep.mubr.bf16.mxu0 0
  %9064 = vmatmul.mubr.bf16.gmra.mrb[0].mxu0 %v8923
  %v9065 = vpop.f32.mrb[0].mxu0
  %v9066 = vadd.f32 0.0, %v9065
  %v9067 = vpop.f32.mrb[0].mxu0
  %v9068 = vpop.f32.mrb[0].mxu0
  %v9069 = vadd.f32 0.0, %v9068
  %v9070 = vpop.f32.mrb[0].mxu0
  %9071 = vmatprep.mubr.bf16.mxu0 0
  %9072 = vmatmul.mubr.bf16.gmra.mrb[0].mxu0 %v8924
  %v9073 = vpop.f32.mrb[0].mxu0
  %v9074 = vadd.f32 0.0, %v9073
  %v9075 = vpop.f32.mrb[0].mxu0
  %v9076 = vpop.f32.mrb[0].mxu0
  %v9077 = vadd.f32 0.0, %v9076
  %v9078 = vpop.f32.mrb[0].mxu0
  %9079 = vmatprep.mubr.bf16.mxu0 0
  %9080 = vmatmul.mubr.bf16.gmra.mrb[0].mxu0 %v8925
  %v9081 = vpop.f32.mrb[0].mxu0
  %v9082 = vadd.f32 0.0, %v9081
  %v9083 = vpop.f32.mrb[0].mxu0
  %v9084 = vpop.f32.mrb[0].mxu0
  %v9085 = vadd.f32 0.0, %v9084
  %v9086 = vpop.f32.mrb[0].mxu0
  %9087 = vdwg.mxu0
  %v9088 = vadd.f32 %v8886, %v9026
  %v9089 = vadd.f32 %v8887, %v9029
  %v9090 = vadd.f32 %v8888, %v9034
  %v9091 = vadd.f32 %v8889, %v9037
  %v9092 = vadd.f32 %v8890, %v9042
  %v9093 = vadd.f32 %v8891, %v9045
  %v9094 = vadd.f32 %v8892, %v9050
  %v9095 = vadd.f32 %v8893, %v9053
  %v9096 = vadd.f32 %v8894, %v9058
  %v9097 = vadd.f32 %v8895, %v9061
  %v9098 = vadd.f32 %v8896, %v9066
  %v9099 = vadd.f32 %v8897, %v9069
  %v9100 = vadd.f32 %v8898, %v9074
  %v9101 = vadd.f32 %v8899, %v9077
  %v9102 = vadd.f32 %v8900, %v9082
  %v9103 = vadd.f32 %v8901, %v9085
  %v9104 = vld [vmem:[%s8699 + $0x1] sm:$0xff]
  %v9105 = vld [vmem:[%s8699 + $0x21] sm:$0xff]
  %v9106 = vld [vmem:[%s8699 + $0x41] sm:$0xff]
  %v9107 = vld [vmem:[%s8699 + $0x61] sm:$0xff]
  %v9108 = vld [vmem:[%s8699 + $0x81] sm:$0xff]
  %v9109 = vld [vmem:[%s8699 + $0xa1] sm:$0xff]
  %v9110 = vld [vmem:[%s8699 + $0xc1] sm:$0xff]
  %v9111 = vld [vmem:[%s8699 + $0xe1] sm:$0xff]
  %v9112 = vld [vmem:[%s8699 + $0x121] sm:$0xff]
  %v9113 = vld [vmem:[%s8699 + $0x141] sm:$0xff]
  %v9114 = vld [vmem:[%s8699 + $0x161] sm:$0xff]
  %v9115 = vld [vmem:[%s8699 + $0x181] sm:$0xff]
  %v9116 = vld [vmem:[%s8699 + $0x1a1] sm:$0xff]
  %v9117 = vld [vmem:[%s8699 + $0x1c1] sm:$0xff]
  %v9118 = vld [vmem:[%s8699 + $0x1e1] sm:$0xff]
  %v9119 = vld [vmem:[%s8699 + $0x201] sm:$0xff]
  %v9120 = vpack.c.bf16 %v9105, %v9104
  %v9121 = vpack.c.bf16 %v9107, %v9106
  %v9122 = vpack.c.bf16 %v9109, %v9108
  %v9123 = vpack.c.bf16 %v9111, %v9110
  %v9124 = vpack.c.bf16 %v9113, %v9112
  %v9125 = vpack.c.bf16 %v9115, %v9114
  %v9126 = vpack.c.bf16 %v9117, %v9116
  %v9127 = vpack.c.bf16 %v9119, %v9118
  %s9128 = scalar_lea.vmem %s3, 960
  %v9129 = vld [vmem:[%s9128] sm:$0xf]
  %v9130 = vld [vmem:[%s9128 + $0x4] sm:$0xf]
  %v9131 = vld [vmem:[%s9128 + $0x8] sm:$0xf]
  %v9132 = vld [vmem:[%s9128 + $0xc] sm:$0xf]
  %v9133 = vld [vmem:[%s9128 + $0x10] sm:$0xf]
  %v9134 = vld [vmem:[%s9128 + $0x14] sm:$0xf]
  %v9135 = vld [vmem:[%s9128 + $0x18] sm:$0xf]
  %v9136 = vld [vmem:[%s9128 + $0x1c] sm:$0xf]
  %v9137 = vld [vmem:[%s9128 + $0x20] sm:$0xf]
  %v9138 = vld [vmem:[%s9128 + $0x24] sm:$0xf]
  %v9139 = vld [vmem:[%s9128 + $0x28] sm:$0xf]
  %v9140 = vld [vmem:[%s9128 + $0x2c] sm:$0xf]
  %v9141 = vld [vmem:[%s9128 + $0x30] sm:$0xf]
  %v9142 = vld [vmem:[%s9128 + $0x34] sm:$0xf]
  %v9143 = vld [vmem:[%s9128 + $0x38] sm:$0xf]
  %v9144 = vld [vmem:[%s9128 + $0x3c] sm:$0xf]
  %v9161 = vunpack.c.l.b16 %v9129
  %v9162 = vunpack.c.l.b16 %v9130
  %v9163 = vunpack.c.l.b16 %v9131
  %v9164 = vunpack.c.l.b16 %v9132
  %v9165 = vunpack.c.l.b16 %v9133
  %v9166 = vunpack.c.l.b16 %v9134
  %v9167 = vunpack.c.l.b16 %v9135
  %v9168 = vunpack.c.l.b16 %v9136
  %v9169 = vunpack.c.l.b16 %v9137
  %v9170 = vunpack.c.l.b16 %v9138
  %v9171 = vunpack.c.l.b16 %v9139
  %v9172 = vunpack.c.l.b16 %v9140
  %v9173 = vunpack.c.l.b16 %v9141
  %v9174 = vunpack.c.l.b16 %v9142
  %v9175 = vunpack.c.l.b16 %v9143
  %v9176 = vunpack.c.l.b16 %v9144
  %v9177 = vpack.c.b16 %v9162, %v9161
  %v9178 = vpack.c.b16 %v9164, %v9163
  %v9179 = vpack.c.b16 %v9166, %v9165
  %v9180 = vpack.c.b16 %v9168, %v9167
  %v9181 = vpack.c.b16 %v9170, %v9169
  %v9182 = vpack.c.b16 %v9172, %v9171
  %v9183 = vpack.c.b16 %v9174, %v9173
  %v9184 = vpack.c.b16 %v9176, %v9175
  %9193 = vmatprep.subr.bf16.mxu0 0
  %9194 = vmatpush1.bf16.msra.mxu0 %v9177
  %9195 = vmatprep.subr.bf16.mxu0 0
  %9196 = vmatpush1.bf16.msra.mxu0 %v9178
  %9197 = vmatprep.subr.bf16.mxu0 0
  %9198 = vmatpush1.bf16.msra.mxu0 %v9179
  %9199 = vmatprep.subr.bf16.mxu0 0
  %9200 = vmatpush1.bf16.msra.mxu0 %v9180
  %9201 = vmatprep.subr.bf16.mxu0 0
  %9202 = vmatpush1.bf16.msra.mxu0 %v9181
  %9203 = vmatprep.subr.bf16.mxu0 0
  %9204 = vmatpush1.bf16.msra.mxu0 %v9182
  %9205 = vmatprep.subr.bf16.mxu0 0
  %9206 = vmatpush1.bf16.msra.mxu0 %v9183
  %9207 = vmatprep.subr.bf16.mxu0 0
  %9208 = vmatpush1.bf16.msra.mxu0 %v9184
  %9209 = vmatprep.subr.bf16.mxu0 0
  %9210 = vmatpush1.bf16.msra.mxu0 0
  %9211 = vmatprep.subr.bf16.mxu0 0
  %9212 = vmatpush1.bf16.msra.mxu0 0
  %9213 = vmatprep.subr.bf16.mxu0 0
  %9214 = vmatpush1.bf16.msra.mxu0 0
  %9215 = vmatprep.subr.bf16.mxu0 0
  %9216 = vmatpush1.bf16.msra.mxu0 0
  %9217 = vmatprep.subr.bf16.mxu0 0
  %9218 = vmatpush1.bf16.msra.mxu0 0
  %9219 = vmatprep.subr.bf16.mxu0 0
  %9220 = vmatpush1.bf16.msra.mxu0 0
  %9221 = vmatprep.subr.bf16.mxu0 0
  %9222 = vmatpush1.bf16.msra.mxu0 0
  %9223 = vmatprep.subr.bf16.mxu0 0
  %9224 = vmatpush1.bf16.msra.mxu0 0
  %9225 = vmatprep.mubr.bf16.mxu0 0
  %9226 = vmatmul.mubr.bf16.gmra.mrb[0].mxu0 %v9120
  %v9227 = vpop.f32.mrb[0].mxu0
  %v9228 = vadd.f32 0.0, %v9227
  %v9229 = vpop.f32.mrb[0].mxu0
  %v9230 = vpop.f32.mrb[0].mxu0
  %v9231 = vadd.f32 0.0, %v9230
  %v9232 = vpop.f32.mrb[0].mxu0
  %9233 = vmatprep.mubr.bf16.mxu0 0
  %9234 = vmatmul.mubr.bf16.gmra.mrb[0].mxu0 %v9121
  %v9235 = vpop.f32.mrb[0].mxu0
  %v9236 = vadd.f32 0.0, %v9235
  %v9237 = vpop.f32.mrb[0].mxu0
  %v9238 = vpop.f32.mrb[0].mxu0
  %v9239 = vadd.f32 0.0, %v9238
  %v9240 = vpop.f32.mrb[0].mxu0
  %9241 = vmatprep.mubr.bf16.mxu0 0
  %9242 = vmatmul.mubr.bf16.gmra.mrb[0].mxu0 %v9122
  %v9243 = vpop.f32.mrb[0].mxu0
  %v9244 = vadd.f32 0.0, %v9243
  %v9245 = vpop.f32.mrb[0].mxu0
  %v9246 = vpop.f32.mrb[0].mxu0
  %v9247 = vadd.f32 0.0, %v9246
  %v9248 = vpop.f32.mrb[0].mxu0
  %9249 = vmatprep.mubr.bf16.mxu0 0
  %9250 = vmatmul.mubr.bf16.gmra.mrb[0].mxu0 %v9123
  %v9251 = vpop.f32.mrb[0].mxu0
  %v9252 = vadd.f32 0.0, %v9251
  %v9253 = vpop.f32.mrb[0].mxu0
  %v9254 = vpop.f32.mrb[0].mxu0
  %v9255 = vadd.f32 0.0, %v9254
  %v9256 = vpop.f32.mrb[0].mxu0
  %9257 = vmatprep.mubr.bf16.mxu0 0
  %9258 = vmatmul.mubr.bf16.gmra.mrb[0].mxu0 %v9124
  %v9259 = vpop.f32.mrb[0].mxu0
  %v9260 = vadd.f32 0.0, %v9259
  %v9261 = vpop.f32.mrb[0].mxu0
  %v9262 = vpop.f32.mrb[0].mxu0
  %v9263 = vadd.f32 0.0, %v9262
  %v9264 = vpop.f32.mrb[0].mxu0
  %9265 = vmatprep.mubr.bf16.mxu0 0
  %9266 = vmatmul.mubr.bf16.gmra.mrb[0].mxu0 %v9125
  %v9267 = vpop.f32.mrb[0].mxu0
  %v9268 = vadd.f32 0.0, %v9267
  %v9269 = vpop.f32.mrb[0].mxu0
  %v9270 = vpop.f32.mrb[0].mxu0
  %v9271 = vadd.f32 0.0, %v9270
  %v9272 = vpop.f32.mrb[0].mxu0
  %9273 = vmatprep.mubr.bf16.mxu0 0
  %9274 = vmatmul.mubr.bf16.gmra.mrb[0].mxu0 %v9126
  %v9275 = vpop.f32.mrb[0].mxu0
  %v9276 = vadd.f32 0.0, %v9275
  %v9277 = vpop.f32.mrb[0].mxu0
  %v9278 = vpop.f32.mrb[0].mxu0
  %v9279 = vadd.f32 0.0, %v9278
  %v9280 = vpop.f32.mrb[0].mxu0
  %9281 = vmatprep.mubr.bf16.mxu0 0
  %9282 = vmatmul.mubr.bf16.gmra.mrb[0].mxu0 %v9127
  %v9283 = vpop.f32.mrb[0].mxu0
  %v9284 = vadd.f32 0.0, %v9283
  %v9285 = vpop.f32.mrb[0].mxu0
  %v9286 = vpop.f32.mrb[0].mxu0
  %v9287 = vadd.f32 0.0, %v9286
  %v9288 = vpop.f32.mrb[0].mxu0
  %9289 = vdwg.mxu0
  %v9290 = vadd.f32 %v9088, %v9228
  %v9291 = vadd.f32 %v9089, %v9231
  %v9292 = vadd.f32 %v9090, %v9236
  %v9293 = vadd.f32 %v9091, %v9239
  %v9294 = vadd.f32 %v9092, %v9244
  %v9295 = vadd.f32 %v9093, %v9247
  %v9296 = vadd.f32 %v9094, %v9252
  %v9297 = vadd.f32 %v9095, %v9255
  %v9298 = vadd.f32 %v9096, %v9260
  %v9299 = vadd.f32 %v9097, %v9263
  %v9300 = vadd.f32 %v9098, %v9268
  %v9301 = vadd.f32 %v9099, %v9271
  %v9302 = vadd.f32 %v9100, %v9276
  %v9303 = vadd.f32 %v9101, %v9279
  %v9304 = vadd.f32 %v9102, %v9284
  %v9305 = vadd.f32 %v9103, %v9287
  %v9306 = vld [vmem:[%s5] sm:$0xff]
  %v9307 = vld [vmem:[%s5 + $0x8] sm:$0xff]
  %v9308 = vld [vmem:[%s5 + $0x10] sm:$0xff]
  %v9309 = vld [vmem:[%s5 + $0x18] sm:$0xff]
  %v9310 = vld [vmem:[%s5 + $0x20] sm:$0xff]
  %v9311 = vld [vmem:[%s5 + $0x28] sm:$0xff]
  %v9312 = vld [vmem:[%s5 + $0x30] sm:$0xff]
  %v9313 = vld [vmem:[%s5 + $0x38] sm:$0xff]
  %v9314 = vld [vmem:[%s5 + $0x40] sm:$0xff]
  %v9315 = vld [vmem:[%s5 + $0x48] sm:$0xff]
  %v9316 = vld [vmem:[%s5 + $0x50] sm:$0xff]
  %v9317 = vld [vmem:[%s5 + $0x58] sm:$0xff]
  %v9318 = vld [vmem:[%s5 + $0x60] sm:$0xff]
  %v9319 = vld [vmem:[%s5 + $0x68] sm:$0xff]
  %v9320 = vld [vmem:[%s5 + $0x70] sm:$0xff]
  %v9321 = vld [vmem:[%s5 + $0x78] sm:$0xff]
  %9323 = vset.pattern.permute.xlu0 0
  %9324 = vperm.xlu0 %9323, %v9306
  %v9325 = vpop.permute.xlu0 %9324
  %9328 = vset.pattern.permute.xlu0 0
  %9329 = vperm.xlu0 %9328, %v9307
  %v9330 = vpop.permute.xlu0 %9329
  %9333 = vset.pattern.permute.xlu0 0
  %9334 = vperm.xlu0 %9333, %v9308
  %v9335 = vpop.permute.xlu0 %9334
  %9338 = vset.pattern.permute.xlu0 0
  %9339 = vperm.xlu0 %9338, %v9309
  %v9340 = vpop.permute.xlu0 %9339
  %9343 = vset.pattern.permute.xlu0 0
  %9344 = vperm.xlu0 %9343, %v9310
  %v9345 = vpop.permute.xlu0 %9344
  %9348 = vset.pattern.permute.xlu0 0
  %9349 = vperm.xlu0 %9348, %v9311
  %v9350 = vpop.permute.xlu0 %9349
  %9353 = vset.pattern.permute.xlu0 0
  %9354 = vperm.xlu0 %9353, %v9312
  %v9355 = vpop.permute.xlu0 %9354
  %9358 = vset.pattern.permute.xlu0 0
  %9359 = vperm.xlu0 %9358, %v9313
  %v9360 = vpop.permute.xlu0 %9359
  %9363 = vset.pattern.permute.xlu0 0
  %9364 = vperm.xlu0 %9363, %v9314
  %v9365 = vpop.permute.xlu0 %9364
  %9368 = vset.pattern.permute.xlu0 0
  %9369 = vperm.xlu0 %9368, %v9315
  %v9370 = vpop.permute.xlu0 %9369
  %9373 = vset.pattern.permute.xlu0 0
  %9374 = vperm.xlu0 %9373, %v9316
  %v9375 = vpop.permute.xlu0 %9374
  %9378 = vset.pattern.permute.xlu0 0
  %9379 = vperm.xlu0 %9378, %v9317
  %v9380 = vpop.permute.xlu0 %9379
  %9383 = vset.pattern.permute.xlu0 0
  %9384 = vperm.xlu0 %9383, %v9318
  %v9385 = vpop.permute.xlu0 %9384
  %9388 = vset.pattern.permute.xlu0 0
  %9389 = vperm.xlu0 %9388, %v9319
  %v9390 = vpop.permute.xlu0 %9389
  %9393 = vset.pattern.permute.xlu0 0
  %9394 = vperm.xlu0 %9393, %v9320
  %v9395 = vpop.permute.xlu0 %9394
  %9398 = vset.pattern.permute.xlu0 0
  %9399 = vperm.xlu0 %9398, %v9321
  %v9400 = vpop.permute.xlu0 %9399
  %v9402 = vmul.f32 %v9290, %v9325
  %v9403 = vmul.f32 %v9291, %v9330
  %v9404 = vmul.f32 %v9292, %v9335
  %v9405 = vmul.f32 %v9293, %v9340
  %v9406 = vmul.f32 %v9294, %v9345
  %v9407 = vmul.f32 %v9295, %v9350
  %v9408 = vmul.f32 %v9296, %v9355
  %v9409 = vmul.f32 %v9297, %v9360
  %v9410 = vmul.f32 %v9298, %v9365
  %v9411 = vmul.f32 %v9299, %v9370
  %v9412 = vmul.f32 %v9300, %v9375
  %v9413 = vmul.f32 %v9301, %v9380
  %v9414 = vmul.f32 %v9302, %v9385
  %v9415 = vmul.f32 %v9303, %v9390
  %v9416 = vmul.f32 %v9304, %v9395
  %v9417 = vmul.f32 %v9305, %v9400
  %v9418 = vadd.f32 %v9402, %v9403
  %v9419 = vadd.f32 %v9418, %v9404
  %v9420 = vadd.f32 %v9419, %v9405
  %v9421 = vadd.f32 %v9420, %v9406
  %v9422 = vadd.f32 %v9421, %v9407
  %v9423 = vadd.f32 %v9422, %v9408
  %v9424 = vadd.f32 %v9423, %v9409
  %v9425 = vadd.f32 %v9424, %v9410
  %v9426 = vadd.f32 %v9425, %v9411
  %v9427 = vadd.f32 %v9426, %v9412
  %v9428 = vadd.f32 %v9427, %v9413
  %v9429 = vadd.f32 %v9428, %v9414
  %v9430 = vadd.f32 %v9429, %v9415
  %v9431 = vadd.f32 %v9430, %v9416
  %v9432 = vadd.f32 %v9431, %v9417
  %v9433 = vrot.slane %v9432, 4
  %v9434 = vadd.f32 %v9432, %v9433
  %v9435 = vrot.slane %v9434, 2
  %v9436 = vadd.f32 %v9434, %v9435
  %v9437 = vrot.slane %v9436, 1
  %v9438 = vadd.f32 %v9436, %v9437
  %v9439 = vrcp.pop 98.0
  %v9440 = vmul.f32 %v9438, %v9439
  %v9441 = vsub.f32 %v9290, %v9440
  %v9442 = vsub.f32 %v9291, %v9440
  %v9443 = vsub.f32 %v9292, %v9440
  %v9444 = vsub.f32 %v9293, %v9440
  %v9445 = vsub.f32 %v9294, %v9440
  %v9446 = vsub.f32 %v9295, %v9440
  %v9447 = vsub.f32 %v9296, %v9440
  %v9448 = vsub.f32 %v9297, %v9440
  %v9449 = vsub.f32 %v9298, %v9440
  %v9450 = vsub.f32 %v9299, %v9440
  %v9451 = vsub.f32 %v9300, %v9440
  %v9452 = vsub.f32 %v9301, %v9440
  %v9453 = vsub.f32 %v9302, %v9440
  %v9454 = vsub.f32 %v9303, %v9440
  %v9455 = vsub.f32 %v9304, %v9440
  %v9456 = vsub.f32 %v9305, %v9440
  %v9457 = vmul.f32 %v9441, %v9325
  %v9458 = vmul.f32 %v9442, %v9330
  %v9459 = vmul.f32 %v9443, %v9335
  %v9460 = vmul.f32 %v9444, %v9340
  %v9461 = vmul.f32 %v9445, %v9345
  %v9462 = vmul.f32 %v9446, %v9350
  %v9463 = vmul.f32 %v9447, %v9355
  %v9464 = vmul.f32 %v9448, %v9360
  %v9465 = vmul.f32 %v9449, %v9365
  %v9466 = vmul.f32 %v9450, %v9370
  %v9467 = vmul.f32 %v9451, %v9375
  %v9468 = vmul.f32 %v9452, %v9380
  %v9469 = vmul.f32 %v9453, %v9385
  %v9470 = vmul.f32 %v9454, %v9390
  %v9471 = vmul.f32 %v9455, %v9395
  %v9472 = vmul.f32 %v9456, %v9400
  %v9473 = vmul.f32 %v9457, %v9457
  %v9474 = vmul.f32 %v9458, %v9458
  %v9475 = vmul.f32 %v9459, %v9459
  %v9476 = vmul.f32 %v9460, %v9460
  %v9477 = vmul.f32 %v9461, %v9461
  %v9478 = vmul.f32 %v9462, %v9462
  %v9479 = vmul.f32 %v9463, %v9463
  %v9480 = vmul.f32 %v9464, %v9464
  %v9481 = vmul.f32 %v9465, %v9465
  %v9482 = vmul.f32 %v9466, %v9466
  %v9483 = vmul.f32 %v9467, %v9467
  %v9484 = vmul.f32 %v9468, %v9468
  %v9485 = vmul.f32 %v9469, %v9469
  %v9486 = vmul.f32 %v9470, %v9470
  %v9487 = vmul.f32 %v9471, %v9471
  %v9488 = vmul.f32 %v9472, %v9472
  %v9489 = vadd.f32 %v9473, %v9474
  %v9490 = vadd.f32 %v9489, %v9475
  %v9491 = vadd.f32 %v9490, %v9476
  %v9492 = vadd.f32 %v9491, %v9477
  %v9493 = vadd.f32 %v9492, %v9478
  %v9494 = vadd.f32 %v9493, %v9479
  %v9495 = vadd.f32 %v9494, %v9480
  %v9496 = vadd.f32 %v9495, %v9481
  %v9497 = vadd.f32 %v9496, %v9482
  %v9498 = vadd.f32 %v9497, %v9483
  %v9499 = vadd.f32 %v9498, %v9484
  %v9500 = vadd.f32 %v9499, %v9485
  %v9501 = vadd.f32 %v9500, %v9486
  %v9502 = vadd.f32 %v9501, %v9487
  %v9503 = vadd.f32 %v9502, %v9488
  %v9504 = vrot.slane %v9503, 4
  %v9505 = vadd.f32 %v9503, %v9504
  %v9506 = vrot.slane %v9505, 2
  %v9507 = vadd.f32 %v9505, %v9506
  %v9508 = vrot.slane %v9507, 1
  %v9509 = vadd.f32 %v9507, %v9508
  %v9510 = vmul.f32 %v9509, %v9439
  %v9511 = vld [vmem:[%s8] sm:$0x1]
  %v9512 = vadd.f32 %v9510, 1e-05
  %v9513 = vrsqrt.pop %v9512
  %v9514 = vmul.f32 %v9511, %v9513
  %v9515 = vld [vmem:[%s9] sm:$0x1]
  %v9516 = vmul.f32 %v9440, %v9514
  %v9517 = vsub.f32 %v9515, %v9516
  %v9519 = vlaneseq
  %v9520 = vshrl.u32 %v9519, 7
  %v9521 = vsub.s32 0, %v9520
  %v9522 = vrot.slane %v9514, %v9521
  %v9524 = vmul.f32 %v9290, %v9522
  %v9525 = vmul.f32 %v9291, %v9522
  %v9526 = vmul.f32 %v9292, %v9522
  %v9527 = vmul.f32 %v9293, %v9522
  %v9528 = vmul.f32 %v9294, %v9522
  %v9529 = vmul.f32 %v9295, %v9522
  %v9530 = vmul.f32 %v9296, %v9522
  %v9531 = vmul.f32 %v9297, %v9522
  %v9532 = vmul.f32 %v9298, %v9522
  %v9533 = vmul.f32 %v9299, %v9522
  %v9534 = vmul.f32 %v9300, %v9522
  %v9535 = vmul.f32 %v9301, %v9522
  %v9536 = vmul.f32 %v9302, %v9522
  %v9537 = vmul.f32 %v9303, %v9522
  %v9538 = vmul.f32 %v9304, %v9522
  %v9539 = vmul.f32 %v9305, %v9522
  %v9541 = vlaneseq
  %v9542 = vshrl.u32 %v9541, 7
  %v9543 = vsub.s32 0, %v9542
  %v9544 = vrot.slane %v9517, %v9543
  %v9546 = vadd.f32 %v9524, %v9544
  %v9547 = vadd.f32 %v9525, %v9544
  %v9548 = vadd.f32 %v9526, %v9544
  %v9549 = vadd.f32 %v9527, %v9544
  %v9550 = vadd.f32 %v9528, %v9544
  %v9551 = vadd.f32 %v9529, %v9544
  %v9552 = vadd.f32 %v9530, %v9544
  %v9553 = vadd.f32 %v9531, %v9544
  %v9554 = vadd.f32 %v9532, %v9544
  %v9555 = vadd.f32 %v9533, %v9544
  %v9556 = vadd.f32 %v9534, %v9544
  %v9557 = vadd.f32 %v9535, %v9544
  %v9558 = vadd.f32 %v9536, %v9544
  %v9559 = vadd.f32 %v9537, %v9544
  %v9560 = vadd.f32 %v9538, %v9544
  %v9561 = vadd.f32 %v9539, %v9544
  %v9562 = vmax.f32 %v9546, 0.0
  %v9563 = vmax.f32 %v9547, 0.0
  %v9564 = vmax.f32 %v9548, 0.0
  %v9565 = vmax.f32 %v9549, 0.0
  %v9566 = vmax.f32 %v9550, 0.0
  %v9567 = vmax.f32 %v9551, 0.0
  %v9568 = vmax.f32 %v9552, 0.0
  %v9569 = vmax.f32 %v9553, 0.0
  %v9570 = vmax.f32 %v9554, 0.0
  %v9571 = vmax.f32 %v9555, 0.0
  %v9572 = vmax.f32 %v9556, 0.0
  %v9573 = vmax.f32 %v9557, 0.0
  %v9574 = vmax.f32 %v9558, 0.0
  %v9575 = vmax.f32 %v9559, 0.0
  %v9576 = vmax.f32 %v9560, 0.0
  %v9577 = vmax.f32 %v9561, 0.0
  %9578 = vst [vmem:[%s10] sm:$0xff] %v9562
  %9579 = vst [vmem:[%s10 + $0x8] sm:$0xff] %v9563
  %9580 = vst [vmem:[%s10 + $0x10] sm:$0xff] %v9564
  %9581 = vst [vmem:[%s10 + $0x18] sm:$0xff] %v9565
  %9582 = vst [vmem:[%s10 + $0x20] sm:$0xff] %v9566
  %9583 = vst [vmem:[%s10 + $0x28] sm:$0xff] %v9567
  %9584 = vst [vmem:[%s10 + $0x30] sm:$0xff] %v9568
  %9585 = vst [vmem:[%s10 + $0x38] sm:$0xff] %v9569
  %9586 = vst [vmem:[%s10 + $0x40] sm:$0xff] %v9570
  %9587 = vst [vmem:[%s10 + $0x48] sm:$0xff] %v9571
  %9588 = vst [vmem:[%s10 + $0x50] sm:$0xff] %v9572
  %9589 = vst [vmem:[%s10 + $0x58] sm:$0xff] %v9573
  %9590 = vst [vmem:[%s10 + $0x60] sm:$0xff] %v9574
  %9591 = vst [vmem:[%s10 + $0x68] sm:$0xff] %v9575
  %9592 = vst [vmem:[%s10 + $0x70] sm:$0xff] %v9576
  %9593 = vst [vmem:[%s10 + $0x78] sm:$0xff] %v9577
  // Predicated region
  $region42: #{res_block_forward.1} parent=0 // pred_check
    _
  $region43: #{res_block_forward.1} parent=0 // pred_check_branch
    %9595 = sbr.rel (0) target = $region45
  $region44: #{res_block_forward.1} parent=0 // pred_region
    _
  $region45: #{res_block_forward.1} parent=0 // pred_fallthru
    _
  // Predicated region
  $region46: #{res_block_forward.1} parent=0 // pred_check
    _
  $region47: #{res_block_forward.1} parent=0 // pred_check_branch
    %9597 = sbr.rel (0) target = $region49
  $region48: #{res_block_forward.1} parent=0 // pred_region
    _
  $region49: #{res_block_forward.1} parent=0 // pred_fallthru
    _

</llo_original>
